<compile_context>
chip_gen: v5e
topology: v5e:2x2
jax: 0.10.0
libtpu: 0.0.40
codegen_flags: <defaults>
</compile_context>

<pallas_src>
import math
from functools import partial

import jax
import jax.numpy as jnp
from jax import lax
from jax.experimental import pallas as pl
from jax.experimental.pallas import tpu as pltpu

NUM_FEATS = 25
NUM_CLASSES = 10
BN_EPS = 1e-5
COMPUTE_DTYPE = jnp.bfloat16      # MXU operand dtype; accumulation stays f32
NEG = -1e30                       # finite "masked" value (avoids -inf/NaN hazards)


def _num_tensorcores():
    """Best-effort TensorCores-per-chip (v7x / v4 / v5p expose 2 via megacore)."""
    try:
        kind = jax.devices()[0].device_kind.lower()
    except Exception:
        return 1
    return 2 if any(t in kind for t in ("v7", "v4", "v5p")) else 1


_NUM_TC = _num_tensorcores()


def _row_tiling(n_rows, max_tm=1024):
    """Row pad / tile / grid: 2 'parallel' steps only on multi-TC chips, else 1 step."""
    g = 2 if (_NUM_TC >= 2 and n_rows >= 16) else 1
    n_pad = n_rows + (-n_rows % (8 * g))
    while n_pad // g > max_tm:
        g *= 2
        n_pad = n_rows + (-n_rows % (8 * g))
    return n_pad, n_pad // g, g


# --------------------- generic fused-MLP kernel (sa3 / fp* / head) ---------------------

def _make_mlp_kernel(n_parts, num_layers, relu_flags, has_affine, softmax_valid):
    def kernel(*refs):
        o_ref = refs[-1]
        xs = refs[:n_parts]
        prm = refs[n_parts:-1]
        # layer 1: z = sum_q x_q @ W1_q + b1  (concat-free)
        z = jnp.dot(xs[0][...], prm[0][...], preferred_element_type=jnp.float32)
        for q in range(1, n_parts):
            z = z + jnp.dot(xs[q][...], prm[q][...], preferred_element_type=jnp.float32)
        p = n_parts
        z = z + prm[p][...]
        p += 1
        for i in range(1, num_layers):
            h = z.astype(COMPUTE_DTYPE)                 # ReLU + downcast in bf16
            if relu_flags[i - 1]:
                h = jnp.maximum(h, 0)
            z = jnp.dot(h, prm[p][...], preferred_element_type=jnp.float32) + prm[p + 1][...]
            p += 2
        if relu_flags[num_layers - 1]:
            z = jnp.maximum(z, 0.0)
        if has_affine:                                   # last layer's folded BN affine
            z = z * prm[p][...] + prm[p + 1][...]
            p += 2
        if softmax_valid:                                # fused log_softmax (valid lanes only)
            lane = lax.broadcasted_iota(jnp.int32, z.shape, 1)
            valid = lane < softmax_valid
            mx = jnp.max(jnp.where(valid, z, NEG), axis=-1, keepdims=True)
            ez = jnp.where(valid, jnp.exp(z - mx), 0.0)
            z = z - mx - jnp.log(jnp.sum(ez, axis=-1, keepdims=True))
        o_ref[...] = z.astype(o_ref.dtype)
    return kernel


def fused_mlp(parts, Ws, bs, relu_flags, scale=None, shift=None,
              out_dtype=COMPUTE_DTYPE, softmax_valid=0):
    """y = MLP(concat(parts)): one pallas_call; the concat is never materialized."""
    n_rows = parts[0].shape[0]
    num_layers = len(Ws)
    cout = Ws[-1].shape[1]
    n_pad, tm, g = _row_tiling(n_rows)
    has_affine = scale is not None

    operands, in_specs = [], []
    for a in parts:
        a = a.astype(COMPUTE_DTYPE)
        if n_pad != n_rows:
            a = jnp.pad(a, ((0, n_pad - n_rows), (0, 0)))
        operands.append(a)
        in_specs.append(pl.BlockSpec((tm, a.shape[1]), lambda i: (i, 0)))
    off = 0
    for a in parts:                                      # split W1 by part widths
        w = Ws[0][off:off + a.shape[1]].astype(COMPUTE_DTYPE)
        off += a.shape[1]
        operands.append(w)
        in_specs.append(pl.BlockSpec(w.shape, lambda i: (0, 0)))
    operands.append(bs[0].reshape(1, -1).astype(jnp.float32))
    in_specs.append(pl.BlockSpec((1, Ws[0].shape[1]), lambda i: (0, 0)))
    for w, b in zip(Ws[1:], bs[1:]):
        operands.append(w.astype(COMPUTE_DTYPE))
        in_specs.append(pl.BlockSpec(w.shape, lambda i: (0, 0)))
        operands.append(b.reshape(1, -1).astype(jnp.float32))
        in_specs.append(pl.BlockSpec((1, w.shape[1]), lambda i: (0, 0)))
    if has_affine:
        operands.append(scale.reshape(1, cout).astype(jnp.float32))
        in_specs.append(pl.BlockSpec((1, cout), lambda i: (0, 0)))
        operands.append(shift.reshape(1, cout).astype(jnp.float32))
        in_specs.append(pl.BlockSpec((1, cout), lambda i: (0, 0)))

    flops = 2 * n_pad * sum(w.shape[0] * w.shape[1] for w in Ws)
    byts = sum(int(o.size) * o.dtype.itemsize for o in operands)
    byts += n_pad * cout * jnp.dtype(out_dtype).itemsize

    out = pl.pallas_call(
        _make_mlp_kernel(len(parts), num_layers, tuple(relu_flags), has_affine,
                         int(softmax_valid)),
        out_shape=jax.ShapeDtypeStruct((n_pad, cout), out_dtype),
        grid_spec=pltpu.PrefetchScalarGridSpec(
            num_scalar_prefetch=0,
            grid=(g,),
            in_specs=in_specs,
            out_specs=pl.BlockSpec((tm, cout), lambda i: (i, 0)),
        ),
        compiler_params=pltpu.CompilerParams(dimension_semantics=("parallel",)),
        cost_estimate=pl.CostEstimate(
            flops=int(flops),
            transcendentals=int(n_pad * 128) if softmax_valid else 0,
            bytes_accessed=int(byts)),
    )(*operands)
    return out[:n_rows] if n_pad != n_rows else out


# ----------------- fused SAModule kernel: message MLP + mask + max -----------------

def _make_sa_kernel(m, n):
    def kernel(x_ref, pos_ref, ctr_ref, maskb_ref,
               w1x_ref, w1p_ref, b1_ref, w2_ref, b2_ref, w3_ref, b3_ref,
               sc_ref, sh_ref, o_ref):
        # hoisted per-point part of layer 1: [n, h1]
        base = (jnp.dot(x_ref[...], w1x_ref[...], preferred_element_type=jnp.float32)
                + jnp.dot(pos_ref[...], w1p_ref[...], preferred_element_type=jnp.float32)
                + b1_ref[...])
        # per-center part: [m, h1]
        ctrw = jnp.dot(ctr_ref[...], w1p_ref[...], preferred_element_type=jnp.float32)
        # z1[i, j] = base[j] - ctrw[i]  ==  [x_j, pos_j - pos_i] @ W1 + b1
        z1 = base[None, :, :] - ctrw[:, None, :]                          # [m, n, h1]
        h = jnp.maximum(z1.astype(COMPUTE_DTYPE), 0).reshape(m * n, -1)
        z2 = jnp.dot(h, w2_ref[...], preferred_element_type=jnp.float32) + b2_ref[...]
        h2 = jnp.maximum(z2.astype(COMPUTE_DTYPE), 0)
        z3 = jnp.dot(h2, w3_ref[...], preferred_element_type=jnp.float32) + b3_ref[...]
        z3 = jnp.maximum(z3, 0.0) * sc_ref[...] + sh_ref[...]             # ReLU + last BN affine
        msgs = z3.reshape(m, n, -1) + maskb_ref[...][:, :, None]          # radius mask as bias
        o_ref[...] = jnp.max(msgs, axis=1).astype(o_ref.dtype)            # max aggregation
    return kernel


def fps_single(pos, m):
    """Greedy farthest point sampling on one graph, deterministic start at index 0."""
    n = pos.shape[0]

    def body(i, carry):
        dists, idxs = carry
        last = idxs[i]
        d = jnp.sum((pos - pos[last]) ** 2, axis=-1)
        dists = jnp.minimum(dists, d)
        nxt = jnp.argmax(dists).astype(jnp.int32)
        idxs = idxs.at[i + 1].set(nxt)
        return dists, idxs

    idxs0 = jnp.zeros((m,), jnp.int32)
    dists0 = jnp.full((n,), jnp.inf, jnp.float32)
    _, idxs = lax.fori_loop(0, m - 1, body, (dists0, idxs0))
    return idxs


def sa_module(x, pos, ratio, r, p):
    """SAModule: fps -> radius graph -> PointNetConv (message MLP + max) in ONE kernel."""
    B, n, c_in = x.shape
    assert len(p["W"]) == 3
    m = max(1, int(math.ceil(ratio * n)))
    idx = jax.vmap(lambda q: fps_single(q, m))(pos)                               # [B, m]
    pos_s = jnp.take_along_axis(pos, jnp.broadcast_to(idx[..., None], (B, m, 3)), axis=1)

    d2 = jnp.sum((pos[:, None, :, :] - pos_s[:, :, None, :]) ** 2, axis=-1)       # [B, m, n]
    # TODO(synk): radius() max_num_neighbors=64 never binds here (n <= 64); no truncation.
    self_loop = jnp.arange(m)[:, None] == jnp.arange(n)[None, :]                  # add_self_loops=True
    maskb = jnp.where((d2 <= r * r) | self_loop, 0.0, NEG).astype(jnp.float32)

    n_pad = n + (-n % 8)                  # pad neighbors so in-kernel reshapes stay tiled
    if n_pad != n:
        x = jnp.pad(x, ((0, 0), (0, n_pad - n), (0, 0)))
        pos = jnp.pad(pos, ((0, 0), (0, n_pad - n), (0, 0)))
        maskb = jnp.pad(maskb, ((0, 0), (0, 0), (0, n_pad - n)), constant_values=NEG)

    W, bvec = p["W"], p["b"]
    h1, h2, c_out = W[0].shape[1], W[1].shape[1], W[2].shape[1]
    operands = [
        x.astype(COMPUTE_DTYPE),
        pos.astype(jnp.float32),
        pos_s.astype(jnp.float32),
        maskb,
        W[0][:c_in].astype(COMPUTE_DTYPE),        # x_j rows of W1
        W[0][c_in:].astype(jnp.float32),          # rel-pos rows of W1 (f32: cancellation-safe)
        bvec[0].reshape(1, h1).astype(jnp.float32),
        W[1].astype(COMPUTE_DTYPE), bvec[1].reshape(1, h2).astype(jnp.float32),
        W[2].astype(COMPUTE_DTYPE), bvec[2].reshape(1, c_out).astype(jnp.float32),
        p["scale"].reshape(1, c_out).astype(jnp.float32),
        p["shift"].reshape(1, c_out).astype(jnp.float32),
    ]
    in_specs = [
        pl.BlockSpec((None, n_pad, c_in), lambda b: (b, 0, 0)),
        pl.BlockSpec((None, n_pad, 3), lambda b: (b, 0, 0)),
        pl.BlockSpec((None, m, 3), lambda b: (b, 0, 0)),
        pl.BlockSpec((None, m, n_pad), lambda b: (b, 0, 0)),
        pl.BlockSpec((c_in, h1), lambda b: (0, 0)),
        pl.BlockSpec((3, h1), lambda b: (0, 0)),
        pl.BlockSpec((1, h1), lambda b: (0, 0)),
        pl.BlockSpec((h1, h2), lambda b: (0, 0)),
        pl.BlockSpec((1, h2), lambda b: (0, 0)),
        pl.BlockSpec((h2, c_out), lambda b: (0, 0)),
        pl.BlockSpec((1, c_out), lambda b: (0, 0)),
        pl.BlockSpec((1, c_out), lambda b: (0, 0)),
        pl.BlockSpec((1, c_out), lambda b: (0, 0)),
    ]
    flops = 2 * B * (n_pad * (c_in + 3) * h1 + m * 3 * h1
                     + m * n_pad * (h1 * h2 + h2 * c_out))
    byts = sum(int(o.size) * o.dtype.itemsize for o in operands) + B * m * c_out * 2

    out = pl.pallas_call(
        _make_sa_kernel(m, n_pad),
        out_shape=jax.ShapeDtypeStruct((B, m, c_out), COMPUTE_DTYPE),
        grid_spec=pltpu.PrefetchScalarGridSpec(
            num_scalar_prefetch=0,
            grid=(B,),
            in_specs=in_specs,
            out_specs=pl.BlockSpec((None, m, c_out), lambda b: (b, 0, 0)),
        ),
        compiler_params=pltpu.CompilerParams(dimension_semantics=("parallel",)),
        cost_estimate=pl.CostEstimate(flops=int(flops), transcendentals=0,
                                      bytes_accessed=int(byts)),
    )(*operands)
    return out, pos_s


# ------------------------------ other network pieces ------------------------------

def global_sa_module(x, pos, p):
    B, n, c = x.shape
    h = fused_mlp([x.reshape(B * n, c), pos.reshape(B * n, 3)],
                  p["W"], p["b"], (True,) * len(p["W"]),
                  scale=p["scale"], shift=p["shift"], out_dtype=COMPUTE_DTYPE)
    h = h.reshape(B, n, -1)
    out = jnp.max(h, axis=1, keepdims=True)                         # global_max_pool
    return out, jnp.zeros((B, 1, 3), jnp.float32)


def knn_interpolate(x, pos, pos_skip, k):
    # TODO(synk): data-dependent knn (torch_cluster) done in plain JAX (dense top_k/gather).
    B, ns, c = x.shape
    nt = pos_skip.shape[1]
    d2 = jnp.sum((pos_skip[:, :, None, :] - pos[:, None, :, :]) ** 2, -1)   # [B, nt, ns]
    neg, idx = lax.top_k(-d2, k)
    w = 1.0 / jnp.clip(-neg, 1e-16, None)                                   # [B, nt, k]
    x_b = jnp.broadcast_to(x[:, None, :, :], (B, nt, ns, c))
    idx_b = jnp.broadcast_to(idx[..., None], (B, nt, k, c))
    xk = jnp.take_along_axis(x_b, idx_b, axis=2)
    return jnp.sum(xk * w[..., None], axis=2) / jnp.sum(w, axis=2, keepdims=True)


def fp_module(x, pos, x_skip, pos_skip, k, p):
    y = knn_interpolate(x, pos, pos_skip, k)
    B, nt, _ = y.shape
    out = fused_mlp([y.reshape(B * nt, -1), x_skip.reshape(B * nt, -1)],
                    p["W"], p["b"], (True,) * len(p["W"]),
                    scale=p["scale"], shift=p["shift"], out_dtype=COMPUTE_DTYPE)
    return out.reshape(B, nt, -1)


# ------------------------------ parameter init ------------------------------

def _init_linear(key, cin, cout):
    kw, kb = jax.random.split(key)
    bound = 1.0 / math.sqrt(cin)
    w = jax.random.uniform(kw, (cin, cout), jnp.float32, -bound, bound)
    b = jax.random.uniform(kb, (cout,), jnp.float32, -bound, bound)
    return w, b


def _init_mlp_raw(key, channels):
    Ws, bs, gammas, betas = [], [], [], []
    for i in range(1, len(channels)):
        key, kl, kg, kb = jax.random.split(key, 4)
        w, b = _init_linear(kl, channels[i - 1], channels[i])
        gamma = 1.0 + 0.1 * jax.random.normal(kg, (channels[i],), jnp.float32)
        beta = 0.1 * jax.random.normal(kb, (channels[i],), jnp.float32)
        Ws.append(w); bs.append(b); gammas.append(gamma); betas.append(beta)
    return Ws, bs, gammas, betas


def _fold_mlp(Ws, bs, gammas, betas):
    """Eval-mode BN (running mean=0, var=1) -> per-channel affine; fold the affine of
    layer i exactly into layer i+1's W/b (relu(z)*s + t then Linear == relu(z) @ (diag(s)W)
    + (tW + b)); keep the last layer's affine for in-kernel application."""
    K = len(Ws)
    scales = [g / jnp.sqrt(1.0 + BN_EPS) for g in gammas]
    shifts = list(betas)
    Wf, bf = [Ws[0]], [bs[0]]
    for i in range(1, K):
        Wf.append(scales[i - 1][:, None] * Ws[i])
        bf.append(shifts[i - 1] @ Ws[i] + bs[i])
    return {"W": Wf, "b": bf, "scale": scales[-1], "shift": shifts[-1]}


def init_net(key):
    keys = jax.random.split(key, 9)
    w1, b1 = _init_linear(keys[6], 128, 128)
    w2, b2 = _init_linear(keys[7], 128, 128)
    w3, b3 = _init_linear(keys[8], 128, NUM_CLASSES)
    # Pad the classifier to 128 output lanes (lane-dense stores); sliced back outside.
    w3p = jnp.pad(w3, ((0, 0), (0, 128 - NUM_CLASSES)))
    b3p = jnp.pad(b3, ((0, 128 - NUM_CLASSES),))
    return {
        "sa1": _fold_mlp(*_init_mlp_raw(keys[0], [3 + NUM_FEATS, 64, 64, 128])),
        "sa2": _fold_mlp(*_init_mlp_raw(keys[1], [128 + 3, 128, 128, 256])),
        "sa3": _fold_mlp(*_init_mlp_raw(keys[2], [256 + 3, 256, 512, 1024])),
        "fp3": _fold_mlp(*_init_mlp_raw(keys[3], [1024 + 256, 256, 256])),
        "fp2": _fold_mlp(*_init_mlp_raw(keys[4], [256 + 128, 256, 128])),
        "fp1": _fold_mlp(*_init_mlp_raw(keys[5], [128 + NUM_FEATS, 128, 128, 128])),
        "head": {"W": [w1, w2, w3p], "b": [b1, b2, b3p]},
    }


# -------------------------------- full network --------------------------------

@partial(jax.jit, static_argnums=(3,))
def _forward(params, x_flat, pos_flat, B):
    N = x_flat.shape[0]
    n = N // B
    x = x_flat.reshape(B, n, NUM_FEATS)
    pos = pos_flat.reshape(B, n, 3)

    sa1_x, sa1_pos = sa_module(x, pos, 0.2, 0.1, params["sa1"])
    sa2_x, sa2_pos = sa_module(sa1_x, sa1_pos, 0.25, 0.2, params["sa2"])
    sa3_x, sa3_pos = global_sa_module(sa2_x, sa2_pos, params["sa3"])

    fp3_x = fp_module(sa3_x, sa3_pos, sa2_x, sa2_pos, 1, params["fp3"])
    fp2_x = fp_module(fp3_x, sa2_pos, sa1_x, sa1_pos, 3, params["fp2"])
    fp1_x = fp_module(fp2_x, sa1_pos, x, pos, 3, params["fp1"])

    # lin1+ReLU, dropout (identity in eval), lin2, dropout, lin3, log_softmax — one kernel.
    head = params["head"]
    logp = fused_mlp([fp1_x.reshape(B * n, 128)], head["W"], head["b"],
                     relu_flags=(True, False, False),
                     out_dtype=jnp.float32, softmax_valid=NUM_CLASSES)
    return logp[:, :NUM_CLASSES]


def net_forward(params, x_flat, pos_flat, batch):
    B = int(batch.max()) + 1
    assert x_flat.shape[0] % B == 0, "equal-sized graphs required"
    return _forward(params, x_flat, pos_flat, B)


if __name__ == "__main__":
    key = jax.random.PRNGKey(0)
    kx, kp, kparam = jax.random.split(key, 3)

    B, n = 2, 64  # two graphs of 64 points each
    x = jax.random.normal(kx, (B * n, NUM_FEATS), jnp.float32)
    pos = jax.random.uniform(kp, (B * n, 3), jnp.float32)
    batch = jnp.repeat(jnp.arange(B, dtype=jnp.int32), n)

    params = init_net(kparam)
    out = net_forward(params, x, pos, batch)
    out = jax.block_until_ready(out)

    assert out.shape == (B * n, NUM_CLASSES), out.shape
    assert bool(jnp.all(jnp.isfinite(out)))
    print("KERNEL_OK")
</pallas_src>

<mosaic_0001>
module attributes {stable_mosaic.version = 11 : i64} {
  func.func @kernel(%arg0: i32, %arg1: memref<1x64x25xbf16, #tpu.memory_space<vmem>>, %arg2: memref<1x64x3xf32, #tpu.memory_space<vmem>>, %arg3: memref<1x13x3xf32, #tpu.memory_space<vmem>>, %arg4: memref<1x13x64xf32, #tpu.memory_space<vmem>>, %arg5: memref<25x64xbf16, #tpu.memory_space<vmem>>, %arg6: memref<3x64xf32, #tpu.memory_space<vmem>>, %arg7: memref<1x64xf32, #tpu.memory_space<vmem>>, %arg8: memref<64x64xbf16, #tpu.memory_space<vmem>>, %arg9: memref<1x64xf32, #tpu.memory_space<vmem>>, %arg10: memref<64x128xbf16, #tpu.memory_space<vmem>>, %arg11: memref<1x128xf32, #tpu.memory_space<vmem>>, %arg12: memref<1x128xf32, #tpu.memory_space<vmem>>, %arg13: memref<1x128xf32, #tpu.memory_space<vmem>>, %arg14: memref<1x13x128xbf16, #tpu.memory_space<vmem>>) attributes {dimension_semantics = [#tpu.dimension_semantics<parallel>], iteration_bounds = array<i64: 2>, scalar_prefetch = 0 : i64, scratch_operands = 0 : i64, tpu.core_type = #tpu.core_type<tc>, window_params = [{transform_indices = @transform_0, window_bounds = array<i64: 1, 64, 25>}, {transform_indices = @transform_1, window_bounds = array<i64: 1, 64, 3>}, {transform_indices = @transform_2, window_bounds = array<i64: 1, 13, 3>}, {transform_indices = @transform_3, window_bounds = array<i64: 1, 13, 64>}, {pipeline_mode = #tpu.pipeline_mode<synchronous>, transform_indices = @transform_4, window_bounds = array<i64: 25, 64>}, {pipeline_mode = #tpu.pipeline_mode<synchronous>, transform_indices = @transform_5, window_bounds = array<i64: 3, 64>}, {pipeline_mode = #tpu.pipeline_mode<synchronous>, transform_indices = @transform_6, window_bounds = array<i64: 1, 64>}, {pipeline_mode = #tpu.pipeline_mode<synchronous>, transform_indices = @transform_7, window_bounds = array<i64: 64, 64>}, {pipeline_mode = #tpu.pipeline_mode<synchronous>, transform_indices = @transform_8, window_bounds = array<i64: 1, 64>}, {pipeline_mode = #tpu.pipeline_mode<synchronous>, transform_indices = @transform_9, window_bounds = array<i64: 64, 128>}, {pipeline_mode = #tpu.pipeline_mode<synchronous>, transform_indices = @transform_10, window_bounds = array<i64: 1, 128>}, {pipeline_mode = #tpu.pipeline_mode<synchronous>, transform_indices = @transform_11, window_bounds = array<i64: 1, 128>}, {pipeline_mode = #tpu.pipeline_mode<synchronous>, transform_indices = @transform_12, window_bounds = array<i64: 1, 128>}, {transform_indices = @transform_13, window_bounds = array<i64: 1, 13, 128>}]} {
    %c0 = arith.constant 0 : index
    %c0_0 = arith.constant 0 : index
    %c0_1 = arith.constant 0 : index
    %0 = vector.load %arg1[%c0, %c0_0, %c0_1] : memref<1x64x25xbf16, #tpu.memory_space<vmem>>, vector<1x64x25xbf16>
    %1 = vector.shape_cast %0 : vector<1x64x25xbf16> to vector<64x25xbf16>
    %c0_2 = arith.constant 0 : index
    %c0_3 = arith.constant 0 : index
    %2 = vector.load %arg5[%c0_2, %c0_3] : memref<25x64xbf16, #tpu.memory_space<vmem>>, vector<25x64xbf16>
    %cst = arith.constant dense<0.000000e+00> : vector<64x64xf32>
    %3 = tpu.matmul %1, %2, %cst {dimension_numbers = #tpu.dot_dimension_numbers<[1], [0], [0], [1], [0, 0, 1, 1], [], []>} : vector<64x25xbf16>, vector<25x64xbf16>, vector<64x64xf32> -> vector<64x64xf32>
    %c0_4 = arith.constant 0 : index
    %c0_5 = arith.constant 0 : index
    %c0_6 = arith.constant 0 : index
    %4 = vector.load %arg2[%c0_4, %c0_5, %c0_6] : memref<1x64x3xf32, #tpu.memory_space<vmem>>, vector<1x64x3xf32>
    %5 = vector.shape_cast %4 : vector<1x64x3xf32> to vector<64x3xf32>
    %c0_7 = arith.constant 0 : index
    %c0_8 = arith.constant 0 : index
    %6 = vector.load %arg6[%c0_7, %c0_8] : memref<3x64xf32, #tpu.memory_space<vmem>>, vector<3x64xf32>
    %cst_9 = arith.constant dense<0.000000e+00> : vector<64x64xf32>
    %7 = tpu.matmul %5, %6, %cst_9 {dimension_numbers = #tpu.dot_dimension_numbers<[1], [0], [0], [1], [0, 0, 1, 1], [], []>} : vector<64x3xf32>, vector<3x64xf32>, vector<64x64xf32> -> vector<64x64xf32>
    %8 = arith.addf %3, %7 : vector<64x64xf32>
    %c0_10 = arith.constant 0 : index
    %c0_11 = arith.constant 0 : index
    %9 = vector.load %arg7[%c0_10, %c0_11] : memref<1x64xf32, #tpu.memory_space<vmem>>, vector<1x64xf32>
    %10 = vector.broadcast %9 : vector<1x64xf32> to vector<64x64xf32>
    %11 = arith.addf %8, %10 : vector<64x64xf32>
    %c0_12 = arith.constant 0 : index
    %c0_13 = arith.constant 0 : index
    %c0_14 = arith.constant 0 : index
    %12 = vector.load %arg3[%c0_12, %c0_13, %c0_14] : memref<1x13x3xf32, #tpu.memory_space<vmem>>, vector<1x13x3xf32>
    %13 = vector.shape_cast %12 : vector<1x13x3xf32> to vector<13x3xf32>
    %c0_15 = arith.constant 0 : index
    %c0_16 = arith.constant 0 : index
    %14 = vector.load %arg6[%c0_15, %c0_16] : memref<3x64xf32, #tpu.memory_space<vmem>>, vector<3x64xf32>
    %cst_17 = arith.constant dense<0.000000e+00> : vector<13x64xf32>
    %15 = tpu.matmul %13, %14, %cst_17 {dimension_numbers = #tpu.dot_dimension_numbers<[1], [0], [0], [1], [0, 0, 1, 1], [], []>} : vector<13x3xf32>, vector<3x64xf32>, vector<13x64xf32> -> vector<13x64xf32>
    %16 = vector.shape_cast %11 : vector<64x64xf32> to vector<1x64x64xf32>
    %17 = vector.shape_cast %15 : vector<13x64xf32> to vector<13x1x64xf32>
    %18 = vector.broadcast %16 : vector<1x64x64xf32> to vector<13x64x64xf32>
    %19 = vector.broadcast %17 : vector<13x1x64xf32> to vector<13x64x64xf32>
    %20 = arith.subf %18, %19 : vector<13x64x64xf32>
    %21 = arith.truncf %20 : vector<13x64x64xf32> to vector<13x64x64xbf16>
    %cst_18 = arith.constant 0.000000e+00 : bf16
    %22 = vector.broadcast %cst_18 : bf16 to vector<13x64x64xbf16>
    %23 = arith.maximumf %21, %22 : vector<13x64x64xbf16>
    %24 = vector.shape_cast %23 : vector<13x64x64xbf16> to vector<832x64xbf16>
    %c0_19 = arith.constant 0 : index
    %c0_20 = arith.constant 0 : index
    %25 = vector.load %arg8[%c0_19, %c0_20] : memref<64x64xbf16, #tpu.memory_space<vmem>>, vector<64x64xbf16>
    %cst_21 = arith.constant dense<0.000000e+00> : vector<832x64xf32>
    %26 = tpu.matmul %24, %25, %cst_21 {dimension_numbers = #tpu.dot_dimension_numbers<[1], [0], [0], [1], [0, 0, 1, 1], [], []>} : vector<832x64xbf16>, vector<64x64xbf16>, vector<832x64xf32> -> vector<832x64xf32>
    %c0_22 = arith.constant 0 : index
    %c0_23 = arith.constant 0 : index
    %27 = vector.load %arg9[%c0_22, %c0_23] : memref<1x64xf32, #tpu.memory_space<vmem>>, vector<1x64xf32>
    %28 = vector.broadcast %27 : vector<1x64xf32> to vector<832x64xf32>
    %29 = arith.addf %26, %28 : vector<832x64xf32>
    %30 = arith.truncf %29 : vector<832x64xf32> to vector<832x64xbf16>
    %cst_24 = arith.constant 0.000000e+00 : bf16
    %31 = vector.broadcast %cst_24 : bf16 to vector<832x64xbf16>
    %32 = arith.maximumf %30, %31 : vector<832x64xbf16>
    %c0_25 = arith.constant 0 : index
    %c0_26 = arith.constant 0 : index
    %33 = vector.load %arg10[%c0_25, %c0_26] : memref<64x128xbf16, #tpu.memory_space<vmem>>, vector<64x128xbf16>
    %cst_27 = arith.constant dense<0.000000e+00> : vector<832x128xf32>
    %34 = tpu.matmul %32, %33, %cst_27 {dimension_numbers = #tpu.dot_dimension_numbers<[1], [0], [0], [1], [0, 0, 1, 1], [], []>} : vector<832x64xbf16>, vector<64x128xbf16>, vector<832x128xf32> -> vector<832x128xf32>
    %c0_28 = arith.constant 0 : index
    %c0_29 = arith.constant 0 : index
    %35 = vector.load %arg11[%c0_28, %c0_29] : memref<1x128xf32, #tpu.memory_space<vmem>>, vector<1x128xf32>
    %36 = vector.broadcast %35 : vector<1x128xf32> to vector<832x128xf32>
    %37 = arith.addf %34, %36 : vector<832x128xf32>
    %cst_30 = arith.constant 0.000000e+00 : f32
    %38 = vector.broadcast %cst_30 : f32 to vector<832x128xf32>
    %39 = arith.maximumf %37, %38 : vector<832x128xf32>
    %c0_31 = arith.constant 0 : index
    %c0_32 = arith.constant 0 : index
    %40 = vector.load %arg12[%c0_31, %c0_32] : memref<1x128xf32, #tpu.memory_space<vmem>>, vector<1x128xf32>
    %41 = vector.broadcast %40 : vector<1x128xf32> to vector<832x128xf32>
    %42 = arith.mulf %39, %41 : vector<832x128xf32>
    %c0_33 = arith.constant 0 : index
    %c0_34 = arith.constant 0 : index
    %43 = vector.load %arg13[%c0_33, %c0_34] : memref<1x128xf32, #tpu.memory_space<vmem>>, vector<1x128xf32>
    %44 = vector.broadcast %43 : vector<1x128xf32> to vector<832x128xf32>
    %45 = arith.addf %42, %44 : vector<832x128xf32>
    %46 = vector.shape_cast %45 : vector<832x128xf32> to vector<13x64x128xf32>
    %c0_35 = arith.constant 0 : index
    %c0_36 = arith.constant 0 : index
    %c0_37 = arith.constant 0 : index
    %47 = vector.load %arg4[%c0_35, %c0_36, %c0_37] : memref<1x13x64xf32, #tpu.memory_space<vmem>>, vector<1x13x64xf32>
    %48 = vector.shape_cast %47 : vector<1x13x64xf32> to vector<13x64xf32>
    %49 = vector.shape_cast %48 : vector<13x64xf32> to vector<13x64x1xf32>
    %50 = vector.broadcast %49 : vector<13x64x1xf32> to vector<13x64x128xf32>
    %51 = arith.addf %46, %50 : vector<13x64x128xf32>
    %cst_38 = arith.constant dense<0xFF800000> : vector<13x128xf32>
    %52 = vector.multi_reduction <maximumf>, %51, %cst_38 [1] : vector<13x64x128xf32> to vector<13x128xf32>
    %53 = arith.truncf %52 : vector<13x128xf32> to vector<13x128xbf16>
    %c0_39 = arith.constant 0 : index
    %c0_40 = arith.constant 0 : index
    %c0_41 = arith.constant 0 : index
    %54 = vector.load %arg14[%c0_39, %c0_40, %c0_41] : memref<1x13x128xbf16, #tpu.memory_space<vmem>>, vector<1x13x128xbf16>
    %55 = vector.shape_cast %54 : vector<1x13x128xbf16> to vector<13x128xbf16>
    %56 = vector.shape_cast %53 : vector<13x128xbf16> to vector<1x13x128xbf16>
    tpu.vector_store %arg14[%c0_39, %c0_40, %c0_41], %56 {strides = array<i32>} : memref<1x13x128xbf16, #tpu.memory_space<vmem>>, vector<1x13x128xbf16>,
    return
  }
  func.func @transform_0(%arg0: i32) -> (i32, i32, i32) {
    %c0_i32 = arith.constant 0 : i32
    %c0_i32_0 = arith.constant 0 : i32
    %c0_i32_1 = arith.constant 0 : i32
    return %arg0, %c0_i32, %c0_i32_0 : i32, i32, i32
  }
  func.func @transform_1(%arg0: i32) -> (i32, i32, i32) {
    %c0_i32 = arith.constant 0 : i32
    %c0_i32_0 = arith.constant 0 : i32
    %c0_i32_1 = arith.constant 0 : i32
    return %arg0, %c0_i32, %c0_i32_0 : i32, i32, i32
  }
  func.func @transform_2(%arg0: i32) -> (i32, i32, i32) {
    %c0_i32 = arith.constant 0 : i32
    %c0_i32_0 = arith.constant 0 : i32
    %c0_i32_1 = arith.constant 0 : i32
    return %arg0, %c0_i32, %c0_i32_0 : i32, i32, i32
  }
  func.func @transform_3(%arg0: i32) -> (i32, i32, i32) {
    %c0_i32 = arith.constant 0 : i32
    %c0_i32_0 = arith.constant 0 : i32
    %c0_i32_1 = arith.constant 0 : i32
    return %arg0, %c0_i32, %c0_i32_0 : i32, i32, i32
  }
  func.func @transform_4(%arg0: i32) -> (i32, i32) {
    %c0_i32 = arith.constant 0 : i32
    %c0_i32_0 = arith.constant 0 : i32
    %c0_i32_1 = arith.constant 0 : i32
    return %c0_i32, %c0_i32_0 : i32, i32
  }
  func.func @transform_5(%arg0: i32) -> (i32, i32) {
    %c0_i32 = arith.constant 0 : i32
    %c0_i32_0 = arith.constant 0 : i32
    %c0_i32_1 = arith.constant 0 : i32
    return %c0_i32, %c0_i32_0 : i32, i32
  }
  func.func @transform_6(%arg0: i32) -> (i32, i32) {
    %c0_i32 = arith.constant 0 : i32
    %c0_i32_0 = arith.constant 0 : i32
    %c0_i32_1 = arith.constant 0 : i32
    return %c0_i32, %c0_i32_0 : i32, i32
  }
  func.func @transform_7(%arg0: i32) -> (i32, i32) {
    %c0_i32 = arith.constant 0 : i32
    %c0_i32_0 = arith.constant 0 : i32
    %c0_i32_1 = arith.constant 0 : i32
    return %c0_i32, %c0_i32_0 : i32, i32
  }
  func.func @transform_8(%arg0: i32) -> (i32, i32) {
    %c0_i32 = arith.constant 0 : i32
    %c0_i32_0 = arith.constant 0 : i32
    %c0_i32_1 = arith.constant 0 : i32
    return %c0_i32, %c0_i32_0 : i32, i32
  }
  func.func @transform_9(%arg0: i32) -> (i32, i32) {
    %c0_i32 = arith.constant 0 : i32
    %c0_i32_0 = arith.constant 0 : i32
    %c0_i32_1 = arith.constant 0 : i32
    return %c0_i32, %c0_i32_0 : i32, i32
  }
  func.func @transform_10(%arg0: i32) -> (i32, i32) {
    %c0_i32 = arith.constant 0 : i32
    %c0_i32_0 = arith.constant 0 : i32
    %c0_i32_1 = arith.constant 0 : i32
    return %c0_i32, %c0_i32_0 : i32, i32
  }
  func.func @transform_11(%arg0: i32) -> (i32, i32) {
    %c0_i32 = arith.constant 0 : i32
    %c0_i32_0 = arith.constant 0 : i32
    %c0_i32_1 = arith.constant 0 : i32
    return %c0_i32, %c0_i32_0 : i32, i32
  }
  func.func @transform_12(%arg0: i32) -> (i32, i32) {
    %c0_i32 = arith.constant 0 : i32
    %c0_i32_0 = arith.constant 0 : i32
    %c0_i32_1 = arith.constant 0 : i32
    return %c0_i32, %c0_i32_0 : i32, i32
  }
  func.func @transform_13(%arg0: i32) -> (i32, i32, i32) {
    %c0_i32 = arith.constant 0 : i32
    %c0_i32_0 = arith.constant 0 : i32
    %c0_i32_1 = arith.constant 0 : i32
    return %arg0, %c0_i32, %c0_i32_0 : i32, i32, i32
  }
}

module attributes {stable_mosaic.version = 11 : i64} {
  func.func @kernel(%arg0: i32, %arg1: memref<1x16x128xbf16, #tpu.memory_space<vmem>>, %arg2: memref<1x16x3xf32, #tpu.memory_space<vmem>>, %arg3: memref<1x4x3xf32, #tpu.memory_space<vmem>>, %arg4: memref<1x4x16xf32, #tpu.memory_space<vmem>>, %arg5: memref<128x128xbf16, #tpu.memory_space<vmem>>, %arg6: memref<3x128xf32, #tpu.memory_space<vmem>>, %arg7: memref<1x128xf32, #tpu.memory_space<vmem>>, %arg8: memref<128x128xbf16, #tpu.memory_space<vmem>>, %arg9: memref<1x128xf32, #tpu.memory_space<vmem>>, %arg10: memref<128x256xbf16, #tpu.memory_space<vmem>>, %arg11: memref<1x256xf32, #tpu.memory_space<vmem>>, %arg12: memref<1x256xf32, #tpu.memory_space<vmem>>, %arg13: memref<1x256xf32, #tpu.memory_space<vmem>>, %arg14: memref<1x4x256xbf16, #tpu.memory_space<vmem>>) attributes {dimension_semantics = [#tpu.dimension_semantics<parallel>], iteration_bounds = array<i64: 2>, scalar_prefetch = 0 : i64, scratch_operands = 0 : i64, tpu.core_type = #tpu.core_type<tc>, window_params = [{transform_indices = @transform_0, window_bounds = array<i64: 1, 16, 128>}, {transform_indices = @transform_1, window_bounds = array<i64: 1, 16, 3>}, {transform_indices = @transform_2, window_bounds = array<i64: 1, 4, 3>}, {transform_indices = @transform_3, window_bounds = array<i64: 1, 4, 16>}, {pipeline_mode = #tpu.pipeline_mode<synchronous>, transform_indices = @transform_4, window_bounds = array<i64: 128, 128>}, {pipeline_mode = #tpu.pipeline_mode<synchronous>, transform_indices = @transform_5, window_bounds = array<i64: 3, 128>}, {pipeline_mode = #tpu.pipeline_mode<synchronous>, transform_indices = @transform_6, window_bounds = array<i64: 1, 128>}, {pipeline_mode = #tpu.pipeline_mode<synchronous>, transform_indices = @transform_7, window_bounds = array<i64: 128, 128>}, {pipeline_mode = #tpu.pipeline_mode<synchronous>, transform_indices = @transform_8, window_bounds = array<i64: 1, 128>}, {pipeline_mode = #tpu.pipeline_mode<synchronous>, transform_indices = @transform_9, window_bounds = array<i64: 128, 256>}, {pipeline_mode = #tpu.pipeline_mode<synchronous>, transform_indices = @transform_10, window_bounds = array<i64: 1, 256>}, {pipeline_mode = #tpu.pipeline_mode<synchronous>, transform_indices = @transform_11, window_bounds = array<i64: 1, 256>}, {pipeline_mode = #tpu.pipeline_mode<synchronous>, transform_indices = @transform_12, window_bounds = array<i64: 1, 256>}, {transform_indices = @transform_13, window_bounds = array<i64: 1, 4, 256>}]} {
    %c0 = arith.constant 0 : index
    %c0_0 = arith.constant 0 : index
    %c0_1 = arith.constant 0 : index
    %0 = vector.load %arg1[%c0, %c0_0, %c0_1] : memref<1x16x128xbf16, #tpu.memory_space<vmem>>, vector<1x16x128xbf16>
    %1 = vector.shape_cast %0 : vector<1x16x128xbf16> to vector<16x128xbf16>
    %c0_2 = arith.constant 0 : index
    %c0_3 = arith.constant 0 : index
    %2 = vector.load %arg5[%c0_2, %c0_3] : memref<128x128xbf16, #tpu.memory_space<vmem>>, vector<128x128xbf16>
    %cst = arith.constant dense<0.000000e+00> : vector<16x128xf32>
    %3 = tpu.matmul %1, %2, %cst {dimension_numbers = #tpu.dot_dimension_numbers<[1], [0], [0], [1], [0, 0, 1, 1], [], []>} : vector<16x128xbf16>, vector<128x128xbf16>, vector<16x128xf32> -> vector<16x128xf32>
    %c0_4 = arith.constant 0 : index
    %c0_5 = arith.constant 0 : index
    %c0_6 = arith.constant 0 : index
    %4 = vector.load %arg2[%c0_4, %c0_5, %c0_6] : memref<1x16x3xf32, #tpu.memory_space<vmem>>, vector<1x16x3xf32>
    %5 = vector.shape_cast %4 : vector<1x16x3xf32> to vector<16x3xf32>
    %c0_7 = arith.constant 0 : index
    %c0_8 = arith.constant 0 : index
    %6 = vector.load %arg6[%c0_7, %c0_8] : memref<3x128xf32, #tpu.memory_space<vmem>>, vector<3x128xf32>
    %cst_9 = arith.constant dense<0.000000e+00> : vector<16x128xf32>
    %7 = tpu.matmul %5, %6, %cst_9 {dimension_numbers = #tpu.dot_dimension_numbers<[1], [0], [0], [1], [0, 0, 1, 1], [], []>} : vector<16x3xf32>, vector<3x128xf32>, vector<16x128xf32> -> vector<16x128xf32>
    %8 = arith.addf %3, %7 : vector<16x128xf32>
    %c0_10 = arith.constant 0 : index
    %c0_11 = arith.constant 0 : index
    %9 = vector.load %arg7[%c0_10, %c0_11] : memref<1x128xf32, #tpu.memory_space<vmem>>, vector<1x128xf32>
    %10 = vector.broadcast %9 : vector<1x128xf32> to vector<16x128xf32>
    %11 = arith.addf %8, %10 : vector<16x128xf32>
    %c0_12 = arith.constant 0 : index
    %c0_13 = arith.constant 0 : index
    %c0_14 = arith.constant 0 : index
    %12 = vector.load %arg3[%c0_12, %c0_13, %c0_14] : memref<1x4x3xf32, #tpu.memory_space<vmem>>, vector<1x4x3xf32>
    %13 = vector.shape_cast %12 : vector<1x4x3xf32> to vector<4x3xf32>
    %c0_15 = arith.constant 0 : index
    %c0_16 = arith.constant 0 : index
    %14 = vector.load %arg6[%c0_15, %c0_16] : memref<3x128xf32, #tpu.memory_space<vmem>>, vector<3x128xf32>
    %cst_17 = arith.constant dense<0.000000e+00> : vector<4x128xf32>
    %15 = tpu.matmul %13, %14, %cst_17 {dimension_numbers = #tpu.dot_dimension_numbers<[1], [0], [0], [1], [0, 0, 1, 1], [], []>} : vector<4x3xf32>, vector<3x128xf32>, vector<4x128xf32> -> vector<4x128xf32>
    %16 = vector.shape_cast %11 : vector<16x128xf32> to vector<1x16x128xf32>
    %17 = vector.shape_cast %15 : vector<4x128xf32> to vector<4x1x128xf32>
    %18 = vector.broadcast %16 : vector<1x16x128xf32> to vector<4x16x128xf32>
    %19 = vector.broadcast %17 : vector<4x1x128xf32> to vector<4x16x128xf32>
    %20 = arith.subf %18, %19 : vector<4x16x128xf32>
    %21 = arith.truncf %20 : vector<4x16x128xf32> to vector<4x16x128xbf16>
    %cst_18 = arith.constant 0.000000e+00 : bf16
    %22 = vector.broadcast %cst_18 : bf16 to vector<4x16x128xbf16>
    %23 = arith.maximumf %21, %22 : vector<4x16x128xbf16>
    %24 = vector.shape_cast %23 : vector<4x16x128xbf16> to vector<64x128xbf16>
    %c0_19 = arith.constant 0 : index
    %c0_20 = arith.constant 0 : index
    %25 = vector.load %arg8[%c0_19, %c0_20] : memref<128x128xbf16, #tpu.memory_space<vmem>>, vector<128x128xbf16>
    %cst_21 = arith.constant dense<0.000000e+00> : vector<64x128xf32>
    %26 = tpu.matmul %24, %25, %cst_21 {dimension_numbers = #tpu.dot_dimension_numbers<[1], [0], [0], [1], [0, 0, 1, 1], [], []>} : vector<64x128xbf16>, vector<128x128xbf16>, vector<64x128xf32> -> vector<64x128xf32>
    %c0_22 = arith.constant 0 : index
    %c0_23 = arith.constant 0 : index
    %27 = vector.load %arg9[%c0_22, %c0_23] : memref<1x128xf32, #tpu.memory_space<vmem>>, vector<1x128xf32>
    %28 = vector.broadcast %27 : vector<1x128xf32> to vector<64x128xf32>
    %29 = arith.addf %26, %28 : vector<64x128xf32>
    %30 = arith.truncf %29 : vector<64x128xf32> to vector<64x128xbf16>
    %cst_24 = arith.constant 0.000000e+00 : bf16
    %31 = vector.broadcast %cst_24 : bf16 to vector<64x128xbf16>
    %32 = arith.maximumf %30, %31 : vector<64x128xbf16>
    %c0_25 = arith.constant 0 : index
    %c0_26 = arith.constant 0 : index
    %33 = vector.load %arg10[%c0_25, %c0_26] : memref<128x256xbf16, #tpu.memory_space<vmem>>, vector<128x256xbf16>
    %cst_27 = arith.constant dense<0.000000e+00> : vector<64x256xf32>
    %34 = tpu.matmul %32, %33, %cst_27 {dimension_numbers = #tpu.dot_dimension_numbers<[1], [0], [0], [1], [0, 0, 1, 1], [], []>} : vector<64x128xbf16>, vector<128x256xbf16>, vector<64x256xf32> -> vector<64x256xf32>
    %c0_28 = arith.constant 0 : index
    %c0_29 = arith.constant 0 : index
    %35 = vector.load %arg11[%c0_28, %c0_29] : memref<1x256xf32, #tpu.memory_space<vmem>>, vector<1x256xf32>
    %36 = vector.broadcast %35 : vector<1x256xf32> to vector<64x256xf32>
    %37 = arith.addf %34, %36 : vector<64x256xf32>
    %cst_30 = arith.constant 0.000000e+00 : f32
    %38 = vector.broadcast %cst_30 : f32 to vector<64x256xf32>
    %39 = arith.maximumf %37, %38 : vector<64x256xf32>
    %c0_31 = arith.constant 0 : index
    %c0_32 = arith.constant 0 : index
    %40 = vector.load %arg12[%c0_31, %c0_32] : memref<1x256xf32, #tpu.memory_space<vmem>>, vector<1x256xf32>
    %41 = vector.broadcast %40 : vector<1x256xf32> to vector<64x256xf32>
    %42 = arith.mulf %39, %41 : vector<64x256xf32>
    %c0_33 = arith.constant 0 : index
    %c0_34 = arith.constant 0 : index
    %43 = vector.load %arg13[%c0_33, %c0_34] : memref<1x256xf32, #tpu.memory_space<vmem>>, vector<1x256xf32>
    %44 = vector.broadcast %43 : vector<1x256xf32> to vector<64x256xf32>
    %45 = arith.addf %42, %44 : vector<64x256xf32>
    %46 = vector.shape_cast %45 : vector<64x256xf32> to vector<4x16x256xf32>
    %c0_35 = arith.constant 0 : index
    %c0_36 = arith.constant 0 : index
    %c0_37 = arith.constant 0 : index
    %47 = vector.load %arg4[%c0_35, %c0_36, %c0_37] : memref<1x4x16xf32, #tpu.memory_space<vmem>>, vector<1x4x16xf32>
    %48 = vector.shape_cast %47 : vector<1x4x16xf32> to vector<4x16xf32>
    %49 = vector.shape_cast %48 : vector<4x16xf32> to vector<4x16x1xf32>
    %50 = vector.broadcast %49 : vector<4x16x1xf32> to vector<4x16x256xf32>
    %51 = arith.addf %46, %50 : vector<4x16x256xf32>
    %cst_38 = arith.constant dense<0xFF800000> : vector<4x256xf32>
    %52 = vector.multi_reduction <maximumf>, %51, %cst_38 [1] : vector<4x16x256xf32> to vector<4x256xf32>
    %53 = arith.truncf %52 : vector<4x256xf32> to vector<4x256xbf16>
    %c0_39 = arith.constant 0 : index
    %c0_40 = arith.constant 0 : index
    %c0_41 = arith.constant 0 : index
    %54 = vector.load %arg14[%c0_39, %c0_40, %c0_41] : memref<1x4x256xbf16, #tpu.memory_space<vmem>>, vector<1x4x256xbf16>
    %55 = vector.shape_cast %54 : vector<1x4x256xbf16> to vector<4x256xbf16>
    %56 = vector.shape_cast %53 : vector<4x256xbf16> to vector<1x4x256xbf16>
    tpu.vector_store %arg14[%c0_39, %c0_40, %c0_41], %56 {strides = array<i32>} : memref<1x4x256xbf16, #tpu.memory_space<vmem>>, vector<1x4x256xbf16>,
    return
  }
  func.func @transform_0(%arg0: i32) -> (i32, i32, i32) {
    %c0_i32 = arith.constant 0 : i32
    %c0_i32_0 = arith.constant 0 : i32
    %c0_i32_1 = arith.constant 0 : i32
    return %arg0, %c0_i32, %c0_i32_0 : i32, i32, i32
  }
  func.func @transform_1(%arg0: i32) -> (i32, i32, i32) {
    %c0_i32 = arith.constant 0 : i32
    %c0_i32_0 = arith.constant 0 : i32
    %c0_i32_1 = arith.constant 0 : i32
    return %arg0, %c0_i32, %c0_i32_0 : i32, i32, i32
  }
  func.func @transform_2(%arg0: i32) -> (i32, i32, i32) {
    %c0_i32 = arith.constant 0 : i32
    %c0_i32_0 = arith.constant 0 : i32
    %c0_i32_1 = arith.constant 0 : i32
    return %arg0, %c0_i32, %c0_i32_0 : i32, i32, i32
  }
  func.func @transform_3(%arg0: i32) -> (i32, i32, i32) {
    %c0_i32 = arith.constant 0 : i32
    %c0_i32_0 = arith.constant 0 : i32
    %c0_i32_1 = arith.constant 0 : i32
    return %arg0, %c0_i32, %c0_i32_0 : i32, i32, i32
  }
  func.func @transform_4(%arg0: i32) -> (i32, i32) {
    %c0_i32 = arith.constant 0 : i32
    %c0_i32_0 = arith.constant 0 : i32
    %c0_i32_1 = arith.constant 0 : i32
    return %c0_i32, %c0_i32_0 : i32, i32
  }
  func.func @transform_5(%arg0: i32) -> (i32, i32) {
    %c0_i32 = arith.constant 0 : i32
    %c0_i32_0 = arith.constant 0 : i32
    %c0_i32_1 = arith.constant 0 : i32
    return %c0_i32, %c0_i32_0 : i32, i32
  }
  func.func @transform_6(%arg0: i32) -> (i32, i32) {
    %c0_i32 = arith.constant 0 : i32
    %c0_i32_0 = arith.constant 0 : i32
    %c0_i32_1 = arith.constant 0 : i32
    return %c0_i32, %c0_i32_0 : i32, i32
  }
  func.func @transform_7(%arg0: i32) -> (i32, i32) {
    %c0_i32 = arith.constant 0 : i32
    %c0_i32_0 = arith.constant 0 : i32
    %c0_i32_1 = arith.constant 0 : i32
    return %c0_i32, %c0_i32_0 : i32, i32
  }
  func.func @transform_8(%arg0: i32) -> (i32, i32) {
    %c0_i32 = arith.constant 0 : i32
    %c0_i32_0 = arith.constant 0 : i32
    %c0_i32_1 = arith.constant 0 : i32
    return %c0_i32, %c0_i32_0 : i32, i32
  }
  func.func @transform_9(%arg0: i32) -> (i32, i32) {
    %c0_i32 = arith.constant 0 : i32
    %c0_i32_0 = arith.constant 0 : i32
    %c0_i32_1 = arith.constant 0 : i32
    return %c0_i32, %c0_i32_0 : i32, i32
  }
  func.func @transform_10(%arg0: i32) -> (i32, i32) {
    %c0_i32 = arith.constant 0 : i32
    %c0_i32_0 = arith.constant 0 : i32
    %c0_i32_1 = arith.constant 0 : i32
    return %c0_i32, %c0_i32_0 : i32, i32
  }
  func.func @transform_11(%arg0: i32) -> (i32, i32) {
    %c0_i32 = arith.constant 0 : i32
    %c0_i32_0 = arith.constant 0 : i32
    %c0_i32_1 = arith.constant 0 : i32
    return %c0_i32, %c0_i32_0 : i32, i32
  }
  func.func @transform_12(%arg0: i32) -> (i32, i32) {
    %c0_i32 = arith.constant 0 : i32
    %c0_i32_0 = arith.constant 0 : i32
    %c0_i32_1 = arith.constant 0 : i32
    return %c0_i32, %c0_i32_0 : i32, i32
  }
  func.func @transform_13(%arg0: i32) -> (i32, i32, i32) {
    %c0_i32 = arith.constant 0 : i32
    %c0_i32_0 = arith.constant 0 : i32
    %c0_i32_1 = arith.constant 0 : i32
    return %arg0, %c0_i32, %c0_i32_0 : i32, i32, i32
  }
}

module attributes {stable_mosaic.version = 11 : i64} {
  func.func @kernel(%arg0: i32, %arg1: memref<8x256xbf16, #tpu.memory_space<vmem>>, %arg2: memref<8x3xbf16, #tpu.memory_space<vmem>>, %arg3: memref<256x256xbf16, #tpu.memory_space<vmem>>, %arg4: memref<3x256xbf16, #tpu.memory_space<vmem>>, %arg5: memref<1x256xf32, #tpu.memory_space<vmem>>, %arg6: memref<256x512xbf16, #tpu.memory_space<vmem>>, %arg7: memref<1x512xf32, #tpu.memory_space<vmem>>, %arg8: memref<512x1024xbf16, #tpu.memory_space<vmem>>, %arg9: memref<1x1024xf32, #tpu.memory_space<vmem>>, %arg10: memref<1x1024xf32, #tpu.memory_space<vmem>>, %arg11: memref<1x1024xf32, #tpu.memory_space<vmem>>, %arg12: memref<8x1024xbf16, #tpu.memory_space<vmem>>) attributes {dimension_semantics = [#tpu.dimension_semantics<parallel>], iteration_bounds = array<i64: 1>, scalar_prefetch = 0 : i64, scratch_operands = 0 : i64, tpu.core_type = #tpu.core_type<tc>, window_params = [{transform_indices = @transform_0, window_bounds = array<i64: 8, 256>}, {transform_indices = @transform_1, window_bounds = array<i64: 8, 3>}, {pipeline_mode = #tpu.pipeline_mode<synchronous>, transform_indices = @transform_2, window_bounds = array<i64: 256, 256>}, {pipeline_mode = #tpu.pipeline_mode<synchronous>, transform_indices = @transform_3, window_bounds = array<i64: 3, 256>}, {pipeline_mode = #tpu.pipeline_mode<synchronous>, transform_indices = @transform_4, window_bounds = array<i64: 1, 256>}, {pipeline_mode = #tpu.pipeline_mode<synchronous>, transform_indices = @transform_5, window_bounds = array<i64: 256, 512>}, {pipeline_mode = #tpu.pipeline_mode<synchronous>, transform_indices = @transform_6, window_bounds = array<i64: 1, 512>}, {pipeline_mode = #tpu.pipeline_mode<synchronous>, transform_indices = @transform_7, window_bounds = array<i64: 512, 1024>}, {pipeline_mode = #tpu.pipeline_mode<synchronous>, transform_indices = @transform_8, window_bounds = array<i64: 1, 1024>}, {pipeline_mode = #tpu.pipeline_mode<synchronous>, transform_indices = @transform_9, window_bounds = array<i64: 1, 1024>}, {pipeline_mode = #tpu.pipeline_mode<synchronous>, transform_indices = @transform_10, window_bounds = array<i64: 1, 1024>}, {transform_indices = @transform_11, window_bounds = array<i64: 8, 1024>}]} {
    %c0 = arith.constant 0 : index
    %c0_0 = arith.constant 0 : index
    %0 = vector.load %arg1[%c0, %c0_0] : memref<8x256xbf16, #tpu.memory_space<vmem>>, vector<8x256xbf16>
    %c0_1 = arith.constant 0 : index
    %c0_2 = arith.constant 0 : index
    %1 = vector.load %arg3[%c0_1, %c0_2] : memref<256x256xbf16, #tpu.memory_space<vmem>>, vector<256x256xbf16>
    %cst = arith.constant dense<0.000000e+00> : vector<8x256xf32>
    %2 = tpu.matmul %0, %1, %cst {dimension_numbers = #tpu.dot_dimension_numbers<[1], [0], [0], [1], [0, 0, 1, 1], [], []>} : vector<8x256xbf16>, vector<256x256xbf16>, vector<8x256xf32> -> vector<8x256xf32>
    %c0_3 = arith.constant 0 : index
    %c0_4 = arith.constant 0 : index
    %3 = vector.load %arg2[%c0_3, %c0_4] : memref<8x3xbf16, #tpu.memory_space<vmem>>, vector<8x3xbf16>
    %c0_5 = arith.constant 0 : index
    %c0_6 = arith.constant 0 : index
    %4 = vector.load %arg4[%c0_5, %c0_6] : memref<3x256xbf16, #tpu.memory_space<vmem>>, vector<3x256xbf16>
    %cst_7 = arith.constant dense<0.000000e+00> : vector<8x256xf32>
    %5 = tpu.matmul %3, %4, %cst_7 {dimension_numbers = #tpu.dot_dimension_numbers<[1], [0], [0], [1], [0, 0, 1, 1], [], []>} : vector<8x3xbf16>, vector<3x256xbf16>, vector<8x256xf32> -> vector<8x256xf32>
    %6 = arith.addf %2, %5 : vector<8x256xf32>
    %c0_8 = arith.constant 0 : index
    %c0_9 = arith.constant 0 : index
    %7 = vector.load %arg5[%c0_8, %c0_9] : memref<1x256xf32, #tpu.memory_space<vmem>>, vector<1x256xf32>
    %8 = vector.broadcast %7 : vector<1x256xf32> to vector<8x256xf32>
    %9 = arith.addf %6, %8 : vector<8x256xf32>
    %10 = arith.truncf %9 : vector<8x256xf32> to vector<8x256xbf16>
    %cst_10 = arith.constant 0.000000e+00 : bf16
    %11 = vector.broadcast %cst_10 : bf16 to vector<8x256xbf16>
    %12 = arith.maximumf %10, %11 : vector<8x256xbf16>
    %c0_11 = arith.constant 0 : index
    %c0_12 = arith.constant 0 : index
    %13 = vector.load %arg6[%c0_11, %c0_12] : memref<256x512xbf16, #tpu.memory_space<vmem>>, vector<256x512xbf16>
    %cst_13 = arith.constant dense<0.000000e+00> : vector<8x512xf32>
    %14 = tpu.matmul %12, %13, %cst_13 {dimension_numbers = #tpu.dot_dimension_numbers<[1], [0], [0], [1], [0, 0, 1, 1], [], []>} : vector<8x256xbf16>, vector<256x512xbf16>, vector<8x512xf32> -> vector<8x512xf32>
    %c0_14 = arith.constant 0 : index
    %c0_15 = arith.constant 0 : index
    %15 = vector.load %arg7[%c0_14, %c0_15] : memref<1x512xf32, #tpu.memory_space<vmem>>, vector<1x512xf32>
    %16 = vector.broadcast %15 : vector<1x512xf32> to vector<8x512xf32>
    %17 = arith.addf %14, %16 : vector<8x512xf32>
    %18 = arith.truncf %17 : vector<8x512xf32> to vector<8x512xbf16>
    %cst_16 = arith.constant 0.000000e+00 : bf16
    %19 = vector.broadcast %cst_16 : bf16 to vector<8x512xbf16>
    %20 = arith.maximumf %18, %19 : vector<8x512xbf16>
    %c0_17 = arith.constant 0 : index
    %c0_18 = arith.constant 0 : index
    %21 = vector.load %arg8[%c0_17, %c0_18] : memref<512x1024xbf16, #tpu.memory_space<vmem>>, vector<512x1024xbf16>
    %cst_19 = arith.constant dense<0.000000e+00> : vector<8x1024xf32>
    %22 = tpu.matmul %20, %21, %cst_19 {dimension_numbers = #tpu.dot_dimension_numbers<[1], [0], [0], [1], [0, 0, 1, 1], [], []>} : vector<8x512xbf16>, vector<512x1024xbf16>, vector<8x1024xf32> -> vector<8x1024xf32>
    %c0_20 = arith.constant 0 : index
    %c0_21 = arith.constant 0 : index
    %23 = vector.load %arg9[%c0_20, %c0_21] : memref<1x1024xf32, #tpu.memory_space<vmem>>, vector<1x1024xf32>
    %24 = vector.broadcast %23 : vector<1x1024xf32> to vector<8x1024xf32>
    %25 = arith.addf %22, %24 : vector<8x1024xf32>
    %cst_22 = arith.constant 0.000000e+00 : f32
    %26 = vector.broadcast %cst_22 : f32 to vector<8x1024xf32>
    %27 = arith.maximumf %25, %26 : vector<8x1024xf32>
    %c0_23 = arith.constant 0 : index
    %c0_24 = arith.constant 0 : index
    %28 = vector.load %arg10[%c0_23, %c0_24] : memref<1x1024xf32, #tpu.memory_space<vmem>>, vector<1x1024xf32>
    %29 = vector.broadcast %28 : vector<1x1024xf32> to vector<8x1024xf32>
    %30 = arith.mulf %27, %29 : vector<8x1024xf32>
    %c0_25 = arith.constant 0 : index
    %c0_26 = arith.constant 0 : index
    %31 = vector.load %arg11[%c0_25, %c0_26] : memref<1x1024xf32, #tpu.memory_space<vmem>>, vector<1x1024xf32>
    %32 = vector.broadcast %31 : vector<1x1024xf32> to vector<8x1024xf32>
    %33 = arith.addf %30, %32 : vector<8x1024xf32>
    %34 = arith.truncf %33 : vector<8x1024xf32> to vector<8x1024xbf16>
    %c0_27 = arith.constant 0 : index
    %c0_28 = arith.constant 0 : index
    %35 = vector.load %arg12[%c0_27, %c0_28] : memref<8x1024xbf16, #tpu.memory_space<vmem>>, vector<8x1024xbf16>
    tpu.vector_store %arg12[%c0_27, %c0_28], %34 {strides = array<i32>} : memref<8x1024xbf16, #tpu.memory_space<vmem>>, vector<8x1024xbf16>,
    return
  }
  func.func @transform_0(%arg0: i32) -> (i32, i32) {
    %c0_i32 = arith.constant 0 : i32
    %c0_i32_0 = arith.constant 0 : i32
    return %arg0, %c0_i32 : i32, i32
  }
  func.func @transform_1(%arg0: i32) -> (i32, i32) {
    %c0_i32 = arith.constant 0 : i32
    %c0_i32_0 = arith.constant 0 : i32
    return %arg0, %c0_i32 : i32, i32
  }
  func.func @transform_2(%arg0: i32) -> (i32, i32) {
    %c0_i32 = arith.constant 0 : i32
    %c0_i32_0 = arith.constant 0 : i32
    %c0_i32_1 = arith.constant 0 : i32
    return %c0_i32, %c0_i32_0 : i32, i32
  }
  func.func @transform_3(%arg0: i32) -> (i32, i32) {
    %c0_i32 = arith.constant 0 : i32
    %c0_i32_0 = arith.constant 0 : i32
    %c0_i32_1 = arith.constant 0 : i32
    return %c0_i32, %c0_i32_0 : i32, i32
  }
  func.func @transform_4(%arg0: i32) -> (i32, i32) {
    %c0_i32 = arith.constant 0 : i32
    %c0_i32_0 = arith.constant 0 : i32
    %c0_i32_1 = arith.constant 0 : i32
    return %c0_i32, %c0_i32_0 : i32, i32
  }
  func.func @transform_5(%arg0: i32) -> (i32, i32) {
    %c0_i32 = arith.constant 0 : i32
    %c0_i32_0 = arith.constant 0 : i32
    %c0_i32_1 = arith.constant 0 : i32
    return %c0_i32, %c0_i32_0 : i32, i32
  }
  func.func @transform_6(%arg0: i32) -> (i32, i32) {
    %c0_i32 = arith.constant 0 : i32
    %c0_i32_0 = arith.constant 0 : i32
    %c0_i32_1 = arith.constant 0 : i32
    return %c0_i32, %c0_i32_0 : i32, i32
  }
  func.func @transform_7(%arg0: i32) -> (i32, i32) {
    %c0_i32 = arith.constant 0 : i32
    %c0_i32_0 = arith.constant 0 : i32
    %c0_i32_1 = arith.constant 0 : i32
    return %c0_i32, %c0_i32_0 : i32, i32
  }
  func.func @transform_8(%arg0: i32) -> (i32, i32) {
    %c0_i32 = arith.constant 0 : i32
    %c0_i32_0 = arith.constant 0 : i32
    %c0_i32_1 = arith.constant 0 : i32
    return %c0_i32, %c0_i32_0 : i32, i32
  }
  func.func @transform_9(%arg0: i32) -> (i32, i32) {
    %c0_i32 = arith.constant 0 : i32
    %c0_i32_0 = arith.constant 0 : i32
    %c0_i32_1 = arith.constant 0 : i32
    return %c0_i32, %c0_i32_0 : i32, i32
  }
  func.func @transform_10(%arg0: i32) -> (i32, i32) {
    %c0_i32 = arith.constant 0 : i32
    %c0_i32_0 = arith.constant 0 : i32
    %c0_i32_1 = arith.constant 0 : i32
    return %c0_i32, %c0_i32_0 : i32, i32
  }
  func.func @transform_11(%arg0: i32) -> (i32, i32) {
    %c0_i32 = arith.constant 0 : i32
    %c0_i32_0 = arith.constant 0 : i32
    return %arg0, %c0_i32 : i32, i32
  }
}

module attributes {stable_mosaic.version = 11 : i64} {
  func.func @kernel(%arg0: i32, %arg1: memref<8x1024xbf16, #tpu.memory_space<vmem>>, %arg2: memref<8x256xbf16, #tpu.memory_space<vmem>>, %arg3: memref<1024x256xbf16, #tpu.memory_space<vmem>>, %arg4: memref<256x256xbf16, #tpu.memory_space<vmem>>, %arg5: memref<1x256xf32, #tpu.memory_space<vmem>>, %arg6: memref<256x256xbf16, #tpu.memory_space<vmem>>, %arg7: memref<1x256xf32, #tpu.memory_space<vmem>>, %arg8: memref<1x256xf32, #tpu.memory_space<vmem>>, %arg9: memref<1x256xf32, #tpu.memory_space<vmem>>, %arg10: memref<8x256xbf16, #tpu.memory_space<vmem>>) attributes {dimension_semantics = [#tpu.dimension_semantics<parallel>], iteration_bounds = array<i64: 1>, scalar_prefetch = 0 : i64, scratch_operands = 0 : i64, tpu.core_type = #tpu.core_type<tc>, window_params = [{transform_indices = @transform_0, window_bounds = array<i64: 8, 1024>}, {transform_indices = @transform_1, window_bounds = array<i64: 8, 256>}, {pipeline_mode = #tpu.pipeline_mode<synchronous>, transform_indices = @transform_2, window_bounds = array<i64: 1024, 256>}, {pipeline_mode = #tpu.pipeline_mode<synchronous>, transform_indices = @transform_3, window_bounds = array<i64: 256, 256>}, {pipeline_mode = #tpu.pipeline_mode<synchronous>, transform_indices = @transform_4, window_bounds = array<i64: 1, 256>}, {pipeline_mode = #tpu.pipeline_mode<synchronous>, transform_indices = @transform_5, window_bounds = array<i64: 256, 256>}, {pipeline_mode = #tpu.pipeline_mode<synchronous>, transform_indices = @transform_6, window_bounds = array<i64: 1, 256>}, {pipeline_mode = #tpu.pipeline_mode<synchronous>, transform_indices = @transform_7, window_bounds = array<i64: 1, 256>}, {pipeline_mode = #tpu.pipeline_mode<synchronous>, transform_indices = @transform_8, window_bounds = array<i64: 1, 256>}, {transform_indices = @transform_9, window_bounds = array<i64: 8, 256>}]} {
    %c0 = arith.constant 0 : index
    %c0_0 = arith.constant 0 : index
    %0 = vector.load %arg1[%c0, %c0_0] : memref<8x1024xbf16, #tpu.memory_space<vmem>>, vector<8x1024xbf16>
    %c0_1 = arith.constant 0 : index
    %c0_2 = arith.constant 0 : index
    %1 = vector.load %arg3[%c0_1, %c0_2] : memref<1024x256xbf16, #tpu.memory_space<vmem>>, vector<1024x256xbf16>
    %cst = arith.constant dense<0.000000e+00> : vector<8x256xf32>
    %2 = tpu.matmul %0, %1, %cst {dimension_numbers = #tpu.dot_dimension_numbers<[1], [0], [0], [1], [0, 0, 1, 1], [], []>} : vector<8x1024xbf16>, vector<1024x256xbf16>, vector<8x256xf32> -> vector<8x256xf32>
    %c0_3 = arith.constant 0 : index
    %c0_4 = arith.constant 0 : index
    %3 = vector.load %arg2[%c0_3, %c0_4] : memref<8x256xbf16, #tpu.memory_space<vmem>>, vector<8x256xbf16>
    %c0_5 = arith.constant 0 : index
    %c0_6 = arith.constant 0 : index
    %4 = vector.load %arg4[%c0_5, %c0_6] : memref<256x256xbf16, #tpu.memory_space<vmem>>, vector<256x256xbf16>
    %cst_7 = arith.constant dense<0.000000e+00> : vector<8x256xf32>
    %5 = tpu.matmul %3, %4, %cst_7 {dimension_numbers = #tpu.dot_dimension_numbers<[1], [0], [0], [1], [0, 0, 1, 1], [], []>} : vector<8x256xbf16>, vector<256x256xbf16>, vector<8x256xf32> -> vector<8x256xf32>
    %6 = arith.addf %2, %5 : vector<8x256xf32>
    %c0_8 = arith.constant 0 : index
    %c0_9 = arith.constant 0 : index
    %7 = vector.load %arg5[%c0_8, %c0_9] : memref<1x256xf32, #tpu.memory_space<vmem>>, vector<1x256xf32>
    %8 = vector.broadcast %7 : vector<1x256xf32> to vector<8x256xf32>
    %9 = arith.addf %6, %8 : vector<8x256xf32>
    %10 = arith.truncf %9 : vector<8x256xf32> to vector<8x256xbf16>
    %cst_10 = arith.constant 0.000000e+00 : bf16
    %11 = vector.broadcast %cst_10 : bf16 to vector<8x256xbf16>
    %12 = arith.maximumf %10, %11 : vector<8x256xbf16>
    %c0_11 = arith.constant 0 : index
    %c0_12 = arith.constant 0 : index
    %13 = vector.load %arg6[%c0_11, %c0_12] : memref<256x256xbf16, #tpu.memory_space<vmem>>, vector<256x256xbf16>
    %cst_13 = arith.constant dense<0.000000e+00> : vector<8x256xf32>
    %14 = tpu.matmul %12, %13, %cst_13 {dimension_numbers = #tpu.dot_dimension_numbers<[1], [0], [0], [1], [0, 0, 1, 1], [], []>} : vector<8x256xbf16>, vector<256x256xbf16>, vector<8x256xf32> -> vector<8x256xf32>
    %c0_14 = arith.constant 0 : index
    %c0_15 = arith.constant 0 : index
    %15 = vector.load %arg7[%c0_14, %c0_15] : memref<1x256xf32, #tpu.memory_space<vmem>>, vector<1x256xf32>
    %16 = vector.broadcast %15 : vector<1x256xf32> to vector<8x256xf32>
    %17 = arith.addf %14, %16 : vector<8x256xf32>
    %cst_16 = arith.constant 0.000000e+00 : f32
    %18 = vector.broadcast %cst_16 : f32 to vector<8x256xf32>
    %19 = arith.maximumf %17, %18 : vector<8x256xf32>
    %c0_17 = arith.constant 0 : index
    %c0_18 = arith.constant 0 : index
    %20 = vector.load %arg8[%c0_17, %c0_18] : memref<1x256xf32, #tpu.memory_space<vmem>>, vector<1x256xf32>
    %21 = vector.broadcast %20 : vector<1x256xf32> to vector<8x256xf32>
    %22 = arith.mulf %19, %21 : vector<8x256xf32>
    %c0_19 = arith.constant 0 : index
    %c0_20 = arith.constant 0 : index
    %23 = vector.load %arg9[%c0_19, %c0_20] : memref<1x256xf32, #tpu.memory_space<vmem>>, vector<1x256xf32>
    %24 = vector.broadcast %23 : vector<1x256xf32> to vector<8x256xf32>
    %25 = arith.addf %22, %24 : vector<8x256xf32>
    %26 = arith.truncf %25 : vector<8x256xf32> to vector<8x256xbf16>
    %c0_21 = arith.constant 0 : index
    %c0_22 = arith.constant 0 : index
    %27 = vector.load %arg10[%c0_21, %c0_22] : memref<8x256xbf16, #tpu.memory_space<vmem>>, vector<8x256xbf16>
    tpu.vector_store %arg10[%c0_21, %c0_22], %26 {strides = array<i32>} : memref<8x256xbf16, #tpu.memory_space<vmem>>, vector<8x256xbf16>,
    return
  }
  func.func @transform_0(%arg0: i32) -> (i32, i32) {
    %c0_i32 = arith.constant 0 : i32
    %c0_i32_0 = arith.constant 0 : i32
    return %arg0, %c0_i32 : i32, i32
  }
  func.func @transform_1(%arg0: i32) -> (i32, i32) {
    %c0_i32 = arith.constant 0 : i32
    %c0_i32_0 = arith.constant 0 : i32
    return %arg0, %c0_i32 : i32, i32
  }
  func.func @transform_2(%arg0: i32) -> (i32, i32) {
    %c0_i32 = arith.constant 0 : i32
    %c0_i32_0 = arith.constant 0 : i32
    %c0_i32_1 = arith.constant 0 : i32
    return %c0_i32, %c0_i32_0 : i32, i32
  }
  func.func @transform_3(%arg0: i32) -> (i32, i32) {
    %c0_i32 = arith.constant 0 : i32
    %c0_i32_0 = arith.constant 0 : i32
    %c0_i32_1 = arith.constant 0 : i32
    return %c0_i32, %c0_i32_0 : i32, i32
  }
  func.func @transform_4(%arg0: i32) -> (i32, i32) {
    %c0_i32 = arith.constant 0 : i32
    %c0_i32_0 = arith.constant 0 : i32
    %c0_i32_1 = arith.constant 0 : i32
    return %c0_i32, %c0_i32_0 : i32, i32
  }
  func.func @transform_5(%arg0: i32) -> (i32, i32) {
    %c0_i32 = arith.constant 0 : i32
    %c0_i32_0 = arith.constant 0 : i32
    %c0_i32_1 = arith.constant 0 : i32
    return %c0_i32, %c0_i32_0 : i32, i32
  }
  func.func @transform_6(%arg0: i32) -> (i32, i32) {
    %c0_i32 = arith.constant 0 : i32
    %c0_i32_0 = arith.constant 0 : i32
    %c0_i32_1 = arith.constant 0 : i32
    return %c0_i32, %c0_i32_0 : i32, i32
  }
  func.func @transform_7(%arg0: i32) -> (i32, i32) {
    %c0_i32 = arith.constant 0 : i32
    %c0_i32_0 = arith.constant 0 : i32
    %c0_i32_1 = arith.constant 0 : i32
    return %c0_i32, %c0_i32_0 : i32, i32
  }
  func.func @transform_8(%arg0: i32) -> (i32, i32) {
    %c0_i32 = arith.constant 0 : i32
    %c0_i32_0 = arith.constant 0 : i32
    %c0_i32_1 = arith.constant 0 : i32
    return %c0_i32, %c0_i32_0 : i32, i32
  }
  func.func @transform_9(%arg0: i32) -> (i32, i32) {
    %c0_i32 = arith.constant 0 : i32
    %c0_i32_0 = arith.constant 0 : i32
    return %arg0, %c0_i32 : i32, i32
  }
}

module attributes {stable_mosaic.version = 11 : i64} {
  func.func @kernel(%arg0: i32, %arg1: memref<32x256xbf16, #tpu.memory_space<vmem>>, %arg2: memref<32x128xbf16, #tpu.memory_space<vmem>>, %arg3: memref<256x256xbf16, #tpu.memory_space<vmem>>, %arg4: memref<128x256xbf16, #tpu.memory_space<vmem>>, %arg5: memref<1x256xf32, #tpu.memory_space<vmem>>, %arg6: memref<256x128xbf16, #tpu.memory_space<vmem>>, %arg7: memref<1x128xf32, #tpu.memory_space<vmem>>, %arg8: memref<1x128xf32, #tpu.memory_space<vmem>>, %arg9: memref<1x128xf32, #tpu.memory_space<vmem>>, %arg10: memref<32x128xbf16, #tpu.memory_space<vmem>>) attributes {dimension_semantics = [#tpu.dimension_semantics<parallel>], iteration_bounds = array<i64: 1>, scalar_prefetch = 0 : i64, scratch_operands = 0 : i64, tpu.core_type = #tpu.core_type<tc>, window_params = [{transform_indices = @transform_0, window_bounds = array<i64: 32, 256>}, {transform_indices = @transform_1, window_bounds = array<i64: 32, 128>}, {pipeline_mode = #tpu.pipeline_mode<synchronous>, transform_indices = @transform_2, window_bounds = array<i64: 256, 256>}, {pipeline_mode = #tpu.pipeline_mode<synchronous>, transform_indices = @transform_3, window_bounds = array<i64: 128, 256>}, {pipeline_mode = #tpu.pipeline_mode<synchronous>, transform_indices = @transform_4, window_bounds = array<i64: 1, 256>}, {pipeline_mode = #tpu.pipeline_mode<synchronous>, transform_indices = @transform_5, window_bounds = array<i64: 256, 128>}, {pipeline_mode = #tpu.pipeline_mode<synchronous>, transform_indices = @transform_6, window_bounds = array<i64: 1, 128>}, {pipeline_mode = #tpu.pipeline_mode<synchronous>, transform_indices = @transform_7, window_bounds = array<i64: 1, 128>}, {pipeline_mode = #tpu.pipeline_mode<synchronous>, transform_indices = @transform_8, window_bounds = array<i64: 1, 128>}, {transform_indices = @transform_9, window_bounds = array<i64: 32, 128>}]} {
    %c0 = arith.constant 0 : index
    %c0_0 = arith.constant 0 : index
    %0 = vector.load %arg1[%c0, %c0_0] : memref<32x256xbf16, #tpu.memory_space<vmem>>, vector<32x256xbf16>
    %c0_1 = arith.constant 0 : index
    %c0_2 = arith.constant 0 : index
    %1 = vector.load %arg3[%c0_1, %c0_2] : memref<256x256xbf16, #tpu.memory_space<vmem>>, vector<256x256xbf16>
    %cst = arith.constant dense<0.000000e+00> : vector<32x256xf32>
    %2 = tpu.matmul %0, %1, %cst {dimension_numbers = #tpu.dot_dimension_numbers<[1], [0], [0], [1], [0, 0, 1, 1], [], []>} : vector<32x256xbf16>, vector<256x256xbf16>, vector<32x256xf32> -> vector<32x256xf32>
    %c0_3 = arith.constant 0 : index
    %c0_4 = arith.constant 0 : index
    %3 = vector.load %arg2[%c0_3, %c0_4] : memref<32x128xbf16, #tpu.memory_space<vmem>>, vector<32x128xbf16>
    %c0_5 = arith.constant 0 : index
    %c0_6 = arith.constant 0 : index
    %4 = vector.load %arg4[%c0_5, %c0_6] : memref<128x256xbf16, #tpu.memory_space<vmem>>, vector<128x256xbf16>
    %cst_7 = arith.constant dense<0.000000e+00> : vector<32x256xf32>
    %5 = tpu.matmul %3, %4, %cst_7 {dimension_numbers = #tpu.dot_dimension_numbers<[1], [0], [0], [1], [0, 0, 1, 1], [], []>} : vector<32x128xbf16>, vector<128x256xbf16>, vector<32x256xf32> -> vector<32x256xf32>
    %6 = arith.addf %2, %5 : vector<32x256xf32>
    %c0_8 = arith.constant 0 : index
    %c0_9 = arith.constant 0 : index
    %7 = vector.load %arg5[%c0_8, %c0_9] : memref<1x256xf32, #tpu.memory_space<vmem>>, vector<1x256xf32>
    %8 = vector.broadcast %7 : vector<1x256xf32> to vector<32x256xf32>
    %9 = arith.addf %6, %8 : vector<32x256xf32>
    %10 = arith.truncf %9 : vector<32x256xf32> to vector<32x256xbf16>
    %cst_10 = arith.constant 0.000000e+00 : bf16
    %11 = vector.broadcast %cst_10 : bf16 to vector<32x256xbf16>
    %12 = arith.maximumf %10, %11 : vector<32x256xbf16>
    %c0_11 = arith.constant 0 : index
    %c0_12 = arith.constant 0 : index
    %13 = vector.load %arg6[%c0_11, %c0_12] : memref<256x128xbf16, #tpu.memory_space<vmem>>, vector<256x128xbf16>
    %cst_13 = arith.constant dense<0.000000e+00> : vector<32x128xf32>
    %14 = tpu.matmul %12, %13, %cst_13 {dimension_numbers = #tpu.dot_dimension_numbers<[1], [0], [0], [1], [0, 0, 1, 1], [], []>} : vector<32x256xbf16>, vector<256x128xbf16>, vector<32x128xf32> -> vector<32x128xf32>
    %c0_14 = arith.constant 0 : index
    %c0_15 = arith.constant 0 : index
    %15 = vector.load %arg7[%c0_14, %c0_15] : memref<1x128xf32, #tpu.memory_space<vmem>>, vector<1x128xf32>
    %16 = vector.broadcast %15 : vector<1x128xf32> to vector<32x128xf32>
    %17 = arith.addf %14, %16 : vector<32x128xf32>
    %cst_16 = arith.constant 0.000000e+00 : f32
    %18 = vector.broadcast %cst_16 : f32 to vector<32x128xf32>
    %19 = arith.maximumf %17, %18 : vector<32x128xf32>
    %c0_17 = arith.constant 0 : index
    %c0_18 = arith.constant 0 : index
    %20 = vector.load %arg8[%c0_17, %c0_18] : memref<1x128xf32, #tpu.memory_space<vmem>>, vector<1x128xf32>
    %21 = vector.broadcast %20 : vector<1x128xf32> to vector<32x128xf32>
    %22 = arith.mulf %19, %21 : vector<32x128xf32>
    %c0_19 = arith.constant 0 : index
    %c0_20 = arith.constant 0 : index
    %23 = vector.load %arg9[%c0_19, %c0_20] : memref<1x128xf32, #tpu.memory_space<vmem>>, vector<1x128xf32>
    %24 = vector.broadcast %23 : vector<1x128xf32> to vector<32x128xf32>
    %25 = arith.addf %22, %24 : vector<32x128xf32>
    %26 = arith.truncf %25 : vector<32x128xf32> to vector<32x128xbf16>
    %c0_21 = arith.constant 0 : index
    %c0_22 = arith.constant 0 : index
    %27 = vector.load %arg10[%c0_21, %c0_22] : memref<32x128xbf16, #tpu.memory_space<vmem>>, vector<32x128xbf16>
    tpu.vector_store %arg10[%c0_21, %c0_22], %26 {strides = array<i32>} : memref<32x128xbf16, #tpu.memory_space<vmem>>, vector<32x128xbf16>,
    return
  }
  func.func @transform_0(%arg0: i32) -> (i32, i32) {
    %c0_i32 = arith.constant 0 : i32
    %c0_i32_0 = arith.constant 0 : i32
    return %arg0, %c0_i32 : i32, i32
  }
  func.func @transform_1(%arg0: i32) -> (i32, i32) {
    %c0_i32 = arith.constant 0 : i32
    %c0_i32_0 = arith.constant 0 : i32
    return %arg0, %c0_i32 : i32, i32
  }
  func.func @transform_2(%arg0: i32) -> (i32, i32) {
    %c0_i32 = arith.constant 0 : i32
    %c0_i32_0 = arith.constant 0 : i32
    %c0_i32_1 = arith.constant 0 : i32
    return %c0_i32, %c0_i32_0 : i32, i32
  }
  func.func @transform_3(%arg0: i32) -> (i32, i32) {
    %c0_i32 = arith.constant 0 : i32
    %c0_i32_0 = arith.constant 0 : i32
    %c0_i32_1 = arith.constant 0 : i32
    return %c0_i32, %c0_i32_0 : i32, i32
  }
  func.func @transform_4(%arg0: i32) -> (i32, i32) {
    %c0_i32 = arith.constant 0 : i32
    %c0_i32_0 = arith.constant 0 : i32
    %c0_i32_1 = arith.constant 0 : i32
    return %c0_i32, %c0_i32_0 : i32, i32
  }
  func.func @transform_5(%arg0: i32) -> (i32, i32) {
    %c0_i32 = arith.constant 0 : i32
    %c0_i32_0 = arith.constant 0 : i32
    %c0_i32_1 = arith.constant 0 : i32
    return %c0_i32, %c0_i32_0 : i32, i32
  }
  func.func @transform_6(%arg0: i32) -> (i32, i32) {
    %c0_i32 = arith.constant 0 : i32
    %c0_i32_0 = arith.constant 0 : i32
    %c0_i32_1 = arith.constant 0 : i32
    return %c0_i32, %c0_i32_0 : i32, i32
  }
  func.func @transform_7(%arg0: i32) -> (i32, i32) {
    %c0_i32 = arith.constant 0 : i32
    %c0_i32_0 = arith.constant 0 : i32
    %c0_i32_1 = arith.constant 0 : i32
    return %c0_i32, %c0_i32_0 : i32, i32
  }
  func.func @transform_8(%arg0: i32) -> (i32, i32) {
    %c0_i32 = arith.constant 0 : i32
    %c0_i32_0 = arith.constant 0 : i32
    %c0_i32_1 = arith.constant 0 : i32
    return %c0_i32, %c0_i32_0 : i32, i32
  }
  func.func @transform_9(%arg0: i32) -> (i32, i32) {
    %c0_i32 = arith.constant 0 : i32
    %c0_i32_0 = arith.constant 0 : i32
    return %arg0, %c0_i32 : i32, i32
  }
}

module attributes {stable_mosaic.version = 11 : i64} {
  func.func @kernel(%arg0: i32, %arg1: memref<128x128xbf16, #tpu.memory_space<vmem>>, %arg2: memref<128x128xbf16, #tpu.memory_space<vmem>>, %arg3: memref<1x128xf32, #tpu.memory_space<vmem>>, %arg4: memref<128x128xbf16, #tpu.memory_space<vmem>>, %arg5: memref<1x128xf32, #tpu.memory_space<vmem>>, %arg6: memref<128x128xbf16, #tpu.memory_space<vmem>>, %arg7: memref<1x128xf32, #tpu.memory_space<vmem>>, %arg8: memref<128x128xf32, #tpu.memory_space<vmem>>) attributes {dimension_semantics = [#tpu.dimension_semantics<parallel>], iteration_bounds = array<i64: 1>, scalar_prefetch = 0 : i64, scratch_operands = 0 : i64, tpu.core_type = #tpu.core_type<tc>, window_params = [{transform_indices = @transform_0, window_bounds = array<i64: 128, 128>}, {pipeline_mode = #tpu.pipeline_mode<synchronous>, transform_indices = @transform_1, window_bounds = array<i64: 128, 128>}, {pipeline_mode = #tpu.pipeline_mode<synchronous>, transform_indices = @transform_2, window_bounds = array<i64: 1, 128>}, {pipeline_mode = #tpu.pipeline_mode<synchronous>, transform_indices = @transform_3, window_bounds = array<i64: 128, 128>}, {pipeline_mode = #tpu.pipeline_mode<synchronous>, transform_indices = @transform_4, window_bounds = array<i64: 1, 128>}, {pipeline_mode = #tpu.pipeline_mode<synchronous>, transform_indices = @transform_5, window_bounds = array<i64: 128, 128>}, {pipeline_mode = #tpu.pipeline_mode<synchronous>, transform_indices = @transform_6, window_bounds = array<i64: 1, 128>}, {transform_indices = @transform_7, window_bounds = array<i64: 128, 128>}]} {
    %c0 = arith.constant 0 : index
    %c0_0 = arith.constant 0 : index
    %0 = vector.load %arg1[%c0, %c0_0] : memref<128x128xbf16, #tpu.memory_space<vmem>>, vector<128x128xbf16>
    %c0_1 = arith.constant 0 : index
    %c0_2 = arith.constant 0 : index
    %1 = vector.load %arg2[%c0_1, %c0_2] : memref<128x128xbf16, #tpu.memory_space<vmem>>, vector<128x128xbf16>
    %cst = arith.constant dense<0.000000e+00> : vector<128x128xf32>
    %2 = tpu.matmul %0, %1, %cst {dimension_numbers = #tpu.dot_dimension_numbers<[1], [0], [0], [1], [0, 0, 1, 1], [], []>} : vector<128x128xbf16>, vector<128x128xbf16>, vector<128x128xf32> -> vector<128x128xf32>
    %c0_3 = arith.constant 0 : index
    %c0_4 = arith.constant 0 : index
    %3 = vector.load %arg3[%c0_3, %c0_4] : memref<1x128xf32, #tpu.memory_space<vmem>>, vector<1x128xf32>
    %4 = vector.broadcast %3 : vector<1x128xf32> to vector<128x128xf32>
    %5 = arith.addf %2, %4 : vector<128x128xf32>
    %6 = arith.truncf %5 : vector<128x128xf32> to vector<128x128xbf16>
    %cst_5 = arith.constant 0.000000e+00 : bf16
    %7 = vector.broadcast %cst_5 : bf16 to vector<128x128xbf16>
    %8 = arith.maximumf %6, %7 : vector<128x128xbf16>
    %c0_6 = arith.constant 0 : index
    %c0_7 = arith.constant 0 : index
    %9 = vector.load %arg4[%c0_6, %c0_7] : memref<128x128xbf16, #tpu.memory_space<vmem>>, vector<128x128xbf16>
    %cst_8 = arith.constant dense<0.000000e+00> : vector<128x128xf32>
    %10 = tpu.matmul %8, %9, %cst_8 {dimension_numbers = #tpu.dot_dimension_numbers<[1], [0], [0], [1], [0, 0, 1, 1], [], []>} : vector<128x128xbf16>, vector<128x128xbf16>, vector<128x128xf32> -> vector<128x128xf32>
    %c0_9 = arith.constant 0 : index
    %c0_10 = arith.constant 0 : index
    %11 = vector.load %arg5[%c0_9, %c0_10] : memref<1x128xf32, #tpu.memory_space<vmem>>, vector<1x128xf32>
    %12 = vector.broadcast %11 : vector<1x128xf32> to vector<128x128xf32>
    %13 = arith.addf %10, %12 : vector<128x128xf32>
    %14 = arith.truncf %13 : vector<128x128xf32> to vector<128x128xbf16>
    %c0_11 = arith.constant 0 : index
    %c0_12 = arith.constant 0 : index
    %15 = vector.load %arg6[%c0_11, %c0_12] : memref<128x128xbf16, #tpu.memory_space<vmem>>, vector<128x128xbf16>
    %cst_13 = arith.constant dense<0.000000e+00> : vector<128x128xf32>
    %16 = tpu.matmul %14, %15, %cst_13 {dimension_numbers = #tpu.dot_dimension_numbers<[1], [0], [0], [1], [0, 0, 1, 1], [], []>} : vector<128x128xbf16>, vector<128x128xbf16>, vector<128x128xf32> -> vector<128x128xf32>
    %c0_14 = arith.constant 0 : index
    %c0_15 = arith.constant 0 : index
    %17 = vector.load %arg7[%c0_14, %c0_15] : memref<1x128xf32, #tpu.memory_space<vmem>>, vector<1x128xf32>
    %18 = vector.broadcast %17 : vector<1x128xf32> to vector<128x128xf32>
    %19 = arith.addf %16, %18 : vector<128x128xf32>
    %20 = tpu.iota {dimensions = array<i32: 1>} : vector<128x128xi32>
    %c10_i32 = arith.constant 10 : i32
    %21 = vector.broadcast %c10_i32 : i32 to vector<128x128xi32>
    %22 = arith.cmpi slt, %20, %21 : vector<128x128xi32>
    %cst_16 = arith.constant -1.000000e+30 : f32
    %23 = vector.broadcast %cst_16 : f32 to vector<128x128xf32>
    %24 = arith.select %22, %19, %23 : vector<128x128xi1>, vector<128x128xf32>
    %cst_17 = arith.constant dense<0xFF800000> : vector<128xf32>
    %25 = vector.multi_reduction <maximumf>, %24, %cst_17 [1] : vector<128x128xf32> to vector<128xf32>
    %26 = vector.shape_cast %25 : vector<128xf32> to vector<128x1xf32>
    %27 = vector.broadcast %26 : vector<128x1xf32> to vector<128x128xf32>
    %28 = arith.subf %19, %27 : vector<128x128xf32>
    %29 = math.exp %28 : vector<128x128xf32>
    %cst_18 = arith.constant 0.000000e+00 : f32
    %30 = vector.broadcast %cst_18 : f32 to vector<128x128xf32>
    %31 = arith.select %22, %29, %30 : vector<128x128xi1>, vector<128x128xf32>
    %32 = vector.broadcast %26 : vector<128x1xf32> to vector<128x128xf32>
    %33 = arith.subf %19, %32 : vector<128x128xf32>
    %cst_19 = arith.constant dense<0.000000e+00> : vector<128xf32>
    %34 = vector.multi_reduction <add>, %31, %cst_19 [1] : vector<128x128xf32> to vector<128xf32>
    %35 = vector.shape_cast %34 : vector<128xf32> to vector<128x1xf32>
    %36 = math.log %35 : vector<128x1xf32>
    %37 = vector.broadcast %36 : vector<128x1xf32> to vector<128x128xf32>
    %38 = arith.subf %33, %37 : vector<128x128xf32>
    %c0_20 = arith.constant 0 : index
    %c0_21 = arith.constant 0 : index
    %39 = vector.load %arg8[%c0_20, %c0_21] : memref<128x128xf32, #tpu.memory_space<vmem>>, vector<128x128xf32>
    tpu.vector_store %arg8[%c0_20, %c0_21], %38 {strides = array<i32>} : memref<128x128xf32, #tpu.memory_space<vmem>>, vector<128x128xf32>,
    return
  }
  func.func @transform_0(%arg0: i32) -> (i32, i32) {
    %c0_i32 = arith.constant 0 : i32
    %c0_i32_0 = arith.constant 0 : i32
    return %arg0, %c0_i32 : i32, i32
  }
  func.func @transform_1(%arg0: i32) -> (i32, i32) {
    %c0_i32 = arith.constant 0 : i32
    %c0_i32_0 = arith.constant 0 : i32
    %c0_i32_1 = arith.constant 0 : i32
    return %c0_i32, %c0_i32_0 : i32, i32
  }
  func.func @transform_2(%arg0: i32) -> (i32, i32) {
    %c0_i32 = arith.constant 0 : i32
    %c0_i32_0 = arith.constant 0 : i32
    %c0_i32_1 = arith.constant 0 : i32
    return %c0_i32, %c0_i32_0 : i32, i32
  }
  func.func @transform_3(%arg0: i32) -> (i32, i32) {
    %c0_i32 = arith.constant 0 : i32
    %c0_i32_0 = arith.constant 0 : i32
    %c0_i32_1 = arith.constant 0 : i32
    return %c0_i32, %c0_i32_0 : i32, i32
  }
  func.func @transform_4(%arg0: i32) -> (i32, i32) {
    %c0_i32 = arith.constant 0 : i32
    %c0_i32_0 = arith.constant 0 : i32
    %c0_i32_1 = arith.constant 0 : i32
    return %c0_i32, %c0_i32_0 : i32, i32
  }
  func.func @transform_5(%arg0: i32) -> (i32, i32) {
    %c0_i32 = arith.constant 0 : i32
    %c0_i32_0 = arith.constant 0 : i32
    %c0_i32_1 = arith.constant 0 : i32
    return %c0_i32, %c0_i32_0 : i32, i32
  }
  func.func @transform_6(%arg0: i32) -> (i32, i32) {
    %c0_i32 = arith.constant 0 : i32
    %c0_i32_0 = arith.constant 0 : i32
    %c0_i32_1 = arith.constant 0 : i32
    return %c0_i32, %c0_i32_0 : i32, i32
  }
  func.func @transform_7(%arg0: i32) -> (i32, i32) {
    %c0_i32 = arith.constant 0 : i32
    %c0_i32_0 = arith.constant 0 : i32
    return %arg0, %c0_i32 : i32, i32
  }
}

module attributes {stable_mosaic.version = 11 : i64} {
  func.func @kernel(%arg0: i32, %arg1: memref<128x128xbf16, #tpu.memory_space<vmem>>, %arg2: memref<128x25xbf16, #tpu.memory_space<vmem>>, %arg3: memref<128x128xbf16, #tpu.memory_space<vmem>>, %arg4: memref<25x128xbf16, #tpu.memory_space<vmem>>, %arg5: memref<1x128xf32, #tpu.memory_space<vmem>>, %arg6: memref<128x128xbf16, #tpu.memory_space<vmem>>, %arg7: memref<1x128xf32, #tpu.memory_space<vmem>>, %arg8: memref<128x128xbf16, #tpu.memory_space<vmem>>, %arg9: memref<1x128xf32, #tpu.memory_space<vmem>>, %arg10: memref<1x128xf32, #tpu.memory_space<vmem>>, %arg11: memref<1x128xf32, #tpu.memory_space<vmem>>, %arg12: memref<128x128xbf16, #tpu.memory_space<vmem>>) attributes {dimension_semantics = [#tpu.dimension_semantics<parallel>], iteration_bounds = array<i64: 1>, scalar_prefetch = 0 : i64, scratch_operands = 0 : i64, tpu.core_type = #tpu.core_type<tc>, window_params = [{transform_indices = @transform_0, window_bounds = array<i64: 128, 128>}, {transform_indices = @transform_1, window_bounds = array<i64: 128, 25>}, {pipeline_mode = #tpu.pipeline_mode<synchronous>, transform_indices = @transform_2, window_bounds = array<i64: 128, 128>}, {pipeline_mode = #tpu.pipeline_mode<synchronous>, transform_indices = @transform_3, window_bounds = array<i64: 25, 128>}, {pipeline_mode = #tpu.pipeline_mode<synchronous>, transform_indices = @transform_4, window_bounds = array<i64: 1, 128>}, {pipeline_mode = #tpu.pipeline_mode<synchronous>, transform_indices = @transform_5, window_bounds = array<i64: 128, 128>}, {pipeline_mode = #tpu.pipeline_mode<synchronous>, transform_indices = @transform_6, window_bounds = array<i64: 1, 128>}, {pipeline_mode = #tpu.pipeline_mode<synchronous>, transform_indices = @transform_7, window_bounds = array<i64: 128, 128>}, {pipeline_mode = #tpu.pipeline_mode<synchronous>, transform_indices = @transform_8, window_bounds = array<i64: 1, 128>}, {pipeline_mode = #tpu.pipeline_mode<synchronous>, transform_indices = @transform_9, window_bounds = array<i64: 1, 128>}, {pipeline_mode = #tpu.pipeline_mode<synchronous>, transform_indices = @transform_10, window_bounds = array<i64: 1, 128>}, {transform_indices = @transform_11, window_bounds = array<i64: 128, 128>}]} {
    %c0 = arith.constant 0 : index
    %c0_0 = arith.constant 0 : index
    %0 = vector.load %arg1[%c0, %c0_0] : memref<128x128xbf16, #tpu.memory_space<vmem>>, vector<128x128xbf16>
    %c0_1 = arith.constant 0 : index
    %c0_2 = arith.constant 0 : index
    %1 = vector.load %arg3[%c0_1, %c0_2] : memref<128x128xbf16, #tpu.memory_space<vmem>>, vector<128x128xbf16>
    %cst = arith.constant dense<0.000000e+00> : vector<128x128xf32>
    %2 = tpu.matmul %0, %1, %cst {dimension_numbers = #tpu.dot_dimension_numbers<[1], [0], [0], [1], [0, 0, 1, 1], [], []>} : vector<128x128xbf16>, vector<128x128xbf16>, vector<128x128xf32> -> vector<128x128xf32>
    %c0_3 = arith.constant 0 : index
    %c0_4 = arith.constant 0 : index
    %3 = vector.load %arg2[%c0_3, %c0_4] : memref<128x25xbf16, #tpu.memory_space<vmem>>, vector<128x25xbf16>
    %c0_5 = arith.constant 0 : index
    %c0_6 = arith.constant 0 : index
    %4 = vector.load %arg4[%c0_5, %c0_6] : memref<25x128xbf16, #tpu.memory_space<vmem>>, vector<25x128xbf16>
    %cst_7 = arith.constant dense<0.000000e+00> : vector<128x128xf32>
    %5 = tpu.matmul %3, %4, %cst_7 {dimension_numbers = #tpu.dot_dimension_numbers<[1], [0], [0], [1], [0, 0, 1, 1], [], []>} : vector<128x25xbf16>, vector<25x128xbf16>, vector<128x128xf32> -> vector<128x128xf32>
    %6 = arith.addf %2, %5 : vector<128x128xf32>
    %c0_8 = arith.constant 0 : index
    %c0_9 = arith.constant 0 : index
    %7 = vector.load %arg5[%c0_8, %c0_9] : memref<1x128xf32, #tpu.memory_space<vmem>>, vector<1x128xf32>
    %8 = vector.broadcast %7 : vector<1x128xf32> to vector<128x128xf32>
    %9 = arith.addf %6, %8 : vector<128x128xf32>
    %10 = arith.truncf %9 : vector<128x128xf32> to vector<128x128xbf16>
    %cst_10 = arith.constant 0.000000e+00 : bf16
    %11 = vector.broadcast %cst_10 : bf16 to vector<128x128xbf16>
    %12 = arith.maximumf %10, %11 : vector<128x128xbf16>
    %c0_11 = arith.constant 0 : index
    %c0_12 = arith.constant 0 : index
    %13 = vector.load %arg6[%c0_11, %c0_12] : memref<128x128xbf16, #tpu.memory_space<vmem>>, vector<128x128xbf16>
    %cst_13 = arith.constant dense<0.000000e+00> : vector<128x128xf32>
    %14 = tpu.matmul %12, %13, %cst_13 {dimension_numbers = #tpu.dot_dimension_numbers<[1], [0], [0], [1], [0, 0, 1, 1], [], []>} : vector<128x128xbf16>, vector<128x128xbf16>, vector<128x128xf32> -> vector<128x128xf32>
    %c0_14 = arith.constant 0 : index
    %c0_15 = arith.constant 0 : index
    %15 = vector.load %arg7[%c0_14, %c0_15] : memref<1x128xf32, #tpu.memory_space<vmem>>, vector<1x128xf32>
    %16 = vector.broadcast %15 : vector<1x128xf32> to vector<128x128xf32>
    %17 = arith.addf %14, %16 : vector<128x128xf32>
    %18 = arith.truncf %17 : vector<128x128xf32> to vector<128x128xbf16>
    %cst_16 = arith.constant 0.000000e+00 : bf16
    %19 = vector.broadcast %cst_16 : bf16 to vector<128x128xbf16>
    %20 = arith.maximumf %18, %19 : vector<128x128xbf16>
    %c0_17 = arith.constant 0 : index
    %c0_18 = arith.constant 0 : index
    %21 = vector.load %arg8[%c0_17, %c0_18] : memref<128x128xbf16, #tpu.memory_space<vmem>>, vector<128x128xbf16>
    %cst_19 = arith.constant dense<0.000000e+00> : vector<128x128xf32>
    %22 = tpu.matmul %20, %21, %cst_19 {dimension_numbers = #tpu.dot_dimension_numbers<[1], [0], [0], [1], [0, 0, 1, 1], [], []>} : vector<128x128xbf16>, vector<128x128xbf16>, vector<128x128xf32> -> vector<128x128xf32>
    %c0_20 = arith.constant 0 : index
    %c0_21 = arith.constant 0 : index
    %23 = vector.load %arg9[%c0_20, %c0_21] : memref<1x128xf32, #tpu.memory_space<vmem>>, vector<1x128xf32>
    %24 = vector.broadcast %23 : vector<1x128xf32> to vector<128x128xf32>
    %25 = arith.addf %22, %24 : vector<128x128xf32>
    %cst_22 = arith.constant 0.000000e+00 : f32
    %26 = vector.broadcast %cst_22 : f32 to vector<128x128xf32>
    %27 = arith.maximumf %25, %26 : vector<128x128xf32>
    %c0_23 = arith.constant 0 : index
    %c0_24 = arith.constant 0 : index
    %28 = vector.load %arg10[%c0_23, %c0_24] : memref<1x128xf32, #tpu.memory_space<vmem>>, vector<1x128xf32>
    %29 = vector.broadcast %28 : vector<1x128xf32> to vector<128x128xf32>
    %30 = arith.mulf %27, %29 : vector<128x128xf32>
    %c0_25 = arith.constant 0 : index
    %c0_26 = arith.constant 0 : index
    %31 = vector.load %arg11[%c0_25, %c0_26] : memref<1x128xf32, #tpu.memory_space<vmem>>, vector<1x128xf32>
    %32 = vector.broadcast %31 : vector<1x128xf32> to vector<128x128xf32>
    %33 = arith.addf %30, %32 : vector<128x128xf32>
    %34 = arith.truncf %33 : vector<128x128xf32> to vector<128x128xbf16>
    %c0_27 = arith.constant 0 : index
    %c0_28 = arith.constant 0 : index
    %35 = vector.load %arg12[%c0_27, %c0_28] : memref<128x128xbf16, #tpu.memory_space<vmem>>, vector<128x128xbf16>
    tpu.vector_store %arg12[%c0_27, %c0_28], %34 {strides = array<i32>} : memref<128x128xbf16, #tpu.memory_space<vmem>>, vector<128x128xbf16>,
    return
  }
  func.func @transform_0(%arg0: i32) -> (i32, i32) {
    %c0_i32 = arith.constant 0 : i32
    %c0_i32_0 = arith.constant 0 : i32
    return %arg0, %c0_i32 : i32, i32
  }
  func.func @transform_1(%arg0: i32) -> (i32, i32) {
    %c0_i32 = arith.constant 0 : i32
    %c0_i32_0 = arith.constant 0 : i32
    return %arg0, %c0_i32 : i32, i32
  }
  func.func @transform_2(%arg0: i32) -> (i32, i32) {
    %c0_i32 = arith.constant 0 : i32
    %c0_i32_0 = arith.constant 0 : i32
    %c0_i32_1 = arith.constant 0 : i32
    return %c0_i32, %c0_i32_0 : i32, i32
  }
  func.func @transform_3(%arg0: i32) -> (i32, i32) {
    %c0_i32 = arith.constant 0 : i32
    %c0_i32_0 = arith.constant 0 : i32
    %c0_i32_1 = arith.constant 0 : i32
    return %c0_i32, %c0_i32_0 : i32, i32
  }
  func.func @transform_4(%arg0: i32) -> (i32, i32) {
    %c0_i32 = arith.constant 0 : i32
    %c0_i32_0 = arith.constant 0 : i32
    %c0_i32_1 = arith.constant 0 : i32
    return %c0_i32, %c0_i32_0 : i32, i32
  }
  func.func @transform_5(%arg0: i32) -> (i32, i32) {
    %c0_i32 = arith.constant 0 : i32
    %c0_i32_0 = arith.constant 0 : i32
    %c0_i32_1 = arith.constant 0 : i32
    return %c0_i32, %c0_i32_0 : i32, i32
  }
  func.func @transform_6(%arg0: i32) -> (i32, i32) {
    %c0_i32 = arith.constant 0 : i32
    %c0_i32_0 = arith.constant 0 : i32
    %c0_i32_1 = arith.constant 0 : i32
    return %c0_i32, %c0_i32_0 : i32, i32
  }
  func.func @transform_7(%arg0: i32) -> (i32, i32) {
    %c0_i32 = arith.constant 0 : i32
    %c0_i32_0 = arith.constant 0 : i32
    %c0_i32_1 = arith.constant 0 : i32
    return %c0_i32, %c0_i32_0 : i32, i32
  }
  func.func @transform_8(%arg0: i32) -> (i32, i32) {
    %c0_i32 = arith.constant 0 : i32
    %c0_i32_0 = arith.constant 0 : i32
    %c0_i32_1 = arith.constant 0 : i32
    return %c0_i32, %c0_i32_0 : i32, i32
  }
  func.func @transform_9(%arg0: i32) -> (i32, i32) {
    %c0_i32 = arith.constant 0 : i32
    %c0_i32_0 = arith.constant 0 : i32
    %c0_i32_1 = arith.constant 0 : i32
    return %c0_i32, %c0_i32_0 : i32, i32
  }
  func.func @transform_10(%arg0: i32) -> (i32, i32) {
    %c0_i32 = arith.constant 0 : i32
    %c0_i32_0 = arith.constant 0 : i32
    %c0_i32_1 = arith.constant 0 : i32
    return %c0_i32, %c0_i32_0 : i32, i32
  }
  func.func @transform_11(%arg0: i32) -> (i32, i32) {
    %c0_i32 = arith.constant 0 : i32
    %c0_i32_0 = arith.constant 0 : i32
    return %arg0, %c0_i32 : i32, i32
  }
}

</mosaic_0001>

<llo_original>
// kernel: custom-call.14
$region0: #{custom-call.14}
  %s0 = inlined_call_operand.vmem [shape: f32[2,64], index: 0, kind: output, shape index: {}]

// kernel: custom-call.15
$region0: #{custom-call.15}
  %s0 = inlined_call_operand.vmem [shape: f32[2,13], index: 0, kind: output, shape index: {}]

// kernel: _forward.8
$region0: #{_forward.8}
  #allocation0 [shape = 'u32[]', space=smem, size = 0x4, offset = 0x4, fixed_abs, tag = 'smem constant byte address 0x4 - core index']
  #allocation1 [shape = 'u32[72,128]{1,0:T(1,128)}', space=vmem, size = 0x9000, scoped, tag = 'internal scratch']
  %s0 = inlined_call_operand.vmem [shape: bf16[2,16,128], index: 0, kind: input, shape index: {}]
  %s1 = inlined_call_operand.vmem [shape: f32[2,16,3], index: 1, kind: input, shape index: {}]
  %s2 = inlined_call_operand.vmem [shape: f32[2,4,3], index: 2, kind: input, shape index: {}]
  %s3 = inlined_call_operand.vmem [shape: f32[2,4,16], index: 3, kind: input, shape index: {}]
  %s4 = inlined_call_operand.vmem [shape: bf16[128,128], index: 4, kind: input, shape index: {}]
  %s5 = inlined_call_operand.vmem [shape: f32[3,128], index: 5, kind: input, shape index: {}]
  %s6 = inlined_call_operand.vmem [shape: f32[1,128], index: 6, kind: input, shape index: {}]
  %s7 = inlined_call_operand.vmem [shape: bf16[128,128], index: 7, kind: input, shape index: {}]
  %s8 = inlined_call_operand.vmem [shape: f32[1,128], index: 8, kind: input, shape index: {}]
  %s9 = inlined_call_operand.vmem [shape: bf16[128,256], index: 9, kind: input, shape index: {}]
  %s10 = inlined_call_operand.vmem [shape: f32[1,256], index: 10, kind: input, shape index: {}]
  %s11 = inlined_call_operand.vmem [shape: f32[1,256], index: 11, kind: input, shape index: {}]
  %s12 = inlined_call_operand.vmem [shape: f32[1,256], index: 12, kind: input, shape index: {}]
  %s13 = inlined_call_operand.vmem [shape: bf16[2,4,256], index: 13, kind: output, shape index: {}]
  %s14 = sld [smem:[#allocation0]]
  $region85: #{_forward.8} parent=0
    _
  %s16 = ssub.s32 1, %s14
  %s17 = scalar_select 0, %s16, %s14
  loop: start=0, step=1, limit=4
  $region2: #{_forward.8} parent=0 // loop_pre_header
    _
  $region3: #{_forward.8} parent=0 // loop_header
    %s19 = sphi 0, %s23
    %p20 = scmp.ge.s32.totalorder %s19, 4
    %s29 = sphi 0, %s31
    %s32 = sphi 0, %s29
    %s33 = sphi 0, %s32
    %s49 = sphi 0, %s33
    %s55 = sphi 0, %s57
    %s58 = sphi 0, %s55
    %s59 = sphi 0, %s58
    %s75 = sphi 0, %s59
    %s81 = sphi 0, %s83
    %s84 = sphi 0, %s81
    %s85 = sphi 0, %s84
    %s101 = sphi 0, %s85
    %s107 = sphi 0, %s109
    %s110 = sphi 0, %s107
    %s111 = sphi 0, %s110
    %s127 = sphi 0, %s111
    %s131 = sphi 0, %s131
    %s133 = sphi 0, %s131
    %s134 = sphi 0, %s133
    %s148 = sphi 0, %s134
    %s152 = sphi 0, %s152
    %s154 = sphi 0, %s152
    %s155 = sphi 0, %s154
    %s169 = sphi 0, %s155
    %s173 = sphi 0, %s173
    %s175 = sphi 0, %s173
    %s176 = sphi 0, %s175
    %s190 = sphi 0, %s176
    %s194 = sphi 0, %s194
    %s196 = sphi 0, %s194
    %s197 = sphi 0, %s196
    %s211 = sphi 0, %s197
    %s215 = sphi 0, %s215
    %s217 = sphi 0, %s215
    %s218 = sphi 0, %s217
    %s232 = sphi 0, %s218
    %s236 = sphi 0, %s236
    %s238 = sphi 0, %s236
    %s239 = sphi 0, %s238
    %s253 = sphi 0, %s239
    %s257 = sphi 0, %s257
    %s259 = sphi 0, %s257
    %s260 = sphi 0, %s259
    %s274 = sphi 0, %s260
    %s278 = sphi 0, %s278
    %s280 = sphi 0, %s278
    %s281 = sphi 0, %s280
    %s295 = sphi 0, %s281
    %s299 = sphi 0, %s299
    %s301 = sphi 0, %s299
    %s302 = sphi 0, %s301
    %s316 = sphi 0, %s302
    %s322 = sphi 0, %s324
    %s325 = sphi 0, %s322
    %s326 = sphi 0, %s325
    %s342 = sphi 0, %s326
  $region4: #{_forward.8} parent=0 // loop_header_branch
    %22 = sbr.rel (%p20) target = $region8
  $region5: #{_forward.8} parent=0 // loop_body
    %s24 = ssub.s32 %s19, 1
    %s25 = ssub.s32 %s19, 2
    %s26 = sadd.s32 %s19, 1
    %s27 = ssub.s32 %s19, %s26
    %p28 = scmp.eq.s32.totalorder %s27, 0
    %s30 = sadd.s32 %s29, 1
    %s31 = scalar_select %p28, %s29, %s30
    %p34 = pneg %p28
    %p35 = scmp.eq.s32.totalorder %s19, 1
    %p36 = por %p34, %p35
    %p37 = scmp.ne.s32.totalorder %s29, %s32
    %p38 = scmp.eq.s32.totalorder %s19, 0
    %p39 = por %p37, %p38
    %p40 = scmp.ne.s32.totalorder %s29, %s32
    %p41 = scmp.eq.s32.totalorder %s24, 1
    %p42 = por %p40, %p41
    %p43 = scmp.ne.s32.totalorder %s32, %s33
    %p44 = scmp.eq.s32.totalorder %s24, 0
    %p45 = por %p43, %p44
    %p46 = scmp.ne.s32.totalorder %s32, %s33
    %p47 = scmp.eq.s32.totalorder %s25, 1
    %p48 = por %p46, %p47
    %p50 = scmp.ne.s32.totalorder %s33, %s49
    %p51 = scmp.eq.s32.totalorder %s25, 0
    %p52 = por %p50, %p51
    %s53 = ssub.s32 %s19, %s26
    %p54 = scmp.eq.s32.totalorder %s53, 0
    %s56 = sadd.s32 %s55, 1
    %s57 = scalar_select %p54, %s55, %s56
    %p60 = pneg %p54
    %p61 = scmp.eq.s32.totalorder %s19, 1
    %p62 = por %p60, %p61
    %p63 = scmp.ne.s32.totalorder %s55, %s58
    %p64 = scmp.eq.s32.totalorder %s19, 0
    %p65 = por %p63, %p64
    %p66 = scmp.ne.s32.totalorder %s55, %s58
    %p67 = scmp.eq.s32.totalorder %s24, 1
    %p68 = por %p66, %p67
    %p69 = scmp.ne.s32.totalorder %s58, %s59
    %p70 = scmp.eq.s32.totalorder %s24, 0
    %p71 = por %p69, %p70
    %p72 = scmp.ne.s32.totalorder %s58, %s59
    %p73 = scmp.eq.s32.totalorder %s25, 1
    %p74 = por %p72, %p73
    %p76 = scmp.ne.s32.totalorder %s59, %s75
    %p77 = scmp.eq.s32.totalorder %s25, 0
    %p78 = por %p76, %p77
    %s79 = ssub.s32 %s19, %s26
    %p80 = scmp.eq.s32.totalorder %s79, 0
    %s82 = sadd.s32 %s81, 1
    %s83 = scalar_select %p80, %s81, %s82
    %p86 = pneg %p80
    %p87 = scmp.eq.s32.totalorder %s19, 1
    %p88 = por %p86, %p87
    %p89 = scmp.ne.s32.totalorder %s81, %s84
    %p90 = scmp.eq.s32.totalorder %s19, 0
    %p91 = por %p89, %p90
    %p92 = scmp.ne.s32.totalorder %s81, %s84
    %p93 = scmp.eq.s32.totalorder %s24, 1
    %p94 = por %p92, %p93
    %p95 = scmp.ne.s32.totalorder %s84, %s85
    %p96 = scmp.eq.s32.totalorder %s24, 0
    %p97 = por %p95, %p96
    %p98 = scmp.ne.s32.totalorder %s84, %s85
    %p99 = scmp.eq.s32.totalorder %s25, 1
    %p100 = por %p98, %p99
    %p102 = scmp.ne.s32.totalorder %s85, %s101
    %p103 = scmp.eq.s32.totalorder %s25, 0
    %p104 = por %p102, %p103
    %s105 = ssub.s32 %s19, %s26
    %p106 = scmp.eq.s32.totalorder %s105, 0
    %s108 = sadd.s32 %s107, 1
    %s109 = scalar_select %p106, %s107, %s108
    %p112 = pneg %p106
    %p113 = scmp.eq.s32.totalorder %s19, 1
    %p114 = por %p112, %p113
    %p115 = scmp.ne.s32.totalorder %s107, %s110
    %p116 = scmp.eq.s32.totalorder %s19, 0
    %p117 = por %p115, %p116
    %p118 = scmp.ne.s32.totalorder %s107, %s110
    %p119 = scmp.eq.s32.totalorder %s24, 1
    %p120 = por %p118, %p119
    %p121 = scmp.ne.s32.totalorder %s110, %s111
    %p122 = scmp.eq.s32.totalorder %s24, 0
    %p123 = por %p121, %p122
    %p124 = scmp.ne.s32.totalorder %s110, %s111
    %p125 = scmp.eq.s32.totalorder %s25, 1
    %p126 = por %p124, %p125
    %p128 = scmp.ne.s32.totalorder %s111, %s127
    %p129 = scmp.eq.s32.totalorder %s25, 0
    %p130 = por %p128, %p129
    %s132 = sadd.s32 %s131, 1
    %p135 = scmp.eq.s32.totalorder %s19, 1
    %p136 = scmp.ne.s32.totalorder %s131, %s133
    %p137 = scmp.eq.s32.totalorder %s19, 0
    %p138 = por %p136, %p137
    %p139 = scmp.ne.s32.totalorder %s131, %s133
    %p140 = scmp.eq.s32.totalorder %s24, 1
    %p141 = por %p139, %p140
    %p142 = scmp.ne.s32.totalorder %s133, %s134
    %p143 = scmp.eq.s32.totalorder %s24, 0
    %p144 = por %p142, %p143
    %p145 = scmp.ne.s32.totalorder %s133, %s134
    %p146 = scmp.eq.s32.totalorder %s25, 1
    %p147 = por %p145, %p146
    %p149 = scmp.ne.s32.totalorder %s134, %s148
    %p150 = scmp.eq.s32.totalorder %s25, 0
    %p151 = por %p149, %p150
    %s153 = sadd.s32 %s152, 1
    %p156 = scmp.eq.s32.totalorder %s19, 1
    %p157 = scmp.ne.s32.totalorder %s152, %s154
    %p158 = scmp.eq.s32.totalorder %s19, 0
    %p159 = por %p157, %p158
    %p160 = scmp.ne.s32.totalorder %s152, %s154
    %p161 = scmp.eq.s32.totalorder %s24, 1
    %p162 = por %p160, %p161
    %p163 = scmp.ne.s32.totalorder %s154, %s155
    %p164 = scmp.eq.s32.totalorder %s24, 0
    %p165 = por %p163, %p164
    %p166 = scmp.ne.s32.totalorder %s154, %s155
    %p167 = scmp.eq.s32.totalorder %s25, 1
    %p168 = por %p166, %p167
    %p170 = scmp.ne.s32.totalorder %s155, %s169
    %p171 = scmp.eq.s32.totalorder %s25, 0
    %p172 = por %p170, %p171
    %s174 = sadd.s32 %s173, 1
    %p177 = scmp.eq.s32.totalorder %s19, 1
    %p178 = scmp.ne.s32.totalorder %s173, %s175
    %p179 = scmp.eq.s32.totalorder %s19, 0
    %p180 = por %p178, %p179
    %p181 = scmp.ne.s32.totalorder %s173, %s175
    %p182 = scmp.eq.s32.totalorder %s24, 1
    %p183 = por %p181, %p182
    %p184 = scmp.ne.s32.totalorder %s175, %s176
    %p185 = scmp.eq.s32.totalorder %s24, 0
    %p186 = por %p184, %p185
    %p187 = scmp.ne.s32.totalorder %s175, %s176
    %p188 = scmp.eq.s32.totalorder %s25, 1
    %p189 = por %p187, %p188
    %p191 = scmp.ne.s32.totalorder %s176, %s190
    %p192 = scmp.eq.s32.totalorder %s25, 0
    %p193 = por %p191, %p192
    %s195 = sadd.s32 %s194, 1
    %p198 = scmp.eq.s32.totalorder %s19, 1
    %p199 = scmp.ne.s32.totalorder %s194, %s196
    %p200 = scmp.eq.s32.totalorder %s19, 0
    %p201 = por %p199, %p200
    %p202 = scmp.ne.s32.totalorder %s194, %s196
    %p203 = scmp.eq.s32.totalorder %s24, 1
    %p204 = por %p202, %p203
    %p205 = scmp.ne.s32.totalorder %s196, %s197
    %p206 = scmp.eq.s32.totalorder %s24, 0
    %p207 = por %p205, %p206
    %p208 = scmp.ne.s32.totalorder %s196, %s197
    %p209 = scmp.eq.s32.totalorder %s25, 1
    %p210 = por %p208, %p209
    %p212 = scmp.ne.s32.totalorder %s197, %s211
    %p213 = scmp.eq.s32.totalorder %s25, 0
    %p214 = por %p212, %p213
    %s216 = sadd.s32 %s215, 1
    %p219 = scmp.eq.s32.totalorder %s19, 1
    %p220 = scmp.ne.s32.totalorder %s215, %s217
    %p221 = scmp.eq.s32.totalorder %s19, 0
    %p222 = por %p220, %p221
    %p223 = scmp.ne.s32.totalorder %s215, %s217
    %p224 = scmp.eq.s32.totalorder %s24, 1
    %p225 = por %p223, %p224
    %p226 = scmp.ne.s32.totalorder %s217, %s218
    %p227 = scmp.eq.s32.totalorder %s24, 0
    %p228 = por %p226, %p227
    %p229 = scmp.ne.s32.totalorder %s217, %s218
    %p230 = scmp.eq.s32.totalorder %s25, 1
    %p231 = por %p229, %p230
    %p233 = scmp.ne.s32.totalorder %s218, %s232
    %p234 = scmp.eq.s32.totalorder %s25, 0
    %p235 = por %p233, %p234
    %s237 = sadd.s32 %s236, 1
    %p240 = scmp.eq.s32.totalorder %s19, 1
    %p241 = scmp.ne.s32.totalorder %s236, %s238
    %p242 = scmp.eq.s32.totalorder %s19, 0
    %p243 = por %p241, %p242
    %p244 = scmp.ne.s32.totalorder %s236, %s238
    %p245 = scmp.eq.s32.totalorder %s24, 1
    %p246 = por %p244, %p245
    %p247 = scmp.ne.s32.totalorder %s238, %s239
    %p248 = scmp.eq.s32.totalorder %s24, 0
    %p249 = por %p247, %p248
    %p250 = scmp.ne.s32.totalorder %s238, %s239
    %p251 = scmp.eq.s32.totalorder %s25, 1
    %p252 = por %p250, %p251
    %p254 = scmp.ne.s32.totalorder %s239, %s253
    %p255 = scmp.eq.s32.totalorder %s25, 0
    %p256 = por %p254, %p255
    %s258 = sadd.s32 %s257, 1
    %p261 = scmp.eq.s32.totalorder %s19, 1
    %p262 = scmp.ne.s32.totalorder %s257, %s259
    %p263 = scmp.eq.s32.totalorder %s19, 0
    %p264 = por %p262, %p263
    %p265 = scmp.ne.s32.totalorder %s257, %s259
    %p266 = scmp.eq.s32.totalorder %s24, 1
    %p267 = por %p265, %p266
    %p268 = scmp.ne.s32.totalorder %s259, %s260
    %p269 = scmp.eq.s32.totalorder %s24, 0
    %p270 = por %p268, %p269
    %p271 = scmp.ne.s32.totalorder %s259, %s260
    %p272 = scmp.eq.s32.totalorder %s25, 1
    %p273 = por %p271, %p272
    %p275 = scmp.ne.s32.totalorder %s260, %s274
    %p276 = scmp.eq.s32.totalorder %s25, 0
    %p277 = por %p275, %p276
    %s279 = sadd.s32 %s278, 1
    %p282 = scmp.eq.s32.totalorder %s19, 1
    %p283 = scmp.ne.s32.totalorder %s278, %s280
    %p284 = scmp.eq.s32.totalorder %s19, 0
    %p285 = por %p283, %p284
    %p286 = scmp.ne.s32.totalorder %s278, %s280
    %p287 = scmp.eq.s32.totalorder %s24, 1
    %p288 = por %p286, %p287
    %p289 = scmp.ne.s32.totalorder %s280, %s281
    %p290 = scmp.eq.s32.totalorder %s24, 0
    %p291 = por %p289, %p290
    %p292 = scmp.ne.s32.totalorder %s280, %s281
    %p293 = scmp.eq.s32.totalorder %s25, 1
    %p294 = por %p292, %p293
    %p296 = scmp.ne.s32.totalorder %s281, %s295
    %p297 = scmp.eq.s32.totalorder %s25, 0
    %p298 = por %p296, %p297
    %s300 = sadd.s32 %s299, 1
    %p303 = scmp.eq.s32.totalorder %s19, 1
    %p304 = scmp.ne.s32.totalorder %s299, %s301
    %p305 = scmp.eq.s32.totalorder %s19, 0
    %p306 = por %p304, %p305
    %p307 = scmp.ne.s32.totalorder %s299, %s301
    %p308 = scmp.eq.s32.totalorder %s24, 1
    %p309 = por %p307, %p308
    %p310 = scmp.ne.s32.totalorder %s301, %s302
    %p311 = scmp.eq.s32.totalorder %s24, 0
    %p312 = por %p310, %p311
    %p313 = scmp.ne.s32.totalorder %s301, %s302
    %p314 = scmp.eq.s32.totalorder %s25, 1
    %p315 = por %p313, %p314
    %p317 = scmp.ne.s32.totalorder %s302, %s316
    %p318 = scmp.eq.s32.totalorder %s25, 0
    %p319 = por %p317, %p318
    %s320 = ssub.s32 %s19, %s26
    %p321 = scmp.eq.s32.totalorder %s320, 0
    %s323 = sadd.s32 %s322, 1
    %s324 = scalar_select %p321, %s322, %s323
    %p327 = pneg %p321
    %p328 = scmp.eq.s32.totalorder %s19, 1
    %p329 = por %p327, %p328
    %p330 = scmp.ne.s32.totalorder %s322, %s325
    %p331 = scmp.eq.s32.totalorder %s19, 0
    %p332 = por %p330, %p331
    %p333 = scmp.ne.s32.totalorder %s322, %s325
    %p334 = scmp.eq.s32.totalorder %s24, 1
    %p335 = por %p333, %p334
    %p336 = scmp.ne.s32.totalorder %s325, %s326
    %p337 = scmp.eq.s32.totalorder %s24, 0
    %p338 = por %p336, %p337
    %p339 = scmp.ne.s32.totalorder %s325, %s326
    %p340 = scmp.eq.s32.totalorder %s25, 1
    %p341 = por %p339, %p340
    %p343 = scmp.ne.s32.totalorder %s326, %s342
    %p344 = scmp.eq.s32.totalorder %s25, 0
    %p345 = por %p343, %p344
    %p346 = scmp.le.s32.totalorder 1, %s19
    %p347 = scmp.lt.s32.totalorder %s19, 3
    %p348 = pnand %p346, %p347
    %p349 = pneg %p348
    // Predicated region
    $region9: #{_forward.8} parent=5 // pred_check
      _
    $region10: #{_forward.8} parent=5 // pred_check_branch
      %351 = sbr.rel (%p348) target = $region12
    $region11: #{_forward.8} parent=5 // pred_region
      %s352 = ssub.s32 %s19, 1
      // Predicated region
      $region13: #{_forward.8} parent=11 // pred_check
        %p353 = pneg %p144
      $region14: #{_forward.8} parent=11 // pred_check_branch
        %355 = sbr.rel (%p353) target = $region16
      $region15: #{_forward.8} parent=11 // pred_region
        _
      $region16: #{_forward.8} parent=11 // pred_fallthru
        _
      // Predicated region
      $region17: #{_forward.8} parent=11 // pred_check
        %p356 = pneg %p165
      $region18: #{_forward.8} parent=11 // pred_check_branch
        %358 = sbr.rel (%p356) target = $region20
      $region19: #{_forward.8} parent=11 // pred_region
        _
      $region20: #{_forward.8} parent=11 // pred_fallthru
        _
      // Predicated region
      $region21: #{_forward.8} parent=11 // pred_check
        %p359 = pneg %p186
      $region22: #{_forward.8} parent=11 // pred_check_branch
        %361 = sbr.rel (%p359) target = $region24
      $region23: #{_forward.8} parent=11 // pred_region
        _
      $region24: #{_forward.8} parent=11 // pred_fallthru
        _
      // Predicated region
      $region25: #{_forward.8} parent=11 // pred_check
        %p362 = pneg %p207
      $region26: #{_forward.8} parent=11 // pred_check_branch
        %364 = sbr.rel (%p362) target = $region28
      $region27: #{_forward.8} parent=11 // pred_region
        _
      $region28: #{_forward.8} parent=11 // pred_fallthru
        _
      // Predicated region
      $region29: #{_forward.8} parent=11 // pred_check
        %p365 = pneg %p228
      $region30: #{_forward.8} parent=11 // pred_check_branch
        %367 = sbr.rel (%p365) target = $region32
      $region31: #{_forward.8} parent=11 // pred_region
        _
      $region32: #{_forward.8} parent=11 // pred_fallthru
        _
      // Predicated region
      $region33: #{_forward.8} parent=11 // pred_check
        %p368 = pneg %p249
      $region34: #{_forward.8} parent=11 // pred_check_branch
        %370 = sbr.rel (%p368) target = $region36
      $region35: #{_forward.8} parent=11 // pred_region
        _
      $region36: #{_forward.8} parent=11 // pred_fallthru
        _
      // Predicated region
      $region37: #{_forward.8} parent=11 // pred_check
        %p371 = pneg %p270
      $region38: #{_forward.8} parent=11 // pred_check_branch
        %373 = sbr.rel (%p371) target = $region40
      $region39: #{_forward.8} parent=11 // pred_region
        _
      $region40: #{_forward.8} parent=11 // pred_fallthru
        _
      // Predicated region
      $region41: #{_forward.8} parent=11 // pred_check
        %p374 = pneg %p291
      $region42: #{_forward.8} parent=11 // pred_check_branch
        %376 = sbr.rel (%p374) target = $region44
      $region43: #{_forward.8} parent=11 // pred_region
        _
      $region44: #{_forward.8} parent=11 // pred_fallthru
        _
      // Predicated region
      $region45: #{_forward.8} parent=11 // pred_check
        %p377 = pneg %p312
      $region46: #{_forward.8} parent=11 // pred_check_branch
        %379 = sbr.rel (%p377) target = $region48
      $region47: #{_forward.8} parent=11 // pred_region
        _
      $region48: #{_forward.8} parent=11 // pred_fallthru
        _
    $region12: #{_forward.8} parent=5 // pred_fallthru
      _
    %p380 = scmp.lt.s32.totalorder %s19, 2
    // Predicated region
    $region49: #{_forward.8} parent=5 // pred_check
      %p381 = pneg %p380
    $region50: #{_forward.8} parent=5 // pred_check_branch
      %383 = sbr.rel (%p381) target = $region52
    $region51: #{_forward.8} parent=5 // pred_region
      // Predicated region
      $region53: #{_forward.8} parent=51 // pred_check
        %p384 = pneg %p39
      $region54: #{_forward.8} parent=51 // pred_check_branch
        %386 = sbr.rel (%p384) target = $region56
      $region55: #{_forward.8} parent=51 // pred_region
        %p387 = scmp.lt.s32.totalorder %s19, 1
        %s388 = scalar_select %p387, %s19, 1
        %s389 = smul.addr %s388, 2
        %s390 = smul.addr %s389, 4
        %s391 = scalar_lea.vmem %s0, %s390
      $region56: #{_forward.8} parent=51 // pred_fallthru
        _
      // Predicated region
      $region57: #{_forward.8} parent=51 // pred_check
        %p392 = pneg %p65
      $region58: #{_forward.8} parent=51 // pred_check_branch
        %394 = sbr.rel (%p392) target = $region60
      $region59: #{_forward.8} parent=51 // pred_region
        %p395 = scmp.lt.s32.totalorder %s19, 1
        %s396 = scalar_select %p395, %s19, 1
        %s397 = smul.addr %s396, 2
        %s398 = smul.addr %s397, 8
        %s399 = scalar_lea.vmem %s1, %s398
      $region60: #{_forward.8} parent=51 // pred_fallthru
        _
      // Predicated region
      $region61: #{_forward.8} parent=51 // pred_check
        %p400 = pneg %p91
      $region62: #{_forward.8} parent=51 // pred_check_branch
        %402 = sbr.rel (%p400) target = $region64
      $region63: #{_forward.8} parent=51 // pred_region
        %p403 = scmp.lt.s32.totalorder %s19, 1
        %s404 = scalar_select %p403, %s19, 1
        %s405 = smul.addr %s404, 4
        %s406 = scalar_lea.vmem %s2, %s405
      $region64: #{_forward.8} parent=51 // pred_fallthru
        _
      // Predicated region
      $region65: #{_forward.8} parent=51 // pred_check
        %p407 = pneg %p117
      $region66: #{_forward.8} parent=51 // pred_check_branch
        %409 = sbr.rel (%p407) target = $region68
      $region67: #{_forward.8} parent=51 // pred_region
        %p410 = scmp.lt.s32.totalorder %s19, 1
        %s411 = scalar_select %p410, %s19, 1
        %s412 = smul.addr %s411, 4
        %s413 = scalar_lea.vmem %s3, %s412
      $region68: #{_forward.8} parent=51 // pred_fallthru
        _
    $region52: #{_forward.8} parent=5 // pred_fallthru
      _
    %p414 = scmp.le.s32.totalorder 1, %s19
    %p415 = scmp.lt.s32.totalorder %s19, 3
    %p416 = pnand %p414, %p415
    %p417 = pneg %p416
    // Predicated region
    $region69: #{_forward.8} parent=5 // pred_check
      _
    $region70: #{_forward.8} parent=5 // pred_check_branch
      %419 = sbr.rel (%p416) target = $region72
    $region71: #{_forward.8} parent=5 // pred_region
      %s420 = ssub.s32 %s19, 1
      %p421 = scmp.lt.s32.totalorder %s24, 1
      %s422 = scalar_select %p421, %s24, 1
      %s423 = smul.addr %s422, 2
      %s424 = smul.addr %s423, 4
      %s425 = scalar_lea.vmem %s0, %s424
      %p426 = pneg %p45
      %p427 = pneg %p42
      %p428 = scmp.lt.s32.totalorder %s24, 1
      %s429 = scalar_select %p428, %s24, 1
      %s430 = smul.addr %s429, 2
      %s431 = smul.addr %s430, 8
      %s432 = scalar_lea.vmem %s1, %s431
      %p433 = pneg %p71
      %p434 = pneg %p68
      %p435 = scmp.lt.s32.totalorder %s24, 1
      %s436 = scalar_select %p435, %s24, 1
      %s437 = smul.addr %s436, 4
      %s438 = scalar_lea.vmem %s2, %s437
      %p439 = pneg %p97
      %p440 = pneg %p94
      %p441 = scmp.lt.s32.totalorder %s24, 1
      %s442 = scalar_select %p441, %s24, 1
      %s443 = smul.addr %s442, 4
      %s444 = scalar_lea.vmem %s3, %s443
      %p445 = pneg %p123
      %p446 = pneg %p120
      %p447 = pneg %p144
      %p448 = pneg %p141
      %p449 = pneg %p165
      %p450 = pneg %p162
      %p451 = pneg %p186
      %p452 = pneg %p183
      %p453 = pneg %p207
      %p454 = pneg %p204
      %p455 = pneg %p228
      %p456 = pneg %p225
      %p457 = pneg %p249
      %p458 = pneg %p246
      %p459 = pneg %p270
      %p460 = pneg %p267
      %p461 = pneg %p291
      %p462 = pneg %p288
      %p463 = pneg %p312
      %p464 = pneg %p309
      %p465 = pneg %p338
      %p466 = pneg %p335
      %p467 = scmp.lt.s32.totalorder %s24, 1
      %s468 = scalar_select %p467, %s24, 1
      %s469 = smul.addr %s468, 2
      %s470 = smul.addr %s469, 2
      %s471 = scalar_lea.vmem %s13, %s470
      %p472 = scmp.lt.s32.totalorder %s24, 1
      %s473 = scalar_select %p472, %s24, 1
      %s474 = smul.addr %s473, 2
      %s475 = smul.addr %s474, 4
      %s476 = scalar_lea.vmem %s0, %s475
      %p477 = scmp.lt.s32.totalorder %s24, 1
      %s478 = scalar_select %p477, %s24, 1
      %s479 = smul.addr %s478, 2
      %s480 = smul.addr %s479, 8
      %s481 = scalar_lea.vmem %s1, %s480
      %p482 = scmp.lt.s32.totalorder %s24, 1
      %s483 = scalar_select %p482, %s24, 1
      %s484 = smul.addr %s483, 4
      %s485 = scalar_lea.vmem %s2, %s484
      %p486 = scmp.lt.s32.totalorder %s24, 1
      %s487 = scalar_select %p486, %s24, 1
      %s488 = smul.addr %s487, 4
      %s489 = scalar_lea.vmem %s3, %s488
      %p490 = scmp.lt.s32.totalorder %s24, 1
      %s491 = scalar_select %p490, %s24, 1
      %s492 = smul.addr %s491, 2
      %s493 = smul.addr %s492, 2
      %s494 = scalar_lea.vmem %s13, %s493
      %v495 = vld [vmem:[%s476] sm:$0xf]
      %v496 = vld [vmem:[%s476 + $0x4] sm:$0xf]
      %v497 = vld [vmem:[%s4] sm:$0xf]
      %v498 = vld [vmem:[%s4 + $0x4] sm:$0xf]
      %v499 = vld [vmem:[%s4 + $0x8] sm:$0xf]
      %v500 = vld [vmem:[%s4 + $0xc] sm:$0xf]
      %v501 = vld [vmem:[%s4 + $0x10] sm:$0xf]
      %v502 = vld [vmem:[%s4 + $0x14] sm:$0xf]
      %v503 = vld [vmem:[%s4 + $0x18] sm:$0xf]
      %v504 = vld [vmem:[%s4 + $0x1c] sm:$0xf]
      %v505 = vld [vmem:[%s4 + $0x20] sm:$0xf]
      %v506 = vld [vmem:[%s4 + $0x24] sm:$0xf]
      %v507 = vld [vmem:[%s4 + $0x28] sm:$0xf]
      %v508 = vld [vmem:[%s4 + $0x2c] sm:$0xf]
      %v509 = vld [vmem:[%s4 + $0x30] sm:$0xf]
      %v510 = vld [vmem:[%s4 + $0x34] sm:$0xf]
      %v511 = vld [vmem:[%s4 + $0x38] sm:$0xf]
      %v512 = vld [vmem:[%s4 + $0x3c] sm:$0xf]
      %v513 = vld [vmem:[%s481] sm:$0xff]
      %v514 = vld [vmem:[%s481 + $0x8] sm:$0xff]
      %v515 = vld [vmem:[%s5] sm:$0x7]
      %vm516 = vcmask 23552
      %v518 = vsel %vm516, %v513, 0
      %v521 = vsel %vm516, %v514, 0
      %vm523 = vcmask 1042432
      %v525 = vsel %vm523, %v515, 0
      %527 = vmatpush.msra.mxu0 0.0
      %528 = vmatpush.msra.mxu0 0.0
      %529 = vmatpush.msra.mxu0 0.0
      %530 = vmatpush.msra.mxu0 0.0
      %531 = vmatpush.msra.mxu0 0.0
      %532 = vmatpush.msra.mxu0 0.0
      %533 = vmatpush.msra.mxu0 0.0
      %534 = vmatpush.msra.mxu0 0.0
      %535 = vmatpush.msra.mxu0 0.0
      %536 = vmatpush.msra.mxu0 0.0
      %537 = vmatpush.msra.mxu0 0.0
      %538 = vmatpush.msra.mxu0 0.0
      %539 = vmatpush.msra.mxu0 0.0
      %540 = vmatpush.msra.mxu0 0.0
      %541 = vmatpush.msra.mxu0 0.0
      %542 = vmatpush.msra.mxu0 %v525
      %543 = vmatmul.f32.gmra.mxu0 %v518
      %v544 = vpop.f32.mrf.mxu0
      %v545 = vadd.f32 0.0, %v544
      %546 = vmatmul.f32.gmra.mxu0 %v521
      %v547 = vpop.f32.mrf.mxu0
      %v548 = vadd.f32 0.0, %v547
      %549 = vdwg.mxu0
      %v552 = vunpack.c.l.b16 %v495
      %v553 = vunpack.c.l.b16 %v496
      %v554 = vpack.c.b16 %v553, %v552
      %v572 = vunpack.c.l.b16 %v497
      %v573 = vunpack.c.l.b16 %v498
      %v574 = vunpack.c.l.b16 %v499
      %v575 = vunpack.c.l.b16 %v500
      %v576 = vunpack.c.l.b16 %v501
      %v577 = vunpack.c.l.b16 %v502
      %v578 = vunpack.c.l.b16 %v503
      %v579 = vunpack.c.l.b16 %v504
      %v580 = vunpack.c.l.b16 %v505
      %v581 = vunpack.c.l.b16 %v506
      %v582 = vunpack.c.l.b16 %v507
      %v583 = vunpack.c.l.b16 %v508
      %v584 = vunpack.c.l.b16 %v509
      %v585 = vunpack.c.l.b16 %v510
      %v586 = vunpack.c.l.b16 %v511
      %v587 = vunpack.c.l.b16 %v512
      %v588 = vpack.c.b16 %v573, %v572
      %v589 = vpack.c.b16 %v575, %v574
      %v590 = vpack.c.b16 %v577, %v576
      %v591 = vpack.c.b16 %v579, %v578
      %v592 = vpack.c.b16 %v581, %v580
      %v593 = vpack.c.b16 %v583, %v582
      %v594 = vpack.c.b16 %v585, %v584
      %v595 = vpack.c.b16 %v587, %v586
      %604 = vmatpush.bf16.msra.mxu0 %v595
      %605 = vmatpush.bf16.msra.mxu0 %v594
      %606 = vmatpush.bf16.msra.mxu0 %v593
      %607 = vmatpush.bf16.msra.mxu0 %v592
      %608 = vmatpush.bf16.msra.mxu0 %v591
      %609 = vmatpush.bf16.msra.mxu0 %v590
      %610 = vmatpush.bf16.msra.mxu0 %v589
      %611 = vmatpush.bf16.msra.mxu0 %v588
      %612 = vmatmul.bf16.gmra.mxu0 %v554
      %v613 = vpop.f32.mrf.mxu0
      %v614 = vadd.f32 %v545, %v613
      %v615 = vpop.f32.mrf.mxu0
      %v616 = vadd.f32 %v548, %v615
      %617 = vdwg.mxu0
      %v618 = vld [vmem:[%s6] sm:$0x1]
      %v620 = vperm.slane %v618, 0
      %v622 = vadd.f32 %v614, %v620
      %v623 = vadd.f32 %v616, %v620
      %v624 = vld [vmem:[%s485] sm:$0xf]
      %v626 = vsel %vm516, %v624, 0
      %628 = vmatpush.msra.mxu0 0.0
      %629 = vmatpush.msra.mxu0 0.0
      %630 = vmatpush.msra.mxu0 0.0
      %631 = vmatpush.msra.mxu0 0.0
      %632 = vmatpush.msra.mxu0 0.0
      %633 = vmatpush.msra.mxu0 0.0
      %634 = vmatpush.msra.mxu0 0.0
      %635 = vmatpush.msra.mxu0 0.0
      %636 = vmatpush.msra.mxu0 0.0
      %637 = vmatpush.msra.mxu0 0.0
      %638 = vmatpush.msra.mxu0 0.0
      %639 = vmatpush.msra.mxu0 0.0
      %640 = vmatpush.msra.mxu0 0.0
      %641 = vmatpush.msra.mxu0 0.0
      %642 = vmatpush.msra.mxu0 0.0
      %643 = vmatpush.msra.mxu0 %v525
      %644 = vmatmul.f32.gmra.mxu0 %v626
      %v645 = vpop.f32.mrf.mxu0
      %v646 = vadd.f32 0.0, %v645
      %647 = vdwg.mxu0
      %v649 = vrot.slane %v646, 1
      %v650 = vrot.slane %v646, 2
      %v651 = vrot.slane %v646, 3
      %v652 = vperm.slane %v646, 0
      %v653 = vperm.slane %v649, 0
      %v654 = vperm.slane %v650, 0
      %v655 = vperm.slane %v651, 0
      %v660 = vsub.f32 %v622, %v652
      %v661 = vsub.f32 %v623, %v652
      %v662 = vsub.f32 %v622, %v653
      %v663 = vsub.f32 %v623, %v653
      %v664 = vsub.f32 %v622, %v654
      %v665 = vsub.f32 %v623, %v654
      %v666 = vsub.f32 %v622, %v655
      %v667 = vsub.f32 %v623, %v655
      %v668 = vpack.c.bf16 %v660, %v660
      %v669 = vpack.c.bf16 %v661, %v661
      %v670 = vpack.c.bf16 %v662, %v662
      %v671 = vpack.c.bf16 %v663, %v663
      %v672 = vpack.c.bf16 %v664, %v664
      %v673 = vpack.c.bf16 %v665, %v665
      %v674 = vpack.c.bf16 %v666, %v666
      %v675 = vpack.c.bf16 %v667, %v667
      %v676 = vunpack.c.l.bf16 %v668
      %v677 = vunpack.c.l.bf16 %v669
      %v678 = vunpack.c.l.bf16 %v670
      %v679 = vunpack.c.l.bf16 %v671
      %v680 = vunpack.c.l.bf16 %v672
      %v681 = vunpack.c.l.bf16 %v673
      %v682 = vunpack.c.l.bf16 %v674
      %v683 = vunpack.c.l.bf16 %v675
      %v684 = vmax.f32 %v676, 0.0
      %v685 = vmax.f32 %v677, 0.0
      %v686 = vmax.f32 %v678, 0.0
      %v687 = vmax.f32 %v679, 0.0
      %v688 = vmax.f32 %v680, 0.0
      %v689 = vmax.f32 %v681, 0.0
      %v690 = vmax.f32 %v682, 0.0
      %v691 = vmax.f32 %v683, 0.0
      %v692 = vpack.c.bf16 %v684, %v684
      %v693 = vpack.c.bf16 %v685, %v685
      %v694 = vpack.c.bf16 %v686, %v686
      %v695 = vpack.c.bf16 %v687, %v687
      %v696 = vpack.c.bf16 %v688, %v688
      %v697 = vpack.c.bf16 %v689, %v689
      %v698 = vpack.c.bf16 %v690, %v690
      %v699 = vpack.c.bf16 %v691, %v691
      %v700 = vld [vmem:[%s7] sm:$0xf]
      %v701 = vld [vmem:[%s7 + $0x4] sm:$0xf]
      %v702 = vld [vmem:[%s7 + $0x8] sm:$0xf]
      %v703 = vld [vmem:[%s7 + $0xc] sm:$0xf]
      %v704 = vld [vmem:[%s7 + $0x10] sm:$0xf]
      %v705 = vld [vmem:[%s7 + $0x14] sm:$0xf]
      %v706 = vld [vmem:[%s7 + $0x18] sm:$0xf]
      %v707 = vld [vmem:[%s7 + $0x1c] sm:$0xf]
      %v708 = vld [vmem:[%s7 + $0x20] sm:$0xf]
      %v709 = vld [vmem:[%s7 + $0x24] sm:$0xf]
      %v710 = vld [vmem:[%s7 + $0x28] sm:$0xf]
      %v711 = vld [vmem:[%s7 + $0x2c] sm:$0xf]
      %v712 = vld [vmem:[%s7 + $0x30] sm:$0xf]
      %v713 = vld [vmem:[%s7 + $0x34] sm:$0xf]
      %v714 = vld [vmem:[%s7 + $0x38] sm:$0xf]
      %v715 = vld [vmem:[%s7 + $0x3c] sm:$0xf]
      %v716 = vld [vmem:[%s8] sm:$0x1]
      %v718 = vperm.slane %v716, 0
      %v728 = vunpack.c.l.b16 %v692
      %v729 = vunpack.c.l.b16 %v693
      %v730 = vunpack.c.l.b16 %v694
      %v731 = vunpack.c.l.b16 %v695
      %v732 = vunpack.c.l.b16 %v696
      %v733 = vunpack.c.l.b16 %v697
      %v734 = vunpack.c.l.b16 %v698
      %v735 = vunpack.c.l.b16 %v699
      %v736 = vpack.c.b16 %v729, %v728
      %v737 = vpack.c.b16 %v731, %v730
      %v738 = vpack.c.b16 %v733, %v732
      %v739 = vpack.c.b16 %v735, %v734
      %v760 = vunpack.c.l.b16 %v700
      %v761 = vunpack.c.l.b16 %v701
      %v762 = vunpack.c.l.b16 %v702
      %v763 = vunpack.c.l.b16 %v703
      %v764 = vunpack.c.l.b16 %v704
      %v765 = vunpack.c.l.b16 %v705
      %v766 = vunpack.c.l.b16 %v706
      %v767 = vunpack.c.l.b16 %v707
      %v768 = vunpack.c.l.b16 %v708
      %v769 = vunpack.c.l.b16 %v709
      %v770 = vunpack.c.l.b16 %v710
      %v771 = vunpack.c.l.b16 %v711
      %v772 = vunpack.c.l.b16 %v712
      %v773 = vunpack.c.l.b16 %v713
      %v774 = vunpack.c.l.b16 %v714
      %v775 = vunpack.c.l.b16 %v715
      %v776 = vpack.c.b16 %v761, %v760
      %v777 = vpack.c.b16 %v763, %v762
      %v778 = vpack.c.b16 %v765, %v764
      %v779 = vpack.c.b16 %v767, %v766
      %v780 = vpack.c.b16 %v769, %v768
      %v781 = vpack.c.b16 %v771, %v770
      %v782 = vpack.c.b16 %v773, %v772
      %v783 = vpack.c.b16 %v775, %v774
      %792 = vmatpush.bf16.msra.mxu0 %v783
      %793 = vmatpush.bf16.msra.mxu0 %v782
      %794 = vmatpush.bf16.msra.mxu0 %v781
      %795 = vmatpush.bf16.msra.mxu0 %v780
      %796 = vmatpush.bf16.msra.mxu0 %v779
      %797 = vmatpush.bf16.msra.mxu0 %v778
      %798 = vmatpush.bf16.msra.mxu0 %v777
      %799 = vmatpush.bf16.msra.mxu0 %v776
      %800 = vmatmul.bf16.gmra.mxu0 %v736
      %v801 = vpop.f32.mrf.mxu0
      %v802 = vadd.f32 %v718, %v801
      %v803 = vpop.f32.mrf.mxu0
      %v804 = vadd.f32 %v718, %v803
      %805 = vmatmul.bf16.gmra.mxu0 %v737
      %v806 = vpop.f32.mrf.mxu0
      %v807 = vadd.f32 %v718, %v806
      %v808 = vpop.f32.mrf.mxu0
      %v809 = vadd.f32 %v718, %v808
      %810 = vmatmul.bf16.gmra.mxu0 %v738
      %v811 = vpop.f32.mrf.mxu0
      %v812 = vadd.f32 %v718, %v811
      %v813 = vpop.f32.mrf.mxu0
      %v814 = vadd.f32 %v718, %v813
      %815 = vmatmul.bf16.gmra.mxu0 %v739
      %v816 = vpop.f32.mrf.mxu0
      %v817 = vadd.f32 %v718, %v816
      %v818 = vpop.f32.mrf.mxu0
      %v819 = vadd.f32 %v718, %v818
      %820 = vdwg.mxu0
      %v821 = vpack.c.bf16 %v802, %v802
      %v822 = vpack.c.bf16 %v804, %v804
      %v823 = vpack.c.bf16 %v807, %v807
      %v824 = vpack.c.bf16 %v809, %v809
      %v825 = vpack.c.bf16 %v812, %v812
      %v826 = vpack.c.bf16 %v814, %v814
      %v827 = vpack.c.bf16 %v817, %v817
      %v828 = vpack.c.bf16 %v819, %v819
      %v829 = vunpack.c.l.bf16 %v821
      %v830 = vunpack.c.l.bf16 %v822
      %v831 = vunpack.c.l.bf16 %v823
      %v832 = vunpack.c.l.bf16 %v824
      %v833 = vunpack.c.l.bf16 %v825
      %v834 = vunpack.c.l.bf16 %v826
      %v835 = vunpack.c.l.bf16 %v827
      %v836 = vunpack.c.l.bf16 %v828
      %v837 = vmax.f32 %v829, 0.0
      %v838 = vmax.f32 %v830, 0.0
      %v839 = vmax.f32 %v831, 0.0
      %v840 = vmax.f32 %v832, 0.0
      %v841 = vmax.f32 %v833, 0.0
      %v842 = vmax.f32 %v834, 0.0
      %v843 = vmax.f32 %v835, 0.0
      %v844 = vmax.f32 %v836, 0.0
      %v845 = vpack.c.bf16 %v838, %v837
      %v846 = vpack.c.bf16 %v840, %v839
      %v847 = vpack.c.bf16 %v842, %v841
      %v848 = vpack.c.bf16 %v844, %v843
      %v849 = vld [vmem:[%s9] sm:$0xff]
      %v850 = vld [vmem:[%s9 + $0x8] sm:$0xff]
      %v851 = vld [vmem:[%s9 + $0x10] sm:$0xff]
      %v852 = vld [vmem:[%s9 + $0x18] sm:$0xff]
      %v853 = vld [vmem:[%s9 + $0x20] sm:$0xff]
      %v854 = vld [vmem:[%s9 + $0x28] sm:$0xff]
      %v855 = vld [vmem:[%s9 + $0x30] sm:$0xff]
      %v856 = vld [vmem:[%s9 + $0x38] sm:$0xff]
      %v857 = vld [vmem:[%s9 + $0x40] sm:$0xff]
      %v858 = vld [vmem:[%s9 + $0x48] sm:$0xff]
      %v859 = vld [vmem:[%s9 + $0x50] sm:$0xff]
      %v860 = vld [vmem:[%s9 + $0x58] sm:$0xff]
      %v861 = vld [vmem:[%s9 + $0x60] sm:$0xff]
      %v862 = vld [vmem:[%s9 + $0x68] sm:$0xff]
      %v863 = vld [vmem:[%s9 + $0x70] sm:$0xff]
      %v864 = vld [vmem:[%s9 + $0x78] sm:$0xff]
      %v865 = vld [vmem:[%s10] sm:$0x3]
      %v867 = vperm.slane %v865, 0
      %v868 = vperm.slane %v865, 1
      %v887 = vunpack.c.l.b16 %v849
      %v888 = vunpack.c.h.b16 %v849
      %v889 = vunpack.c.l.b16 %v850
      %v890 = vunpack.c.h.b16 %v850
      %v891 = vunpack.c.l.b16 %v851
      %v892 = vunpack.c.h.b16 %v851
      %v893 = vunpack.c.l.b16 %v852
      %v894 = vunpack.c.h.b16 %v852
      %v895 = vunpack.c.l.b16 %v853
      %v896 = vunpack.c.h.b16 %v853
      %v897 = vunpack.c.l.b16 %v854
      %v898 = vunpack.c.h.b16 %v854
      %v899 = vunpack.c.l.b16 %v855
      %v900 = vunpack.c.h.b16 %v855
      %v901 = vunpack.c.l.b16 %v856
      %v902 = vunpack.c.h.b16 %v856
      %v903 = vunpack.c.l.b16 %v857
      %v904 = vunpack.c.h.b16 %v857
      %v905 = vunpack.c.l.b16 %v858
      %v906 = vunpack.c.h.b16 %v858
      %v907 = vunpack.c.l.b16 %v859
      %v908 = vunpack.c.h.b16 %v859
      %v909 = vunpack.c.l.b16 %v860
      %v910 = vunpack.c.h.b16 %v860
      %v911 = vunpack.c.l.b16 %v861
      %v912 = vunpack.c.h.b16 %v861
      %v913 = vunpack.c.l.b16 %v862
      %v914 = vunpack.c.h.b16 %v862
      %v915 = vunpack.c.l.b16 %v863
      %v916 = vunpack.c.h.b16 %v863
      %v917 = vunpack.c.l.b16 %v864
      %v918 = vunpack.c.h.b16 %v864
      %v919 = vpack.c.b16 %v889, %v887
      %v920 = vpack.c.b16 %v890, %v888
      %v921 = vpack.c.b16 %v893, %v891
      %v922 = vpack.c.b16 %v894, %v892
      %v923 = vpack.c.b16 %v897, %v895
      %v924 = vpack.c.b16 %v898, %v896
      %v925 = vpack.c.b16 %v901, %v899
      %v926 = vpack.c.b16 %v902, %v900
      %v927 = vpack.c.b16 %v905, %v903
      %v928 = vpack.c.b16 %v906, %v904
      %v929 = vpack.c.b16 %v909, %v907
      %v930 = vpack.c.b16 %v910, %v908
      %v931 = vpack.c.b16 %v913, %v911
      %v932 = vpack.c.b16 %v914, %v912
      %v933 = vpack.c.b16 %v917, %v915
      %v934 = vpack.c.b16 %v918, %v916
      %951 = vmatpush.bf16.msra.mxu0 %v933
      %952 = vmatpush.bf16.msra.mxu0 %v931
      %953 = vmatpush.bf16.msra.mxu0 %v929
      %954 = vmatpush.bf16.msra.mxu0 %v927
      %955 = vmatpush.bf16.msra.mxu0 %v925
      %956 = vmatpush.bf16.msra.mxu0 %v923
      %957 = vmatpush.bf16.msra.mxu0 %v921
      %958 = vmatpush.bf16.msra.mxu0 %v919
      %959 = vmatmul.bf16.gmra.mxu0 %v845
      %v960 = vpop.f32.mrf.mxu0
      %v961 = vadd.f32 %v867, %v960
      %v962 = vpop.f32.mrf.mxu0
      %v963 = vadd.f32 %v867, %v962
      %964 = vmatmul.bf16.gmra.mxu0 %v846
      %v965 = vpop.f32.mrf.mxu0
      %v966 = vadd.f32 %v867, %v965
      %v967 = vpop.f32.mrf.mxu0
      %v968 = vadd.f32 %v867, %v967
      %969 = vmatmul.bf16.gmra.mxu0 %v847
      %v970 = vpop.f32.mrf.mxu0
      %v971 = vadd.f32 %v867, %v970
      %v972 = vpop.f32.mrf.mxu0
      %v973 = vadd.f32 %v867, %v972
      %974 = vmatmul.bf16.gmra.mxu0 %v848
      %v975 = vpop.f32.mrf.mxu0
      %v976 = vadd.f32 %v867, %v975
      %v977 = vpop.f32.mrf.mxu0
      %v978 = vadd.f32 %v867, %v977
      %979 = vdwg.mxu0
      %980 = vmatpush.bf16.msra.mxu0 %v934
      %981 = vmatpush.bf16.msra.mxu0 %v932
      %982 = vmatpush.bf16.msra.mxu0 %v930
      %983 = vmatpush.bf16.msra.mxu0 %v928
      %984 = vmatpush.bf16.msra.mxu0 %v926
      %985 = vmatpush.bf16.msra.mxu0 %v924
      %986 = vmatpush.bf16.msra.mxu0 %v922
      %987 = vmatpush.bf16.msra.mxu0 %v920
      %988 = vmatmul.bf16.gmra.mxu0 %v845
      %v989 = vpop.f32.mrf.mxu0
      %v990 = vadd.f32 %v868, %v989
      %v991 = vpop.f32.mrf.mxu0
      %v992 = vadd.f32 %v868, %v991
      %993 = vmatmul.bf16.gmra.mxu0 %v846
      %v994 = vpop.f32.mrf.mxu0
      %v995 = vadd.f32 %v868, %v994
      %v996 = vpop.f32.mrf.mxu0
      %v997 = vadd.f32 %v868, %v996
      %998 = vmatmul.bf16.gmra.mxu0 %v847
      %v999 = vpop.f32.mrf.mxu0
      %v1000 = vadd.f32 %v868, %v999
      %v1001 = vpop.f32.mrf.mxu0
      %v1002 = vadd.f32 %v868, %v1001
      %1003 = vmatmul.bf16.gmra.mxu0 %v848
      %v1004 = vpop.f32.mrf.mxu0
      %v1005 = vadd.f32 %v868, %v1004
      %v1006 = vpop.f32.mrf.mxu0
      %v1007 = vadd.f32 %v868, %v1006
      %1008 = vdwg.mxu0
      %v1009 = vmax.f32 %v961, 0.0
      %v1010 = vmax.f32 %v990, 0.0
      %v1011 = vmax.f32 %v963, 0.0
      %v1012 = vmax.f32 %v992, 0.0
      %v1013 = vmax.f32 %v966, 0.0
      %v1014 = vmax.f32 %v995, 0.0
      %v1015 = vmax.f32 %v968, 0.0
      %v1016 = vmax.f32 %v997, 0.0
      %v1017 = vmax.f32 %v971, 0.0
      %v1018 = vmax.f32 %v1000, 0.0
      %v1019 = vmax.f32 %v973, 0.0
      %v1020 = vmax.f32 %v1002, 0.0
      %v1021 = vmax.f32 %v976, 0.0
      %v1022 = vmax.f32 %v1005, 0.0
      %v1023 = vmax.f32 %v978, 0.0
      %v1024 = vmax.f32 %v1007, 0.0
      %v1025 = vld [vmem:[%s11] sm:$0x3]
      %v1027 = vperm.slane %v1025, 0
      %v1028 = vperm.slane %v1025, 1
      %v1031 = vmul.f32 %v1009, %v1027
      %v1032 = vmul.f32 %v1010, %v1028
      %v1033 = vmul.f32 %v1011, %v1027
      %v1034 = vmul.f32 %v1012, %v1028
      %v1035 = vmul.f32 %v1013, %v1027
      %v1036 = vmul.f32 %v1014, %v1028
      %v1037 = vmul.f32 %v1015, %v1027
      %v1038 = vmul.f32 %v1016, %v1028
      %v1039 = vmul.f32 %v1017, %v1027
      %v1040 = vmul.f32 %v1018, %v1028
      %v1041 = vmul.f32 %v1019, %v1027
      %v1042 = vmul.f32 %v1020, %v1028
      %v1043 = vmul.f32 %v1021, %v1027
      %v1044 = vmul.f32 %v1022, %v1028
      %v1045 = vmul.f32 %v1023, %v1027
      %v1046 = vmul.f32 %v1024, %v1028
      %v1047 = vld [vmem:[%s12] sm:$0x3]
      %v1049 = vperm.slane %v1047, 0
      %v1050 = vperm.slane %v1047, 1
      %v1053 = vadd.f32 %v1031, %v1049
      %v1054 = vadd.f32 %v1032, %v1050
      %v1055 = vadd.f32 %v1033, %v1049
      %v1056 = vadd.f32 %v1034, %v1050
      %v1057 = vadd.f32 %v1035, %v1049
      %v1058 = vadd.f32 %v1036, %v1050
      %v1059 = vadd.f32 %v1037, %v1049
      %v1060 = vadd.f32 %v1038, %v1050
      %v1061 = vadd.f32 %v1039, %v1049
      %v1062 = vadd.f32 %v1040, %v1050
      %v1063 = vadd.f32 %v1041, %v1049
      %v1064 = vadd.f32 %v1042, %v1050
      %v1065 = vadd.f32 %v1043, %v1049
      %v1066 = vadd.f32 %v1044, %v1050
      %v1067 = vadd.f32 %v1045, %v1049
      %v1068 = vadd.f32 %v1046, %v1050
      %v1069 = vld [vmem:[%s489] sm:$0xf]
      %v1070 = vperm.slane %v1069, 0
      %v1071 = vlaneseq
      %v1072 = vshrl.u32 %v1071, 7
      %1074 = vset.pattern.permute.xlu0 %v1072
      %1075 = vperm.xlu0 %1074, %v1070
      %v1076 = vpop.permute.xlu0 %1075
      %v1077 = vlaneseq
      %v1078 = vshrl.u32 %v1077, 7
      %v1079 = vadd.s32 %v1078, 8
      %1080 = vset.pattern.permute.xlu0 %v1079
      %1081 = vperm.xlu0 %1080, %v1070
      %v1082 = vpop.permute.xlu0 %1081
      %v1083 = vperm.slane %v1069, 1
      %v1084 = vlaneseq
      %v1085 = vshrl.u32 %v1084, 7
      %1087 = vset.pattern.permute.xlu0 %v1085
      %1088 = vperm.xlu0 %1087, %v1083
      %v1089 = vpop.permute.xlu0 %1088
      %v1090 = vlaneseq
      %v1091 = vshrl.u32 %v1090, 7
      %v1092 = vadd.s32 %v1091, 8
      %1093 = vset.pattern.permute.xlu0 %v1092
      %1094 = vperm.xlu0 %1093, %v1083
      %v1095 = vpop.permute.xlu0 %1094
      %v1096 = vperm.slane %v1069, 2
      %v1097 = vlaneseq
      %v1098 = vshrl.u32 %v1097, 7
      %1100 = vset.pattern.permute.xlu0 %v1098
      %1101 = vperm.xlu0 %1100, %v1096
      %v1102 = vpop.permute.xlu0 %1101
      %v1103 = vlaneseq
      %v1104 = vshrl.u32 %v1103, 7
      %v1105 = vadd.s32 %v1104, 8
      %1106 = vset.pattern.permute.xlu0 %v1105
      %1107 = vperm.xlu0 %1106, %v1096
      %v1108 = vpop.permute.xlu0 %1107
      %v1109 = vperm.slane %v1069, 3
      %v1110 = vlaneseq
      %v1111 = vshrl.u32 %v1110, 7
      %1113 = vset.pattern.permute.xlu0 %v1111
      %1114 = vperm.xlu0 %1113, %v1109
      %v1115 = vpop.permute.xlu0 %1114
      %v1116 = vlaneseq
      %v1117 = vshrl.u32 %v1116, 7
      %v1118 = vadd.s32 %v1117, 8
      %1119 = vset.pattern.permute.xlu0 %v1118
      %1120 = vperm.xlu0 %1119, %v1109
      %v1121 = vpop.permute.xlu0 %1120
      %v1122 = vadd.f32 %v1053, %v1076
      %v1123 = vadd.f32 %v1054, %v1076
      %v1124 = vadd.f32 %v1055, %v1082
      %v1125 = vadd.f32 %v1056, %v1082
      %v1126 = vadd.f32 %v1057, %v1089
      %v1127 = vadd.f32 %v1058, %v1089
      %v1128 = vadd.f32 %v1059, %v1095
      %v1129 = vadd.f32 %v1060, %v1095
      %v1130 = vadd.f32 %v1061, %v1102
      %v1131 = vadd.f32 %v1062, %v1102
      %v1132 = vadd.f32 %v1063, %v1108
      %v1133 = vadd.f32 %v1064, %v1108
      %v1134 = vadd.f32 %v1065, %v1115
      %v1135 = vadd.f32 %v1066, %v1115
      %v1136 = vadd.f32 %v1067, %v1121
      %v1137 = vadd.f32 %v1068, %v1121
      %v1138 = vmax.f32 %v1122, %v1124
      %v1139 = vrot.slane %v1138, 4
      %v1140 = vmax.f32 %v1138, %v1139
      %v1141 = vrot.slane %v1140, 2
      %v1142 = vmax.f32 %v1140, %v1141
      %v1143 = vrot.slane %v1142, 1
      %v1144 = vmax.f32 %v1142, %v1143
      %v1145 = vmax.f32 %v1123, %v1125
      %v1146 = vrot.slane %v1145, 4
      %v1147 = vmax.f32 %v1145, %v1146
      %v1148 = vrot.slane %v1147, 2
      %v1149 = vmax.f32 %v1147, %v1148
      %v1150 = vrot.slane %v1149, 1
      %v1151 = vmax.f32 %v1149, %v1150
      %v1152 = vmax.f32 %v1126, %v1128
      %v1153 = vrot.slane %v1152, 4
      %v1154 = vmax.f32 %v1152, %v1153
      %v1155 = vrot.slane %v1154, 2
      %v1156 = vmax.f32 %v1154, %v1155
      %v1157 = vrot.slane %v1156, 1
      %v1158 = vmax.f32 %v1156, %v1157
      %v1159 = vmax.f32 %v1127, %v1129
      %v1160 = vrot.slane %v1159, 4
      %v1161 = vmax.f32 %v1159, %v1160
      %v1162 = vrot.slane %v1161, 2
      %v1163 = vmax.f32 %v1161, %v1162
      %v1164 = vrot.slane %v1163, 1
      %v1165 = vmax.f32 %v1163, %v1164
      %v1166 = vmax.f32 %v1130, %v1132
      %v1167 = vrot.slane %v1166, 4
      %v1168 = vmax.f32 %v1166, %v1167
      %v1169 = vrot.slane %v1168, 2
      %v1170 = vmax.f32 %v1168, %v1169
      %v1171 = vrot.slane %v1170, 1
      %v1172 = vmax.f32 %v1170, %v1171
      %v1173 = vmax.f32 %v1131, %v1133
      %v1174 = vrot.slane %v1173, 4
      %v1175 = vmax.f32 %v1173, %v1174
      %v1176 = vrot.slane %v1175, 2
      %v1177 = vmax.f32 %v1175, %v1176
      %v1178 = vrot.slane %v1177, 1
      %v1179 = vmax.f32 %v1177, %v1178
      %v1180 = vmax.f32 %v1134, %v1136
      %v1181 = vrot.slane %v1180, 4
      %v1182 = vmax.f32 %v1180, %v1181
      %v1183 = vrot.slane %v1182, 2
      %v1184 = vmax.f32 %v1182, %v1183
      %v1185 = vrot.slane %v1184, 1
      %v1186 = vmax.f32 %v1184, %v1185
      %v1187 = vmax.f32 %v1135, %v1137
      %v1188 = vrot.slane %v1187, 4
      %v1189 = vmax.f32 %v1187, %v1188
      %v1190 = vrot.slane %v1189, 2
      %v1191 = vmax.f32 %v1189, %v1190
      %v1192 = vrot.slane %v1191, 1
      %v1193 = vmax.f32 %v1191, %v1192
      %v1194 = vpack.c.bf16 %v1151, %v1144
      %v1195 = vpack.c.bf16 %v1165, %v1158
      %v1196 = vpack.c.bf16 %v1179, %v1172
      %v1197 = vpack.c.bf16 %v1193, %v1186
      %v1202 = vrot.slane %v1194, 2
      %v1203 = vrot.slane %v1195, 2
      %v1204 = vrot.slane %v1196, 2
      %v1205 = vrot.slane %v1197, 2
      %vm1206 = vcmask 1041408
      %v1209 = vsel %vm1206, %v1194, %v1202
      %v1212 = vsel %vm1206, %v1195, %v1203
      %v1215 = vsel %vm1206, %v1196, %v1204
      %v1218 = vsel %vm1206, %v1197, %v1205
      %1219 = vst [vmem:[#allocation1] ss:$2 sm:$0xff] %v1209
      %v1220 = vld.sshfl [vmem:[#allocation1] sm:$0xff pattern:$0x75643120]
      %s1222 = scalar_lea.vmem [#allocation1], 16
      %1223 = vst [vmem:[%s1222] ss:$2 sm:$0xff] %v1212
      %v1224 = vld.sshfl [vmem:[#allocation1 + $0x10] sm:$0xff pattern:$0x75643120]
      %s1226 = scalar_lea.vmem [#allocation1], 32
      %1227 = vst [vmem:[%s1226] ss:$2 sm:$0xff] %v1215
      %v1228 = vld.sshfl [vmem:[#allocation1 + $0x20] sm:$0xff pattern:$0x75643120]
      %s1230 = scalar_lea.vmem [#allocation1], 48
      %1231 = vst [vmem:[%s1230] ss:$2 sm:$0xff] %v1218
      %v1232 = vld.sshfl [vmem:[#allocation1 + $0x30] sm:$0xff pattern:$0x75643120]
      %v1234 = vunpack.c.l.b16 %v1220
      %v1235 = vunpack.c.h.b16 %v1220
      %v1236 = vunpack.c.l.b16 %v1224
      %v1237 = vunpack.c.h.b16 %v1224
      %v1238 = vunpack.c.l.b16 %v1228
      %v1239 = vunpack.c.h.b16 %v1228
      %v1240 = vunpack.c.l.b16 %v1232
      %v1241 = vunpack.c.h.b16 %v1232
      %v1242 = vrot.slane %v1236, 7
      %vm1243 = vcmask 1041409
      %v1244 = vsel %vm1243, %v1242, %v1234
      %v1245 = vrot.slane %v1238, 6
      %vm1246 = vcmask 1042434
      %v1247 = vsel %vm1246, %v1245, %v1244
      %v1248 = vrot.slane %v1240, 5
      %vm1249 = vcmask 1043459
      %v1250 = vsel %vm1249, %v1248, %v1247
      %v1251 = vrot.slane %v1237, 7
      %v1252 = vsel %vm1243, %v1251, %v1235
      %v1253 = vrot.slane %v1239, 6
      %v1254 = vsel %vm1246, %v1253, %v1252
      %v1255 = vrot.slane %v1241, 5
      %v1256 = vsel %vm1249, %v1255, %v1254
      %v1257 = vpack.c.b16 %v1256, %v1250
      %v1258 = vrot.slane %v1257, 2
      %v1261 = vsel %vm1206, %v1257, %v1258
      %1263 = vst [vmem:[%s494] sm:$0xf] %v1261
      %p1264 = scmp.lt.s32.totalorder %s24, 1
      %s1265 = scalar_select %p1264, %s24, 1
      %s1266 = smul.addr %s1265, 2
      %s1267 = smul.addr %s1266, 2
      %s1268 = scalar_lea.vmem %s13, %s1267
      // Predicated region
      $region73: #{_forward.8} parent=71 // pred_check
        %p1269 = pneg %p335
      $region74: #{_forward.8} parent=71 // pred_check_branch
        %1271 = sbr.rel (%p1269) target = $region76
      $region75: #{_forward.8} parent=71 // pred_region
        _
      $region76: #{_forward.8} parent=71 // pred_fallthru
        _
    $region72: #{_forward.8} parent=5 // pred_fallthru
      _
    %p1272 = scmp.le.s32.totalorder 2, %s19
    // Predicated region
    $region77: #{_forward.8} parent=5 // pred_check
      %p1273 = pneg %p1272
    $region78: #{_forward.8} parent=5 // pred_check_branch
      %1275 = sbr.rel (%p1273) target = $region80
    $region79: #{_forward.8} parent=5 // pred_region
      %s1276 = ssub.s32 %s19, 2
      // Predicated region
      $region81: #{_forward.8} parent=79 // pred_check
        %p1277 = pneg %p341
      $region82: #{_forward.8} parent=79 // pred_check_branch
        %1279 = sbr.rel (%p1277) target = $region84
      $region83: #{_forward.8} parent=79 // pred_region
        %p1280 = scmp.lt.s32.totalorder %s25, 1
        %s1281 = scalar_select %p1280, %s25, 1
        %s1282 = smul.addr %s1281, 2
        %s1283 = smul.addr %s1282, 2
        %s1284 = scalar_lea.vmem %s13, %s1283
      $region84: #{_forward.8} parent=79 // pred_fallthru
        _
    $region80: #{_forward.8} parent=5 // pred_fallthru
      _
  $region6: #{_forward.8} parent=0 // loop_footer
    %s23 = sadd.s32 1, %s19
  $region7: #{_forward.8} parent=0 // loop_footer_branch
    %18 = sbr.rel target = $region3
  $region8: #{_forward.8} parent=0 // loop_exit
    _

// kernel: _forward.7
$region0: #{_forward.7}
  #allocation0 [shape = 'u32[]', space=smem, size = 0x4, offset = 0x4, fixed_abs, tag = 'smem constant byte address 0x4 - core index']
  #allocation1 [shape = 'u32[72,128]{1,0:T(1,128)}', space=vmem, size = 0x9000, scoped, tag = 'internal scratch']
  %s0 = inlined_call_operand.vmem [shape: bf16[2,64,25], index: 0, kind: input, shape index: {}]
  %s1 = inlined_call_operand.vmem [shape: f32[2,64,3], index: 1, kind: input, shape index: {}]
  %s2 = inlined_call_operand.vmem [shape: f32[2,13,3], index: 2, kind: input, shape index: {}]
  %s3 = inlined_call_operand.vmem [shape: f32[2,13,64], index: 3, kind: input, shape index: {}]
  %s4 = inlined_call_operand.vmem [shape: bf16[25,64], index: 4, kind: input, shape index: {}]
  %s5 = inlined_call_operand.vmem [shape: f32[3,64], index: 5, kind: input, shape index: {}]
  %s6 = inlined_call_operand.vmem [shape: f32[1,64], index: 6, kind: input, shape index: {}]
  %s7 = inlined_call_operand.vmem [shape: bf16[64,64], index: 7, kind: input, shape index: {}]
  %s8 = inlined_call_operand.vmem [shape: f32[1,64], index: 8, kind: input, shape index: {}]
  %s9 = inlined_call_operand.vmem [shape: bf16[64,128], index: 9, kind: input, shape index: {}]
  %s10 = inlined_call_operand.vmem [shape: f32[1,128], index: 10, kind: input, shape index: {}]
  %s11 = inlined_call_operand.vmem [shape: f32[1,128], index: 11, kind: input, shape index: {}]
  %s12 = inlined_call_operand.vmem [shape: f32[1,128], index: 12, kind: input, shape index: {}]
  %s13 = inlined_call_operand.vmem [shape: bf16[2,13,128], index: 13, kind: output, shape index: {}]
  %s14 = sld [smem:[#allocation0]]
  $region85: #{_forward.7} parent=0
    _
  %s16 = ssub.s32 1, %s14
  %s17 = scalar_select 0, %s16, %s14
  loop: start=0, step=1, limit=4
  $region2: #{_forward.7} parent=0 // loop_pre_header
    _
  $region3: #{_forward.7} parent=0 // loop_header
    %s19 = sphi 0, %s23
    %p20 = scmp.ge.s32.totalorder %s19, 4
    %s29 = sphi 0, %s31
    %s32 = sphi 0, %s29
    %s33 = sphi 0, %s32
    %s49 = sphi 0, %s33
    %s55 = sphi 0, %s57
    %s58 = sphi 0, %s55
    %s59 = sphi 0, %s58
    %s75 = sphi 0, %s59
    %s81 = sphi 0, %s83
    %s84 = sphi 0, %s81
    %s85 = sphi 0, %s84
    %s101 = sphi 0, %s85
    %s107 = sphi 0, %s109
    %s110 = sphi 0, %s107
    %s111 = sphi 0, %s110
    %s127 = sphi 0, %s111
    %s131 = sphi 0, %s131
    %s133 = sphi 0, %s131
    %s134 = sphi 0, %s133
    %s148 = sphi 0, %s134
    %s152 = sphi 0, %s152
    %s154 = sphi 0, %s152
    %s155 = sphi 0, %s154
    %s169 = sphi 0, %s155
    %s173 = sphi 0, %s173
    %s175 = sphi 0, %s173
    %s176 = sphi 0, %s175
    %s190 = sphi 0, %s176
    %s194 = sphi 0, %s194
    %s196 = sphi 0, %s194
    %s197 = sphi 0, %s196
    %s211 = sphi 0, %s197
    %s215 = sphi 0, %s215
    %s217 = sphi 0, %s215
    %s218 = sphi 0, %s217
    %s232 = sphi 0, %s218
    %s236 = sphi 0, %s236
    %s238 = sphi 0, %s236
    %s239 = sphi 0, %s238
    %s253 = sphi 0, %s239
    %s257 = sphi 0, %s257
    %s259 = sphi 0, %s257
    %s260 = sphi 0, %s259
    %s274 = sphi 0, %s260
    %s278 = sphi 0, %s278
    %s280 = sphi 0, %s278
    %s281 = sphi 0, %s280
    %s295 = sphi 0, %s281
    %s299 = sphi 0, %s299
    %s301 = sphi 0, %s299
    %s302 = sphi 0, %s301
    %s316 = sphi 0, %s302
    %s322 = sphi 0, %s324
    %s325 = sphi 0, %s322
    %s326 = sphi 0, %s325
    %s342 = sphi 0, %s326
  $region4: #{_forward.7} parent=0 // loop_header_branch
    %22 = sbr.rel (%p20) target = $region8
  $region5: #{_forward.7} parent=0 // loop_body
    %s24 = ssub.s32 %s19, 1
    %s25 = ssub.s32 %s19, 2
    %s26 = sadd.s32 %s19, 1
    %s27 = ssub.s32 %s19, %s26
    %p28 = scmp.eq.s32.totalorder %s27, 0
    %s30 = sadd.s32 %s29, 1
    %s31 = scalar_select %p28, %s29, %s30
    %p34 = pneg %p28
    %p35 = scmp.eq.s32.totalorder %s19, 1
    %p36 = por %p34, %p35
    %p37 = scmp.ne.s32.totalorder %s29, %s32
    %p38 = scmp.eq.s32.totalorder %s19, 0
    %p39 = por %p37, %p38
    %p40 = scmp.ne.s32.totalorder %s29, %s32
    %p41 = scmp.eq.s32.totalorder %s24, 1
    %p42 = por %p40, %p41
    %p43 = scmp.ne.s32.totalorder %s32, %s33
    %p44 = scmp.eq.s32.totalorder %s24, 0
    %p45 = por %p43, %p44
    %p46 = scmp.ne.s32.totalorder %s32, %s33
    %p47 = scmp.eq.s32.totalorder %s25, 1
    %p48 = por %p46, %p47
    %p50 = scmp.ne.s32.totalorder %s33, %s49
    %p51 = scmp.eq.s32.totalorder %s25, 0
    %p52 = por %p50, %p51
    %s53 = ssub.s32 %s19, %s26
    %p54 = scmp.eq.s32.totalorder %s53, 0
    %s56 = sadd.s32 %s55, 1
    %s57 = scalar_select %p54, %s55, %s56
    %p60 = pneg %p54
    %p61 = scmp.eq.s32.totalorder %s19, 1
    %p62 = por %p60, %p61
    %p63 = scmp.ne.s32.totalorder %s55, %s58
    %p64 = scmp.eq.s32.totalorder %s19, 0
    %p65 = por %p63, %p64
    %p66 = scmp.ne.s32.totalorder %s55, %s58
    %p67 = scmp.eq.s32.totalorder %s24, 1
    %p68 = por %p66, %p67
    %p69 = scmp.ne.s32.totalorder %s58, %s59
    %p70 = scmp.eq.s32.totalorder %s24, 0
    %p71 = por %p69, %p70
    %p72 = scmp.ne.s32.totalorder %s58, %s59
    %p73 = scmp.eq.s32.totalorder %s25, 1
    %p74 = por %p72, %p73
    %p76 = scmp.ne.s32.totalorder %s59, %s75
    %p77 = scmp.eq.s32.totalorder %s25, 0
    %p78 = por %p76, %p77
    %s79 = ssub.s32 %s19, %s26
    %p80 = scmp.eq.s32.totalorder %s79, 0
    %s82 = sadd.s32 %s81, 1
    %s83 = scalar_select %p80, %s81, %s82
    %p86 = pneg %p80
    %p87 = scmp.eq.s32.totalorder %s19, 1
    %p88 = por %p86, %p87
    %p89 = scmp.ne.s32.totalorder %s81, %s84
    %p90 = scmp.eq.s32.totalorder %s19, 0
    %p91 = por %p89, %p90
    %p92 = scmp.ne.s32.totalorder %s81, %s84
    %p93 = scmp.eq.s32.totalorder %s24, 1
    %p94 = por %p92, %p93
    %p95 = scmp.ne.s32.totalorder %s84, %s85
    %p96 = scmp.eq.s32.totalorder %s24, 0
    %p97 = por %p95, %p96
    %p98 = scmp.ne.s32.totalorder %s84, %s85
    %p99 = scmp.eq.s32.totalorder %s25, 1
    %p100 = por %p98, %p99
    %p102 = scmp.ne.s32.totalorder %s85, %s101
    %p103 = scmp.eq.s32.totalorder %s25, 0
    %p104 = por %p102, %p103
    %s105 = ssub.s32 %s19, %s26
    %p106 = scmp.eq.s32.totalorder %s105, 0
    %s108 = sadd.s32 %s107, 1
    %s109 = scalar_select %p106, %s107, %s108
    %p112 = pneg %p106
    %p113 = scmp.eq.s32.totalorder %s19, 1
    %p114 = por %p112, %p113
    %p115 = scmp.ne.s32.totalorder %s107, %s110
    %p116 = scmp.eq.s32.totalorder %s19, 0
    %p117 = por %p115, %p116
    %p118 = scmp.ne.s32.totalorder %s107, %s110
    %p119 = scmp.eq.s32.totalorder %s24, 1
    %p120 = por %p118, %p119
    %p121 = scmp.ne.s32.totalorder %s110, %s111
    %p122 = scmp.eq.s32.totalorder %s24, 0
    %p123 = por %p121, %p122
    %p124 = scmp.ne.s32.totalorder %s110, %s111
    %p125 = scmp.eq.s32.totalorder %s25, 1
    %p126 = por %p124, %p125
    %p128 = scmp.ne.s32.totalorder %s111, %s127
    %p129 = scmp.eq.s32.totalorder %s25, 0
    %p130 = por %p128, %p129
    %s132 = sadd.s32 %s131, 1
    %p135 = scmp.eq.s32.totalorder %s19, 1
    %p136 = scmp.ne.s32.totalorder %s131, %s133
    %p137 = scmp.eq.s32.totalorder %s19, 0
    %p138 = por %p136, %p137
    %p139 = scmp.ne.s32.totalorder %s131, %s133
    %p140 = scmp.eq.s32.totalorder %s24, 1
    %p141 = por %p139, %p140
    %p142 = scmp.ne.s32.totalorder %s133, %s134
    %p143 = scmp.eq.s32.totalorder %s24, 0
    %p144 = por %p142, %p143
    %p145 = scmp.ne.s32.totalorder %s133, %s134
    %p146 = scmp.eq.s32.totalorder %s25, 1
    %p147 = por %p145, %p146
    %p149 = scmp.ne.s32.totalorder %s134, %s148
    %p150 = scmp.eq.s32.totalorder %s25, 0
    %p151 = por %p149, %p150
    %s153 = sadd.s32 %s152, 1
    %p156 = scmp.eq.s32.totalorder %s19, 1
    %p157 = scmp.ne.s32.totalorder %s152, %s154
    %p158 = scmp.eq.s32.totalorder %s19, 0
    %p159 = por %p157, %p158
    %p160 = scmp.ne.s32.totalorder %s152, %s154
    %p161 = scmp.eq.s32.totalorder %s24, 1
    %p162 = por %p160, %p161
    %p163 = scmp.ne.s32.totalorder %s154, %s155
    %p164 = scmp.eq.s32.totalorder %s24, 0
    %p165 = por %p163, %p164
    %p166 = scmp.ne.s32.totalorder %s154, %s155
    %p167 = scmp.eq.s32.totalorder %s25, 1
    %p168 = por %p166, %p167
    %p170 = scmp.ne.s32.totalorder %s155, %s169
    %p171 = scmp.eq.s32.totalorder %s25, 0
    %p172 = por %p170, %p171
    %s174 = sadd.s32 %s173, 1
    %p177 = scmp.eq.s32.totalorder %s19, 1
    %p178 = scmp.ne.s32.totalorder %s173, %s175
    %p179 = scmp.eq.s32.totalorder %s19, 0
    %p180 = por %p178, %p179
    %p181 = scmp.ne.s32.totalorder %s173, %s175
    %p182 = scmp.eq.s32.totalorder %s24, 1
    %p183 = por %p181, %p182
    %p184 = scmp.ne.s32.totalorder %s175, %s176
    %p185 = scmp.eq.s32.totalorder %s24, 0
    %p186 = por %p184, %p185
    %p187 = scmp.ne.s32.totalorder %s175, %s176
    %p188 = scmp.eq.s32.totalorder %s25, 1
    %p189 = por %p187, %p188
    %p191 = scmp.ne.s32.totalorder %s176, %s190
    %p192 = scmp.eq.s32.totalorder %s25, 0
    %p193 = por %p191, %p192
    %s195 = sadd.s32 %s194, 1
    %p198 = scmp.eq.s32.totalorder %s19, 1
    %p199 = scmp.ne.s32.totalorder %s194, %s196
    %p200 = scmp.eq.s32.totalorder %s19, 0
    %p201 = por %p199, %p200
    %p202 = scmp.ne.s32.totalorder %s194, %s196
    %p203 = scmp.eq.s32.totalorder %s24, 1
    %p204 = por %p202, %p203
    %p205 = scmp.ne.s32.totalorder %s196, %s197
    %p206 = scmp.eq.s32.totalorder %s24, 0
    %p207 = por %p205, %p206
    %p208 = scmp.ne.s32.totalorder %s196, %s197
    %p209 = scmp.eq.s32.totalorder %s25, 1
    %p210 = por %p208, %p209
    %p212 = scmp.ne.s32.totalorder %s197, %s211
    %p213 = scmp.eq.s32.totalorder %s25, 0
    %p214 = por %p212, %p213
    %s216 = sadd.s32 %s215, 1
    %p219 = scmp.eq.s32.totalorder %s19, 1
    %p220 = scmp.ne.s32.totalorder %s215, %s217
    %p221 = scmp.eq.s32.totalorder %s19, 0
    %p222 = por %p220, %p221
    %p223 = scmp.ne.s32.totalorder %s215, %s217
    %p224 = scmp.eq.s32.totalorder %s24, 1
    %p225 = por %p223, %p224
    %p226 = scmp.ne.s32.totalorder %s217, %s218
    %p227 = scmp.eq.s32.totalorder %s24, 0
    %p228 = por %p226, %p227
    %p229 = scmp.ne.s32.totalorder %s217, %s218
    %p230 = scmp.eq.s32.totalorder %s25, 1
    %p231 = por %p229, %p230
    %p233 = scmp.ne.s32.totalorder %s218, %s232
    %p234 = scmp.eq.s32.totalorder %s25, 0
    %p235 = por %p233, %p234
    %s237 = sadd.s32 %s236, 1
    %p240 = scmp.eq.s32.totalorder %s19, 1
    %p241 = scmp.ne.s32.totalorder %s236, %s238
    %p242 = scmp.eq.s32.totalorder %s19, 0
    %p243 = por %p241, %p242
    %p244 = scmp.ne.s32.totalorder %s236, %s238
    %p245 = scmp.eq.s32.totalorder %s24, 1
    %p246 = por %p244, %p245
    %p247 = scmp.ne.s32.totalorder %s238, %s239
    %p248 = scmp.eq.s32.totalorder %s24, 0
    %p249 = por %p247, %p248
    %p250 = scmp.ne.s32.totalorder %s238, %s239
    %p251 = scmp.eq.s32.totalorder %s25, 1
    %p252 = por %p250, %p251
    %p254 = scmp.ne.s32.totalorder %s239, %s253
    %p255 = scmp.eq.s32.totalorder %s25, 0
    %p256 = por %p254, %p255
    %s258 = sadd.s32 %s257, 1
    %p261 = scmp.eq.s32.totalorder %s19, 1
    %p262 = scmp.ne.s32.totalorder %s257, %s259
    %p263 = scmp.eq.s32.totalorder %s19, 0
    %p264 = por %p262, %p263
    %p265 = scmp.ne.s32.totalorder %s257, %s259
    %p266 = scmp.eq.s32.totalorder %s24, 1
    %p267 = por %p265, %p266
    %p268 = scmp.ne.s32.totalorder %s259, %s260
    %p269 = scmp.eq.s32.totalorder %s24, 0
    %p270 = por %p268, %p269
    %p271 = scmp.ne.s32.totalorder %s259, %s260
    %p272 = scmp.eq.s32.totalorder %s25, 1
    %p273 = por %p271, %p272
    %p275 = scmp.ne.s32.totalorder %s260, %s274
    %p276 = scmp.eq.s32.totalorder %s25, 0
    %p277 = por %p275, %p276
    %s279 = sadd.s32 %s278, 1
    %p282 = scmp.eq.s32.totalorder %s19, 1
    %p283 = scmp.ne.s32.totalorder %s278, %s280
    %p284 = scmp.eq.s32.totalorder %s19, 0
    %p285 = por %p283, %p284
    %p286 = scmp.ne.s32.totalorder %s278, %s280
    %p287 = scmp.eq.s32.totalorder %s24, 1
    %p288 = por %p286, %p287
    %p289 = scmp.ne.s32.totalorder %s280, %s281
    %p290 = scmp.eq.s32.totalorder %s24, 0
    %p291 = por %p289, %p290
    %p292 = scmp.ne.s32.totalorder %s280, %s281
    %p293 = scmp.eq.s32.totalorder %s25, 1
    %p294 = por %p292, %p293
    %p296 = scmp.ne.s32.totalorder %s281, %s295
    %p297 = scmp.eq.s32.totalorder %s25, 0
    %p298 = por %p296, %p297
    %s300 = sadd.s32 %s299, 1
    %p303 = scmp.eq.s32.totalorder %s19, 1
    %p304 = scmp.ne.s32.totalorder %s299, %s301
    %p305 = scmp.eq.s32.totalorder %s19, 0
    %p306 = por %p304, %p305
    %p307 = scmp.ne.s32.totalorder %s299, %s301
    %p308 = scmp.eq.s32.totalorder %s24, 1
    %p309 = por %p307, %p308
    %p310 = scmp.ne.s32.totalorder %s301, %s302
    %p311 = scmp.eq.s32.totalorder %s24, 0
    %p312 = por %p310, %p311
    %p313 = scmp.ne.s32.totalorder %s301, %s302
    %p314 = scmp.eq.s32.totalorder %s25, 1
    %p315 = por %p313, %p314
    %p317 = scmp.ne.s32.totalorder %s302, %s316
    %p318 = scmp.eq.s32.totalorder %s25, 0
    %p319 = por %p317, %p318
    %s320 = ssub.s32 %s19, %s26
    %p321 = scmp.eq.s32.totalorder %s320, 0
    %s323 = sadd.s32 %s322, 1
    %s324 = scalar_select %p321, %s322, %s323
    %p327 = pneg %p321
    %p328 = scmp.eq.s32.totalorder %s19, 1
    %p329 = por %p327, %p328
    %p330 = scmp.ne.s32.totalorder %s322, %s325
    %p331 = scmp.eq.s32.totalorder %s19, 0
    %p332 = por %p330, %p331
    %p333 = scmp.ne.s32.totalorder %s322, %s325
    %p334 = scmp.eq.s32.totalorder %s24, 1
    %p335 = por %p333, %p334
    %p336 = scmp.ne.s32.totalorder %s325, %s326
    %p337 = scmp.eq.s32.totalorder %s24, 0
    %p338 = por %p336, %p337
    %p339 = scmp.ne.s32.totalorder %s325, %s326
    %p340 = scmp.eq.s32.totalorder %s25, 1
    %p341 = por %p339, %p340
    %p343 = scmp.ne.s32.totalorder %s326, %s342
    %p344 = scmp.eq.s32.totalorder %s25, 0
    %p345 = por %p343, %p344
    %p346 = scmp.le.s32.totalorder 1, %s19
    %p347 = scmp.lt.s32.totalorder %s19, 3
    %p348 = pnand %p346, %p347
    %p349 = pneg %p348
    // Predicated region
    $region9: #{_forward.7} parent=5 // pred_check
      _
    $region10: #{_forward.7} parent=5 // pred_check_branch
      %351 = sbr.rel (%p348) target = $region12
    $region11: #{_forward.7} parent=5 // pred_region
      %s352 = ssub.s32 %s19, 1
      // Predicated region
      $region13: #{_forward.7} parent=11 // pred_check
        %p353 = pneg %p144
      $region14: #{_forward.7} parent=11 // pred_check_branch
        %355 = sbr.rel (%p353) target = $region16
      $region15: #{_forward.7} parent=11 // pred_region
        _
      $region16: #{_forward.7} parent=11 // pred_fallthru
        _
      // Predicated region
      $region17: #{_forward.7} parent=11 // pred_check
        %p356 = pneg %p165
      $region18: #{_forward.7} parent=11 // pred_check_branch
        %358 = sbr.rel (%p356) target = $region20
      $region19: #{_forward.7} parent=11 // pred_region
        _
      $region20: #{_forward.7} parent=11 // pred_fallthru
        _
      // Predicated region
      $region21: #{_forward.7} parent=11 // pred_check
        %p359 = pneg %p186
      $region22: #{_forward.7} parent=11 // pred_check_branch
        %361 = sbr.rel (%p359) target = $region24
      $region23: #{_forward.7} parent=11 // pred_region
        _
      $region24: #{_forward.7} parent=11 // pred_fallthru
        _
      // Predicated region
      $region25: #{_forward.7} parent=11 // pred_check
        %p362 = pneg %p207
      $region26: #{_forward.7} parent=11 // pred_check_branch
        %364 = sbr.rel (%p362) target = $region28
      $region27: #{_forward.7} parent=11 // pred_region
        _
      $region28: #{_forward.7} parent=11 // pred_fallthru
        _
      // Predicated region
      $region29: #{_forward.7} parent=11 // pred_check
        %p365 = pneg %p228
      $region30: #{_forward.7} parent=11 // pred_check_branch
        %367 = sbr.rel (%p365) target = $region32
      $region31: #{_forward.7} parent=11 // pred_region
        _
      $region32: #{_forward.7} parent=11 // pred_fallthru
        _
      // Predicated region
      $region33: #{_forward.7} parent=11 // pred_check
        %p368 = pneg %p249
      $region34: #{_forward.7} parent=11 // pred_check_branch
        %370 = sbr.rel (%p368) target = $region36
      $region35: #{_forward.7} parent=11 // pred_region
        _
      $region36: #{_forward.7} parent=11 // pred_fallthru
        _
      // Predicated region
      $region37: #{_forward.7} parent=11 // pred_check
        %p371 = pneg %p270
      $region38: #{_forward.7} parent=11 // pred_check_branch
        %373 = sbr.rel (%p371) target = $region40
      $region39: #{_forward.7} parent=11 // pred_region
        _
      $region40: #{_forward.7} parent=11 // pred_fallthru
        _
      // Predicated region
      $region41: #{_forward.7} parent=11 // pred_check
        %p374 = pneg %p291
      $region42: #{_forward.7} parent=11 // pred_check_branch
        %376 = sbr.rel (%p374) target = $region44
      $region43: #{_forward.7} parent=11 // pred_region
        _
      $region44: #{_forward.7} parent=11 // pred_fallthru
        _
      // Predicated region
      $region45: #{_forward.7} parent=11 // pred_check
        %p377 = pneg %p312
      $region46: #{_forward.7} parent=11 // pred_check_branch
        %379 = sbr.rel (%p377) target = $region48
      $region47: #{_forward.7} parent=11 // pred_region
        _
      $region48: #{_forward.7} parent=11 // pred_fallthru
        _
    $region12: #{_forward.7} parent=5 // pred_fallthru
      _
    %p380 = scmp.lt.s32.totalorder %s19, 2
    // Predicated region
    $region49: #{_forward.7} parent=5 // pred_check
      %p381 = pneg %p380
    $region50: #{_forward.7} parent=5 // pred_check_branch
      %383 = sbr.rel (%p381) target = $region52
    $region51: #{_forward.7} parent=5 // pred_region
      // Predicated region
      $region53: #{_forward.7} parent=51 // pred_check
        %p384 = pneg %p39
      $region54: #{_forward.7} parent=51 // pred_check_branch
        %386 = sbr.rel (%p384) target = $region56
      $region55: #{_forward.7} parent=51 // pred_region
        %p387 = scmp.lt.s32.totalorder %s19, 1
        %s388 = scalar_select %p387, %s19, 1
        %s389 = smul.addr %s388, 8
        %s390 = smul.addr %s389, 4
        %s391 = scalar_lea.vmem %s0, %s390
      $region56: #{_forward.7} parent=51 // pred_fallthru
        _
      // Predicated region
      $region57: #{_forward.7} parent=51 // pred_check
        %p392 = pneg %p65
      $region58: #{_forward.7} parent=51 // pred_check_branch
        %394 = sbr.rel (%p392) target = $region60
      $region59: #{_forward.7} parent=51 // pred_region
        %p395 = scmp.lt.s32.totalorder %s19, 1
        %s396 = scalar_select %p395, %s19, 1
        %s397 = smul.addr %s396, 8
        %s398 = smul.addr %s397, 8
        %s399 = scalar_lea.vmem %s1, %s398
      $region60: #{_forward.7} parent=51 // pred_fallthru
        _
      // Predicated region
      $region61: #{_forward.7} parent=51 // pred_check
        %p400 = pneg %p91
      $region62: #{_forward.7} parent=51 // pred_check_branch
        %402 = sbr.rel (%p400) target = $region64
      $region63: #{_forward.7} parent=51 // pred_region
        %p403 = scmp.lt.s32.totalorder %s19, 1
        %s404 = scalar_select %p403, %s19, 1
        %s405 = smul.addr %s404, 2
        %s406 = smul.addr %s405, 8
        %s407 = scalar_lea.vmem %s2, %s406
      $region64: #{_forward.7} parent=51 // pred_fallthru
        _
      // Predicated region
      $region65: #{_forward.7} parent=51 // pred_check
        %p408 = pneg %p117
      $region66: #{_forward.7} parent=51 // pred_check_branch
        %410 = sbr.rel (%p408) target = $region68
      $region67: #{_forward.7} parent=51 // pred_region
        %p411 = scmp.lt.s32.totalorder %s19, 1
        %s412 = scalar_select %p411, %s19, 1
        %s413 = smul.addr %s412, 2
        %s414 = smul.addr %s413, 8
        %s415 = scalar_lea.vmem %s3, %s414
      $region68: #{_forward.7} parent=51 // pred_fallthru
        _
    $region52: #{_forward.7} parent=5 // pred_fallthru
      _
    %p416 = scmp.le.s32.totalorder 1, %s19
    %p417 = scmp.lt.s32.totalorder %s19, 3
    %p418 = pnand %p416, %p417
    %p419 = pneg %p418
    // Predicated region
    $region69: #{_forward.7} parent=5 // pred_check
      _
    $region70: #{_forward.7} parent=5 // pred_check_branch
      %421 = sbr.rel (%p418) target = $region72
    $region71: #{_forward.7} parent=5 // pred_region
      %s422 = ssub.s32 %s19, 1
      %p423 = scmp.lt.s32.totalorder %s24, 1
      %s424 = scalar_select %p423, %s24, 1
      %s425 = smul.addr %s424, 8
      %s426 = smul.addr %s425, 4
      %s427 = scalar_lea.vmem %s0, %s426
      %p428 = pneg %p45
      %p429 = pneg %p42
      %p430 = scmp.lt.s32.totalorder %s24, 1
      %s431 = scalar_select %p430, %s24, 1
      %s432 = smul.addr %s431, 8
      %s433 = smul.addr %s432, 8
      %s434 = scalar_lea.vmem %s1, %s433
      %p435 = pneg %p71
      %p436 = pneg %p68
      %p437 = scmp.lt.s32.totalorder %s24, 1
      %s438 = scalar_select %p437, %s24, 1
      %s439 = smul.addr %s438, 2
      %s440 = smul.addr %s439, 8
      %s441 = scalar_lea.vmem %s2, %s440
      %p442 = pneg %p97
      %p443 = pneg %p94
      %p444 = scmp.lt.s32.totalorder %s24, 1
      %s445 = scalar_select %p444, %s24, 1
      %s446 = smul.addr %s445, 2
      %s447 = smul.addr %s446, 8
      %s448 = scalar_lea.vmem %s3, %s447
      %p449 = pneg %p123
      %p450 = pneg %p120
      %p451 = pneg %p144
      %p452 = pneg %p141
      %p453 = pneg %p165
      %p454 = pneg %p162
      %p455 = pneg %p186
      %p456 = pneg %p183
      %p457 = pneg %p207
      %p458 = pneg %p204
      %p459 = pneg %p228
      %p460 = pneg %p225
      %p461 = pneg %p249
      %p462 = pneg %p246
      %p463 = pneg %p270
      %p464 = pneg %p267
      %p465 = pneg %p291
      %p466 = pneg %p288
      %p467 = pneg %p312
      %p468 = pneg %p309
      %p469 = pneg %p338
      %p470 = pneg %p335
      %p471 = scmp.lt.s32.totalorder %s24, 1
      %s472 = scalar_select %p471, %s24, 1
      %s473 = smul.addr %s472, 2
      %s474 = smul.addr %s473, 4
      %s475 = scalar_lea.vmem %s13, %s474
      %p476 = scmp.lt.s32.totalorder %s24, 1
      %s477 = scalar_select %p476, %s24, 1
      %s478 = smul.addr %s477, 8
      %s479 = smul.addr %s478, 4
      %s480 = scalar_lea.vmem %s0, %s479
      %p481 = scmp.lt.s32.totalorder %s24, 1
      %s482 = scalar_select %p481, %s24, 1
      %s483 = smul.addr %s482, 8
      %s484 = smul.addr %s483, 8
      %s485 = scalar_lea.vmem %s1, %s484
      %p486 = scmp.lt.s32.totalorder %s24, 1
      %s487 = scalar_select %p486, %s24, 1
      %s488 = smul.addr %s487, 2
      %s489 = smul.addr %s488, 8
      %s490 = scalar_lea.vmem %s2, %s489
      %p491 = scmp.lt.s32.totalorder %s24, 1
      %s492 = scalar_select %p491, %s24, 1
      %s493 = smul.addr %s492, 2
      %s494 = smul.addr %s493, 8
      %s495 = scalar_lea.vmem %s3, %s494
      %p496 = scmp.lt.s32.totalorder %s24, 1
      %s497 = scalar_select %p496, %s24, 1
      %s498 = smul.addr %s497, 2
      %s499 = smul.addr %s498, 4
      %s500 = scalar_lea.vmem %s13, %s499
      %v502 = vld [vmem:[%s480] sm:$0xf]
      %v503 = vld [vmem:[%s480 + $0x4] sm:$0xf]
      %v504 = vld [vmem:[%s480 + $0x8] sm:$0xf]
      %v505 = vld [vmem:[%s480 + $0xc] sm:$0xf]
      %v506 = vld [vmem:[%s480 + $0x10] sm:$0xf]
      %v507 = vld [vmem:[%s480 + $0x14] sm:$0xf]
      %v508 = vld [vmem:[%s480 + $0x18] sm:$0xf]
      %v509 = vld [vmem:[%s480 + $0x1c] sm:$0xf]
      %v510 = vld [vmem:[%s4] sm:$0xf]
      %v511 = vld [vmem:[%s4 + $0x4] sm:$0xf]
      %v512 = vld [vmem:[%s4 + $0x8] sm:$0xf]
      %v513 = vld [vmem:[%s4 + $0xc] sm:$0x1]
      %v514 = vld [vmem:[%s485] sm:$0xff]
      %v515 = vld [vmem:[%s485 + $0x8] sm:$0xff]
      %v516 = vld [vmem:[%s485 + $0x10] sm:$0xff]
      %v517 = vld [vmem:[%s485 + $0x18] sm:$0xff]
      %v518 = vld [vmem:[%s485 + $0x20] sm:$0xff]
      %v519 = vld [vmem:[%s485 + $0x28] sm:$0xff]
      %v520 = vld [vmem:[%s485 + $0x30] sm:$0xff]
      %v521 = vld [vmem:[%s485 + $0x38] sm:$0xff]
      %v522 = vld [vmem:[%s5] sm:$0x7]
      %vm523 = vcmask 23552
      %v525 = vsel %vm523, %v514, 0
      %v528 = vsel %vm523, %v515, 0
      %v531 = vsel %vm523, %v516, 0
      %v534 = vsel %vm523, %v517, 0
      %v537 = vsel %vm523, %v518, 0
      %v540 = vsel %vm523, %v519, 0
      %v543 = vsel %vm523, %v520, 0
      %v546 = vsel %vm523, %v521, 0
      %vm548 = vcmask 1042432
      %v550 = vsel %vm548, %v522, 0
      %552 = vmatpush.msra.mxu0 0.0
      %553 = vmatpush.msra.mxu0 0.0
      %554 = vmatpush.msra.mxu0 0.0
      %555 = vmatpush.msra.mxu0 0.0
      %556 = vmatpush.msra.mxu0 0.0
      %557 = vmatpush.msra.mxu0 0.0
      %558 = vmatpush.msra.mxu0 0.0
      %559 = vmatpush.msra.mxu0 0.0
      %560 = vmatpush.msra.mxu0 0.0
      %561 = vmatpush.msra.mxu0 0.0
      %562 = vmatpush.msra.mxu0 0.0
      %563 = vmatpush.msra.mxu0 0.0
      %564 = vmatpush.msra.mxu0 0.0
      %565 = vmatpush.msra.mxu0 0.0
      %566 = vmatpush.msra.mxu0 0.0
      %567 = vmatpush.msra.mxu0 %v550
      %568 = vmatmul.f32.gmra.mxu0 %v525
      %v569 = vpop.f32.mrf.mxu0
      %v570 = vadd.f32 0.0, %v569
      %571 = vmatmul.f32.gmra.mxu0 %v528
      %v572 = vpop.f32.mrf.mxu0
      %v573 = vadd.f32 0.0, %v572
      %574 = vmatmul.f32.gmra.mxu0 %v531
      %v575 = vpop.f32.mrf.mxu0
      %v576 = vadd.f32 0.0, %v575
      %577 = vmatmul.f32.gmra.mxu0 %v534
      %v578 = vpop.f32.mrf.mxu0
      %v579 = vadd.f32 0.0, %v578
      %580 = vmatmul.f32.gmra.mxu0 %v537
      %v581 = vpop.f32.mrf.mxu0
      %v582 = vadd.f32 0.0, %v581
      %583 = vmatmul.f32.gmra.mxu0 %v540
      %v584 = vpop.f32.mrf.mxu0
      %v585 = vadd.f32 0.0, %v584
      %586 = vmatmul.f32.gmra.mxu0 %v543
      %v587 = vpop.f32.mrf.mxu0
      %v588 = vadd.f32 0.0, %v587
      %589 = vmatmul.f32.gmra.mxu0 %v546
      %v590 = vpop.f32.mrf.mxu0
      %v591 = vadd.f32 0.0, %v590
      %592 = vdwg.mxu0
      %v601 = vunpack.c.l.b16 %v502
      %v602 = vunpack.c.l.b16 %v503
      %v603 = vunpack.c.l.b16 %v504
      %v604 = vunpack.c.l.b16 %v505
      %v605 = vunpack.c.l.b16 %v506
      %v606 = vunpack.c.l.b16 %v507
      %v607 = vunpack.c.l.b16 %v508
      %v608 = vunpack.c.l.b16 %v509
      %v609 = vpack.c.b16 %v602, %v601
      %v610 = vpack.c.b16 %v604, %v603
      %v611 = vpack.c.b16 %v606, %v605
      %v612 = vpack.c.b16 %v608, %v607
      %v617 = vunpack.c.l.b16 %v510
      %v618 = vunpack.c.l.b16 %v511
      %v619 = vunpack.c.l.b16 %v512
      %v620 = vunpack.c.l.b16 %v513
      %v621 = vpack.c.b16 %v618, %v617
      %v622 = vpack.c.b16 %v620, %v619
      %vm624 = vcmask 203776
      %v626 = vsel %vm624, %v609, 0
      %v629 = vsel %vm624, %v610, 0
      %v632 = vsel %vm624, %v611, 0
      %v635 = vsel %vm624, %v612, 0
      %vm637 = vcmask 1043456
      %vm638 = vcmask 1044480
      %v639 = vsel %vm637, 4294967295, 65535
      %v640 = vsel %vm638, %v639, 0
      %v642 = vand.u32 %v622, %v640
      %644 = vmatpush.bf16.msra.mxu0 0
      %645 = vmatpush.bf16.msra.mxu0 0
      %646 = vmatpush.bf16.msra.mxu0 0
      %647 = vmatpush.bf16.msra.mxu0 0
      %648 = vmatpush.bf16.msra.mxu0 0
      %649 = vmatpush.bf16.msra.mxu0 0
      %650 = vmatpush.bf16.msra.mxu0 %v642
      %651 = vmatpush.bf16.msra.mxu0 %v621
      %652 = vmatmul.bf16.gmra.mxu0 %v626
      %v653 = vpop.f32.mrf.mxu0
      %v654 = vadd.f32 %v570, %v653
      %v655 = vpop.f32.mrf.mxu0
      %v656 = vadd.f32 %v573, %v655
      %657 = vmatmul.bf16.gmra.mxu0 %v629
      %v658 = vpop.f32.mrf.mxu0
      %v659 = vadd.f32 %v576, %v658
      %v660 = vpop.f32.mrf.mxu0
      %v661 = vadd.f32 %v579, %v660
      %662 = vmatmul.bf16.gmra.mxu0 %v632
      %v663 = vpop.f32.mrf.mxu0
      %v664 = vadd.f32 %v582, %v663
      %v665 = vpop.f32.mrf.mxu0
      %v666 = vadd.f32 %v585, %v665
      %667 = vmatmul.bf16.gmra.mxu0 %v635
      %v668 = vpop.f32.mrf.mxu0
      %v669 = vadd.f32 %v588, %v668
      %v670 = vpop.f32.mrf.mxu0
      %v671 = vadd.f32 %v591, %v670
      %672 = vdwg.mxu0
      %v673 = vld [vmem:[%s6] sm:$0x1]
      %v675 = vperm.slane %v673, 0
      %v677 = vadd.f32 %v654, %v675
      %v678 = vadd.f32 %v656, %v675
      %v679 = vadd.f32 %v659, %v675
      %v680 = vadd.f32 %v661, %v675
      %v681 = vadd.f32 %v664, %v675
      %v682 = vadd.f32 %v666, %v675
      %v683 = vadd.f32 %v669, %v675
      %v684 = vadd.f32 %v671, %v675
      %v685 = vld [vmem:[%s490] sm:$0xff]
      %v686 = vld [vmem:[%s490 + $0x8] sm:$0x1f]
      %v688 = vsel %vm523, %v685, 0
      %v691 = vsel %vm523, %v686, 0
      %693 = vmatpush.msra.mxu0 0.0
      %694 = vmatpush.msra.mxu0 0.0
      %695 = vmatpush.msra.mxu0 0.0
      %696 = vmatpush.msra.mxu0 0.0
      %697 = vmatpush.msra.mxu0 0.0
      %698 = vmatpush.msra.mxu0 0.0
      %699 = vmatpush.msra.mxu0 0.0
      %700 = vmatpush.msra.mxu0 0.0
      %701 = vmatpush.msra.mxu0 0.0
      %702 = vmatpush.msra.mxu0 0.0
      %703 = vmatpush.msra.mxu0 0.0
      %704 = vmatpush.msra.mxu0 0.0
      %705 = vmatpush.msra.mxu0 0.0
      %706 = vmatpush.msra.mxu0 0.0
      %707 = vmatpush.msra.mxu0 0.0
      %708 = vmatpush.msra.mxu0 %v550
      %709 = vmatmul.f32.gmra.mxu0 %v688
      %v710 = vpop.f32.mrf.mxu0
      %v711 = vadd.f32 0.0, %v710
      %712 = vmatmul.f32.gmra.mxu0 %v691
      %v713 = vpop.f32.mrf.mxu0
      %v714 = vadd.f32 0.0, %v713
      %715 = vdwg.mxu0
      %v718 = vrot.slane %v711, 1
      %v719 = vrot.slane %v711, 2
      %v720 = vrot.slane %v711, 3
      %v721 = vrot.slane %v711, 4
      %v722 = vrot.slane %v711, 5
      %v723 = vrot.slane %v711, 6
      %v724 = vrot.slane %v711, 7
      %v725 = vrot.slane %v714, 1
      %v726 = vrot.slane %v714, 2
      %v727 = vrot.slane %v714, 3
      %v728 = vrot.slane %v714, 4
      %v729 = vperm.slane %v711, 0
      %v730 = vperm.slane %v718, 0
      %v731 = vperm.slane %v719, 0
      %v732 = vperm.slane %v720, 0
      %v733 = vperm.slane %v721, 0
      %v734 = vperm.slane %v722, 0
      %v735 = vperm.slane %v723, 0
      %v736 = vperm.slane %v724, 0
      %v737 = vperm.slane %v714, 0
      %v738 = vperm.slane %v725, 0
      %v739 = vperm.slane %v726, 0
      %v740 = vperm.slane %v727, 0
      %v741 = vperm.slane %v728, 0
      %v755 = vsub.f32 %v677, %v729
      %v756 = vsub.f32 %v678, %v729
      %v757 = vsub.f32 %v679, %v729
      %v758 = vsub.f32 %v680, %v729
      %v759 = vsub.f32 %v681, %v729
      %v760 = vsub.f32 %v682, %v729
      %v761 = vsub.f32 %v683, %v729
      %v762 = vsub.f32 %v684, %v729
      %v763 = vsub.f32 %v677, %v730
      %v764 = vsub.f32 %v678, %v730
      %v765 = vsub.f32 %v679, %v730
      %v766 = vsub.f32 %v680, %v730
      %v767 = vsub.f32 %v681, %v730
      %v768 = vsub.f32 %v682, %v730
      %v769 = vsub.f32 %v683, %v730
      %v770 = vsub.f32 %v684, %v730
      %v771 = vsub.f32 %v677, %v731
      %v772 = vsub.f32 %v678, %v731
      %v773 = vsub.f32 %v679, %v731
      %v774 = vsub.f32 %v680, %v731
      %v775 = vsub.f32 %v681, %v731
      %v776 = vsub.f32 %v682, %v731
      %v777 = vsub.f32 %v683, %v731
      %v778 = vsub.f32 %v684, %v731
      %v779 = vsub.f32 %v677, %v732
      %v780 = vsub.f32 %v678, %v732
      %v781 = vsub.f32 %v679, %v732
      %v782 = vsub.f32 %v680, %v732
      %v783 = vsub.f32 %v681, %v732
      %v784 = vsub.f32 %v682, %v732
      %v785 = vsub.f32 %v683, %v732
      %v786 = vsub.f32 %v684, %v732
      %v787 = vsub.f32 %v677, %v733
      %v788 = vsub.f32 %v678, %v733
      %v789 = vsub.f32 %v679, %v733
      %v790 = vsub.f32 %v680, %v733
      %v791 = vsub.f32 %v681, %v733
      %v792 = vsub.f32 %v682, %v733
      %v793 = vsub.f32 %v683, %v733
      %v794 = vsub.f32 %v684, %v733
      %v795 = vsub.f32 %v677, %v734
      %v796 = vsub.f32 %v678, %v734
      %v797 = vsub.f32 %v679, %v734
      %v798 = vsub.f32 %v680, %v734
      %v799 = vsub.f32 %v681, %v734
      %v800 = vsub.f32 %v682, %v734
      %v801 = vsub.f32 %v683, %v734
      %v802 = vsub.f32 %v684, %v734
      %v803 = vsub.f32 %v677, %v735
      %v804 = vsub.f32 %v678, %v735
      %v805 = vsub.f32 %v679, %v735
      %v806 = vsub.f32 %v680, %v735
      %v807 = vsub.f32 %v681, %v735
      %v808 = vsub.f32 %v682, %v735
      %v809 = vsub.f32 %v683, %v735
      %v810 = vsub.f32 %v684, %v735
      %v811 = vsub.f32 %v677, %v736
      %v812 = vsub.f32 %v678, %v736
      %v813 = vsub.f32 %v679, %v736
      %v814 = vsub.f32 %v680, %v736
      %v815 = vsub.f32 %v681, %v736
      %v816 = vsub.f32 %v682, %v736
      %v817 = vsub.f32 %v683, %v736
      %v818 = vsub.f32 %v684, %v736
      %v819 = vsub.f32 %v677, %v737
      %v820 = vsub.f32 %v678, %v737
      %v821 = vsub.f32 %v679, %v737
      %v822 = vsub.f32 %v680, %v737
      %v823 = vsub.f32 %v681, %v737
      %v824 = vsub.f32 %v682, %v737
      %v825 = vsub.f32 %v683, %v737
      %v826 = vsub.f32 %v684, %v737
      %v827 = vsub.f32 %v677, %v738
      %v828 = vsub.f32 %v678, %v738
      %v829 = vsub.f32 %v679, %v738
      %v830 = vsub.f32 %v680, %v738
      %v831 = vsub.f32 %v681, %v738
      %v832 = vsub.f32 %v682, %v738
      %v833 = vsub.f32 %v683, %v738
      %v834 = vsub.f32 %v684, %v738
      %v835 = vsub.f32 %v677, %v739
      %v836 = vsub.f32 %v678, %v739
      %v837 = vsub.f32 %v679, %v739
      %v838 = vsub.f32 %v680, %v739
      %v839 = vsub.f32 %v681, %v739
      %v840 = vsub.f32 %v682, %v739
      %v841 = vsub.f32 %v683, %v739
      %v842 = vsub.f32 %v684, %v739
      %v843 = vsub.f32 %v677, %v740
      %v844 = vsub.f32 %v678, %v740
      %v845 = vsub.f32 %v679, %v740
      %v846 = vsub.f32 %v680, %v740
      %v847 = vsub.f32 %v681, %v740
      %v848 = vsub.f32 %v682, %v740
      %v849 = vsub.f32 %v683, %v740
      %v850 = vsub.f32 %v684, %v740
      %v851 = vsub.f32 %v677, %v741
      %v852 = vsub.f32 %v678, %v741
      %v853 = vsub.f32 %v679, %v741
      %v854 = vsub.f32 %v680, %v741
      %v855 = vsub.f32 %v681, %v741
      %v856 = vsub.f32 %v682, %v741
      %v857 = vsub.f32 %v683, %v741
      %v858 = vsub.f32 %v684, %v741
      %v859 = vpack.c.bf16 %v755, %v755
      %v860 = vpack.c.bf16 %v756, %v756
      %v861 = vpack.c.bf16 %v757, %v757
      %v862 = vpack.c.bf16 %v758, %v758
      %v863 = vpack.c.bf16 %v759, %v759
      %v864 = vpack.c.bf16 %v760, %v760
      %v865 = vpack.c.bf16 %v761, %v761
      %v866 = vpack.c.bf16 %v762, %v762
      %v867 = vpack.c.bf16 %v763, %v763
      %v868 = vpack.c.bf16 %v764, %v764
      %v869 = vpack.c.bf16 %v765, %v765
      %v870 = vpack.c.bf16 %v766, %v766
      %v871 = vpack.c.bf16 %v767, %v767
      %v872 = vpack.c.bf16 %v768, %v768
      %v873 = vpack.c.bf16 %v769, %v769
      %v874 = vpack.c.bf16 %v770, %v770
      %v875 = vpack.c.bf16 %v771, %v771
      %v876 = vpack.c.bf16 %v772, %v772
      %v877 = vpack.c.bf16 %v773, %v773
      %v878 = vpack.c.bf16 %v774, %v774
      %v879 = vpack.c.bf16 %v775, %v775
      %v880 = vpack.c.bf16 %v776, %v776
      %v881 = vpack.c.bf16 %v777, %v777
      %v882 = vpack.c.bf16 %v778, %v778
      %v883 = vpack.c.bf16 %v779, %v779
      %v884 = vpack.c.bf16 %v780, %v780
      %v885 = vpack.c.bf16 %v781, %v781
      %v886 = vpack.c.bf16 %v782, %v782
      %v887 = vpack.c.bf16 %v783, %v783
      %v888 = vpack.c.bf16 %v784, %v784
      %v889 = vpack.c.bf16 %v785, %v785
      %v890 = vpack.c.bf16 %v786, %v786
      %v891 = vpack.c.bf16 %v787, %v787
      %v892 = vpack.c.bf16 %v788, %v788
      %v893 = vpack.c.bf16 %v789, %v789
      %v894 = vpack.c.bf16 %v790, %v790
      %v895 = vpack.c.bf16 %v791, %v791
      %v896 = vpack.c.bf16 %v792, %v792
      %v897 = vpack.c.bf16 %v793, %v793
      %v898 = vpack.c.bf16 %v794, %v794
      %v899 = vpack.c.bf16 %v795, %v795
      %v900 = vpack.c.bf16 %v796, %v796
      %v901 = vpack.c.bf16 %v797, %v797
      %v902 = vpack.c.bf16 %v798, %v798
      %v903 = vpack.c.bf16 %v799, %v799
      %v904 = vpack.c.bf16 %v800, %v800
      %v905 = vpack.c.bf16 %v801, %v801
      %v906 = vpack.c.bf16 %v802, %v802
      %v907 = vpack.c.bf16 %v803, %v803
      %v908 = vpack.c.bf16 %v804, %v804
      %v909 = vpack.c.bf16 %v805, %v805
      %v910 = vpack.c.bf16 %v806, %v806
      %v911 = vpack.c.bf16 %v807, %v807
      %v912 = vpack.c.bf16 %v808, %v808
      %v913 = vpack.c.bf16 %v809, %v809
      %v914 = vpack.c.bf16 %v810, %v810
      %v915 = vpack.c.bf16 %v811, %v811
      %v916 = vpack.c.bf16 %v812, %v812
      %v917 = vpack.c.bf16 %v813, %v813
      %v918 = vpack.c.bf16 %v814, %v814
      %v919 = vpack.c.bf16 %v815, %v815
      %v920 = vpack.c.bf16 %v816, %v816
      %v921 = vpack.c.bf16 %v817, %v817
      %v922 = vpack.c.bf16 %v818, %v818
      %v923 = vpack.c.bf16 %v819, %v819
      %v924 = vpack.c.bf16 %v820, %v820
      %v925 = vpack.c.bf16 %v821, %v821
      %v926 = vpack.c.bf16 %v822, %v822
      %v927 = vpack.c.bf16 %v823, %v823
      %v928 = vpack.c.bf16 %v824, %v824
      %v929 = vpack.c.bf16 %v825, %v825
      %v930 = vpack.c.bf16 %v826, %v826
      %v931 = vpack.c.bf16 %v827, %v827
      %v932 = vpack.c.bf16 %v828, %v828
      %v933 = vpack.c.bf16 %v829, %v829
      %v934 = vpack.c.bf16 %v830, %v830
      %v935 = vpack.c.bf16 %v831, %v831
      %v936 = vpack.c.bf16 %v832, %v832
      %v937 = vpack.c.bf16 %v833, %v833
      %v938 = vpack.c.bf16 %v834, %v834
      %v939 = vpack.c.bf16 %v835, %v835
      %v940 = vpack.c.bf16 %v836, %v836
      %v941 = vpack.c.bf16 %v837, %v837
      %v942 = vpack.c.bf16 %v838, %v838
      %v943 = vpack.c.bf16 %v839, %v839
      %v944 = vpack.c.bf16 %v840, %v840
      %v945 = vpack.c.bf16 %v841, %v841
      %v946 = vpack.c.bf16 %v842, %v842
      %v947 = vpack.c.bf16 %v843, %v843
      %v948 = vpack.c.bf16 %v844, %v844
      %v949 = vpack.c.bf16 %v845, %v845
      %v950 = vpack.c.bf16 %v846, %v846
      %v951 = vpack.c.bf16 %v847, %v847
      %v952 = vpack.c.bf16 %v848, %v848
      %v953 = vpack.c.bf16 %v849, %v849
      %v954 = vpack.c.bf16 %v850, %v850
      %v955 = vpack.c.bf16 %v851, %v851
      %v956 = vpack.c.bf16 %v852, %v852
      %v957 = vpack.c.bf16 %v853, %v853
      %v958 = vpack.c.bf16 %v854, %v854
      %v959 = vpack.c.bf16 %v855, %v855
      %v960 = vpack.c.bf16 %v856, %v856
      %v961 = vpack.c.bf16 %v857, %v857
      %v962 = vpack.c.bf16 %v858, %v858
      %v963 = vunpack.c.l.bf16 %v859
      %v964 = vunpack.c.l.bf16 %v860
      %v965 = vunpack.c.l.bf16 %v861
      %v966 = vunpack.c.l.bf16 %v862
      %v967 = vunpack.c.l.bf16 %v863
      %v968 = vunpack.c.l.bf16 %v864
      %v969 = vunpack.c.l.bf16 %v865
      %v970 = vunpack.c.l.bf16 %v866
      %v971 = vunpack.c.l.bf16 %v867
      %v972 = vunpack.c.l.bf16 %v868
      %v973 = vunpack.c.l.bf16 %v869
      %v974 = vunpack.c.l.bf16 %v870
      %v975 = vunpack.c.l.bf16 %v871
      %v976 = vunpack.c.l.bf16 %v872
      %v977 = vunpack.c.l.bf16 %v873
      %v978 = vunpack.c.l.bf16 %v874
      %v979 = vunpack.c.l.bf16 %v875
      %v980 = vunpack.c.l.bf16 %v876
      %v981 = vunpack.c.l.bf16 %v877
      %v982 = vunpack.c.l.bf16 %v878
      %v983 = vunpack.c.l.bf16 %v879
      %v984 = vunpack.c.l.bf16 %v880
      %v985 = vunpack.c.l.bf16 %v881
      %v986 = vunpack.c.l.bf16 %v882
      %v987 = vunpack.c.l.bf16 %v883
      %v988 = vunpack.c.l.bf16 %v884
      %v989 = vunpack.c.l.bf16 %v885
      %v990 = vunpack.c.l.bf16 %v886
      %v991 = vunpack.c.l.bf16 %v887
      %v992 = vunpack.c.l.bf16 %v888
      %v993 = vunpack.c.l.bf16 %v889
      %v994 = vunpack.c.l.bf16 %v890
      %v995 = vunpack.c.l.bf16 %v891
      %v996 = vunpack.c.l.bf16 %v892
      %v997 = vunpack.c.l.bf16 %v893
      %v998 = vunpack.c.l.bf16 %v894
      %v999 = vunpack.c.l.bf16 %v895
      %v1000 = vunpack.c.l.bf16 %v896
      %v1001 = vunpack.c.l.bf16 %v897
      %v1002 = vunpack.c.l.bf16 %v898
      %v1003 = vunpack.c.l.bf16 %v899
      %v1004 = vunpack.c.l.bf16 %v900
      %v1005 = vunpack.c.l.bf16 %v901
      %v1006 = vunpack.c.l.bf16 %v902
      %v1007 = vunpack.c.l.bf16 %v903
      %v1008 = vunpack.c.l.bf16 %v904
      %v1009 = vunpack.c.l.bf16 %v905
      %v1010 = vunpack.c.l.bf16 %v906
      %v1011 = vunpack.c.l.bf16 %v907
      %v1012 = vunpack.c.l.bf16 %v908
      %v1013 = vunpack.c.l.bf16 %v909
      %v1014 = vunpack.c.l.bf16 %v910
      %v1015 = vunpack.c.l.bf16 %v911
      %v1016 = vunpack.c.l.bf16 %v912
      %v1017 = vunpack.c.l.bf16 %v913
      %v1018 = vunpack.c.l.bf16 %v914
      %v1019 = vunpack.c.l.bf16 %v915
      %v1020 = vunpack.c.l.bf16 %v916
      %v1021 = vunpack.c.l.bf16 %v917
      %v1022 = vunpack.c.l.bf16 %v918
      %v1023 = vunpack.c.l.bf16 %v919
      %v1024 = vunpack.c.l.bf16 %v920
      %v1025 = vunpack.c.l.bf16 %v921
      %v1026 = vunpack.c.l.bf16 %v922
      %v1027 = vunpack.c.l.bf16 %v923
      %v1028 = vunpack.c.l.bf16 %v924
      %v1029 = vunpack.c.l.bf16 %v925
      %v1030 = vunpack.c.l.bf16 %v926
      %v1031 = vunpack.c.l.bf16 %v927
      %v1032 = vunpack.c.l.bf16 %v928
      %v1033 = vunpack.c.l.bf16 %v929
      %v1034 = vunpack.c.l.bf16 %v930
      %v1035 = vunpack.c.l.bf16 %v931
      %v1036 = vunpack.c.l.bf16 %v932
      %v1037 = vunpack.c.l.bf16 %v933
      %v1038 = vunpack.c.l.bf16 %v934
      %v1039 = vunpack.c.l.bf16 %v935
      %v1040 = vunpack.c.l.bf16 %v936
      %v1041 = vunpack.c.l.bf16 %v937
      %v1042 = vunpack.c.l.bf16 %v938
      %v1043 = vunpack.c.l.bf16 %v939
      %v1044 = vunpack.c.l.bf16 %v940
      %v1045 = vunpack.c.l.bf16 %v941
      %v1046 = vunpack.c.l.bf16 %v942
      %v1047 = vunpack.c.l.bf16 %v943
      %v1048 = vunpack.c.l.bf16 %v944
      %v1049 = vunpack.c.l.bf16 %v945
      %v1050 = vunpack.c.l.bf16 %v946
      %v1051 = vunpack.c.l.bf16 %v947
      %v1052 = vunpack.c.l.bf16 %v948
      %v1053 = vunpack.c.l.bf16 %v949
      %v1054 = vunpack.c.l.bf16 %v950
      %v1055 = vunpack.c.l.bf16 %v951
      %v1056 = vunpack.c.l.bf16 %v952
      %v1057 = vunpack.c.l.bf16 %v953
      %v1058 = vunpack.c.l.bf16 %v954
      %v1059 = vunpack.c.l.bf16 %v955
      %v1060 = vunpack.c.l.bf16 %v956
      %v1061 = vunpack.c.l.bf16 %v957
      %v1062 = vunpack.c.l.bf16 %v958
      %v1063 = vunpack.c.l.bf16 %v959
      %v1064 = vunpack.c.l.bf16 %v960
      %v1065 = vunpack.c.l.bf16 %v961
      %v1066 = vunpack.c.l.bf16 %v962
      %v1067 = vmax.f32 %v963, 0.0
      %v1068 = vmax.f32 %v964, 0.0
      %v1069 = vmax.f32 %v965, 0.0
      %v1070 = vmax.f32 %v966, 0.0
      %v1071 = vmax.f32 %v967, 0.0
      %v1072 = vmax.f32 %v968, 0.0
      %v1073 = vmax.f32 %v969, 0.0
      %v1074 = vmax.f32 %v970, 0.0
      %v1075 = vmax.f32 %v971, 0.0
      %v1076 = vmax.f32 %v972, 0.0
      %v1077 = vmax.f32 %v973, 0.0
      %v1078 = vmax.f32 %v974, 0.0
      %v1079 = vmax.f32 %v975, 0.0
      %v1080 = vmax.f32 %v976, 0.0
      %v1081 = vmax.f32 %v977, 0.0
      %v1082 = vmax.f32 %v978, 0.0
      %v1083 = vmax.f32 %v979, 0.0
      %v1084 = vmax.f32 %v980, 0.0
      %v1085 = vmax.f32 %v981, 0.0
      %v1086 = vmax.f32 %v982, 0.0
      %v1087 = vmax.f32 %v983, 0.0
      %v1088 = vmax.f32 %v984, 0.0
      %v1089 = vmax.f32 %v985, 0.0
      %v1090 = vmax.f32 %v986, 0.0
      %v1091 = vmax.f32 %v987, 0.0
      %v1092 = vmax.f32 %v988, 0.0
      %v1093 = vmax.f32 %v989, 0.0
      %v1094 = vmax.f32 %v990, 0.0
      %v1095 = vmax.f32 %v991, 0.0
      %v1096 = vmax.f32 %v992, 0.0
      %v1097 = vmax.f32 %v993, 0.0
      %v1098 = vmax.f32 %v994, 0.0
      %v1099 = vmax.f32 %v995, 0.0
      %v1100 = vmax.f32 %v996, 0.0
      %v1101 = vmax.f32 %v997, 0.0
      %v1102 = vmax.f32 %v998, 0.0
      %v1103 = vmax.f32 %v999, 0.0
      %v1104 = vmax.f32 %v1000, 0.0
      %v1105 = vmax.f32 %v1001, 0.0
      %v1106 = vmax.f32 %v1002, 0.0
      %v1107 = vmax.f32 %v1003, 0.0
      %v1108 = vmax.f32 %v1004, 0.0
      %v1109 = vmax.f32 %v1005, 0.0
      %v1110 = vmax.f32 %v1006, 0.0
      %v1111 = vmax.f32 %v1007, 0.0
      %v1112 = vmax.f32 %v1008, 0.0
      %v1113 = vmax.f32 %v1009, 0.0
      %v1114 = vmax.f32 %v1010, 0.0
      %v1115 = vmax.f32 %v1011, 0.0
      %v1116 = vmax.f32 %v1012, 0.0
      %v1117 = vmax.f32 %v1013, 0.0
      %v1118 = vmax.f32 %v1014, 0.0
      %v1119 = vmax.f32 %v1015, 0.0
      %v1120 = vmax.f32 %v1016, 0.0
      %v1121 = vmax.f32 %v1017, 0.0
      %v1122 = vmax.f32 %v1018, 0.0
      %v1123 = vmax.f32 %v1019, 0.0
      %v1124 = vmax.f32 %v1020, 0.0
      %v1125 = vmax.f32 %v1021, 0.0
      %v1126 = vmax.f32 %v1022, 0.0
      %v1127 = vmax.f32 %v1023, 0.0
      %v1128 = vmax.f32 %v1024, 0.0
      %v1129 = vmax.f32 %v1025, 0.0
      %v1130 = vmax.f32 %v1026, 0.0
      %v1131 = vmax.f32 %v1027, 0.0
      %v1132 = vmax.f32 %v1028, 0.0
      %v1133 = vmax.f32 %v1029, 0.0
      %v1134 = vmax.f32 %v1030, 0.0
      %v1135 = vmax.f32 %v1031, 0.0
      %v1136 = vmax.f32 %v1032, 0.0
      %v1137 = vmax.f32 %v1033, 0.0
      %v1138 = vmax.f32 %v1034, 0.0
      %v1139 = vmax.f32 %v1035, 0.0
      %v1140 = vmax.f32 %v1036, 0.0
      %v1141 = vmax.f32 %v1037, 0.0
      %v1142 = vmax.f32 %v1038, 0.0
      %v1143 = vmax.f32 %v1039, 0.0
      %v1144 = vmax.f32 %v1040, 0.0
      %v1145 = vmax.f32 %v1041, 0.0
      %v1146 = vmax.f32 %v1042, 0.0
      %v1147 = vmax.f32 %v1043, 0.0
      %v1148 = vmax.f32 %v1044, 0.0
      %v1149 = vmax.f32 %v1045, 0.0
      %v1150 = vmax.f32 %v1046, 0.0
      %v1151 = vmax.f32 %v1047, 0.0
      %v1152 = vmax.f32 %v1048, 0.0
      %v1153 = vmax.f32 %v1049, 0.0
      %v1154 = vmax.f32 %v1050, 0.0
      %v1155 = vmax.f32 %v1051, 0.0
      %v1156 = vmax.f32 %v1052, 0.0
      %v1157 = vmax.f32 %v1053, 0.0
      %v1158 = vmax.f32 %v1054, 0.0
      %v1159 = vmax.f32 %v1055, 0.0
      %v1160 = vmax.f32 %v1056, 0.0
      %v1161 = vmax.f32 %v1057, 0.0
      %v1162 = vmax.f32 %v1058, 0.0
      %v1163 = vmax.f32 %v1059, 0.0
      %v1164 = vmax.f32 %v1060, 0.0
      %v1165 = vmax.f32 %v1061, 0.0
      %v1166 = vmax.f32 %v1062, 0.0
      %v1167 = vmax.f32 %v1063, 0.0
      %v1168 = vmax.f32 %v1064, 0.0
      %v1169 = vmax.f32 %v1065, 0.0
      %v1170 = vmax.f32 %v1066, 0.0
      %v1171 = vpack.c.bf16 %v1067, %v1067
      %v1172 = vpack.c.bf16 %v1068, %v1068
      %v1173 = vpack.c.bf16 %v1069, %v1069
      %v1174 = vpack.c.bf16 %v1070, %v1070
      %v1175 = vpack.c.bf16 %v1071, %v1071
      %v1176 = vpack.c.bf16 %v1072, %v1072
      %v1177 = vpack.c.bf16 %v1073, %v1073
      %v1178 = vpack.c.bf16 %v1074, %v1074
      %v1179 = vpack.c.bf16 %v1075, %v1075
      %v1180 = vpack.c.bf16 %v1076, %v1076
      %v1181 = vpack.c.bf16 %v1077, %v1077
      %v1182 = vpack.c.bf16 %v1078, %v1078
      %v1183 = vpack.c.bf16 %v1079, %v1079
      %v1184 = vpack.c.bf16 %v1080, %v1080
      %v1185 = vpack.c.bf16 %v1081, %v1081
      %v1186 = vpack.c.bf16 %v1082, %v1082
      %v1187 = vpack.c.bf16 %v1083, %v1083
      %v1188 = vpack.c.bf16 %v1084, %v1084
      %v1189 = vpack.c.bf16 %v1085, %v1085
      %v1190 = vpack.c.bf16 %v1086, %v1086
      %v1191 = vpack.c.bf16 %v1087, %v1087
      %v1192 = vpack.c.bf16 %v1088, %v1088
      %v1193 = vpack.c.bf16 %v1089, %v1089
      %v1194 = vpack.c.bf16 %v1090, %v1090
      %v1195 = vpack.c.bf16 %v1091, %v1091
      %v1196 = vpack.c.bf16 %v1092, %v1092
      %v1197 = vpack.c.bf16 %v1093, %v1093
      %v1198 = vpack.c.bf16 %v1094, %v1094
      %v1199 = vpack.c.bf16 %v1095, %v1095
      %v1200 = vpack.c.bf16 %v1096, %v1096
      %v1201 = vpack.c.bf16 %v1097, %v1097
      %v1202 = vpack.c.bf16 %v1098, %v1098
      %v1203 = vpack.c.bf16 %v1099, %v1099
      %v1204 = vpack.c.bf16 %v1100, %v1100
      %v1205 = vpack.c.bf16 %v1101, %v1101
      %v1206 = vpack.c.bf16 %v1102, %v1102
      %v1207 = vpack.c.bf16 %v1103, %v1103
      %v1208 = vpack.c.bf16 %v1104, %v1104
      %v1209 = vpack.c.bf16 %v1105, %v1105
      %v1210 = vpack.c.bf16 %v1106, %v1106
      %v1211 = vpack.c.bf16 %v1107, %v1107
      %v1212 = vpack.c.bf16 %v1108, %v1108
      %v1213 = vpack.c.bf16 %v1109, %v1109
      %v1214 = vpack.c.bf16 %v1110, %v1110
      %v1215 = vpack.c.bf16 %v1111, %v1111
      %v1216 = vpack.c.bf16 %v1112, %v1112
      %v1217 = vpack.c.bf16 %v1113, %v1113
      %v1218 = vpack.c.bf16 %v1114, %v1114
      %v1219 = vpack.c.bf16 %v1115, %v1115
      %v1220 = vpack.c.bf16 %v1116, %v1116
      %v1221 = vpack.c.bf16 %v1117, %v1117
      %v1222 = vpack.c.bf16 %v1118, %v1118
      %v1223 = vpack.c.bf16 %v1119, %v1119
      %v1224 = vpack.c.bf16 %v1120, %v1120
      %v1225 = vpack.c.bf16 %v1121, %v1121
      %v1226 = vpack.c.bf16 %v1122, %v1122
      %v1227 = vpack.c.bf16 %v1123, %v1123
      %v1228 = vpack.c.bf16 %v1124, %v1124
      %v1229 = vpack.c.bf16 %v1125, %v1125
      %v1230 = vpack.c.bf16 %v1126, %v1126
      %v1231 = vpack.c.bf16 %v1127, %v1127
      %v1232 = vpack.c.bf16 %v1128, %v1128
      %v1233 = vpack.c.bf16 %v1129, %v1129
      %v1234 = vpack.c.bf16 %v1130, %v1130
      %v1235 = vpack.c.bf16 %v1131, %v1131
      %v1236 = vpack.c.bf16 %v1132, %v1132
      %v1237 = vpack.c.bf16 %v1133, %v1133
      %v1238 = vpack.c.bf16 %v1134, %v1134
      %v1239 = vpack.c.bf16 %v1135, %v1135
      %v1240 = vpack.c.bf16 %v1136, %v1136
      %v1241 = vpack.c.bf16 %v1137, %v1137
      %v1242 = vpack.c.bf16 %v1138, %v1138
      %v1243 = vpack.c.bf16 %v1139, %v1139
      %v1244 = vpack.c.bf16 %v1140, %v1140
      %v1245 = vpack.c.bf16 %v1141, %v1141
      %v1246 = vpack.c.bf16 %v1142, %v1142
      %v1247 = vpack.c.bf16 %v1143, %v1143
      %v1248 = vpack.c.bf16 %v1144, %v1144
      %v1249 = vpack.c.bf16 %v1145, %v1145
      %v1250 = vpack.c.bf16 %v1146, %v1146
      %v1251 = vpack.c.bf16 %v1147, %v1147
      %v1252 = vpack.c.bf16 %v1148, %v1148
      %v1253 = vpack.c.bf16 %v1149, %v1149
      %v1254 = vpack.c.bf16 %v1150, %v1150
      %v1255 = vpack.c.bf16 %v1151, %v1151
      %v1256 = vpack.c.bf16 %v1152, %v1152
      %v1257 = vpack.c.bf16 %v1153, %v1153
      %v1258 = vpack.c.bf16 %v1154, %v1154
      %v1259 = vpack.c.bf16 %v1155, %v1155
      %v1260 = vpack.c.bf16 %v1156, %v1156
      %v1261 = vpack.c.bf16 %v1157, %v1157
      %v1262 = vpack.c.bf16 %v1158, %v1158
      %v1263 = vpack.c.bf16 %v1159, %v1159
      %v1264 = vpack.c.bf16 %v1160, %v1160
      %v1265 = vpack.c.bf16 %v1161, %v1161
      %v1266 = vpack.c.bf16 %v1162, %v1162
      %v1267 = vpack.c.bf16 %v1163, %v1163
      %v1268 = vpack.c.bf16 %v1164, %v1164
      %v1269 = vpack.c.bf16 %v1165, %v1165
      %v1270 = vpack.c.bf16 %v1166, %v1166
      %v1271 = vpack.c.bf16 %v1167, %v1167
      %v1272 = vpack.c.bf16 %v1168, %v1168
      %v1273 = vpack.c.bf16 %v1169, %v1169
      %v1274 = vpack.c.bf16 %v1170, %v1170
      %v1275 = vld [vmem:[%s7] sm:$0xf]
      %v1276 = vld [vmem:[%s7 + $0x4] sm:$0xf]
      %v1277 = vld [vmem:[%s7 + $0x8] sm:$0xf]
      %v1278 = vld [vmem:[%s7 + $0xc] sm:$0xf]
      %v1279 = vld [vmem:[%s7 + $0x10] sm:$0xf]
      %v1280 = vld [vmem:[%s7 + $0x14] sm:$0xf]
      %v1281 = vld [vmem:[%s7 + $0x18] sm:$0xf]
      %v1282 = vld [vmem:[%s7 + $0x1c] sm:$0xf]
      %v1283 = vld [vmem:[%s8] sm:$0x1]
      %v1285 = vperm.slane %v1283, 0
      %v1391 = vunpack.c.l.b16 %v1171
      %v1392 = vunpack.c.l.b16 %v1172
      %v1393 = vunpack.c.l.b16 %v1173
      %v1394 = vunpack.c.l.b16 %v1174
      %v1395 = vunpack.c.l.b16 %v1175
      %v1396 = vunpack.c.l.b16 %v1176
      %v1397 = vunpack.c.l.b16 %v1177
      %v1398 = vunpack.c.l.b16 %v1178
      %v1399 = vunpack.c.l.b16 %v1179
      %v1400 = vunpack.c.l.b16 %v1180
      %v1401 = vunpack.c.l.b16 %v1181
      %v1402 = vunpack.c.l.b16 %v1182
      %v1403 = vunpack.c.l.b16 %v1183
      %v1404 = vunpack.c.l.b16 %v1184
      %v1405 = vunpack.c.l.b16 %v1185
      %v1406 = vunpack.c.l.b16 %v1186
      %v1407 = vunpack.c.l.b16 %v1187
      %v1408 = vunpack.c.l.b16 %v1188
      %v1409 = vunpack.c.l.b16 %v1189
      %v1410 = vunpack.c.l.b16 %v1190
      %v1411 = vunpack.c.l.b16 %v1191
      %v1412 = vunpack.c.l.b16 %v1192
      %v1413 = vunpack.c.l.b16 %v1193
      %v1414 = vunpack.c.l.b16 %v1194
      %v1415 = vunpack.c.l.b16 %v1195
      %v1416 = vunpack.c.l.b16 %v1196
      %v1417 = vunpack.c.l.b16 %v1197
      %v1418 = vunpack.c.l.b16 %v1198
      %v1419 = vunpack.c.l.b16 %v1199
      %v1420 = vunpack.c.l.b16 %v1200
      %v1421 = vunpack.c.l.b16 %v1201
      %v1422 = vunpack.c.l.b16 %v1202
      %v1423 = vunpack.c.l.b16 %v1203
      %v1424 = vunpack.c.l.b16 %v1204
      %v1425 = vunpack.c.l.b16 %v1205
      %v1426 = vunpack.c.l.b16 %v1206
      %v1427 = vunpack.c.l.b16 %v1207
      %v1428 = vunpack.c.l.b16 %v1208
      %v1429 = vunpack.c.l.b16 %v1209
      %v1430 = vunpack.c.l.b16 %v1210
      %v1431 = vunpack.c.l.b16 %v1211
      %v1432 = vunpack.c.l.b16 %v1212
      %v1433 = vunpack.c.l.b16 %v1213
      %v1434 = vunpack.c.l.b16 %v1214
      %v1435 = vunpack.c.l.b16 %v1215
      %v1436 = vunpack.c.l.b16 %v1216
      %v1437 = vunpack.c.l.b16 %v1217
      %v1438 = vunpack.c.l.b16 %v1218
      %v1439 = vunpack.c.l.b16 %v1219
      %v1440 = vunpack.c.l.b16 %v1220
      %v1441 = vunpack.c.l.b16 %v1221
      %v1442 = vunpack.c.l.b16 %v1222
      %v1443 = vunpack.c.l.b16 %v1223
      %v1444 = vunpack.c.l.b16 %v1224
      %v1445 = vunpack.c.l.b16 %v1225
      %v1446 = vunpack.c.l.b16 %v1226
      %v1447 = vunpack.c.l.b16 %v1227
      %v1448 = vunpack.c.l.b16 %v1228
      %v1449 = vunpack.c.l.b16 %v1229
      %v1450 = vunpack.c.l.b16 %v1230
      %v1451 = vunpack.c.l.b16 %v1231
      %v1452 = vunpack.c.l.b16 %v1232
      %v1453 = vunpack.c.l.b16 %v1233
      %v1454 = vunpack.c.l.b16 %v1234
      %v1455 = vunpack.c.l.b16 %v1235
      %v1456 = vunpack.c.l.b16 %v1236
      %v1457 = vunpack.c.l.b16 %v1237
      %v1458 = vunpack.c.l.b16 %v1238
      %v1459 = vunpack.c.l.b16 %v1239
      %v1460 = vunpack.c.l.b16 %v1240
      %v1461 = vunpack.c.l.b16 %v1241
      %v1462 = vunpack.c.l.b16 %v1242
      %v1463 = vunpack.c.l.b16 %v1243
      %v1464 = vunpack.c.l.b16 %v1244
      %v1465 = vunpack.c.l.b16 %v1245
      %v1466 = vunpack.c.l.b16 %v1246
      %v1467 = vunpack.c.l.b16 %v1247
      %v1468 = vunpack.c.l.b16 %v1248
      %v1469 = vunpack.c.l.b16 %v1249
      %v1470 = vunpack.c.l.b16 %v1250
      %v1471 = vunpack.c.l.b16 %v1251
      %v1472 = vunpack.c.l.b16 %v1252
      %v1473 = vunpack.c.l.b16 %v1253
      %v1474 = vunpack.c.l.b16 %v1254
      %v1475 = vunpack.c.l.b16 %v1255
      %v1476 = vunpack.c.l.b16 %v1256
      %v1477 = vunpack.c.l.b16 %v1257
      %v1478 = vunpack.c.l.b16 %v1258
      %v1479 = vunpack.c.l.b16 %v1259
      %v1480 = vunpack.c.l.b16 %v1260
      %v1481 = vunpack.c.l.b16 %v1261
      %v1482 = vunpack.c.l.b16 %v1262
      %v1483 = vunpack.c.l.b16 %v1263
      %v1484 = vunpack.c.l.b16 %v1264
      %v1485 = vunpack.c.l.b16 %v1265
      %v1486 = vunpack.c.l.b16 %v1266
      %v1487 = vunpack.c.l.b16 %v1267
      %v1488 = vunpack.c.l.b16 %v1268
      %v1489 = vunpack.c.l.b16 %v1269
      %v1490 = vunpack.c.l.b16 %v1270
      %v1491 = vunpack.c.l.b16 %v1271
      %v1492 = vunpack.c.l.b16 %v1272
      %v1493 = vunpack.c.l.b16 %v1273
      %v1494 = vunpack.c.l.b16 %v1274
      %v1495 = vpack.c.b16 %v1392, %v1391
      %v1496 = vpack.c.b16 %v1394, %v1393
      %v1497 = vpack.c.b16 %v1396, %v1395
      %v1498 = vpack.c.b16 %v1398, %v1397
      %v1499 = vpack.c.b16 %v1400, %v1399
      %v1500 = vpack.c.b16 %v1402, %v1401
      %v1501 = vpack.c.b16 %v1404, %v1403
      %v1502 = vpack.c.b16 %v1406, %v1405
      %v1503 = vpack.c.b16 %v1408, %v1407
      %v1504 = vpack.c.b16 %v1410, %v1409
      %v1505 = vpack.c.b16 %v1412, %v1411
      %v1506 = vpack.c.b16 %v1414, %v1413
      %v1507 = vpack.c.b16 %v1416, %v1415
      %v1508 = vpack.c.b16 %v1418, %v1417
      %v1509 = vpack.c.b16 %v1420, %v1419
      %v1510 = vpack.c.b16 %v1422, %v1421
      %v1511 = vpack.c.b16 %v1424, %v1423
      %v1512 = vpack.c.b16 %v1426, %v1425
      %v1513 = vpack.c.b16 %v1428, %v1427
      %v1514 = vpack.c.b16 %v1430, %v1429
      %v1515 = vpack.c.b16 %v1432, %v1431
      %v1516 = vpack.c.b16 %v1434, %v1433
      %v1517 = vpack.c.b16 %v1436, %v1435
      %v1518 = vpack.c.b16 %v1438, %v1437
      %v1519 = vpack.c.b16 %v1440, %v1439
      %v1520 = vpack.c.b16 %v1442, %v1441
      %v1521 = vpack.c.b16 %v1444, %v1443
      %v1522 = vpack.c.b16 %v1446, %v1445
      %v1523 = vpack.c.b16 %v1448, %v1447
      %v1524 = vpack.c.b16 %v1450, %v1449
      %v1525 = vpack.c.b16 %v1452, %v1451
      %v1526 = vpack.c.b16 %v1454, %v1453
      %v1527 = vpack.c.b16 %v1456, %v1455
      %v1528 = vpack.c.b16 %v1458, %v1457
      %v1529 = vpack.c.b16 %v1460, %v1459
      %v1530 = vpack.c.b16 %v1462, %v1461
      %v1531 = vpack.c.b16 %v1464, %v1463
      %v1532 = vpack.c.b16 %v1466, %v1465
      %v1533 = vpack.c.b16 %v1468, %v1467
      %v1534 = vpack.c.b16 %v1470, %v1469
      %v1535 = vpack.c.b16 %v1472, %v1471
      %v1536 = vpack.c.b16 %v1474, %v1473
      %v1537 = vpack.c.b16 %v1476, %v1475
      %v1538 = vpack.c.b16 %v1478, %v1477
      %v1539 = vpack.c.b16 %v1480, %v1479
      %v1540 = vpack.c.b16 %v1482, %v1481
      %v1541 = vpack.c.b16 %v1484, %v1483
      %v1542 = vpack.c.b16 %v1486, %v1485
      %v1543 = vpack.c.b16 %v1488, %v1487
      %v1544 = vpack.c.b16 %v1490, %v1489
      %v1545 = vpack.c.b16 %v1492, %v1491
      %v1546 = vpack.c.b16 %v1494, %v1493
      %v1555 = vunpack.c.l.b16 %v1275
      %v1556 = vunpack.c.l.b16 %v1276
      %v1557 = vunpack.c.l.b16 %v1277
      %v1558 = vunpack.c.l.b16 %v1278
      %v1559 = vunpack.c.l.b16 %v1279
      %v1560 = vunpack.c.l.b16 %v1280
      %v1561 = vunpack.c.l.b16 %v1281
      %v1562 = vunpack.c.l.b16 %v1282
      %v1563 = vpack.c.b16 %v1556, %v1555
      %v1564 = vpack.c.b16 %v1558, %v1557
      %v1565 = vpack.c.b16 %v1560, %v1559
      %v1566 = vpack.c.b16 %v1562, %v1561
      %vm1571 = vcmask 523264
      %v1573 = vsel %vm1571, %v1495, 0
      %v1576 = vsel %vm1571, %v1496, 0
      %v1579 = vsel %vm1571, %v1497, 0
      %v1582 = vsel %vm1571, %v1498, 0
      %v1585 = vsel %vm1571, %v1499, 0
      %v1588 = vsel %vm1571, %v1500, 0
      %v1591 = vsel %vm1571, %v1501, 0
      %v1594 = vsel %vm1571, %v1502, 0
      %v1597 = vsel %vm1571, %v1503, 0
      %v1600 = vsel %vm1571, %v1504, 0
      %v1603 = vsel %vm1571, %v1505, 0
      %v1606 = vsel %vm1571, %v1506, 0
      %v1609 = vsel %vm1571, %v1507, 0
      %v1612 = vsel %vm1571, %v1508, 0
      %v1615 = vsel %vm1571, %v1509, 0
      %v1618 = vsel %vm1571, %v1510, 0
      %v1621 = vsel %vm1571, %v1511, 0
      %v1624 = vsel %vm1571, %v1512, 0
      %v1627 = vsel %vm1571, %v1513, 0
      %v1630 = vsel %vm1571, %v1514, 0
      %v1633 = vsel %vm1571, %v1515, 0
      %v1636 = vsel %vm1571, %v1516, 0
      %v1639 = vsel %vm1571, %v1517, 0
      %v1642 = vsel %vm1571, %v1518, 0
      %v1645 = vsel %vm1571, %v1519, 0
      %v1648 = vsel %vm1571, %v1520, 0
      %v1651 = vsel %vm1571, %v1521, 0
      %v1654 = vsel %vm1571, %v1522, 0
      %v1657 = vsel %vm1571, %v1523, 0
      %v1660 = vsel %vm1571, %v1524, 0
      %v1663 = vsel %vm1571, %v1525, 0
      %v1666 = vsel %vm1571, %v1526, 0
      %v1669 = vsel %vm1571, %v1527, 0
      %v1672 = vsel %vm1571, %v1528, 0
      %v1675 = vsel %vm1571, %v1529, 0
      %v1678 = vsel %vm1571, %v1530, 0
      %v1681 = vsel %vm1571, %v1531, 0
      %v1684 = vsel %vm1571, %v1532, 0
      %v1687 = vsel %vm1571, %v1533, 0
      %v1690 = vsel %vm1571, %v1534, 0
      %v1693 = vsel %vm1571, %v1535, 0
      %v1696 = vsel %vm1571, %v1536, 0
      %v1699 = vsel %vm1571, %v1537, 0
      %v1702 = vsel %vm1571, %v1538, 0
      %v1705 = vsel %vm1571, %v1539, 0
      %v1708 = vsel %vm1571, %v1540, 0
      %v1711 = vsel %vm1571, %v1541, 0
      %v1714 = vsel %vm1571, %v1542, 0
      %v1717 = vsel %vm1571, %v1543, 0
      %v1720 = vsel %vm1571, %v1544, 0
      %v1723 = vsel %vm1571, %v1545, 0
      %v1726 = vsel %vm1571, %v1546, 0
      %1728 = vmatpush.bf16.msra.mxu0 0
      %1729 = vmatpush.bf16.msra.mxu0 0
      %1730 = vmatpush.bf16.msra.mxu0 0
      %1731 = vmatpush.bf16.msra.mxu0 0
      %1732 = vmatpush.bf16.msra.mxu0 %v1566
      %1733 = vmatpush.bf16.msra.mxu0 %v1565
      %1734 = vmatpush.bf16.msra.mxu0 %v1564
      %1735 = vmatpush.bf16.msra.mxu0 %v1563
      %1736 = vmatmul.bf16.gmra.mxu0 %v1573
      %v1737 = vpop.f32.mrf.mxu0
      %v1738 = vadd.f32 %v1285, %v1737
      %v1739 = vpop.f32.mrf.mxu0
      %v1740 = vadd.f32 %v1285, %v1739
      %1741 = vmatmul.bf16.gmra.mxu0 %v1576
      %v1742 = vpop.f32.mrf.mxu0
      %v1743 = vadd.f32 %v1285, %v1742
      %v1744 = vpop.f32.mrf.mxu0
      %v1745 = vadd.f32 %v1285, %v1744
      %1746 = vmatmul.bf16.gmra.mxu0 %v1579
      %v1747 = vpop.f32.mrf.mxu0
      %v1748 = vadd.f32 %v1285, %v1747
      %v1749 = vpop.f32.mrf.mxu0
      %v1750 = vadd.f32 %v1285, %v1749
      %1751 = vmatmul.bf16.gmra.mxu0 %v1582
      %v1752 = vpop.f32.mrf.mxu0
      %v1753 = vadd.f32 %v1285, %v1752
      %v1754 = vpop.f32.mrf.mxu0
      %v1755 = vadd.f32 %v1285, %v1754
      %1756 = vmatmul.bf16.gmra.mxu0 %v1585
      %v1757 = vpop.f32.mrf.mxu0
      %v1758 = vadd.f32 %v1285, %v1757
      %v1759 = vpop.f32.mrf.mxu0
      %v1760 = vadd.f32 %v1285, %v1759
      %1761 = vmatmul.bf16.gmra.mxu0 %v1588
      %v1762 = vpop.f32.mrf.mxu0
      %v1763 = vadd.f32 %v1285, %v1762
      %v1764 = vpop.f32.mrf.mxu0
      %v1765 = vadd.f32 %v1285, %v1764
      %1766 = vmatmul.bf16.gmra.mxu0 %v1591
      %v1767 = vpop.f32.mrf.mxu0
      %v1768 = vadd.f32 %v1285, %v1767
      %v1769 = vpop.f32.mrf.mxu0
      %v1770 = vadd.f32 %v1285, %v1769
      %1771 = vmatmul.bf16.gmra.mxu0 %v1594
      %v1772 = vpop.f32.mrf.mxu0
      %v1773 = vadd.f32 %v1285, %v1772
      %v1774 = vpop.f32.mrf.mxu0
      %v1775 = vadd.f32 %v1285, %v1774
      %1776 = vmatmul.bf16.gmra.mxu0 %v1597
      %v1777 = vpop.f32.mrf.mxu0
      %v1778 = vadd.f32 %v1285, %v1777
      %v1779 = vpop.f32.mrf.mxu0
      %v1780 = vadd.f32 %v1285, %v1779
      %1781 = vmatmul.bf16.gmra.mxu0 %v1600
      %v1782 = vpop.f32.mrf.mxu0
      %v1783 = vadd.f32 %v1285, %v1782
      %v1784 = vpop.f32.mrf.mxu0
      %v1785 = vadd.f32 %v1285, %v1784
      %1786 = vmatmul.bf16.gmra.mxu0 %v1603
      %v1787 = vpop.f32.mrf.mxu0
      %v1788 = vadd.f32 %v1285, %v1787
      %v1789 = vpop.f32.mrf.mxu0
      %v1790 = vadd.f32 %v1285, %v1789
      %1791 = vmatmul.bf16.gmra.mxu0 %v1606
      %v1792 = vpop.f32.mrf.mxu0
      %v1793 = vadd.f32 %v1285, %v1792
      %v1794 = vpop.f32.mrf.mxu0
      %v1795 = vadd.f32 %v1285, %v1794
      %1796 = vmatmul.bf16.gmra.mxu0 %v1609
      %v1797 = vpop.f32.mrf.mxu0
      %v1798 = vadd.f32 %v1285, %v1797
      %v1799 = vpop.f32.mrf.mxu0
      %v1800 = vadd.f32 %v1285, %v1799
      %1801 = vmatmul.bf16.gmra.mxu0 %v1612
      %v1802 = vpop.f32.mrf.mxu0
      %v1803 = vadd.f32 %v1285, %v1802
      %v1804 = vpop.f32.mrf.mxu0
      %v1805 = vadd.f32 %v1285, %v1804
      %1806 = vmatmul.bf16.gmra.mxu0 %v1615
      %v1807 = vpop.f32.mrf.mxu0
      %v1808 = vadd.f32 %v1285, %v1807
      %v1809 = vpop.f32.mrf.mxu0
      %v1810 = vadd.f32 %v1285, %v1809
      %1811 = vmatmul.bf16.gmra.mxu0 %v1618
      %v1812 = vpop.f32.mrf.mxu0
      %v1813 = vadd.f32 %v1285, %v1812
      %v1814 = vpop.f32.mrf.mxu0
      %v1815 = vadd.f32 %v1285, %v1814
      %1816 = vmatmul.bf16.gmra.mxu0 %v1621
      %v1817 = vpop.f32.mrf.mxu0
      %v1818 = vadd.f32 %v1285, %v1817
      %v1819 = vpop.f32.mrf.mxu0
      %v1820 = vadd.f32 %v1285, %v1819
      %1821 = vmatmul.bf16.gmra.mxu0 %v1624
      %v1822 = vpop.f32.mrf.mxu0
      %v1823 = vadd.f32 %v1285, %v1822
      %v1824 = vpop.f32.mrf.mxu0
      %v1825 = vadd.f32 %v1285, %v1824
      %1826 = vmatmul.bf16.gmra.mxu0 %v1627
      %v1827 = vpop.f32.mrf.mxu0
      %v1828 = vadd.f32 %v1285, %v1827
      %v1829 = vpop.f32.mrf.mxu0
      %v1830 = vadd.f32 %v1285, %v1829
      %1831 = vmatmul.bf16.gmra.mxu0 %v1630
      %v1832 = vpop.f32.mrf.mxu0
      %v1833 = vadd.f32 %v1285, %v1832
      %v1834 = vpop.f32.mrf.mxu0
      %v1835 = vadd.f32 %v1285, %v1834
      %1836 = vmatmul.bf16.gmra.mxu0 %v1633
      %v1837 = vpop.f32.mrf.mxu0
      %v1838 = vadd.f32 %v1285, %v1837
      %v1839 = vpop.f32.mrf.mxu0
      %v1840 = vadd.f32 %v1285, %v1839
      %1841 = vmatmul.bf16.gmra.mxu0 %v1636
      %v1842 = vpop.f32.mrf.mxu0
      %v1843 = vadd.f32 %v1285, %v1842
      %v1844 = vpop.f32.mrf.mxu0
      %v1845 = vadd.f32 %v1285, %v1844
      %1846 = vmatmul.bf16.gmra.mxu0 %v1639
      %v1847 = vpop.f32.mrf.mxu0
      %v1848 = vadd.f32 %v1285, %v1847
      %v1849 = vpop.f32.mrf.mxu0
      %v1850 = vadd.f32 %v1285, %v1849
      %1851 = vmatmul.bf16.gmra.mxu0 %v1642
      %v1852 = vpop.f32.mrf.mxu0
      %v1853 = vadd.f32 %v1285, %v1852
      %v1854 = vpop.f32.mrf.mxu0
      %v1855 = vadd.f32 %v1285, %v1854
      %1856 = vmatmul.bf16.gmra.mxu0 %v1645
      %v1857 = vpop.f32.mrf.mxu0
      %v1858 = vadd.f32 %v1285, %v1857
      %v1859 = vpop.f32.mrf.mxu0
      %v1860 = vadd.f32 %v1285, %v1859
      %1861 = vmatmul.bf16.gmra.mxu0 %v1648
      %v1862 = vpop.f32.mrf.mxu0
      %v1863 = vadd.f32 %v1285, %v1862
      %v1864 = vpop.f32.mrf.mxu0
      %v1865 = vadd.f32 %v1285, %v1864
      %1866 = vmatmul.bf16.gmra.mxu0 %v1651
      %v1867 = vpop.f32.mrf.mxu0
      %v1868 = vadd.f32 %v1285, %v1867
      %v1869 = vpop.f32.mrf.mxu0
      %v1870 = vadd.f32 %v1285, %v1869
      %1871 = vmatmul.bf16.gmra.mxu0 %v1654
      %v1872 = vpop.f32.mrf.mxu0
      %v1873 = vadd.f32 %v1285, %v1872
      %v1874 = vpop.f32.mrf.mxu0
      %v1875 = vadd.f32 %v1285, %v1874
      %1876 = vmatmul.bf16.gmra.mxu0 %v1657
      %v1877 = vpop.f32.mrf.mxu0
      %v1878 = vadd.f32 %v1285, %v1877
      %v1879 = vpop.f32.mrf.mxu0
      %v1880 = vadd.f32 %v1285, %v1879
      %1881 = vmatmul.bf16.gmra.mxu0 %v1660
      %v1882 = vpop.f32.mrf.mxu0
      %v1883 = vadd.f32 %v1285, %v1882
      %v1884 = vpop.f32.mrf.mxu0
      %v1885 = vadd.f32 %v1285, %v1884
      %1886 = vmatmul.bf16.gmra.mxu0 %v1663
      %v1887 = vpop.f32.mrf.mxu0
      %v1888 = vadd.f32 %v1285, %v1887
      %v1889 = vpop.f32.mrf.mxu0
      %v1890 = vadd.f32 %v1285, %v1889
      %1891 = vmatmul.bf16.gmra.mxu0 %v1666
      %v1892 = vpop.f32.mrf.mxu0
      %v1893 = vadd.f32 %v1285, %v1892
      %v1894 = vpop.f32.mrf.mxu0
      %v1895 = vadd.f32 %v1285, %v1894
      %1896 = vmatmul.bf16.gmra.mxu0 %v1669
      %v1897 = vpop.f32.mrf.mxu0
      %v1898 = vadd.f32 %v1285, %v1897
      %v1899 = vpop.f32.mrf.mxu0
      %v1900 = vadd.f32 %v1285, %v1899
      %1901 = vmatmul.bf16.gmra.mxu0 %v1672
      %v1902 = vpop.f32.mrf.mxu0
      %v1903 = vadd.f32 %v1285, %v1902
      %v1904 = vpop.f32.mrf.mxu0
      %v1905 = vadd.f32 %v1285, %v1904
      %1906 = vmatmul.bf16.gmra.mxu0 %v1675
      %v1907 = vpop.f32.mrf.mxu0
      %v1908 = vadd.f32 %v1285, %v1907
      %v1909 = vpop.f32.mrf.mxu0
      %v1910 = vadd.f32 %v1285, %v1909
      %1911 = vmatmul.bf16.gmra.mxu0 %v1678
      %v1912 = vpop.f32.mrf.mxu0
      %v1913 = vadd.f32 %v1285, %v1912
      %v1914 = vpop.f32.mrf.mxu0
      %v1915 = vadd.f32 %v1285, %v1914
      %1916 = vmatmul.bf16.gmra.mxu0 %v1681
      %v1917 = vpop.f32.mrf.mxu0
      %v1918 = vadd.f32 %v1285, %v1917
      %v1919 = vpop.f32.mrf.mxu0
      %v1920 = vadd.f32 %v1285, %v1919
      %1921 = vmatmul.bf16.gmra.mxu0 %v1684
      %v1922 = vpop.f32.mrf.mxu0
      %v1923 = vadd.f32 %v1285, %v1922
      %v1924 = vpop.f32.mrf.mxu0
      %v1925 = vadd.f32 %v1285, %v1924
      %1926 = vmatmul.bf16.gmra.mxu0 %v1687
      %v1927 = vpop.f32.mrf.mxu0
      %v1928 = vadd.f32 %v1285, %v1927
      %v1929 = vpop.f32.mrf.mxu0
      %v1930 = vadd.f32 %v1285, %v1929
      %1931 = vmatmul.bf16.gmra.mxu0 %v1690
      %v1932 = vpop.f32.mrf.mxu0
      %v1933 = vadd.f32 %v1285, %v1932
      %v1934 = vpop.f32.mrf.mxu0
      %v1935 = vadd.f32 %v1285, %v1934
      %1936 = vmatmul.bf16.gmra.mxu0 %v1693
      %v1937 = vpop.f32.mrf.mxu0
      %v1938 = vadd.f32 %v1285, %v1937
      %v1939 = vpop.f32.mrf.mxu0
      %v1940 = vadd.f32 %v1285, %v1939
      %1941 = vmatmul.bf16.gmra.mxu0 %v1696
      %v1942 = vpop.f32.mrf.mxu0
      %v1943 = vadd.f32 %v1285, %v1942
      %v1944 = vpop.f32.mrf.mxu0
      %v1945 = vadd.f32 %v1285, %v1944
      %1946 = vmatmul.bf16.gmra.mxu0 %v1699
      %v1947 = vpop.f32.mrf.mxu0
      %v1948 = vadd.f32 %v1285, %v1947
      %v1949 = vpop.f32.mrf.mxu0
      %v1950 = vadd.f32 %v1285, %v1949
      %1951 = vmatmul.bf16.gmra.mxu0 %v1702
      %v1952 = vpop.f32.mrf.mxu0
      %v1953 = vadd.f32 %v1285, %v1952
      %v1954 = vpop.f32.mrf.mxu0
      %v1955 = vadd.f32 %v1285, %v1954
      %1956 = vmatmul.bf16.gmra.mxu0 %v1705
      %v1957 = vpop.f32.mrf.mxu0
      %v1958 = vadd.f32 %v1285, %v1957
      %v1959 = vpop.f32.mrf.mxu0
      %v1960 = vadd.f32 %v1285, %v1959
      %1961 = vmatmul.bf16.gmra.mxu0 %v1708
      %v1962 = vpop.f32.mrf.mxu0
      %v1963 = vadd.f32 %v1285, %v1962
      %v1964 = vpop.f32.mrf.mxu0
      %v1965 = vadd.f32 %v1285, %v1964
      %1966 = vmatmul.bf16.gmra.mxu0 %v1711
      %v1967 = vpop.f32.mrf.mxu0
      %v1968 = vadd.f32 %v1285, %v1967
      %v1969 = vpop.f32.mrf.mxu0
      %v1970 = vadd.f32 %v1285, %v1969
      %1971 = vmatmul.bf16.gmra.mxu0 %v1714
      %v1972 = vpop.f32.mrf.mxu0
      %v1973 = vadd.f32 %v1285, %v1972
      %v1974 = vpop.f32.mrf.mxu0
      %v1975 = vadd.f32 %v1285, %v1974
      %1976 = vmatmul.bf16.gmra.mxu0 %v1717
      %v1977 = vpop.f32.mrf.mxu0
      %v1978 = vadd.f32 %v1285, %v1977
      %v1979 = vpop.f32.mrf.mxu0
      %v1980 = vadd.f32 %v1285, %v1979
      %1981 = vmatmul.bf16.gmra.mxu0 %v1720
      %v1982 = vpop.f32.mrf.mxu0
      %v1983 = vadd.f32 %v1285, %v1982
      %v1984 = vpop.f32.mrf.mxu0
      %v1985 = vadd.f32 %v1285, %v1984
      %1986 = vmatmul.bf16.gmra.mxu0 %v1723
      %v1987 = vpop.f32.mrf.mxu0
      %v1988 = vadd.f32 %v1285, %v1987
      %v1989 = vpop.f32.mrf.mxu0
      %v1990 = vadd.f32 %v1285, %v1989
      %1991 = vmatmul.bf16.gmra.mxu0 %v1726
      %v1992 = vpop.f32.mrf.mxu0
      %v1993 = vadd.f32 %v1285, %v1992
      %v1994 = vpop.f32.mrf.mxu0
      %v1995 = vadd.f32 %v1285, %v1994
      %1996 = vdwg.mxu0
      %v1997 = vpack.c.bf16 %v1738, %v1738
      %v1998 = vpack.c.bf16 %v1740, %v1740
      %v1999 = vpack.c.bf16 %v1743, %v1743
      %v2000 = vpack.c.bf16 %v1745, %v1745
      %v2001 = vpack.c.bf16 %v1748, %v1748
      %v2002 = vpack.c.bf16 %v1750, %v1750
      %v2003 = vpack.c.bf16 %v1753, %v1753
      %v2004 = vpack.c.bf16 %v1755, %v1755
      %v2005 = vpack.c.bf16 %v1758, %v1758
      %v2006 = vpack.c.bf16 %v1760, %v1760
      %v2007 = vpack.c.bf16 %v1763, %v1763
      %v2008 = vpack.c.bf16 %v1765, %v1765
      %v2009 = vpack.c.bf16 %v1768, %v1768
      %v2010 = vpack.c.bf16 %v1770, %v1770
      %v2011 = vpack.c.bf16 %v1773, %v1773
      %v2012 = vpack.c.bf16 %v1775, %v1775
      %v2013 = vpack.c.bf16 %v1778, %v1778
      %v2014 = vpack.c.bf16 %v1780, %v1780
      %v2015 = vpack.c.bf16 %v1783, %v1783
      %v2016 = vpack.c.bf16 %v1785, %v1785
      %v2017 = vpack.c.bf16 %v1788, %v1788
      %v2018 = vpack.c.bf16 %v1790, %v1790
      %v2019 = vpack.c.bf16 %v1793, %v1793
      %v2020 = vpack.c.bf16 %v1795, %v1795
      %v2021 = vpack.c.bf16 %v1798, %v1798
      %v2022 = vpack.c.bf16 %v1800, %v1800
      %v2023 = vpack.c.bf16 %v1803, %v1803
      %v2024 = vpack.c.bf16 %v1805, %v1805
      %v2025 = vpack.c.bf16 %v1808, %v1808
      %v2026 = vpack.c.bf16 %v1810, %v1810
      %v2027 = vpack.c.bf16 %v1813, %v1813
      %v2028 = vpack.c.bf16 %v1815, %v1815
      %v2029 = vpack.c.bf16 %v1818, %v1818
      %v2030 = vpack.c.bf16 %v1820, %v1820
      %v2031 = vpack.c.bf16 %v1823, %v1823
      %v2032 = vpack.c.bf16 %v1825, %v1825
      %v2033 = vpack.c.bf16 %v1828, %v1828
      %v2034 = vpack.c.bf16 %v1830, %v1830
      %v2035 = vpack.c.bf16 %v1833, %v1833
      %v2036 = vpack.c.bf16 %v1835, %v1835
      %v2037 = vpack.c.bf16 %v1838, %v1838
      %v2038 = vpack.c.bf16 %v1840, %v1840
      %v2039 = vpack.c.bf16 %v1843, %v1843
      %v2040 = vpack.c.bf16 %v1845, %v1845
      %v2041 = vpack.c.bf16 %v1848, %v1848
      %v2042 = vpack.c.bf16 %v1850, %v1850
      %v2043 = vpack.c.bf16 %v1853, %v1853
      %v2044 = vpack.c.bf16 %v1855, %v1855
      %v2045 = vpack.c.bf16 %v1858, %v1858
      %v2046 = vpack.c.bf16 %v1860, %v1860
      %v2047 = vpack.c.bf16 %v1863, %v1863
      %v2048 = vpack.c.bf16 %v1865, %v1865
      %v2049 = vpack.c.bf16 %v1868, %v1868
      %v2050 = vpack.c.bf16 %v1870, %v1870
      %v2051 = vpack.c.bf16 %v1873, %v1873
      %v2052 = vpack.c.bf16 %v1875, %v1875
      %v2053 = vpack.c.bf16 %v1878, %v1878
      %v2054 = vpack.c.bf16 %v1880, %v1880
      %v2055 = vpack.c.bf16 %v1883, %v1883
      %v2056 = vpack.c.bf16 %v1885, %v1885
      %v2057 = vpack.c.bf16 %v1888, %v1888
      %v2058 = vpack.c.bf16 %v1890, %v1890
      %v2059 = vpack.c.bf16 %v1893, %v1893
      %v2060 = vpack.c.bf16 %v1895, %v1895
      %v2061 = vpack.c.bf16 %v1898, %v1898
      %v2062 = vpack.c.bf16 %v1900, %v1900
      %v2063 = vpack.c.bf16 %v1903, %v1903
      %v2064 = vpack.c.bf16 %v1905, %v1905
      %v2065 = vpack.c.bf16 %v1908, %v1908
      %v2066 = vpack.c.bf16 %v1910, %v1910
      %v2067 = vpack.c.bf16 %v1913, %v1913
      %v2068 = vpack.c.bf16 %v1915, %v1915
      %v2069 = vpack.c.bf16 %v1918, %v1918
      %v2070 = vpack.c.bf16 %v1920, %v1920
      %v2071 = vpack.c.bf16 %v1923, %v1923
      %v2072 = vpack.c.bf16 %v1925, %v1925
      %v2073 = vpack.c.bf16 %v1928, %v1928
      %v2074 = vpack.c.bf16 %v1930, %v1930
      %v2075 = vpack.c.bf16 %v1933, %v1933
      %v2076 = vpack.c.bf16 %v1935, %v1935
      %v2077 = vpack.c.bf16 %v1938, %v1938
      %v2078 = vpack.c.bf16 %v1940, %v1940
      %v2079 = vpack.c.bf16 %v1943, %v1943
      %v2080 = vpack.c.bf16 %v1945, %v1945
      %v2081 = vpack.c.bf16 %v1948, %v1948
      %v2082 = vpack.c.bf16 %v1950, %v1950
      %v2083 = vpack.c.bf16 %v1953, %v1953
      %v2084 = vpack.c.bf16 %v1955, %v1955
      %v2085 = vpack.c.bf16 %v1958, %v1958
      %v2086 = vpack.c.bf16 %v1960, %v1960
      %v2087 = vpack.c.bf16 %v1963, %v1963
      %v2088 = vpack.c.bf16 %v1965, %v1965
      %v2089 = vpack.c.bf16 %v1968, %v1968
      %v2090 = vpack.c.bf16 %v1970, %v1970
      %v2091 = vpack.c.bf16 %v1973, %v1973
      %v2092 = vpack.c.bf16 %v1975, %v1975
      %v2093 = vpack.c.bf16 %v1978, %v1978
      %v2094 = vpack.c.bf16 %v1980, %v1980
      %v2095 = vpack.c.bf16 %v1983, %v1983
      %v2096 = vpack.c.bf16 %v1985, %v1985
      %v2097 = vpack.c.bf16 %v1988, %v1988
      %v2098 = vpack.c.bf16 %v1990, %v1990
      %v2099 = vpack.c.bf16 %v1993, %v1993
      %v2100 = vpack.c.bf16 %v1995, %v1995
      %v2101 = vunpack.c.l.bf16 %v1997
      %v2102 = vunpack.c.l.bf16 %v1998
      %v2103 = vunpack.c.l.bf16 %v1999
      %v2104 = vunpack.c.l.bf16 %v2000
      %v2105 = vunpack.c.l.bf16 %v2001
      %v2106 = vunpack.c.l.bf16 %v2002
      %v2107 = vunpack.c.l.bf16 %v2003
      %v2108 = vunpack.c.l.bf16 %v2004
      %v2109 = vunpack.c.l.bf16 %v2005
      %v2110 = vunpack.c.l.bf16 %v2006
      %v2111 = vunpack.c.l.bf16 %v2007
      %v2112 = vunpack.c.l.bf16 %v2008
      %v2113 = vunpack.c.l.bf16 %v2009
      %v2114 = vunpack.c.l.bf16 %v2010
      %v2115 = vunpack.c.l.bf16 %v2011
      %v2116 = vunpack.c.l.bf16 %v2012
      %v2117 = vunpack.c.l.bf16 %v2013
      %v2118 = vunpack.c.l.bf16 %v2014
      %v2119 = vunpack.c.l.bf16 %v2015
      %v2120 = vunpack.c.l.bf16 %v2016
      %v2121 = vunpack.c.l.bf16 %v2017
      %v2122 = vunpack.c.l.bf16 %v2018
      %v2123 = vunpack.c.l.bf16 %v2019
      %v2124 = vunpack.c.l.bf16 %v2020
      %v2125 = vunpack.c.l.bf16 %v2021
      %v2126 = vunpack.c.l.bf16 %v2022
      %v2127 = vunpack.c.l.bf16 %v2023
      %v2128 = vunpack.c.l.bf16 %v2024
      %v2129 = vunpack.c.l.bf16 %v2025
      %v2130 = vunpack.c.l.bf16 %v2026
      %v2131 = vunpack.c.l.bf16 %v2027
      %v2132 = vunpack.c.l.bf16 %v2028
      %v2133 = vunpack.c.l.bf16 %v2029
      %v2134 = vunpack.c.l.bf16 %v2030
      %v2135 = vunpack.c.l.bf16 %v2031
      %v2136 = vunpack.c.l.bf16 %v2032
      %v2137 = vunpack.c.l.bf16 %v2033
      %v2138 = vunpack.c.l.bf16 %v2034
      %v2139 = vunpack.c.l.bf16 %v2035
      %v2140 = vunpack.c.l.bf16 %v2036
      %v2141 = vunpack.c.l.bf16 %v2037
      %v2142 = vunpack.c.l.bf16 %v2038
      %v2143 = vunpack.c.l.bf16 %v2039
      %v2144 = vunpack.c.l.bf16 %v2040
      %v2145 = vunpack.c.l.bf16 %v2041
      %v2146 = vunpack.c.l.bf16 %v2042
      %v2147 = vunpack.c.l.bf16 %v2043
      %v2148 = vunpack.c.l.bf16 %v2044
      %v2149 = vunpack.c.l.bf16 %v2045
      %v2150 = vunpack.c.l.bf16 %v2046
      %v2151 = vunpack.c.l.bf16 %v2047
      %v2152 = vunpack.c.l.bf16 %v2048
      %v2153 = vunpack.c.l.bf16 %v2049
      %v2154 = vunpack.c.l.bf16 %v2050
      %v2155 = vunpack.c.l.bf16 %v2051
      %v2156 = vunpack.c.l.bf16 %v2052
      %v2157 = vunpack.c.l.bf16 %v2053
      %v2158 = vunpack.c.l.bf16 %v2054
      %v2159 = vunpack.c.l.bf16 %v2055
      %v2160 = vunpack.c.l.bf16 %v2056
      %v2161 = vunpack.c.l.bf16 %v2057
      %v2162 = vunpack.c.l.bf16 %v2058
      %v2163 = vunpack.c.l.bf16 %v2059
      %v2164 = vunpack.c.l.bf16 %v2060
      %v2165 = vunpack.c.l.bf16 %v2061
      %v2166 = vunpack.c.l.bf16 %v2062
      %v2167 = vunpack.c.l.bf16 %v2063
      %v2168 = vunpack.c.l.bf16 %v2064
      %v2169 = vunpack.c.l.bf16 %v2065
      %v2170 = vunpack.c.l.bf16 %v2066
      %v2171 = vunpack.c.l.bf16 %v2067
      %v2172 = vunpack.c.l.bf16 %v2068
      %v2173 = vunpack.c.l.bf16 %v2069
      %v2174 = vunpack.c.l.bf16 %v2070
      %v2175 = vunpack.c.l.bf16 %v2071
      %v2176 = vunpack.c.l.bf16 %v2072
      %v2177 = vunpack.c.l.bf16 %v2073
      %v2178 = vunpack.c.l.bf16 %v2074
      %v2179 = vunpack.c.l.bf16 %v2075
      %v2180 = vunpack.c.l.bf16 %v2076
      %v2181 = vunpack.c.l.bf16 %v2077
      %v2182 = vunpack.c.l.bf16 %v2078
      %v2183 = vunpack.c.l.bf16 %v2079
      %v2184 = vunpack.c.l.bf16 %v2080
      %v2185 = vunpack.c.l.bf16 %v2081
      %v2186 = vunpack.c.l.bf16 %v2082
      %v2187 = vunpack.c.l.bf16 %v2083
      %v2188 = vunpack.c.l.bf16 %v2084
      %v2189 = vunpack.c.l.bf16 %v2085
      %v2190 = vunpack.c.l.bf16 %v2086
      %v2191 = vunpack.c.l.bf16 %v2087
      %v2192 = vunpack.c.l.bf16 %v2088
      %v2193 = vunpack.c.l.bf16 %v2089
      %v2194 = vunpack.c.l.bf16 %v2090
      %v2195 = vunpack.c.l.bf16 %v2091
      %v2196 = vunpack.c.l.bf16 %v2092
      %v2197 = vunpack.c.l.bf16 %v2093
      %v2198 = vunpack.c.l.bf16 %v2094
      %v2199 = vunpack.c.l.bf16 %v2095
      %v2200 = vunpack.c.l.bf16 %v2096
      %v2201 = vunpack.c.l.bf16 %v2097
      %v2202 = vunpack.c.l.bf16 %v2098
      %v2203 = vunpack.c.l.bf16 %v2099
      %v2204 = vunpack.c.l.bf16 %v2100
      %v2205 = vmax.f32 %v2101, 0.0
      %v2206 = vmax.f32 %v2102, 0.0
      %v2207 = vmax.f32 %v2103, 0.0
      %v2208 = vmax.f32 %v2104, 0.0
      %v2209 = vmax.f32 %v2105, 0.0
      %v2210 = vmax.f32 %v2106, 0.0
      %v2211 = vmax.f32 %v2107, 0.0
      %v2212 = vmax.f32 %v2108, 0.0
      %v2213 = vmax.f32 %v2109, 0.0
      %v2214 = vmax.f32 %v2110, 0.0
      %v2215 = vmax.f32 %v2111, 0.0
      %v2216 = vmax.f32 %v2112, 0.0
      %v2217 = vmax.f32 %v2113, 0.0
      %v2218 = vmax.f32 %v2114, 0.0
      %v2219 = vmax.f32 %v2115, 0.0
      %v2220 = vmax.f32 %v2116, 0.0
      %v2221 = vmax.f32 %v2117, 0.0
      %v2222 = vmax.f32 %v2118, 0.0
      %v2223 = vmax.f32 %v2119, 0.0
      %v2224 = vmax.f32 %v2120, 0.0
      %v2225 = vmax.f32 %v2121, 0.0
      %v2226 = vmax.f32 %v2122, 0.0
      %v2227 = vmax.f32 %v2123, 0.0
      %v2228 = vmax.f32 %v2124, 0.0
      %v2229 = vmax.f32 %v2125, 0.0
      %v2230 = vmax.f32 %v2126, 0.0
      %v2231 = vmax.f32 %v2127, 0.0
      %v2232 = vmax.f32 %v2128, 0.0
      %v2233 = vmax.f32 %v2129, 0.0
      %v2234 = vmax.f32 %v2130, 0.0
      %v2235 = vmax.f32 %v2131, 0.0
      %v2236 = vmax.f32 %v2132, 0.0
      %v2237 = vmax.f32 %v2133, 0.0
      %v2238 = vmax.f32 %v2134, 0.0
      %v2239 = vmax.f32 %v2135, 0.0
      %v2240 = vmax.f32 %v2136, 0.0
      %v2241 = vmax.f32 %v2137, 0.0
      %v2242 = vmax.f32 %v2138, 0.0
      %v2243 = vmax.f32 %v2139, 0.0
      %v2244 = vmax.f32 %v2140, 0.0
      %v2245 = vmax.f32 %v2141, 0.0
      %v2246 = vmax.f32 %v2142, 0.0
      %v2247 = vmax.f32 %v2143, 0.0
      %v2248 = vmax.f32 %v2144, 0.0
      %v2249 = vmax.f32 %v2145, 0.0
      %v2250 = vmax.f32 %v2146, 0.0
      %v2251 = vmax.f32 %v2147, 0.0
      %v2252 = vmax.f32 %v2148, 0.0
      %v2253 = vmax.f32 %v2149, 0.0
      %v2254 = vmax.f32 %v2150, 0.0
      %v2255 = vmax.f32 %v2151, 0.0
      %v2256 = vmax.f32 %v2152, 0.0
      %v2257 = vmax.f32 %v2153, 0.0
      %v2258 = vmax.f32 %v2154, 0.0
      %v2259 = vmax.f32 %v2155, 0.0
      %v2260 = vmax.f32 %v2156, 0.0
      %v2261 = vmax.f32 %v2157, 0.0
      %v2262 = vmax.f32 %v2158, 0.0
      %v2263 = vmax.f32 %v2159, 0.0
      %v2264 = vmax.f32 %v2160, 0.0
      %v2265 = vmax.f32 %v2161, 0.0
      %v2266 = vmax.f32 %v2162, 0.0
      %v2267 = vmax.f32 %v2163, 0.0
      %v2268 = vmax.f32 %v2164, 0.0
      %v2269 = vmax.f32 %v2165, 0.0
      %v2270 = vmax.f32 %v2166, 0.0
      %v2271 = vmax.f32 %v2167, 0.0
      %v2272 = vmax.f32 %v2168, 0.0
      %v2273 = vmax.f32 %v2169, 0.0
      %v2274 = vmax.f32 %v2170, 0.0
      %v2275 = vmax.f32 %v2171, 0.0
      %v2276 = vmax.f32 %v2172, 0.0
      %v2277 = vmax.f32 %v2173, 0.0
      %v2278 = vmax.f32 %v2174, 0.0
      %v2279 = vmax.f32 %v2175, 0.0
      %v2280 = vmax.f32 %v2176, 0.0
      %v2281 = vmax.f32 %v2177, 0.0
      %v2282 = vmax.f32 %v2178, 0.0
      %v2283 = vmax.f32 %v2179, 0.0
      %v2284 = vmax.f32 %v2180, 0.0
      %v2285 = vmax.f32 %v2181, 0.0
      %v2286 = vmax.f32 %v2182, 0.0
      %v2287 = vmax.f32 %v2183, 0.0
      %v2288 = vmax.f32 %v2184, 0.0
      %v2289 = vmax.f32 %v2185, 0.0
      %v2290 = vmax.f32 %v2186, 0.0
      %v2291 = vmax.f32 %v2187, 0.0
      %v2292 = vmax.f32 %v2188, 0.0
      %v2293 = vmax.f32 %v2189, 0.0
      %v2294 = vmax.f32 %v2190, 0.0
      %v2295 = vmax.f32 %v2191, 0.0
      %v2296 = vmax.f32 %v2192, 0.0
      %v2297 = vmax.f32 %v2193, 0.0
      %v2298 = vmax.f32 %v2194, 0.0
      %v2299 = vmax.f32 %v2195, 0.0
      %v2300 = vmax.f32 %v2196, 0.0
      %v2301 = vmax.f32 %v2197, 0.0
      %v2302 = vmax.f32 %v2198, 0.0
      %v2303 = vmax.f32 %v2199, 0.0
      %v2304 = vmax.f32 %v2200, 0.0
      %v2305 = vmax.f32 %v2201, 0.0
      %v2306 = vmax.f32 %v2202, 0.0
      %v2307 = vmax.f32 %v2203, 0.0
      %v2308 = vmax.f32 %v2204, 0.0
      %v2309 = vpack.c.bf16 %v2206, %v2205
      %v2310 = vpack.c.bf16 %v2208, %v2207
      %v2311 = vpack.c.bf16 %v2210, %v2209
      %v2312 = vpack.c.bf16 %v2212, %v2211
      %v2313 = vpack.c.bf16 %v2214, %v2213
      %v2314 = vpack.c.bf16 %v2216, %v2215
      %v2315 = vpack.c.bf16 %v2218, %v2217
      %v2316 = vpack.c.bf16 %v2220, %v2219
      %v2317 = vpack.c.bf16 %v2222, %v2221
      %v2318 = vpack.c.bf16 %v2224, %v2223
      %v2319 = vpack.c.bf16 %v2226, %v2225
      %v2320 = vpack.c.bf16 %v2228, %v2227
      %v2321 = vpack.c.bf16 %v2230, %v2229
      %v2322 = vpack.c.bf16 %v2232, %v2231
      %v2323 = vpack.c.bf16 %v2234, %v2233
      %v2324 = vpack.c.bf16 %v2236, %v2235
      %v2325 = vpack.c.bf16 %v2238, %v2237
      %v2326 = vpack.c.bf16 %v2240, %v2239
      %v2327 = vpack.c.bf16 %v2242, %v2241
      %v2328 = vpack.c.bf16 %v2244, %v2243
      %v2329 = vpack.c.bf16 %v2246, %v2245
      %v2330 = vpack.c.bf16 %v2248, %v2247
      %v2331 = vpack.c.bf16 %v2250, %v2249
      %v2332 = vpack.c.bf16 %v2252, %v2251
      %v2333 = vpack.c.bf16 %v2254, %v2253
      %v2334 = vpack.c.bf16 %v2256, %v2255
      %v2335 = vpack.c.bf16 %v2258, %v2257
      %v2336 = vpack.c.bf16 %v2260, %v2259
      %v2337 = vpack.c.bf16 %v2262, %v2261
      %v2338 = vpack.c.bf16 %v2264, %v2263
      %v2339 = vpack.c.bf16 %v2266, %v2265
      %v2340 = vpack.c.bf16 %v2268, %v2267
      %v2341 = vpack.c.bf16 %v2270, %v2269
      %v2342 = vpack.c.bf16 %v2272, %v2271
      %v2343 = vpack.c.bf16 %v2274, %v2273
      %v2344 = vpack.c.bf16 %v2276, %v2275
      %v2345 = vpack.c.bf16 %v2278, %v2277
      %v2346 = vpack.c.bf16 %v2280, %v2279
      %v2347 = vpack.c.bf16 %v2282, %v2281
      %v2348 = vpack.c.bf16 %v2284, %v2283
      %v2349 = vpack.c.bf16 %v2286, %v2285
      %v2350 = vpack.c.bf16 %v2288, %v2287
      %v2351 = vpack.c.bf16 %v2290, %v2289
      %v2352 = vpack.c.bf16 %v2292, %v2291
      %v2353 = vpack.c.bf16 %v2294, %v2293
      %v2354 = vpack.c.bf16 %v2296, %v2295
      %v2355 = vpack.c.bf16 %v2298, %v2297
      %v2356 = vpack.c.bf16 %v2300, %v2299
      %v2357 = vpack.c.bf16 %v2302, %v2301
      %v2358 = vpack.c.bf16 %v2304, %v2303
      %v2359 = vpack.c.bf16 %v2306, %v2305
      %v2360 = vpack.c.bf16 %v2308, %v2307
      %v2361 = vld [vmem:[%s9] sm:$0xf]
      %v2362 = vld [vmem:[%s9 + $0x4] sm:$0xf]
      %v2363 = vld [vmem:[%s9 + $0x8] sm:$0xf]
      %v2364 = vld [vmem:[%s9 + $0xc] sm:$0xf]
      %v2365 = vld [vmem:[%s9 + $0x10] sm:$0xf]
      %v2366 = vld [vmem:[%s9 + $0x14] sm:$0xf]
      %v2367 = vld [vmem:[%s9 + $0x18] sm:$0xf]
      %v2368 = vld [vmem:[%s9 + $0x1c] sm:$0xf]
      %v2369 = vld [vmem:[%s10] sm:$0x1]
      %v2371 = vperm.slane %v2369, 0
      %v2381 = vunpack.c.l.b16 %v2361
      %v2382 = vunpack.c.l.b16 %v2362
      %v2383 = vunpack.c.l.b16 %v2363
      %v2384 = vunpack.c.l.b16 %v2364
      %v2385 = vunpack.c.l.b16 %v2365
      %v2386 = vunpack.c.l.b16 %v2366
      %v2387 = vunpack.c.l.b16 %v2367
      %v2388 = vunpack.c.l.b16 %v2368
      %v2389 = vpack.c.b16 %v2382, %v2381
      %v2390 = vpack.c.b16 %v2384, %v2383
      %v2391 = vpack.c.b16 %v2386, %v2385
      %v2392 = vpack.c.b16 %v2388, %v2387
      %v2398 = vsel %vm1571, %v2309, 0
      %v2401 = vsel %vm1571, %v2310, 0
      %v2404 = vsel %vm1571, %v2311, 0
      %v2407 = vsel %vm1571, %v2312, 0
      %v2410 = vsel %vm1571, %v2313, 0
      %v2413 = vsel %vm1571, %v2314, 0
      %v2416 = vsel %vm1571, %v2315, 0
      %v2419 = vsel %vm1571, %v2316, 0
      %v2422 = vsel %vm1571, %v2317, 0
      %v2425 = vsel %vm1571, %v2318, 0
      %v2428 = vsel %vm1571, %v2319, 0
      %v2431 = vsel %vm1571, %v2320, 0
      %v2434 = vsel %vm1571, %v2321, 0
      %v2437 = vsel %vm1571, %v2322, 0
      %v2440 = vsel %vm1571, %v2323, 0
      %v2443 = vsel %vm1571, %v2324, 0
      %v2446 = vsel %vm1571, %v2325, 0
      %v2449 = vsel %vm1571, %v2326, 0
      %v2452 = vsel %vm1571, %v2327, 0
      %v2455 = vsel %vm1571, %v2328, 0
      %v2458 = vsel %vm1571, %v2329, 0
      %v2461 = vsel %vm1571, %v2330, 0
      %v2464 = vsel %vm1571, %v2331, 0
      %v2467 = vsel %vm1571, %v2332, 0
      %v2470 = vsel %vm1571, %v2333, 0
      %v2473 = vsel %vm1571, %v2334, 0
      %v2476 = vsel %vm1571, %v2335, 0
      %v2479 = vsel %vm1571, %v2336, 0
      %v2482 = vsel %vm1571, %v2337, 0
      %v2485 = vsel %vm1571, %v2338, 0
      %v2488 = vsel %vm1571, %v2339, 0
      %v2491 = vsel %vm1571, %v2340, 0
      %v2494 = vsel %vm1571, %v2341, 0
      %v2497 = vsel %vm1571, %v2342, 0
      %v2500 = vsel %vm1571, %v2343, 0
      %v2503 = vsel %vm1571, %v2344, 0
      %v2506 = vsel %vm1571, %v2345, 0
      %v2509 = vsel %vm1571, %v2346, 0
      %v2512 = vsel %vm1571, %v2347, 0
      %v2515 = vsel %vm1571, %v2348, 0
      %v2518 = vsel %vm1571, %v2349, 0
      %v2521 = vsel %vm1571, %v2350, 0
      %v2524 = vsel %vm1571, %v2351, 0
      %v2527 = vsel %vm1571, %v2352, 0
      %v2530 = vsel %vm1571, %v2353, 0
      %v2533 = vsel %vm1571, %v2354, 0
      %v2536 = vsel %vm1571, %v2355, 0
      %v2539 = vsel %vm1571, %v2356, 0
      %v2542 = vsel %vm1571, %v2357, 0
      %v2545 = vsel %vm1571, %v2358, 0
      %v2548 = vsel %vm1571, %v2359, 0
      %v2551 = vsel %vm1571, %v2360, 0
      %2553 = vmatpush.bf16.msra.mxu0 0
      %2554 = vmatpush.bf16.msra.mxu0 0
      %2555 = vmatpush.bf16.msra.mxu0 0
      %2556 = vmatpush.bf16.msra.mxu0 0
      %2557 = vmatpush.bf16.msra.mxu0 %v2392
      %2558 = vmatpush.bf16.msra.mxu0 %v2391
      %2559 = vmatpush.bf16.msra.mxu0 %v2390
      %2560 = vmatpush.bf16.msra.mxu0 %v2389
      %2561 = vmatmul.bf16.gmra.mxu0 %v2398
      %v2562 = vpop.f32.mrf.mxu0
      %v2563 = vadd.f32 %v2371, %v2562
      %v2564 = vpop.f32.mrf.mxu0
      %v2565 = vadd.f32 %v2371, %v2564
      %2566 = vmatmul.bf16.gmra.mxu0 %v2401
      %v2567 = vpop.f32.mrf.mxu0
      %v2568 = vadd.f32 %v2371, %v2567
      %v2569 = vpop.f32.mrf.mxu0
      %v2570 = vadd.f32 %v2371, %v2569
      %2571 = vmatmul.bf16.gmra.mxu0 %v2404
      %v2572 = vpop.f32.mrf.mxu0
      %v2573 = vadd.f32 %v2371, %v2572
      %v2574 = vpop.f32.mrf.mxu0
      %v2575 = vadd.f32 %v2371, %v2574
      %2576 = vmatmul.bf16.gmra.mxu0 %v2407
      %v2577 = vpop.f32.mrf.mxu0
      %v2578 = vadd.f32 %v2371, %v2577
      %v2579 = vpop.f32.mrf.mxu0
      %v2580 = vadd.f32 %v2371, %v2579
      %2581 = vmatmul.bf16.gmra.mxu0 %v2410
      %v2582 = vpop.f32.mrf.mxu0
      %v2583 = vadd.f32 %v2371, %v2582
      %v2584 = vpop.f32.mrf.mxu0
      %v2585 = vadd.f32 %v2371, %v2584
      %2586 = vmatmul.bf16.gmra.mxu0 %v2413
      %v2587 = vpop.f32.mrf.mxu0
      %v2588 = vadd.f32 %v2371, %v2587
      %v2589 = vpop.f32.mrf.mxu0
      %v2590 = vadd.f32 %v2371, %v2589
      %2591 = vmatmul.bf16.gmra.mxu0 %v2416
      %v2592 = vpop.f32.mrf.mxu0
      %v2593 = vadd.f32 %v2371, %v2592
      %v2594 = vpop.f32.mrf.mxu0
      %v2595 = vadd.f32 %v2371, %v2594
      %2596 = vmatmul.bf16.gmra.mxu0 %v2419
      %v2597 = vpop.f32.mrf.mxu0
      %v2598 = vadd.f32 %v2371, %v2597
      %v2599 = vpop.f32.mrf.mxu0
      %v2600 = vadd.f32 %v2371, %v2599
      %2601 = vmatmul.bf16.gmra.mxu0 %v2422
      %v2602 = vpop.f32.mrf.mxu0
      %v2603 = vadd.f32 %v2371, %v2602
      %v2604 = vpop.f32.mrf.mxu0
      %v2605 = vadd.f32 %v2371, %v2604
      %2606 = vmatmul.bf16.gmra.mxu0 %v2425
      %v2607 = vpop.f32.mrf.mxu0
      %v2608 = vadd.f32 %v2371, %v2607
      %v2609 = vpop.f32.mrf.mxu0
      %v2610 = vadd.f32 %v2371, %v2609
      %2611 = vmatmul.bf16.gmra.mxu0 %v2428
      %v2612 = vpop.f32.mrf.mxu0
      %v2613 = vadd.f32 %v2371, %v2612
      %v2614 = vpop.f32.mrf.mxu0
      %v2615 = vadd.f32 %v2371, %v2614
      %2616 = vmatmul.bf16.gmra.mxu0 %v2431
      %v2617 = vpop.f32.mrf.mxu0
      %v2618 = vadd.f32 %v2371, %v2617
      %v2619 = vpop.f32.mrf.mxu0
      %v2620 = vadd.f32 %v2371, %v2619
      %2621 = vmatmul.bf16.gmra.mxu0 %v2434
      %v2622 = vpop.f32.mrf.mxu0
      %v2623 = vadd.f32 %v2371, %v2622
      %v2624 = vpop.f32.mrf.mxu0
      %v2625 = vadd.f32 %v2371, %v2624
      %2626 = vmatmul.bf16.gmra.mxu0 %v2437
      %v2627 = vpop.f32.mrf.mxu0
      %v2628 = vadd.f32 %v2371, %v2627
      %v2629 = vpop.f32.mrf.mxu0
      %v2630 = vadd.f32 %v2371, %v2629
      %2631 = vmatmul.bf16.gmra.mxu0 %v2440
      %v2632 = vpop.f32.mrf.mxu0
      %v2633 = vadd.f32 %v2371, %v2632
      %v2634 = vpop.f32.mrf.mxu0
      %v2635 = vadd.f32 %v2371, %v2634
      %2636 = vmatmul.bf16.gmra.mxu0 %v2443
      %v2637 = vpop.f32.mrf.mxu0
      %v2638 = vadd.f32 %v2371, %v2637
      %v2639 = vpop.f32.mrf.mxu0
      %v2640 = vadd.f32 %v2371, %v2639
      %2641 = vmatmul.bf16.gmra.mxu0 %v2446
      %v2642 = vpop.f32.mrf.mxu0
      %v2643 = vadd.f32 %v2371, %v2642
      %v2644 = vpop.f32.mrf.mxu0
      %v2645 = vadd.f32 %v2371, %v2644
      %2646 = vmatmul.bf16.gmra.mxu0 %v2449
      %v2647 = vpop.f32.mrf.mxu0
      %v2648 = vadd.f32 %v2371, %v2647
      %v2649 = vpop.f32.mrf.mxu0
      %v2650 = vadd.f32 %v2371, %v2649
      %2651 = vmatmul.bf16.gmra.mxu0 %v2452
      %v2652 = vpop.f32.mrf.mxu0
      %v2653 = vadd.f32 %v2371, %v2652
      %v2654 = vpop.f32.mrf.mxu0
      %v2655 = vadd.f32 %v2371, %v2654
      %2656 = vmatmul.bf16.gmra.mxu0 %v2455
      %v2657 = vpop.f32.mrf.mxu0
      %v2658 = vadd.f32 %v2371, %v2657
      %v2659 = vpop.f32.mrf.mxu0
      %v2660 = vadd.f32 %v2371, %v2659
      %2661 = vmatmul.bf16.gmra.mxu0 %v2458
      %v2662 = vpop.f32.mrf.mxu0
      %v2663 = vadd.f32 %v2371, %v2662
      %v2664 = vpop.f32.mrf.mxu0
      %v2665 = vadd.f32 %v2371, %v2664
      %2666 = vmatmul.bf16.gmra.mxu0 %v2461
      %v2667 = vpop.f32.mrf.mxu0
      %v2668 = vadd.f32 %v2371, %v2667
      %v2669 = vpop.f32.mrf.mxu0
      %v2670 = vadd.f32 %v2371, %v2669
      %2671 = vmatmul.bf16.gmra.mxu0 %v2464
      %v2672 = vpop.f32.mrf.mxu0
      %v2673 = vadd.f32 %v2371, %v2672
      %v2674 = vpop.f32.mrf.mxu0
      %v2675 = vadd.f32 %v2371, %v2674
      %2676 = vmatmul.bf16.gmra.mxu0 %v2467
      %v2677 = vpop.f32.mrf.mxu0
      %v2678 = vadd.f32 %v2371, %v2677
      %v2679 = vpop.f32.mrf.mxu0
      %v2680 = vadd.f32 %v2371, %v2679
      %2681 = vmatmul.bf16.gmra.mxu0 %v2470
      %v2682 = vpop.f32.mrf.mxu0
      %v2683 = vadd.f32 %v2371, %v2682
      %v2684 = vpop.f32.mrf.mxu0
      %v2685 = vadd.f32 %v2371, %v2684
      %2686 = vmatmul.bf16.gmra.mxu0 %v2473
      %v2687 = vpop.f32.mrf.mxu0
      %v2688 = vadd.f32 %v2371, %v2687
      %v2689 = vpop.f32.mrf.mxu0
      %v2690 = vadd.f32 %v2371, %v2689
      %2691 = vmatmul.bf16.gmra.mxu0 %v2476
      %v2692 = vpop.f32.mrf.mxu0
      %v2693 = vadd.f32 %v2371, %v2692
      %v2694 = vpop.f32.mrf.mxu0
      %v2695 = vadd.f32 %v2371, %v2694
      %2696 = vmatmul.bf16.gmra.mxu0 %v2479
      %v2697 = vpop.f32.mrf.mxu0
      %v2698 = vadd.f32 %v2371, %v2697
      %v2699 = vpop.f32.mrf.mxu0
      %v2700 = vadd.f32 %v2371, %v2699
      %2701 = vmatmul.bf16.gmra.mxu0 %v2482
      %v2702 = vpop.f32.mrf.mxu0
      %v2703 = vadd.f32 %v2371, %v2702
      %v2704 = vpop.f32.mrf.mxu0
      %v2705 = vadd.f32 %v2371, %v2704
      %2706 = vmatmul.bf16.gmra.mxu0 %v2485
      %v2707 = vpop.f32.mrf.mxu0
      %v2708 = vadd.f32 %v2371, %v2707
      %v2709 = vpop.f32.mrf.mxu0
      %v2710 = vadd.f32 %v2371, %v2709
      %2711 = vmatmul.bf16.gmra.mxu0 %v2488
      %v2712 = vpop.f32.mrf.mxu0
      %v2713 = vadd.f32 %v2371, %v2712
      %v2714 = vpop.f32.mrf.mxu0
      %v2715 = vadd.f32 %v2371, %v2714
      %2716 = vmatmul.bf16.gmra.mxu0 %v2491
      %v2717 = vpop.f32.mrf.mxu0
      %v2718 = vadd.f32 %v2371, %v2717
      %v2719 = vpop.f32.mrf.mxu0
      %v2720 = vadd.f32 %v2371, %v2719
      %2721 = vmatmul.bf16.gmra.mxu0 %v2494
      %v2722 = vpop.f32.mrf.mxu0
      %v2723 = vadd.f32 %v2371, %v2722
      %v2724 = vpop.f32.mrf.mxu0
      %v2725 = vadd.f32 %v2371, %v2724
      %2726 = vmatmul.bf16.gmra.mxu0 %v2497
      %v2727 = vpop.f32.mrf.mxu0
      %v2728 = vadd.f32 %v2371, %v2727
      %v2729 = vpop.f32.mrf.mxu0
      %v2730 = vadd.f32 %v2371, %v2729
      %2731 = vmatmul.bf16.gmra.mxu0 %v2500
      %v2732 = vpop.f32.mrf.mxu0
      %v2733 = vadd.f32 %v2371, %v2732
      %v2734 = vpop.f32.mrf.mxu0
      %v2735 = vadd.f32 %v2371, %v2734
      %2736 = vmatmul.bf16.gmra.mxu0 %v2503
      %v2737 = vpop.f32.mrf.mxu0
      %v2738 = vadd.f32 %v2371, %v2737
      %v2739 = vpop.f32.mrf.mxu0
      %v2740 = vadd.f32 %v2371, %v2739
      %2741 = vmatmul.bf16.gmra.mxu0 %v2506
      %v2742 = vpop.f32.mrf.mxu0
      %v2743 = vadd.f32 %v2371, %v2742
      %v2744 = vpop.f32.mrf.mxu0
      %v2745 = vadd.f32 %v2371, %v2744
      %2746 = vmatmul.bf16.gmra.mxu0 %v2509
      %v2747 = vpop.f32.mrf.mxu0
      %v2748 = vadd.f32 %v2371, %v2747
      %v2749 = vpop.f32.mrf.mxu0
      %v2750 = vadd.f32 %v2371, %v2749
      %2751 = vmatmul.bf16.gmra.mxu0 %v2512
      %v2752 = vpop.f32.mrf.mxu0
      %v2753 = vadd.f32 %v2371, %v2752
      %v2754 = vpop.f32.mrf.mxu0
      %v2755 = vadd.f32 %v2371, %v2754
      %2756 = vmatmul.bf16.gmra.mxu0 %v2515
      %v2757 = vpop.f32.mrf.mxu0
      %v2758 = vadd.f32 %v2371, %v2757
      %v2759 = vpop.f32.mrf.mxu0
      %v2760 = vadd.f32 %v2371, %v2759
      %2761 = vmatmul.bf16.gmra.mxu0 %v2518
      %v2762 = vpop.f32.mrf.mxu0
      %v2763 = vadd.f32 %v2371, %v2762
      %v2764 = vpop.f32.mrf.mxu0
      %v2765 = vadd.f32 %v2371, %v2764
      %2766 = vmatmul.bf16.gmra.mxu0 %v2521
      %v2767 = vpop.f32.mrf.mxu0
      %v2768 = vadd.f32 %v2371, %v2767
      %v2769 = vpop.f32.mrf.mxu0
      %v2770 = vadd.f32 %v2371, %v2769
      %2771 = vmatmul.bf16.gmra.mxu0 %v2524
      %v2772 = vpop.f32.mrf.mxu0
      %v2773 = vadd.f32 %v2371, %v2772
      %v2774 = vpop.f32.mrf.mxu0
      %v2775 = vadd.f32 %v2371, %v2774
      %2776 = vmatmul.bf16.gmra.mxu0 %v2527
      %v2777 = vpop.f32.mrf.mxu0
      %v2778 = vadd.f32 %v2371, %v2777
      %v2779 = vpop.f32.mrf.mxu0
      %v2780 = vadd.f32 %v2371, %v2779
      %2781 = vmatmul.bf16.gmra.mxu0 %v2530
      %v2782 = vpop.f32.mrf.mxu0
      %v2783 = vadd.f32 %v2371, %v2782
      %v2784 = vpop.f32.mrf.mxu0
      %v2785 = vadd.f32 %v2371, %v2784
      %2786 = vmatmul.bf16.gmra.mxu0 %v2533
      %v2787 = vpop.f32.mrf.mxu0
      %v2788 = vadd.f32 %v2371, %v2787
      %v2789 = vpop.f32.mrf.mxu0
      %v2790 = vadd.f32 %v2371, %v2789
      %2791 = vmatmul.bf16.gmra.mxu0 %v2536
      %v2792 = vpop.f32.mrf.mxu0
      %v2793 = vadd.f32 %v2371, %v2792
      %v2794 = vpop.f32.mrf.mxu0
      %v2795 = vadd.f32 %v2371, %v2794
      %2796 = vmatmul.bf16.gmra.mxu0 %v2539
      %v2797 = vpop.f32.mrf.mxu0
      %v2798 = vadd.f32 %v2371, %v2797
      %v2799 = vpop.f32.mrf.mxu0
      %v2800 = vadd.f32 %v2371, %v2799
      %2801 = vmatmul.bf16.gmra.mxu0 %v2542
      %v2802 = vpop.f32.mrf.mxu0
      %v2803 = vadd.f32 %v2371, %v2802
      %v2804 = vpop.f32.mrf.mxu0
      %v2805 = vadd.f32 %v2371, %v2804
      %2806 = vmatmul.bf16.gmra.mxu0 %v2545
      %v2807 = vpop.f32.mrf.mxu0
      %v2808 = vadd.f32 %v2371, %v2807
      %v2809 = vpop.f32.mrf.mxu0
      %v2810 = vadd.f32 %v2371, %v2809
      %2811 = vmatmul.bf16.gmra.mxu0 %v2548
      %v2812 = vpop.f32.mrf.mxu0
      %v2813 = vadd.f32 %v2371, %v2812
      %v2814 = vpop.f32.mrf.mxu0
      %v2815 = vadd.f32 %v2371, %v2814
      %2816 = vmatmul.bf16.gmra.mxu0 %v2551
      %v2817 = vpop.f32.mrf.mxu0
      %v2818 = vadd.f32 %v2371, %v2817
      %v2819 = vpop.f32.mrf.mxu0
      %v2820 = vadd.f32 %v2371, %v2819
      %2821 = vdwg.mxu0
      %v2822 = vmax.f32 %v2563, 0.0
      %v2823 = vmax.f32 %v2565, 0.0
      %v2824 = vmax.f32 %v2568, 0.0
      %v2825 = vmax.f32 %v2570, 0.0
      %v2826 = vmax.f32 %v2573, 0.0
      %v2827 = vmax.f32 %v2575, 0.0
      %v2828 = vmax.f32 %v2578, 0.0
      %v2829 = vmax.f32 %v2580, 0.0
      %v2830 = vmax.f32 %v2583, 0.0
      %v2831 = vmax.f32 %v2585, 0.0
      %v2832 = vmax.f32 %v2588, 0.0
      %v2833 = vmax.f32 %v2590, 0.0
      %v2834 = vmax.f32 %v2593, 0.0
      %v2835 = vmax.f32 %v2595, 0.0
      %v2836 = vmax.f32 %v2598, 0.0
      %v2837 = vmax.f32 %v2600, 0.0
      %v2838 = vmax.f32 %v2603, 0.0
      %v2839 = vmax.f32 %v2605, 0.0
      %v2840 = vmax.f32 %v2608, 0.0
      %v2841 = vmax.f32 %v2610, 0.0
      %v2842 = vmax.f32 %v2613, 0.0
      %v2843 = vmax.f32 %v2615, 0.0
      %v2844 = vmax.f32 %v2618, 0.0
      %v2845 = vmax.f32 %v2620, 0.0
      %v2846 = vmax.f32 %v2623, 0.0
      %v2847 = vmax.f32 %v2625, 0.0
      %v2848 = vmax.f32 %v2628, 0.0
      %v2849 = vmax.f32 %v2630, 0.0
      %v2850 = vmax.f32 %v2633, 0.0
      %v2851 = vmax.f32 %v2635, 0.0
      %v2852 = vmax.f32 %v2638, 0.0
      %v2853 = vmax.f32 %v2640, 0.0
      %v2854 = vmax.f32 %v2643, 0.0
      %v2855 = vmax.f32 %v2645, 0.0
      %v2856 = vmax.f32 %v2648, 0.0
      %v2857 = vmax.f32 %v2650, 0.0
      %v2858 = vmax.f32 %v2653, 0.0
      %v2859 = vmax.f32 %v2655, 0.0
      %v2860 = vmax.f32 %v2658, 0.0
      %v2861 = vmax.f32 %v2660, 0.0
      %v2862 = vmax.f32 %v2663, 0.0
      %v2863 = vmax.f32 %v2665, 0.0
      %v2864 = vmax.f32 %v2668, 0.0
      %v2865 = vmax.f32 %v2670, 0.0
      %v2866 = vmax.f32 %v2673, 0.0
      %v2867 = vmax.f32 %v2675, 0.0
      %v2868 = vmax.f32 %v2678, 0.0
      %v2869 = vmax.f32 %v2680, 0.0
      %v2870 = vmax.f32 %v2683, 0.0
      %v2871 = vmax.f32 %v2685, 0.0
      %v2872 = vmax.f32 %v2688, 0.0
      %v2873 = vmax.f32 %v2690, 0.0
      %v2874 = vmax.f32 %v2693, 0.0
      %v2875 = vmax.f32 %v2695, 0.0
      %v2876 = vmax.f32 %v2698, 0.0
      %v2877 = vmax.f32 %v2700, 0.0
      %v2878 = vmax.f32 %v2703, 0.0
      %v2879 = vmax.f32 %v2705, 0.0
      %v2880 = vmax.f32 %v2708, 0.0
      %v2881 = vmax.f32 %v2710, 0.0
      %v2882 = vmax.f32 %v2713, 0.0
      %v2883 = vmax.f32 %v2715, 0.0
      %v2884 = vmax.f32 %v2718, 0.0
      %v2885 = vmax.f32 %v2720, 0.0
      %v2886 = vmax.f32 %v2723, 0.0
      %v2887 = vmax.f32 %v2725, 0.0
      %v2888 = vmax.f32 %v2728, 0.0
      %v2889 = vmax.f32 %v2730, 0.0
      %v2890 = vmax.f32 %v2733, 0.0
      %v2891 = vmax.f32 %v2735, 0.0
      %v2892 = vmax.f32 %v2738, 0.0
      %v2893 = vmax.f32 %v2740, 0.0
      %v2894 = vmax.f32 %v2743, 0.0
      %v2895 = vmax.f32 %v2745, 0.0
      %v2896 = vmax.f32 %v2748, 0.0
      %v2897 = vmax.f32 %v2750, 0.0
      %v2898 = vmax.f32 %v2753, 0.0
      %v2899 = vmax.f32 %v2755, 0.0
      %v2900 = vmax.f32 %v2758, 0.0
      %v2901 = vmax.f32 %v2760, 0.0
      %v2902 = vmax.f32 %v2763, 0.0
      %v2903 = vmax.f32 %v2765, 0.0
      %v2904 = vmax.f32 %v2768, 0.0
      %v2905 = vmax.f32 %v2770, 0.0
      %v2906 = vmax.f32 %v2773, 0.0
      %v2907 = vmax.f32 %v2775, 0.0
      %v2908 = vmax.f32 %v2778, 0.0
      %v2909 = vmax.f32 %v2780, 0.0
      %v2910 = vmax.f32 %v2783, 0.0
      %v2911 = vmax.f32 %v2785, 0.0
      %v2912 = vmax.f32 %v2788, 0.0
      %v2913 = vmax.f32 %v2790, 0.0
      %v2914 = vmax.f32 %v2793, 0.0
      %v2915 = vmax.f32 %v2795, 0.0
      %v2916 = vmax.f32 %v2798, 0.0
      %v2917 = vmax.f32 %v2800, 0.0
      %v2918 = vmax.f32 %v2803, 0.0
      %v2919 = vmax.f32 %v2805, 0.0
      %v2920 = vmax.f32 %v2808, 0.0
      %v2921 = vmax.f32 %v2810, 0.0
      %v2922 = vmax.f32 %v2813, 0.0
      %v2923 = vmax.f32 %v2815, 0.0
      %v2924 = vmax.f32 %v2818, 0.0
      %v2925 = vmax.f32 %v2820, 0.0
      %v2926 = vld [vmem:[%s11] sm:$0x1]
      %v2928 = vperm.slane %v2926, 0
      %v2930 = vmul.f32 %v2822, %v2928
      %v2931 = vmul.f32 %v2823, %v2928
      %v2932 = vmul.f32 %v2824, %v2928
      %v2933 = vmul.f32 %v2825, %v2928
      %v2934 = vmul.f32 %v2826, %v2928
      %v2935 = vmul.f32 %v2827, %v2928
      %v2936 = vmul.f32 %v2828, %v2928
      %v2937 = vmul.f32 %v2829, %v2928
      %v2938 = vmul.f32 %v2830, %v2928
      %v2939 = vmul.f32 %v2831, %v2928
      %v2940 = vmul.f32 %v2832, %v2928
      %v2941 = vmul.f32 %v2833, %v2928
      %v2942 = vmul.f32 %v2834, %v2928
      %v2943 = vmul.f32 %v2835, %v2928
      %v2944 = vmul.f32 %v2836, %v2928
      %v2945 = vmul.f32 %v2837, %v2928
      %v2946 = vmul.f32 %v2838, %v2928
      %v2947 = vmul.f32 %v2839, %v2928
      %v2948 = vmul.f32 %v2840, %v2928
      %v2949 = vmul.f32 %v2841, %v2928
      %v2950 = vmul.f32 %v2842, %v2928
      %v2951 = vmul.f32 %v2843, %v2928
      %v2952 = vmul.f32 %v2844, %v2928
      %v2953 = vmul.f32 %v2845, %v2928
      %v2954 = vmul.f32 %v2846, %v2928
      %v2955 = vmul.f32 %v2847, %v2928
      %v2956 = vmul.f32 %v2848, %v2928
      %v2957 = vmul.f32 %v2849, %v2928
      %v2958 = vmul.f32 %v2850, %v2928
      %v2959 = vmul.f32 %v2851, %v2928
      %v2960 = vmul.f32 %v2852, %v2928
      %v2961 = vmul.f32 %v2853, %v2928
      %v2962 = vmul.f32 %v2854, %v2928
      %v2963 = vmul.f32 %v2855, %v2928
      %v2964 = vmul.f32 %v2856, %v2928
      %v2965 = vmul.f32 %v2857, %v2928
      %v2966 = vmul.f32 %v2858, %v2928
      %v2967 = vmul.f32 %v2859, %v2928
      %v2968 = vmul.f32 %v2860, %v2928
      %v2969 = vmul.f32 %v2861, %v2928
      %v2970 = vmul.f32 %v2862, %v2928
      %v2971 = vmul.f32 %v2863, %v2928
      %v2972 = vmul.f32 %v2864, %v2928
      %v2973 = vmul.f32 %v2865, %v2928
      %v2974 = vmul.f32 %v2866, %v2928
      %v2975 = vmul.f32 %v2867, %v2928
      %v2976 = vmul.f32 %v2868, %v2928
      %v2977 = vmul.f32 %v2869, %v2928
      %v2978 = vmul.f32 %v2870, %v2928
      %v2979 = vmul.f32 %v2871, %v2928
      %v2980 = vmul.f32 %v2872, %v2928
      %v2981 = vmul.f32 %v2873, %v2928
      %v2982 = vmul.f32 %v2874, %v2928
      %v2983 = vmul.f32 %v2875, %v2928
      %v2984 = vmul.f32 %v2876, %v2928
      %v2985 = vmul.f32 %v2877, %v2928
      %v2986 = vmul.f32 %v2878, %v2928
      %v2987 = vmul.f32 %v2879, %v2928
      %v2988 = vmul.f32 %v2880, %v2928
      %v2989 = vmul.f32 %v2881, %v2928
      %v2990 = vmul.f32 %v2882, %v2928
      %v2991 = vmul.f32 %v2883, %v2928
      %v2992 = vmul.f32 %v2884, %v2928
      %v2993 = vmul.f32 %v2885, %v2928
      %v2994 = vmul.f32 %v2886, %v2928
      %v2995 = vmul.f32 %v2887, %v2928
      %v2996 = vmul.f32 %v2888, %v2928
      %v2997 = vmul.f32 %v2889, %v2928
      %v2998 = vmul.f32 %v2890, %v2928
      %v2999 = vmul.f32 %v2891, %v2928
      %v3000 = vmul.f32 %v2892, %v2928
      %v3001 = vmul.f32 %v2893, %v2928
      %v3002 = vmul.f32 %v2894, %v2928
      %v3003 = vmul.f32 %v2895, %v2928
      %v3004 = vmul.f32 %v2896, %v2928
      %v3005 = vmul.f32 %v2897, %v2928
      %v3006 = vmul.f32 %v2898, %v2928
      %v3007 = vmul.f32 %v2899, %v2928
      %v3008 = vmul.f32 %v2900, %v2928
      %v3009 = vmul.f32 %v2901, %v2928
      %v3010 = vmul.f32 %v2902, %v2928
      %v3011 = vmul.f32 %v2903, %v2928
      %v3012 = vmul.f32 %v2904, %v2928
      %v3013 = vmul.f32 %v2905, %v2928
      %v3014 = vmul.f32 %v2906, %v2928
      %v3015 = vmul.f32 %v2907, %v2928
      %v3016 = vmul.f32 %v2908, %v2928
      %v3017 = vmul.f32 %v2909, %v2928
      %v3018 = vmul.f32 %v2910, %v2928
      %v3019 = vmul.f32 %v2911, %v2928
      %v3020 = vmul.f32 %v2912, %v2928
      %v3021 = vmul.f32 %v2913, %v2928
      %v3022 = vmul.f32 %v2914, %v2928
      %v3023 = vmul.f32 %v2915, %v2928
      %v3024 = vmul.f32 %v2916, %v2928
      %v3025 = vmul.f32 %v2917, %v2928
      %v3026 = vmul.f32 %v2918, %v2928
      %v3027 = vmul.f32 %v2919, %v2928
      %v3028 = vmul.f32 %v2920, %v2928
      %v3029 = vmul.f32 %v2921, %v2928
      %v3030 = vmul.f32 %v2922, %v2928
      %v3031 = vmul.f32 %v2923, %v2928
      %v3032 = vmul.f32 %v2924, %v2928
      %v3033 = vmul.f32 %v2925, %v2928
      %v3034 = vld [vmem:[%s12] sm:$0x1]
      %v3036 = vperm.slane %v3034, 0
      %v3038 = vadd.f32 %v2930, %v3036
      %v3039 = vadd.f32 %v2931, %v3036
      %v3040 = vadd.f32 %v2932, %v3036
      %v3041 = vadd.f32 %v2933, %v3036
      %v3042 = vadd.f32 %v2934, %v3036
      %v3043 = vadd.f32 %v2935, %v3036
      %v3044 = vadd.f32 %v2936, %v3036
      %v3045 = vadd.f32 %v2937, %v3036
      %v3046 = vadd.f32 %v2938, %v3036
      %v3047 = vadd.f32 %v2939, %v3036
      %v3048 = vadd.f32 %v2940, %v3036
      %v3049 = vadd.f32 %v2941, %v3036
      %v3050 = vadd.f32 %v2942, %v3036
      %v3051 = vadd.f32 %v2943, %v3036
      %v3052 = vadd.f32 %v2944, %v3036
      %v3053 = vadd.f32 %v2945, %v3036
      %v3054 = vadd.f32 %v2946, %v3036
      %v3055 = vadd.f32 %v2947, %v3036
      %v3056 = vadd.f32 %v2948, %v3036
      %v3057 = vadd.f32 %v2949, %v3036
      %v3058 = vadd.f32 %v2950, %v3036
      %v3059 = vadd.f32 %v2951, %v3036
      %v3060 = vadd.f32 %v2952, %v3036
      %v3061 = vadd.f32 %v2953, %v3036
      %v3062 = vadd.f32 %v2954, %v3036
      %v3063 = vadd.f32 %v2955, %v3036
      %v3064 = vadd.f32 %v2956, %v3036
      %v3065 = vadd.f32 %v2957, %v3036
      %v3066 = vadd.f32 %v2958, %v3036
      %v3067 = vadd.f32 %v2959, %v3036
      %v3068 = vadd.f32 %v2960, %v3036
      %v3069 = vadd.f32 %v2961, %v3036
      %v3070 = vadd.f32 %v2962, %v3036
      %v3071 = vadd.f32 %v2963, %v3036
      %v3072 = vadd.f32 %v2964, %v3036
      %v3073 = vadd.f32 %v2965, %v3036
      %v3074 = vadd.f32 %v2966, %v3036
      %v3075 = vadd.f32 %v2967, %v3036
      %v3076 = vadd.f32 %v2968, %v3036
      %v3077 = vadd.f32 %v2969, %v3036
      %v3078 = vadd.f32 %v2970, %v3036
      %v3079 = vadd.f32 %v2971, %v3036
      %v3080 = vadd.f32 %v2972, %v3036
      %v3081 = vadd.f32 %v2973, %v3036
      %v3082 = vadd.f32 %v2974, %v3036
      %v3083 = vadd.f32 %v2975, %v3036
      %v3084 = vadd.f32 %v2976, %v3036
      %v3085 = vadd.f32 %v2977, %v3036
      %v3086 = vadd.f32 %v2978, %v3036
      %v3087 = vadd.f32 %v2979, %v3036
      %v3088 = vadd.f32 %v2980, %v3036
      %v3089 = vadd.f32 %v2981, %v3036
      %v3090 = vadd.f32 %v2982, %v3036
      %v3091 = vadd.f32 %v2983, %v3036
      %v3092 = vadd.f32 %v2984, %v3036
      %v3093 = vadd.f32 %v2985, %v3036
      %v3094 = vadd.f32 %v2986, %v3036
      %v3095 = vadd.f32 %v2987, %v3036
      %v3096 = vadd.f32 %v2988, %v3036
      %v3097 = vadd.f32 %v2989, %v3036
      %v3098 = vadd.f32 %v2990, %v3036
      %v3099 = vadd.f32 %v2991, %v3036
      %v3100 = vadd.f32 %v2992, %v3036
      %v3101 = vadd.f32 %v2993, %v3036
      %v3102 = vadd.f32 %v2994, %v3036
      %v3103 = vadd.f32 %v2995, %v3036
      %v3104 = vadd.f32 %v2996, %v3036
      %v3105 = vadd.f32 %v2997, %v3036
      %v3106 = vadd.f32 %v2998, %v3036
      %v3107 = vadd.f32 %v2999, %v3036
      %v3108 = vadd.f32 %v3000, %v3036
      %v3109 = vadd.f32 %v3001, %v3036
      %v3110 = vadd.f32 %v3002, %v3036
      %v3111 = vadd.f32 %v3003, %v3036
      %v3112 = vadd.f32 %v3004, %v3036
      %v3113 = vadd.f32 %v3005, %v3036
      %v3114 = vadd.f32 %v3006, %v3036
      %v3115 = vadd.f32 %v3007, %v3036
      %v3116 = vadd.f32 %v3008, %v3036
      %v3117 = vadd.f32 %v3009, %v3036
      %v3118 = vadd.f32 %v3010, %v3036
      %v3119 = vadd.f32 %v3011, %v3036
      %v3120 = vadd.f32 %v3012, %v3036
      %v3121 = vadd.f32 %v3013, %v3036
      %v3122 = vadd.f32 %v3014, %v3036
      %v3123 = vadd.f32 %v3015, %v3036
      %v3124 = vadd.f32 %v3016, %v3036
      %v3125 = vadd.f32 %v3017, %v3036
      %v3126 = vadd.f32 %v3018, %v3036
      %v3127 = vadd.f32 %v3019, %v3036
      %v3128 = vadd.f32 %v3020, %v3036
      %v3129 = vadd.f32 %v3021, %v3036
      %v3130 = vadd.f32 %v3022, %v3036
      %v3131 = vadd.f32 %v3023, %v3036
      %v3132 = vadd.f32 %v3024, %v3036
      %v3133 = vadd.f32 %v3025, %v3036
      %v3134 = vadd.f32 %v3026, %v3036
      %v3135 = vadd.f32 %v3027, %v3036
      %v3136 = vadd.f32 %v3028, %v3036
      %v3137 = vadd.f32 %v3029, %v3036
      %v3138 = vadd.f32 %v3030, %v3036
      %v3139 = vadd.f32 %v3031, %v3036
      %v3140 = vadd.f32 %v3032, %v3036
      %v3141 = vadd.f32 %v3033, %v3036
      %v3142 = vld [vmem:[%s495] sm:$0xff]
      %v3143 = vld [vmem:[%s495 + $0x8] sm:$0x1f]
      %v3144 = vperm.slane %v3142, 0
      %v3145 = vlaneseq
      %v3146 = vshrl.u32 %v3145, 7
      %3148 = vset.pattern.permute.xlu0 %v3146
      %3149 = vperm.xlu0 %3148, %v3144
      %v3150 = vpop.permute.xlu0 %3149
      %v3151 = vlaneseq
      %v3152 = vshrl.u32 %v3151, 7
      %v3153 = vadd.s32 %v3152, 8
      %3154 = vset.pattern.permute.xlu0 %v3153
      %3155 = vperm.xlu0 %3154, %v3144
      %v3156 = vpop.permute.xlu0 %3155
      %v3157 = vlaneseq
      %v3158 = vshrl.u32 %v3157, 7
      %v3159 = vadd.s32 %v3158, 16
      %3160 = vset.pattern.permute.xlu0 %v3159
      %3161 = vperm.xlu0 %3160, %v3144
      %v3162 = vpop.permute.xlu0 %3161
      %v3163 = vlaneseq
      %v3164 = vshrl.u32 %v3163, 7
      %v3165 = vadd.s32 %v3164, 24
      %3166 = vset.pattern.permute.xlu0 %v3165
      %3167 = vperm.xlu0 %3166, %v3144
      %v3168 = vpop.permute.xlu0 %3167
      %v3169 = vlaneseq
      %v3170 = vshrl.u32 %v3169, 7
      %v3171 = vadd.s32 %v3170, 32
      %3172 = vset.pattern.permute.xlu0 %v3171
      %3173 = vperm.xlu0 %3172, %v3144
      %v3174 = vpop.permute.xlu0 %3173
      %v3175 = vlaneseq
      %v3176 = vshrl.u32 %v3175, 7
      %v3177 = vadd.s32 %v3176, 40
      %3178 = vset.pattern.permute.xlu0 %v3177
      %3179 = vperm.xlu0 %3178, %v3144
      %v3180 = vpop.permute.xlu0 %3179
      %v3181 = vlaneseq
      %v3182 = vshrl.u32 %v3181, 7
      %v3183 = vadd.s32 %v3182, 48
      %3184 = vset.pattern.permute.xlu0 %v3183
      %3185 = vperm.xlu0 %3184, %v3144
      %v3186 = vpop.permute.xlu0 %3185
      %v3187 = vlaneseq
      %v3188 = vshrl.u32 %v3187, 7
      %v3189 = vadd.s32 %v3188, 56
      %3190 = vset.pattern.permute.xlu0 %v3189
      %3191 = vperm.xlu0 %3190, %v3144
      %v3192 = vpop.permute.xlu0 %3191
      %v3193 = vperm.slane %v3142, 1
      %v3194 = vlaneseq
      %v3195 = vshrl.u32 %v3194, 7
      %3197 = vset.pattern.permute.xlu0 %v3195
      %3198 = vperm.xlu0 %3197, %v3193
      %v3199 = vpop.permute.xlu0 %3198
      %v3200 = vlaneseq
      %v3201 = vshrl.u32 %v3200, 7
      %v3202 = vadd.s32 %v3201, 8
      %3203 = vset.pattern.permute.xlu0 %v3202
      %3204 = vperm.xlu0 %3203, %v3193
      %v3205 = vpop.permute.xlu0 %3204
      %v3206 = vlaneseq
      %v3207 = vshrl.u32 %v3206, 7
      %v3208 = vadd.s32 %v3207, 16
      %3209 = vset.pattern.permute.xlu0 %v3208
      %3210 = vperm.xlu0 %3209, %v3193
      %v3211 = vpop.permute.xlu0 %3210
      %v3212 = vlaneseq
      %v3213 = vshrl.u32 %v3212, 7
      %v3214 = vadd.s32 %v3213, 24
      %3215 = vset.pattern.permute.xlu0 %v3214
      %3216 = vperm.xlu0 %3215, %v3193
      %v3217 = vpop.permute.xlu0 %3216
      %v3218 = vlaneseq
      %v3219 = vshrl.u32 %v3218, 7
      %v3220 = vadd.s32 %v3219, 32
      %3221 = vset.pattern.permute.xlu0 %v3220
      %3222 = vperm.xlu0 %3221, %v3193
      %v3223 = vpop.permute.xlu0 %3222
      %v3224 = vlaneseq
      %v3225 = vshrl.u32 %v3224, 7
      %v3226 = vadd.s32 %v3225, 40
      %3227 = vset.pattern.permute.xlu0 %v3226
      %3228 = vperm.xlu0 %3227, %v3193
      %v3229 = vpop.permute.xlu0 %3228
      %v3230 = vlaneseq
      %v3231 = vshrl.u32 %v3230, 7
      %v3232 = vadd.s32 %v3231, 48
      %3233 = vset.pattern.permute.xlu0 %v3232
      %3234 = vperm.xlu0 %3233, %v3193
      %v3235 = vpop.permute.xlu0 %3234
      %v3236 = vlaneseq
      %v3237 = vshrl.u32 %v3236, 7
      %v3238 = vadd.s32 %v3237, 56
      %3239 = vset.pattern.permute.xlu0 %v3238
      %3240 = vperm.xlu0 %3239, %v3193
      %v3241 = vpop.permute.xlu0 %3240
      %v3242 = vperm.slane %v3142, 2
      %v3243 = vlaneseq
      %v3244 = vshrl.u32 %v3243, 7
      %3246 = vset.pattern.permute.xlu0 %v3244
      %3247 = vperm.xlu0 %3246, %v3242
      %v3248 = vpop.permute.xlu0 %3247
      %v3249 = vlaneseq
      %v3250 = vshrl.u32 %v3249, 7
      %v3251 = vadd.s32 %v3250, 8
      %3252 = vset.pattern.permute.xlu0 %v3251
      %3253 = vperm.xlu0 %3252, %v3242
      %v3254 = vpop.permute.xlu0 %3253
      %v3255 = vlaneseq
      %v3256 = vshrl.u32 %v3255, 7
      %v3257 = vadd.s32 %v3256, 16
      %3258 = vset.pattern.permute.xlu0 %v3257
      %3259 = vperm.xlu0 %3258, %v3242
      %v3260 = vpop.permute.xlu0 %3259
      %v3261 = vlaneseq
      %v3262 = vshrl.u32 %v3261, 7
      %v3263 = vadd.s32 %v3262, 24
      %3264 = vset.pattern.permute.xlu0 %v3263
      %3265 = vperm.xlu0 %3264, %v3242
      %v3266 = vpop.permute.xlu0 %3265
      %v3267 = vlaneseq
      %v3268 = vshrl.u32 %v3267, 7
      %v3269 = vadd.s32 %v3268, 32
      %3270 = vset.pattern.permute.xlu0 %v3269
      %3271 = vperm.xlu0 %3270, %v3242
      %v3272 = vpop.permute.xlu0 %3271
      %v3273 = vlaneseq
      %v3274 = vshrl.u32 %v3273, 7
      %v3275 = vadd.s32 %v3274, 40
      %3276 = vset.pattern.permute.xlu0 %v3275
      %3277 = vperm.xlu0 %3276, %v3242
      %v3278 = vpop.permute.xlu0 %3277
      %v3279 = vlaneseq
      %v3280 = vshrl.u32 %v3279, 7
      %v3281 = vadd.s32 %v3280, 48
      %3282 = vset.pattern.permute.xlu0 %v3281
      %3283 = vperm.xlu0 %3282, %v3242
      %v3284 = vpop.permute.xlu0 %3283
      %v3285 = vlaneseq
      %v3286 = vshrl.u32 %v3285, 7
      %v3287 = vadd.s32 %v3286, 56
      %3288 = vset.pattern.permute.xlu0 %v3287
      %3289 = vperm.xlu0 %3288, %v3242
      %v3290 = vpop.permute.xlu0 %3289
      %v3291 = vperm.slane %v3142, 3
      %v3292 = vlaneseq
      %v3293 = vshrl.u32 %v3292, 7
      %3295 = vset.pattern.permute.xlu0 %v3293
      %3296 = vperm.xlu0 %3295, %v3291
      %v3297 = vpop.permute.xlu0 %3296
      %v3298 = vlaneseq
      %v3299 = vshrl.u32 %v3298, 7
      %v3300 = vadd.s32 %v3299, 8
      %3301 = vset.pattern.permute.xlu0 %v3300
      %3302 = vperm.xlu0 %3301, %v3291
      %v3303 = vpop.permute.xlu0 %3302
      %v3304 = vlaneseq
      %v3305 = vshrl.u32 %v3304, 7
      %v3306 = vadd.s32 %v3305, 16
      %3307 = vset.pattern.permute.xlu0 %v3306
      %3308 = vperm.xlu0 %3307, %v3291
      %v3309 = vpop.permute.xlu0 %3308
      %v3310 = vlaneseq
      %v3311 = vshrl.u32 %v3310, 7
      %v3312 = vadd.s32 %v3311, 24
      %3313 = vset.pattern.permute.xlu0 %v3312
      %3314 = vperm.xlu0 %3313, %v3291
      %v3315 = vpop.permute.xlu0 %3314
      %v3316 = vlaneseq
      %v3317 = vshrl.u32 %v3316, 7
      %v3318 = vadd.s32 %v3317, 32
      %3319 = vset.pattern.permute.xlu0 %v3318
      %3320 = vperm.xlu0 %3319, %v3291
      %v3321 = vpop.permute.xlu0 %3320
      %v3322 = vlaneseq
      %v3323 = vshrl.u32 %v3322, 7
      %v3324 = vadd.s32 %v3323, 40
      %3325 = vset.pattern.permute.xlu0 %v3324
      %3326 = vperm.xlu0 %3325, %v3291
      %v3327 = vpop.permute.xlu0 %3326
      %v3328 = vlaneseq
      %v3329 = vshrl.u32 %v3328, 7
      %v3330 = vadd.s32 %v3329, 48
      %3331 = vset.pattern.permute.xlu0 %v3330
      %3332 = vperm.xlu0 %3331, %v3291
      %v3333 = vpop.permute.xlu0 %3332
      %v3334 = vlaneseq
      %v3335 = vshrl.u32 %v3334, 7
      %v3336 = vadd.s32 %v3335, 56
      %3337 = vset.pattern.permute.xlu0 %v3336
      %3338 = vperm.xlu0 %3337, %v3291
      %v3339 = vpop.permute.xlu0 %3338
      %v3340 = vperm.slane %v3142, 4
      %v3341 = vlaneseq
      %v3342 = vshrl.u32 %v3341, 7
      %3344 = vset.pattern.permute.xlu0 %v3342
      %3345 = vperm.xlu0 %3344, %v3340
      %v3346 = vpop.permute.xlu0 %3345
      %v3347 = vlaneseq
      %v3348 = vshrl.u32 %v3347, 7
      %v3349 = vadd.s32 %v3348, 8
      %3350 = vset.pattern.permute.xlu0 %v3349
      %3351 = vperm.xlu0 %3350, %v3340
      %v3352 = vpop.permute.xlu0 %3351
      %v3353 = vlaneseq
      %v3354 = vshrl.u32 %v3353, 7
      %v3355 = vadd.s32 %v3354, 16
      %3356 = vset.pattern.permute.xlu0 %v3355
      %3357 = vperm.xlu0 %3356, %v3340
      %v3358 = vpop.permute.xlu0 %3357
      %v3359 = vlaneseq
      %v3360 = vshrl.u32 %v3359, 7
      %v3361 = vadd.s32 %v3360, 24
      %3362 = vset.pattern.permute.xlu0 %v3361
      %3363 = vperm.xlu0 %3362, %v3340
      %v3364 = vpop.permute.xlu0 %3363
      %v3365 = vlaneseq
      %v3366 = vshrl.u32 %v3365, 7
      %v3367 = vadd.s32 %v3366, 32
      %3368 = vset.pattern.permute.xlu0 %v3367
      %3369 = vperm.xlu0 %3368, %v3340
      %v3370 = vpop.permute.xlu0 %3369
      %v3371 = vlaneseq
      %v3372 = vshrl.u32 %v3371, 7
      %v3373 = vadd.s32 %v3372, 40
      %3374 = vset.pattern.permute.xlu0 %v3373
      %3375 = vperm.xlu0 %3374, %v3340
      %v3376 = vpop.permute.xlu0 %3375
      %v3377 = vlaneseq
      %v3378 = vshrl.u32 %v3377, 7
      %v3379 = vadd.s32 %v3378, 48
      %3380 = vset.pattern.permute.xlu0 %v3379
      %3381 = vperm.xlu0 %3380, %v3340
      %v3382 = vpop.permute.xlu0 %3381
      %v3383 = vlaneseq
      %v3384 = vshrl.u32 %v3383, 7
      %v3385 = vadd.s32 %v3384, 56
      %3386 = vset.pattern.permute.xlu0 %v3385
      %3387 = vperm.xlu0 %3386, %v3340
      %v3388 = vpop.permute.xlu0 %3387
      %v3389 = vperm.slane %v3142, 5
      %v3390 = vlaneseq
      %v3391 = vshrl.u32 %v3390, 7
      %3393 = vset.pattern.permute.xlu0 %v3391
      %3394 = vperm.xlu0 %3393, %v3389
      %v3395 = vpop.permute.xlu0 %3394
      %v3396 = vlaneseq
      %v3397 = vshrl.u32 %v3396, 7
      %v3398 = vadd.s32 %v3397, 8
      %3399 = vset.pattern.permute.xlu0 %v3398
      %3400 = vperm.xlu0 %3399, %v3389
      %v3401 = vpop.permute.xlu0 %3400
      %v3402 = vlaneseq
      %v3403 = vshrl.u32 %v3402, 7
      %v3404 = vadd.s32 %v3403, 16
      %3405 = vset.pattern.permute.xlu0 %v3404
      %3406 = vperm.xlu0 %3405, %v3389
      %v3407 = vpop.permute.xlu0 %3406
      %v3408 = vlaneseq
      %v3409 = vshrl.u32 %v3408, 7
      %v3410 = vadd.s32 %v3409, 24
      %3411 = vset.pattern.permute.xlu0 %v3410
      %3412 = vperm.xlu0 %3411, %v3389
      %v3413 = vpop.permute.xlu0 %3412
      %v3414 = vlaneseq
      %v3415 = vshrl.u32 %v3414, 7
      %v3416 = vadd.s32 %v3415, 32
      %3417 = vset.pattern.permute.xlu0 %v3416
      %3418 = vperm.xlu0 %3417, %v3389
      %v3419 = vpop.permute.xlu0 %3418
      %v3420 = vlaneseq
      %v3421 = vshrl.u32 %v3420, 7
      %v3422 = vadd.s32 %v3421, 40
      %3423 = vset.pattern.permute.xlu0 %v3422
      %3424 = vperm.xlu0 %3423, %v3389
      %v3425 = vpop.permute.xlu0 %3424
      %v3426 = vlaneseq
      %v3427 = vshrl.u32 %v3426, 7
      %v3428 = vadd.s32 %v3427, 48
      %3429 = vset.pattern.permute.xlu0 %v3428
      %3430 = vperm.xlu0 %3429, %v3389
      %v3431 = vpop.permute.xlu0 %3430
      %v3432 = vlaneseq
      %v3433 = vshrl.u32 %v3432, 7
      %v3434 = vadd.s32 %v3433, 56
      %3435 = vset.pattern.permute.xlu0 %v3434
      %3436 = vperm.xlu0 %3435, %v3389
      %v3437 = vpop.permute.xlu0 %3436
      %v3438 = vperm.slane %v3142, 6
      %v3439 = vlaneseq
      %v3440 = vshrl.u32 %v3439, 7
      %3442 = vset.pattern.permute.xlu0 %v3440
      %3443 = vperm.xlu0 %3442, %v3438
      %v3444 = vpop.permute.xlu0 %3443
      %v3445 = vlaneseq
      %v3446 = vshrl.u32 %v3445, 7
      %v3447 = vadd.s32 %v3446, 8
      %3448 = vset.pattern.permute.xlu0 %v3447
      %3449 = vperm.xlu0 %3448, %v3438
      %v3450 = vpop.permute.xlu0 %3449
      %v3451 = vlaneseq
      %v3452 = vshrl.u32 %v3451, 7
      %v3453 = vadd.s32 %v3452, 16
      %3454 = vset.pattern.permute.xlu0 %v3453
      %3455 = vperm.xlu0 %3454, %v3438
      %v3456 = vpop.permute.xlu0 %3455
      %v3457 = vlaneseq
      %v3458 = vshrl.u32 %v3457, 7
      %v3459 = vadd.s32 %v3458, 24
      %3460 = vset.pattern.permute.xlu0 %v3459
      %3461 = vperm.xlu0 %3460, %v3438
      %v3462 = vpop.permute.xlu0 %3461
      %v3463 = vlaneseq
      %v3464 = vshrl.u32 %v3463, 7
      %v3465 = vadd.s32 %v3464, 32
      %3466 = vset.pattern.permute.xlu0 %v3465
      %3467 = vperm.xlu0 %3466, %v3438
      %v3468 = vpop.permute.xlu0 %3467
      %v3469 = vlaneseq
      %v3470 = vshrl.u32 %v3469, 7
      %v3471 = vadd.s32 %v3470, 40
      %3472 = vset.pattern.permute.xlu0 %v3471
      %3473 = vperm.xlu0 %3472, %v3438
      %v3474 = vpop.permute.xlu0 %3473
      %v3475 = vlaneseq
      %v3476 = vshrl.u32 %v3475, 7
      %v3477 = vadd.s32 %v3476, 48
      %3478 = vset.pattern.permute.xlu0 %v3477
      %3479 = vperm.xlu0 %3478, %v3438
      %v3480 = vpop.permute.xlu0 %3479
      %v3481 = vlaneseq
      %v3482 = vshrl.u32 %v3481, 7
      %v3483 = vadd.s32 %v3482, 56
      %3484 = vset.pattern.permute.xlu0 %v3483
      %3485 = vperm.xlu0 %3484, %v3438
      %v3486 = vpop.permute.xlu0 %3485
      %v3487 = vperm.slane %v3142, 7
      %v3488 = vlaneseq
      %v3489 = vshrl.u32 %v3488, 7
      %3491 = vset.pattern.permute.xlu0 %v3489
      %3492 = vperm.xlu0 %3491, %v3487
      %v3493 = vpop.permute.xlu0 %3492
      %v3494 = vlaneseq
      %v3495 = vshrl.u32 %v3494, 7
      %v3496 = vadd.s32 %v3495, 8
      %3497 = vset.pattern.permute.xlu0 %v3496
      %3498 = vperm.xlu0 %3497, %v3487
      %v3499 = vpop.permute.xlu0 %3498
      %v3500 = vlaneseq
      %v3501 = vshrl.u32 %v3500, 7
      %v3502 = vadd.s32 %v3501, 16
      %3503 = vset.pattern.permute.xlu0 %v3502
      %3504 = vperm.xlu0 %3503, %v3487
      %v3505 = vpop.permute.xlu0 %3504
      %v3506 = vlaneseq
      %v3507 = vshrl.u32 %v3506, 7
      %v3508 = vadd.s32 %v3507, 24
      %3509 = vset.pattern.permute.xlu0 %v3508
      %3510 = vperm.xlu0 %3509, %v3487
      %v3511 = vpop.permute.xlu0 %3510
      %v3512 = vlaneseq
      %v3513 = vshrl.u32 %v3512, 7
      %v3514 = vadd.s32 %v3513, 32
      %3515 = vset.pattern.permute.xlu0 %v3514
      %3516 = vperm.xlu0 %3515, %v3487
      %v3517 = vpop.permute.xlu0 %3516
      %v3518 = vlaneseq
      %v3519 = vshrl.u32 %v3518, 7
      %v3520 = vadd.s32 %v3519, 40
      %3521 = vset.pattern.permute.xlu0 %v3520
      %3522 = vperm.xlu0 %3521, %v3487
      %v3523 = vpop.permute.xlu0 %3522
      %v3524 = vlaneseq
      %v3525 = vshrl.u32 %v3524, 7
      %v3526 = vadd.s32 %v3525, 48
      %3527 = vset.pattern.permute.xlu0 %v3526
      %3528 = vperm.xlu0 %3527, %v3487
      %v3529 = vpop.permute.xlu0 %3528
      %v3530 = vlaneseq
      %v3531 = vshrl.u32 %v3530, 7
      %v3532 = vadd.s32 %v3531, 56
      %3533 = vset.pattern.permute.xlu0 %v3532
      %3534 = vperm.xlu0 %3533, %v3487
      %v3535 = vpop.permute.xlu0 %3534
      %v3536 = vperm.slane %v3143, 0
      %v3537 = vlaneseq
      %v3538 = vshrl.u32 %v3537, 7
      %3540 = vset.pattern.permute.xlu0 %v3538
      %3541 = vperm.xlu0 %3540, %v3536
      %v3542 = vpop.permute.xlu0 %3541
      %v3543 = vlaneseq
      %v3544 = vshrl.u32 %v3543, 7
      %v3545 = vadd.s32 %v3544, 8
      %3546 = vset.pattern.permute.xlu0 %v3545
      %3547 = vperm.xlu0 %3546, %v3536
      %v3548 = vpop.permute.xlu0 %3547
      %v3549 = vlaneseq
      %v3550 = vshrl.u32 %v3549, 7
      %v3551 = vadd.s32 %v3550, 16
      %3552 = vset.pattern.permute.xlu0 %v3551
      %3553 = vperm.xlu0 %3552, %v3536
      %v3554 = vpop.permute.xlu0 %3553
      %v3555 = vlaneseq
      %v3556 = vshrl.u32 %v3555, 7
      %v3557 = vadd.s32 %v3556, 24
      %3558 = vset.pattern.permute.xlu0 %v3557
      %3559 = vperm.xlu0 %3558, %v3536
      %v3560 = vpop.permute.xlu0 %3559
      %v3561 = vlaneseq
      %v3562 = vshrl.u32 %v3561, 7
      %v3563 = vadd.s32 %v3562, 32
      %3564 = vset.pattern.permute.xlu0 %v3563
      %3565 = vperm.xlu0 %3564, %v3536
      %v3566 = vpop.permute.xlu0 %3565
      %v3567 = vlaneseq
      %v3568 = vshrl.u32 %v3567, 7
      %v3569 = vadd.s32 %v3568, 40
      %3570 = vset.pattern.permute.xlu0 %v3569
      %3571 = vperm.xlu0 %3570, %v3536
      %v3572 = vpop.permute.xlu0 %3571
      %v3573 = vlaneseq
      %v3574 = vshrl.u32 %v3573, 7
      %v3575 = vadd.s32 %v3574, 48
      %3576 = vset.pattern.permute.xlu0 %v3575
      %3577 = vperm.xlu0 %3576, %v3536
      %v3578 = vpop.permute.xlu0 %3577
      %v3579 = vlaneseq
      %v3580 = vshrl.u32 %v3579, 7
      %v3581 = vadd.s32 %v3580, 56
      %3582 = vset.pattern.permute.xlu0 %v3581
      %3583 = vperm.xlu0 %3582, %v3536
      %v3584 = vpop.permute.xlu0 %3583
      %v3585 = vperm.slane %v3143, 1
      %v3586 = vlaneseq
      %v3587 = vshrl.u32 %v3586, 7
      %3589 = vset.pattern.permute.xlu0 %v3587
      %3590 = vperm.xlu0 %3589, %v3585
      %v3591 = vpop.permute.xlu0 %3590
      %v3592 = vlaneseq
      %v3593 = vshrl.u32 %v3592, 7
      %v3594 = vadd.s32 %v3593, 8
      %3595 = vset.pattern.permute.xlu0 %v3594
      %3596 = vperm.xlu0 %3595, %v3585
      %v3597 = vpop.permute.xlu0 %3596
      %v3598 = vlaneseq
      %v3599 = vshrl.u32 %v3598, 7
      %v3600 = vadd.s32 %v3599, 16
      %3601 = vset.pattern.permute.xlu0 %v3600
      %3602 = vperm.xlu0 %3601, %v3585
      %v3603 = vpop.permute.xlu0 %3602
      %v3604 = vlaneseq
      %v3605 = vshrl.u32 %v3604, 7
      %v3606 = vadd.s32 %v3605, 24
      %3607 = vset.pattern.permute.xlu0 %v3606
      %3608 = vperm.xlu0 %3607, %v3585
      %v3609 = vpop.permute.xlu0 %3608
      %v3610 = vlaneseq
      %v3611 = vshrl.u32 %v3610, 7
      %v3612 = vadd.s32 %v3611, 32
      %3613 = vset.pattern.permute.xlu0 %v3612
      %3614 = vperm.xlu0 %3613, %v3585
      %v3615 = vpop.permute.xlu0 %3614
      %v3616 = vlaneseq
      %v3617 = vshrl.u32 %v3616, 7
      %v3618 = vadd.s32 %v3617, 40
      %3619 = vset.pattern.permute.xlu0 %v3618
      %3620 = vperm.xlu0 %3619, %v3585
      %v3621 = vpop.permute.xlu0 %3620
      %v3622 = vlaneseq
      %v3623 = vshrl.u32 %v3622, 7
      %v3624 = vadd.s32 %v3623, 48
      %3625 = vset.pattern.permute.xlu0 %v3624
      %3626 = vperm.xlu0 %3625, %v3585
      %v3627 = vpop.permute.xlu0 %3626
      %v3628 = vlaneseq
      %v3629 = vshrl.u32 %v3628, 7
      %v3630 = vadd.s32 %v3629, 56
      %3631 = vset.pattern.permute.xlu0 %v3630
      %3632 = vperm.xlu0 %3631, %v3585
      %v3633 = vpop.permute.xlu0 %3632
      %v3634 = vperm.slane %v3143, 2
      %v3635 = vlaneseq
      %v3636 = vshrl.u32 %v3635, 7
      %3638 = vset.pattern.permute.xlu0 %v3636
      %3639 = vperm.xlu0 %3638, %v3634
      %v3640 = vpop.permute.xlu0 %3639
      %v3641 = vlaneseq
      %v3642 = vshrl.u32 %v3641, 7
      %v3643 = vadd.s32 %v3642, 8
      %3644 = vset.pattern.permute.xlu0 %v3643
      %3645 = vperm.xlu0 %3644, %v3634
      %v3646 = vpop.permute.xlu0 %3645
      %v3647 = vlaneseq
      %v3648 = vshrl.u32 %v3647, 7
      %v3649 = vadd.s32 %v3648, 16
      %3650 = vset.pattern.permute.xlu0 %v3649
      %3651 = vperm.xlu0 %3650, %v3634
      %v3652 = vpop.permute.xlu0 %3651
      %v3653 = vlaneseq
      %v3654 = vshrl.u32 %v3653, 7
      %v3655 = vadd.s32 %v3654, 24
      %3656 = vset.pattern.permute.xlu0 %v3655
      %3657 = vperm.xlu0 %3656, %v3634
      %v3658 = vpop.permute.xlu0 %3657
      %v3659 = vlaneseq
      %v3660 = vshrl.u32 %v3659, 7
      %v3661 = vadd.s32 %v3660, 32
      %3662 = vset.pattern.permute.xlu0 %v3661
      %3663 = vperm.xlu0 %3662, %v3634
      %v3664 = vpop.permute.xlu0 %3663
      %v3665 = vlaneseq
      %v3666 = vshrl.u32 %v3665, 7
      %v3667 = vadd.s32 %v3666, 40
      %3668 = vset.pattern.permute.xlu0 %v3667
      %3669 = vperm.xlu0 %3668, %v3634
      %v3670 = vpop.permute.xlu0 %3669
      %v3671 = vlaneseq
      %v3672 = vshrl.u32 %v3671, 7
      %v3673 = vadd.s32 %v3672, 48
      %3674 = vset.pattern.permute.xlu0 %v3673
      %3675 = vperm.xlu0 %3674, %v3634
      %v3676 = vpop.permute.xlu0 %3675
      %v3677 = vlaneseq
      %v3678 = vshrl.u32 %v3677, 7
      %v3679 = vadd.s32 %v3678, 56
      %3680 = vset.pattern.permute.xlu0 %v3679
      %3681 = vperm.xlu0 %3680, %v3634
      %v3682 = vpop.permute.xlu0 %3681
      %v3683 = vperm.slane %v3143, 3
      %v3684 = vlaneseq
      %v3685 = vshrl.u32 %v3684, 7
      %3687 = vset.pattern.permute.xlu0 %v3685
      %3688 = vperm.xlu0 %3687, %v3683
      %v3689 = vpop.permute.xlu0 %3688
      %v3690 = vlaneseq
      %v3691 = vshrl.u32 %v3690, 7
      %v3692 = vadd.s32 %v3691, 8
      %3693 = vset.pattern.permute.xlu0 %v3692
      %3694 = vperm.xlu0 %3693, %v3683
      %v3695 = vpop.permute.xlu0 %3694
      %v3696 = vlaneseq
      %v3697 = vshrl.u32 %v3696, 7
      %v3698 = vadd.s32 %v3697, 16
      %3699 = vset.pattern.permute.xlu0 %v3698
      %3700 = vperm.xlu0 %3699, %v3683
      %v3701 = vpop.permute.xlu0 %3700
      %v3702 = vlaneseq
      %v3703 = vshrl.u32 %v3702, 7
      %v3704 = vadd.s32 %v3703, 24
      %3705 = vset.pattern.permute.xlu0 %v3704
      %3706 = vperm.xlu0 %3705, %v3683
      %v3707 = vpop.permute.xlu0 %3706
      %v3708 = vlaneseq
      %v3709 = vshrl.u32 %v3708, 7
      %v3710 = vadd.s32 %v3709, 32
      %3711 = vset.pattern.permute.xlu0 %v3710
      %3712 = vperm.xlu0 %3711, %v3683
      %v3713 = vpop.permute.xlu0 %3712
      %v3714 = vlaneseq
      %v3715 = vshrl.u32 %v3714, 7
      %v3716 = vadd.s32 %v3715, 40
      %3717 = vset.pattern.permute.xlu0 %v3716
      %3718 = vperm.xlu0 %3717, %v3683
      %v3719 = vpop.permute.xlu0 %3718
      %v3720 = vlaneseq
      %v3721 = vshrl.u32 %v3720, 7
      %v3722 = vadd.s32 %v3721, 48
      %3723 = vset.pattern.permute.xlu0 %v3722
      %3724 = vperm.xlu0 %3723, %v3683
      %v3725 = vpop.permute.xlu0 %3724
      %v3726 = vlaneseq
      %v3727 = vshrl.u32 %v3726, 7
      %v3728 = vadd.s32 %v3727, 56
      %3729 = vset.pattern.permute.xlu0 %v3728
      %3730 = vperm.xlu0 %3729, %v3683
      %v3731 = vpop.permute.xlu0 %3730
      %v3732 = vperm.slane %v3143, 4
      %v3733 = vlaneseq
      %v3734 = vshrl.u32 %v3733, 7
      %3736 = vset.pattern.permute.xlu0 %v3734
      %3737 = vperm.xlu0 %3736, %v3732
      %v3738 = vpop.permute.xlu0 %3737
      %v3739 = vlaneseq
      %v3740 = vshrl.u32 %v3739, 7
      %v3741 = vadd.s32 %v3740, 8
      %3742 = vset.pattern.permute.xlu0 %v3741
      %3743 = vperm.xlu0 %3742, %v3732
      %v3744 = vpop.permute.xlu0 %3743
      %v3745 = vlaneseq
      %v3746 = vshrl.u32 %v3745, 7
      %v3747 = vadd.s32 %v3746, 16
      %3748 = vset.pattern.permute.xlu0 %v3747
      %3749 = vperm.xlu0 %3748, %v3732
      %v3750 = vpop.permute.xlu0 %3749
      %v3751 = vlaneseq
      %v3752 = vshrl.u32 %v3751, 7
      %v3753 = vadd.s32 %v3752, 24
      %3754 = vset.pattern.permute.xlu0 %v3753
      %3755 = vperm.xlu0 %3754, %v3732
      %v3756 = vpop.permute.xlu0 %3755
      %v3757 = vlaneseq
      %v3758 = vshrl.u32 %v3757, 7
      %v3759 = vadd.s32 %v3758, 32
      %3760 = vset.pattern.permute.xlu0 %v3759
      %3761 = vperm.xlu0 %3760, %v3732
      %v3762 = vpop.permute.xlu0 %3761
      %v3763 = vlaneseq
      %v3764 = vshrl.u32 %v3763, 7
      %v3765 = vadd.s32 %v3764, 40
      %3766 = vset.pattern.permute.xlu0 %v3765
      %3767 = vperm.xlu0 %3766, %v3732
      %v3768 = vpop.permute.xlu0 %3767
      %v3769 = vlaneseq
      %v3770 = vshrl.u32 %v3769, 7
      %v3771 = vadd.s32 %v3770, 48
      %3772 = vset.pattern.permute.xlu0 %v3771
      %3773 = vperm.xlu0 %3772, %v3732
      %v3774 = vpop.permute.xlu0 %3773
      %v3775 = vlaneseq
      %v3776 = vshrl.u32 %v3775, 7
      %v3777 = vadd.s32 %v3776, 56
      %3778 = vset.pattern.permute.xlu0 %v3777
      %3779 = vperm.xlu0 %3778, %v3732
      %v3780 = vpop.permute.xlu0 %3779
      %v3781 = vadd.f32 %v3038, %v3150
      %v3782 = vadd.f32 %v3039, %v3156
      %v3783 = vadd.f32 %v3040, %v3162
      %v3784 = vadd.f32 %v3041, %v3168
      %v3785 = vadd.f32 %v3042, %v3174
      %v3786 = vadd.f32 %v3043, %v3180
      %v3787 = vadd.f32 %v3044, %v3186
      %v3788 = vadd.f32 %v3045, %v3192
      %v3789 = vadd.f32 %v3046, %v3199
      %v3790 = vadd.f32 %v3047, %v3205
      %v3791 = vadd.f32 %v3048, %v3211
      %v3792 = vadd.f32 %v3049, %v3217
      %v3793 = vadd.f32 %v3050, %v3223
      %v3794 = vadd.f32 %v3051, %v3229
      %v3795 = vadd.f32 %v3052, %v3235
      %v3796 = vadd.f32 %v3053, %v3241
      %v3797 = vadd.f32 %v3054, %v3248
      %v3798 = vadd.f32 %v3055, %v3254
      %v3799 = vadd.f32 %v3056, %v3260
      %v3800 = vadd.f32 %v3057, %v3266
      %v3801 = vadd.f32 %v3058, %v3272
      %v3802 = vadd.f32 %v3059, %v3278
      %v3803 = vadd.f32 %v3060, %v3284
      %v3804 = vadd.f32 %v3061, %v3290
      %v3805 = vadd.f32 %v3062, %v3297
      %v3806 = vadd.f32 %v3063, %v3303
      %v3807 = vadd.f32 %v3064, %v3309
      %v3808 = vadd.f32 %v3065, %v3315
      %v3809 = vadd.f32 %v3066, %v3321
      %v3810 = vadd.f32 %v3067, %v3327
      %v3811 = vadd.f32 %v3068, %v3333
      %v3812 = vadd.f32 %v3069, %v3339
      %v3813 = vadd.f32 %v3070, %v3346
      %v3814 = vadd.f32 %v3071, %v3352
      %v3815 = vadd.f32 %v3072, %v3358
      %v3816 = vadd.f32 %v3073, %v3364
      %v3817 = vadd.f32 %v3074, %v3370
      %v3818 = vadd.f32 %v3075, %v3376
      %v3819 = vadd.f32 %v3076, %v3382
      %v3820 = vadd.f32 %v3077, %v3388
      %v3821 = vadd.f32 %v3078, %v3395
      %v3822 = vadd.f32 %v3079, %v3401
      %v3823 = vadd.f32 %v3080, %v3407
      %v3824 = vadd.f32 %v3081, %v3413
      %v3825 = vadd.f32 %v3082, %v3419
      %v3826 = vadd.f32 %v3083, %v3425
      %v3827 = vadd.f32 %v3084, %v3431
      %v3828 = vadd.f32 %v3085, %v3437
      %v3829 = vadd.f32 %v3086, %v3444
      %v3830 = vadd.f32 %v3087, %v3450
      %v3831 = vadd.f32 %v3088, %v3456
      %v3832 = vadd.f32 %v3089, %v3462
      %v3833 = vadd.f32 %v3090, %v3468
      %v3834 = vadd.f32 %v3091, %v3474
      %v3835 = vadd.f32 %v3092, %v3480
      %v3836 = vadd.f32 %v3093, %v3486
      %v3837 = vadd.f32 %v3094, %v3493
      %v3838 = vadd.f32 %v3095, %v3499
      %v3839 = vadd.f32 %v3096, %v3505
      %v3840 = vadd.f32 %v3097, %v3511
      %v3841 = vadd.f32 %v3098, %v3517
      %v3842 = vadd.f32 %v3099, %v3523
      %v3843 = vadd.f32 %v3100, %v3529
      %v3844 = vadd.f32 %v3101, %v3535
      %v3845 = vadd.f32 %v3102, %v3542
      %v3846 = vadd.f32 %v3103, %v3548
      %v3847 = vadd.f32 %v3104, %v3554
      %v3848 = vadd.f32 %v3105, %v3560
      %v3849 = vadd.f32 %v3106, %v3566
      %v3850 = vadd.f32 %v3107, %v3572
      %v3851 = vadd.f32 %v3108, %v3578
      %v3852 = vadd.f32 %v3109, %v3584
      %v3853 = vadd.f32 %v3110, %v3591
      %v3854 = vadd.f32 %v3111, %v3597
      %v3855 = vadd.f32 %v3112, %v3603
      %v3856 = vadd.f32 %v3113, %v3609
      %v3857 = vadd.f32 %v3114, %v3615
      %v3858 = vadd.f32 %v3115, %v3621
      %v3859 = vadd.f32 %v3116, %v3627
      %v3860 = vadd.f32 %v3117, %v3633
      %v3861 = vadd.f32 %v3118, %v3640
      %v3862 = vadd.f32 %v3119, %v3646
      %v3863 = vadd.f32 %v3120, %v3652
      %v3864 = vadd.f32 %v3121, %v3658
      %v3865 = vadd.f32 %v3122, %v3664
      %v3866 = vadd.f32 %v3123, %v3670
      %v3867 = vadd.f32 %v3124, %v3676
      %v3868 = vadd.f32 %v3125, %v3682
      %v3869 = vadd.f32 %v3126, %v3689
      %v3870 = vadd.f32 %v3127, %v3695
      %v3871 = vadd.f32 %v3128, %v3701
      %v3872 = vadd.f32 %v3129, %v3707
      %v3873 = vadd.f32 %v3130, %v3713
      %v3874 = vadd.f32 %v3131, %v3719
      %v3875 = vadd.f32 %v3132, %v3725
      %v3876 = vadd.f32 %v3133, %v3731
      %v3877 = vadd.f32 %v3134, %v3738
      %v3878 = vadd.f32 %v3135, %v3744
      %v3879 = vadd.f32 %v3136, %v3750
      %v3880 = vadd.f32 %v3137, %v3756
      %v3881 = vadd.f32 %v3138, %v3762
      %v3882 = vadd.f32 %v3139, %v3768
      %v3883 = vadd.f32 %v3140, %v3774
      %v3884 = vadd.f32 %v3141, %v3780
      %v3885 = vmax.f32 %v3781, %v3782
      %v3886 = vmax.f32 %v3885, %v3783
      %v3887 = vmax.f32 %v3886, %v3784
      %v3888 = vmax.f32 %v3887, %v3785
      %v3889 = vmax.f32 %v3888, %v3786
      %v3890 = vmax.f32 %v3889, %v3787
      %v3891 = vmax.f32 %v3890, %v3788
      %v3892 = vrot.slane %v3891, 4
      %v3893 = vmax.f32 %v3891, %v3892
      %v3894 = vrot.slane %v3893, 2
      %v3895 = vmax.f32 %v3893, %v3894
      %v3896 = vrot.slane %v3895, 1
      %v3897 = vmax.f32 %v3895, %v3896
      %v3898 = vmax.f32 %v3789, %v3790
      %v3899 = vmax.f32 %v3898, %v3791
      %v3900 = vmax.f32 %v3899, %v3792
      %v3901 = vmax.f32 %v3900, %v3793
      %v3902 = vmax.f32 %v3901, %v3794
      %v3903 = vmax.f32 %v3902, %v3795
      %v3904 = vmax.f32 %v3903, %v3796
      %v3905 = vrot.slane %v3904, 4
      %v3906 = vmax.f32 %v3904, %v3905
      %v3907 = vrot.slane %v3906, 2
      %v3908 = vmax.f32 %v3906, %v3907
      %v3909 = vrot.slane %v3908, 1
      %v3910 = vmax.f32 %v3908, %v3909
      %v3911 = vmax.f32 %v3797, %v3798
      %v3912 = vmax.f32 %v3911, %v3799
      %v3913 = vmax.f32 %v3912, %v3800
      %v3914 = vmax.f32 %v3913, %v3801
      %v3915 = vmax.f32 %v3914, %v3802
      %v3916 = vmax.f32 %v3915, %v3803
      %v3917 = vmax.f32 %v3916, %v3804
      %v3918 = vrot.slane %v3917, 4
      %v3919 = vmax.f32 %v3917, %v3918
      %v3920 = vrot.slane %v3919, 2
      %v3921 = vmax.f32 %v3919, %v3920
      %v3922 = vrot.slane %v3921, 1
      %v3923 = vmax.f32 %v3921, %v3922
      %v3924 = vmax.f32 %v3805, %v3806
      %v3925 = vmax.f32 %v3924, %v3807
      %v3926 = vmax.f32 %v3925, %v3808
      %v3927 = vmax.f32 %v3926, %v3809
      %v3928 = vmax.f32 %v3927, %v3810
      %v3929 = vmax.f32 %v3928, %v3811
      %v3930 = vmax.f32 %v3929, %v3812
      %v3931 = vrot.slane %v3930, 4
      %v3932 = vmax.f32 %v3930, %v3931
      %v3933 = vrot.slane %v3932, 2
      %v3934 = vmax.f32 %v3932, %v3933
      %v3935 = vrot.slane %v3934, 1
      %v3936 = vmax.f32 %v3934, %v3935
      %v3937 = vmax.f32 %v3813, %v3814
      %v3938 = vmax.f32 %v3937, %v3815
      %v3939 = vmax.f32 %v3938, %v3816
      %v3940 = vmax.f32 %v3939, %v3817
      %v3941 = vmax.f32 %v3940, %v3818
      %v3942 = vmax.f32 %v3941, %v3819
      %v3943 = vmax.f32 %v3942, %v3820
      %v3944 = vrot.slane %v3943, 4
      %v3945 = vmax.f32 %v3943, %v3944
      %v3946 = vrot.slane %v3945, 2
      %v3947 = vmax.f32 %v3945, %v3946
      %v3948 = vrot.slane %v3947, 1
      %v3949 = vmax.f32 %v3947, %v3948
      %v3950 = vmax.f32 %v3821, %v3822
      %v3951 = vmax.f32 %v3950, %v3823
      %v3952 = vmax.f32 %v3951, %v3824
      %v3953 = vmax.f32 %v3952, %v3825
      %v3954 = vmax.f32 %v3953, %v3826
      %v3955 = vmax.f32 %v3954, %v3827
      %v3956 = vmax.f32 %v3955, %v3828
      %v3957 = vrot.slane %v3956, 4
      %v3958 = vmax.f32 %v3956, %v3957
      %v3959 = vrot.slane %v3958, 2
      %v3960 = vmax.f32 %v3958, %v3959
      %v3961 = vrot.slane %v3960, 1
      %v3962 = vmax.f32 %v3960, %v3961
      %v3963 = vmax.f32 %v3829, %v3830
      %v3964 = vmax.f32 %v3963, %v3831
      %v3965 = vmax.f32 %v3964, %v3832
      %v3966 = vmax.f32 %v3965, %v3833
      %v3967 = vmax.f32 %v3966, %v3834
      %v3968 = vmax.f32 %v3967, %v3835
      %v3969 = vmax.f32 %v3968, %v3836
      %v3970 = vrot.slane %v3969, 4
      %v3971 = vmax.f32 %v3969, %v3970
      %v3972 = vrot.slane %v3971, 2
      %v3973 = vmax.f32 %v3971, %v3972
      %v3974 = vrot.slane %v3973, 1
      %v3975 = vmax.f32 %v3973, %v3974
      %v3976 = vmax.f32 %v3837, %v3838
      %v3977 = vmax.f32 %v3976, %v3839
      %v3978 = vmax.f32 %v3977, %v3840
      %v3979 = vmax.f32 %v3978, %v3841
      %v3980 = vmax.f32 %v3979, %v3842
      %v3981 = vmax.f32 %v3980, %v3843
      %v3982 = vmax.f32 %v3981, %v3844
      %v3983 = vrot.slane %v3982, 4
      %v3984 = vmax.f32 %v3982, %v3983
      %v3985 = vrot.slane %v3984, 2
      %v3986 = vmax.f32 %v3984, %v3985
      %v3987 = vrot.slane %v3986, 1
      %v3988 = vmax.f32 %v3986, %v3987
      %v3989 = vmax.f32 %v3845, %v3846
      %v3990 = vmax.f32 %v3989, %v3847
      %v3991 = vmax.f32 %v3990, %v3848
      %v3992 = vmax.f32 %v3991, %v3849
      %v3993 = vmax.f32 %v3992, %v3850
      %v3994 = vmax.f32 %v3993, %v3851
      %v3995 = vmax.f32 %v3994, %v3852
      %v3996 = vrot.slane %v3995, 4
      %v3997 = vmax.f32 %v3995, %v3996
      %v3998 = vrot.slane %v3997, 2
      %v3999 = vmax.f32 %v3997, %v3998
      %v4000 = vrot.slane %v3999, 1
      %v4001 = vmax.f32 %v3999, %v4000
      %v4002 = vmax.f32 %v3853, %v3854
      %v4003 = vmax.f32 %v4002, %v3855
      %v4004 = vmax.f32 %v4003, %v3856
      %v4005 = vmax.f32 %v4004, %v3857
      %v4006 = vmax.f32 %v4005, %v3858
      %v4007 = vmax.f32 %v4006, %v3859
      %v4008 = vmax.f32 %v4007, %v3860
      %v4009 = vrot.slane %v4008, 4
      %v4010 = vmax.f32 %v4008, %v4009
      %v4011 = vrot.slane %v4010, 2
      %v4012 = vmax.f32 %v4010, %v4011
      %v4013 = vrot.slane %v4012, 1
      %v4014 = vmax.f32 %v4012, %v4013
      %v4015 = vmax.f32 %v3861, %v3862
      %v4016 = vmax.f32 %v4015, %v3863
      %v4017 = vmax.f32 %v4016, %v3864
      %v4018 = vmax.f32 %v4017, %v3865
      %v4019 = vmax.f32 %v4018, %v3866
      %v4020 = vmax.f32 %v4019, %v3867
      %v4021 = vmax.f32 %v4020, %v3868
      %v4022 = vrot.slane %v4021, 4
      %v4023 = vmax.f32 %v4021, %v4022
      %v4024 = vrot.slane %v4023, 2
      %v4025 = vmax.f32 %v4023, %v4024
      %v4026 = vrot.slane %v4025, 1
      %v4027 = vmax.f32 %v4025, %v4026
      %v4028 = vmax.f32 %v3869, %v3870
      %v4029 = vmax.f32 %v4028, %v3871
      %v4030 = vmax.f32 %v4029, %v3872
      %v4031 = vmax.f32 %v4030, %v3873
      %v4032 = vmax.f32 %v4031, %v3874
      %v4033 = vmax.f32 %v4032, %v3875
      %v4034 = vmax.f32 %v4033, %v3876
      %v4035 = vrot.slane %v4034, 4
      %v4036 = vmax.f32 %v4034, %v4035
      %v4037 = vrot.slane %v4036, 2
      %v4038 = vmax.f32 %v4036, %v4037
      %v4039 = vrot.slane %v4038, 1
      %v4040 = vmax.f32 %v4038, %v4039
      %v4041 = vmax.f32 %v3877, %v3878
      %v4042 = vmax.f32 %v4041, %v3879
      %v4043 = vmax.f32 %v4042, %v3880
      %v4044 = vmax.f32 %v4043, %v3881
      %v4045 = vmax.f32 %v4044, %v3882
      %v4046 = vmax.f32 %v4045, %v3883
      %v4047 = vmax.f32 %v4046, %v3884
      %v4048 = vrot.slane %v4047, 4
      %v4049 = vmax.f32 %v4047, %v4048
      %v4050 = vrot.slane %v4049, 2
      %v4051 = vmax.f32 %v4049, %v4050
      %v4052 = vrot.slane %v4051, 1
      %v4053 = vmax.f32 %v4051, %v4052
      %v4054 = vpack.c.bf16 %v3897, %v3897
      %v4055 = vpack.c.bf16 %v3910, %v3910
      %v4056 = vpack.c.bf16 %v3923, %v3923
      %v4057 = vpack.c.bf16 %v3936, %v3936
      %v4058 = vpack.c.bf16 %v3949, %v3949
      %v4059 = vpack.c.bf16 %v3962, %v3962
      %v4060 = vpack.c.bf16 %v3975, %v3975
      %v4061 = vpack.c.bf16 %v3988, %v3988
      %v4062 = vpack.c.bf16 %v4001, %v4001
      %v4063 = vpack.c.bf16 %v4014, %v4014
      %v4064 = vpack.c.bf16 %v4027, %v4027
      %v4065 = vpack.c.bf16 %v4040, %v4040
      %v4066 = vpack.c.bf16 %v4053, %v4053
      %v4080 = vunpack.c.l.b16 %v4054
      %v4081 = vunpack.c.l.b16 %v4055
      %v4082 = vunpack.c.l.b16 %v4056
      %v4083 = vunpack.c.l.b16 %v4057
      %v4084 = vunpack.c.l.b16 %v4058
      %v4085 = vunpack.c.l.b16 %v4059
      %v4086 = vunpack.c.l.b16 %v4060
      %v4087 = vunpack.c.l.b16 %v4061
      %v4088 = vunpack.c.l.b16 %v4062
      %v4089 = vunpack.c.l.b16 %v4063
      %v4090 = vunpack.c.l.b16 %v4064
      %v4091 = vunpack.c.l.b16 %v4065
      %v4092 = vunpack.c.l.b16 %v4066
      %vm4093 = vcmask 1041409
      %v4094 = vsel %vm4093, %v4081, %v4080
      %vm4095 = vcmask 1042434
      %v4096 = vsel %vm4095, %v4082, %v4094
      %vm4097 = vcmask 1043459
      %v4098 = vsel %vm4097, %v4083, %v4096
      %vm4099 = vcmask 1044484
      %v4100 = vsel %vm4099, %v4084, %v4098
      %vm4101 = vcmask 1045509
      %v4102 = vsel %vm4101, %v4085, %v4100
      %vm4103 = vcmask 1046534
      %v4104 = vsel %vm4103, %v4086, %v4102
      %vm4105 = vcmask 1047559
      %v4106 = vsel %vm4105, %v4087, %v4104
      %v4107 = vsel %vm4093, %v4089, %v4088
      %v4108 = vsel %vm4095, %v4090, %v4107
      %v4109 = vsel %vm4097, %v4091, %v4108
      %v4110 = vsel %vm4099, %v4092, %v4109
      %v4111 = vpack.c.b16 %v4106, %v4106
      %v4112 = vpack.c.b16 %v4110, %v4110
      %4115 = vst [vmem:[%s500] sm:$0xf] %v4111
      %vm4116 = vcmask 1042432
      %vm4117 = vsmask.f32 2304
      %vm4118 = vmand %vm4116, %vm4117
      %v4119 = vld [vmem:[%s500 + $0x4] sm:$0x7]
      %v4120 = vsel %vm4118, %v4112, %v4119
      %4121 = vst [vmem:[%s500 + $0x4] sm:$0x7] %v4120
      %p4122 = scmp.lt.s32.totalorder %s24, 1
      %s4123 = scalar_select %p4122, %s24, 1
      %s4124 = smul.addr %s4123, 2
      %s4125 = smul.addr %s4124, 4
      %s4126 = scalar_lea.vmem %s13, %s4125
      // Predicated region
      $region73: #{_forward.7} parent=71 // pred_check
        %p4127 = pneg %p335
      $region74: #{_forward.7} parent=71 // pred_check_branch
        %4129 = sbr.rel (%p4127) target = $region76
      $region75: #{_forward.7} parent=71 // pred_region
        _
      $region76: #{_forward.7} parent=71 // pred_fallthru
        _
    $region72: #{_forward.7} parent=5 // pred_fallthru
      _
    %p4130 = scmp.le.s32.totalorder 2, %s19
    // Predicated region
    $region77: #{_forward.7} parent=5 // pred_check
      %p4131 = pneg %p4130
    $region78: #{_forward.7} parent=5 // pred_check_branch
      %4133 = sbr.rel (%p4131) target = $region80
    $region79: #{_forward.7} parent=5 // pred_region
      %s4134 = ssub.s32 %s19, 2
      // Predicated region
      $region81: #{_forward.7} parent=79 // pred_check
        %p4135 = pneg %p341
      $region82: #{_forward.7} parent=79 // pred_check_branch
        %4137 = sbr.rel (%p4135) target = $region84
      $region83: #{_forward.7} parent=79 // pred_region
        %p4138 = scmp.lt.s32.totalorder %s25, 1
        %s4139 = scalar_select %p4138, %s25, 1
        %s4140 = smul.addr %s4139, 2
        %s4141 = smul.addr %s4140, 4
        %s4142 = scalar_lea.vmem %s13, %s4141
      $region84: #{_forward.7} parent=79 // pred_fallthru
        _
    $region80: #{_forward.7} parent=5 // pred_fallthru
      _
  $region6: #{_forward.7} parent=0 // loop_footer
    %s23 = sadd.s32 1, %s19
  $region7: #{_forward.7} parent=0 // loop_footer_branch
    %18 = sbr.rel target = $region3
  $region8: #{_forward.7} parent=0 // loop_exit
    _

// kernel: _forward.9
$region0: #{_forward.9}
  #allocation0 [shape = 'u32[]', space=smem, size = 0x4, offset = 0x4, fixed_abs, tag = 'smem constant byte address 0x4 - core index']
  #allocation1 [shape = 'u32[72,128]{1,0:T(1,128)}', space=vmem, size = 0x9000, scoped, tag = 'internal scratch']
  %s0 = inlined_call_operand.vmem [shape: bf16[8,256], index: 0, kind: input, shape index: {}]
  %s1 = inlined_call_operand.vmem [shape: bf16[8,3], index: 1, kind: input, shape index: {}]
  %s2 = inlined_call_operand.vmem [shape: bf16[256,256], index: 2, kind: input, shape index: {}]
  %s3 = inlined_call_operand.vmem [shape: bf16[3,256], index: 3, kind: input, shape index: {}]
  %s4 = inlined_call_operand.vmem [shape: f32[1,256], index: 4, kind: input, shape index: {}]
  %s5 = inlined_call_operand.vmem [shape: bf16[256,512], index: 5, kind: input, shape index: {}]
  %s6 = inlined_call_operand.vmem [shape: f32[1,512], index: 6, kind: input, shape index: {}]
  %s7 = inlined_call_operand.vmem [shape: bf16[512,1024], index: 7, kind: input, shape index: {}]
  %s8 = inlined_call_operand.vmem [shape: f32[1,1024], index: 8, kind: input, shape index: {}]
  %s9 = inlined_call_operand.vmem [shape: f32[1,1024], index: 9, kind: input, shape index: {}]
  %s10 = inlined_call_operand.vmem [shape: f32[1,1024], index: 10, kind: input, shape index: {}]
  %s11 = inlined_call_operand.vmem [shape: bf16[8,1024], index: 11, kind: output, shape index: {}]
  %s12 = sld [smem:[#allocation0]]
  $region54: #{_forward.9} parent=0
    _
  %s14 = ssub.s32 1, %s12
  %s15 = scalar_select 0, %s14, %s12
  // Predicated region
  $region2: #{_forward.9} parent=0 // pred_check
    _
  $region3: #{_forward.9} parent=0 // pred_check_branch
    %17 = sbr.rel (0) target = $region5
  $region4: #{_forward.9} parent=0 // pred_region
    _
  $region5: #{_forward.9} parent=0 // pred_fallthru
    _
  // Predicated region
  $region6: #{_forward.9} parent=0 // pred_check
    _
  $region7: #{_forward.9} parent=0 // pred_check_branch
    %19 = sbr.rel (0) target = $region9
  $region8: #{_forward.9} parent=0 // pred_region
    _
  $region9: #{_forward.9} parent=0 // pred_fallthru
    _
  // Predicated region
  $region10: #{_forward.9} parent=0 // pred_check
    _
  $region11: #{_forward.9} parent=0 // pred_check_branch
    %21 = sbr.rel (0) target = $region13
  $region12: #{_forward.9} parent=0 // pred_region
    _
  $region13: #{_forward.9} parent=0 // pred_fallthru
    _
  // Predicated region
  $region14: #{_forward.9} parent=0 // pred_check
    _
  $region15: #{_forward.9} parent=0 // pred_check_branch
    %23 = sbr.rel (0) target = $region17
  $region16: #{_forward.9} parent=0 // pred_region
    _
  $region17: #{_forward.9} parent=0 // pred_fallthru
    _
  // Predicated region
  $region18: #{_forward.9} parent=0 // pred_check
    _
  $region19: #{_forward.9} parent=0 // pred_check_branch
    %25 = sbr.rel (0) target = $region21
  $region20: #{_forward.9} parent=0 // pred_region
    _
  $region21: #{_forward.9} parent=0 // pred_fallthru
    _
  // Predicated region
  $region22: #{_forward.9} parent=0 // pred_check
    _
  $region23: #{_forward.9} parent=0 // pred_check_branch
    %27 = sbr.rel (0) target = $region25
  $region24: #{_forward.9} parent=0 // pred_region
    _
  $region25: #{_forward.9} parent=0 // pred_fallthru
    _
  // Predicated region
  $region26: #{_forward.9} parent=0 // pred_check
    _
  $region27: #{_forward.9} parent=0 // pred_check_branch
    %29 = sbr.rel (0) target = $region29
  $region28: #{_forward.9} parent=0 // pred_region
    _
  $region29: #{_forward.9} parent=0 // pred_fallthru
    _
  // Predicated region
  $region30: #{_forward.9} parent=0 // pred_check
    _
  $region31: #{_forward.9} parent=0 // pred_check_branch
    %31 = sbr.rel (0) target = $region33
  $region32: #{_forward.9} parent=0 // pred_region
    _
  $region33: #{_forward.9} parent=0 // pred_fallthru
    _
  // Predicated region
  $region34: #{_forward.9} parent=0 // pred_check
    _
  $region35: #{_forward.9} parent=0 // pred_check_branch
    %33 = sbr.rel (0) target = $region37
  $region36: #{_forward.9} parent=0 // pred_region
    _
  $region37: #{_forward.9} parent=0 // pred_fallthru
    _
  // Predicated region
  $region38: #{_forward.9} parent=0 // pred_check
    _
  $region39: #{_forward.9} parent=0 // pred_check_branch
    %35 = sbr.rel (0) target = $region41
  $region40: #{_forward.9} parent=0 // pred_region
    _
  $region41: #{_forward.9} parent=0 // pred_fallthru
    _
  // Predicated region
  $region42: #{_forward.9} parent=0 // pred_check
    _
  $region43: #{_forward.9} parent=0 // pred_check_branch
    %37 = sbr.rel (0) target = $region45
  $region44: #{_forward.9} parent=0 // pred_region
    _
  $region45: #{_forward.9} parent=0 // pred_fallthru
    _
  %v39 = vld [vmem:[%s0] sm:$0xff]
  %v40 = vld [vmem:[%s2] sm:$0xff]
  %v41 = vld [vmem:[%s2 + $0x8] sm:$0xff]
  %v42 = vld [vmem:[%s2 + $0x10] sm:$0xff]
  %v43 = vld [vmem:[%s2 + $0x18] sm:$0xff]
  %v44 = vld [vmem:[%s2 + $0x20] sm:$0xff]
  %v45 = vld [vmem:[%s2 + $0x28] sm:$0xff]
  %v46 = vld [vmem:[%s2 + $0x30] sm:$0xff]
  %v47 = vld [vmem:[%s2 + $0x38] sm:$0xff]
  %v48 = vld [vmem:[%s2 + $0x40] sm:$0xff]
  %v49 = vld [vmem:[%s2 + $0x48] sm:$0xff]
  %v50 = vld [vmem:[%s2 + $0x50] sm:$0xff]
  %v51 = vld [vmem:[%s2 + $0x58] sm:$0xff]
  %v52 = vld [vmem:[%s2 + $0x60] sm:$0xff]
  %v53 = vld [vmem:[%s2 + $0x68] sm:$0xff]
  %v54 = vld [vmem:[%s2 + $0x70] sm:$0xff]
  %v55 = vld [vmem:[%s2 + $0x78] sm:$0xff]
  %v56 = vld [vmem:[%s2 + $0x80] sm:$0xff]
  %v57 = vld [vmem:[%s2 + $0x88] sm:$0xff]
  %v58 = vld [vmem:[%s2 + $0x90] sm:$0xff]
  %v59 = vld [vmem:[%s2 + $0x98] sm:$0xff]
  %v60 = vld [vmem:[%s2 + $0xa0] sm:$0xff]
  %v61 = vld [vmem:[%s2 + $0xa8] sm:$0xff]
  %v62 = vld [vmem:[%s2 + $0xb0] sm:$0xff]
  %v63 = vld [vmem:[%s2 + $0xb8] sm:$0xff]
  %v64 = vld [vmem:[%s2 + $0xc0] sm:$0xff]
  %v65 = vld [vmem:[%s2 + $0xc8] sm:$0xff]
  %v66 = vld [vmem:[%s2 + $0xd0] sm:$0xff]
  %v67 = vld [vmem:[%s2 + $0xd8] sm:$0xff]
  %v68 = vld [vmem:[%s2 + $0xe0] sm:$0xff]
  %v69 = vld [vmem:[%s2 + $0xe8] sm:$0xff]
  %v70 = vld [vmem:[%s2 + $0xf0] sm:$0xff]
  %v71 = vld [vmem:[%s2 + $0xf8] sm:$0xff]
  %v72 = vld [vmem:[%s1] sm:$0xf]
  %v73 = vld [vmem:[%s3] sm:$0xf]
  %75 = vst [vmem:[#allocation1] ss:$4 sm:$0xff] %v73
  %v76 = vld.sshfl [vmem:[#allocation1] sm:$0xff pattern:$0x73625140]
  %v77 = vld.sshfl [vmem:[#allocation1 + $0x8] sm:$0xff pattern:$0x73625140]
  %vm78 = vcmask 23552
  %v80 = vsel %vm78, %v72, 0
  %vm82 = vcmask 1040384
  %vm83 = vcmask 1041408
  %v84 = vsel %vm82, 4294967295, 65535
  %v85 = vsel %vm83, %v84, 0
  %v86 = vand.u32 %v76, %v85
  %v88 = vand.u32 %v77, %v85
  %90 = vmatpush.bf16.msra.mxu0 0
  %91 = vmatpush.bf16.msra.mxu0 0
  %92 = vmatpush.bf16.msra.mxu0 0
  %93 = vmatpush.bf16.msra.mxu0 0
  %94 = vmatpush.bf16.msra.mxu0 0
  %95 = vmatpush.bf16.msra.mxu0 0
  %96 = vmatpush.bf16.msra.mxu0 0
  %97 = vmatpush.bf16.msra.mxu0 %v86
  %98 = vmatmul.bf16.gmra.mxu0 %v80
  %v99 = vpop.f32.mrf.mxu0
  %v100 = vadd.f32 0.0, %v99
  %v101 = vpop.f32.mrf.mxu0
  %102 = vdwg.mxu0
  %103 = vmatpush.bf16.msra.mxu0 0
  %104 = vmatpush.bf16.msra.mxu0 0
  %105 = vmatpush.bf16.msra.mxu0 0
  %106 = vmatpush.bf16.msra.mxu0 0
  %107 = vmatpush.bf16.msra.mxu0 0
  %108 = vmatpush.bf16.msra.mxu0 0
  %109 = vmatpush.bf16.msra.mxu0 0
  %110 = vmatpush.bf16.msra.mxu0 %v88
  %111 = vmatmul.bf16.gmra.mxu0 %v80
  %v112 = vpop.f32.mrf.mxu0
  %v113 = vadd.f32 0.0, %v112
  %v114 = vpop.f32.mrf.mxu0
  %115 = vdwg.mxu0
  %v117 = vunpack.c.l.b16 %v39
  %v118 = vunpack.c.h.b16 %v39
  %v119 = vpack.c.b16 %v117, %v117
  %v120 = vpack.c.b16 %v118, %v118
  %v155 = vunpack.c.l.b16 %v40
  %v156 = vunpack.c.h.b16 %v40
  %v157 = vunpack.c.l.b16 %v41
  %v158 = vunpack.c.h.b16 %v41
  %v159 = vunpack.c.l.b16 %v42
  %v160 = vunpack.c.h.b16 %v42
  %v161 = vunpack.c.l.b16 %v43
  %v162 = vunpack.c.h.b16 %v43
  %v163 = vunpack.c.l.b16 %v44
  %v164 = vunpack.c.h.b16 %v44
  %v165 = vunpack.c.l.b16 %v45
  %v166 = vunpack.c.h.b16 %v45
  %v167 = vunpack.c.l.b16 %v46
  %v168 = vunpack.c.h.b16 %v46
  %v169 = vunpack.c.l.b16 %v47
  %v170 = vunpack.c.h.b16 %v47
  %v171 = vunpack.c.l.b16 %v48
  %v172 = vunpack.c.h.b16 %v48
  %v173 = vunpack.c.l.b16 %v49
  %v174 = vunpack.c.h.b16 %v49
  %v175 = vunpack.c.l.b16 %v50
  %v176 = vunpack.c.h.b16 %v50
  %v177 = vunpack.c.l.b16 %v51
  %v178 = vunpack.c.h.b16 %v51
  %v179 = vunpack.c.l.b16 %v52
  %v180 = vunpack.c.h.b16 %v52
  %v181 = vunpack.c.l.b16 %v53
  %v182 = vunpack.c.h.b16 %v53
  %v183 = vunpack.c.l.b16 %v54
  %v184 = vunpack.c.h.b16 %v54
  %v185 = vunpack.c.l.b16 %v55
  %v186 = vunpack.c.h.b16 %v55
  %v187 = vunpack.c.l.b16 %v56
  %v188 = vunpack.c.h.b16 %v56
  %v189 = vunpack.c.l.b16 %v57
  %v190 = vunpack.c.h.b16 %v57
  %v191 = vunpack.c.l.b16 %v58
  %v192 = vunpack.c.h.b16 %v58
  %v193 = vunpack.c.l.b16 %v59
  %v194 = vunpack.c.h.b16 %v59
  %v195 = vunpack.c.l.b16 %v60
  %v196 = vunpack.c.h.b16 %v60
  %v197 = vunpack.c.l.b16 %v61
  %v198 = vunpack.c.h.b16 %v61
  %v199 = vunpack.c.l.b16 %v62
  %v200 = vunpack.c.h.b16 %v62
  %v201 = vunpack.c.l.b16 %v63
  %v202 = vunpack.c.h.b16 %v63
  %v203 = vunpack.c.l.b16 %v64
  %v204 = vunpack.c.h.b16 %v64
  %v205 = vunpack.c.l.b16 %v65
  %v206 = vunpack.c.h.b16 %v65
  %v207 = vunpack.c.l.b16 %v66
  %v208 = vunpack.c.h.b16 %v66
  %v209 = vunpack.c.l.b16 %v67
  %v210 = vunpack.c.h.b16 %v67
  %v211 = vunpack.c.l.b16 %v68
  %v212 = vunpack.c.h.b16 %v68
  %v213 = vunpack.c.l.b16 %v69
  %v214 = vunpack.c.h.b16 %v69
  %v215 = vunpack.c.l.b16 %v70
  %v216 = vunpack.c.h.b16 %v70
  %v217 = vunpack.c.l.b16 %v71
  %v218 = vunpack.c.h.b16 %v71
  %v219 = vpack.c.b16 %v157, %v155
  %v220 = vpack.c.b16 %v158, %v156
  %v221 = vpack.c.b16 %v161, %v159
  %v222 = vpack.c.b16 %v162, %v160
  %v223 = vpack.c.b16 %v165, %v163
  %v224 = vpack.c.b16 %v166, %v164
  %v225 = vpack.c.b16 %v169, %v167
  %v226 = vpack.c.b16 %v170, %v168
  %v227 = vpack.c.b16 %v173, %v171
  %v228 = vpack.c.b16 %v174, %v172
  %v229 = vpack.c.b16 %v177, %v175
  %v230 = vpack.c.b16 %v178, %v176
  %v231 = vpack.c.b16 %v181, %v179
  %v232 = vpack.c.b16 %v182, %v180
  %v233 = vpack.c.b16 %v185, %v183
  %v234 = vpack.c.b16 %v186, %v184
  %v235 = vpack.c.b16 %v189, %v187
  %v236 = vpack.c.b16 %v190, %v188
  %v237 = vpack.c.b16 %v193, %v191
  %v238 = vpack.c.b16 %v194, %v192
  %v239 = vpack.c.b16 %v197, %v195
  %v240 = vpack.c.b16 %v198, %v196
  %v241 = vpack.c.b16 %v201, %v199
  %v242 = vpack.c.b16 %v202, %v200
  %v243 = vpack.c.b16 %v205, %v203
  %v244 = vpack.c.b16 %v206, %v204
  %v245 = vpack.c.b16 %v209, %v207
  %v246 = vpack.c.b16 %v210, %v208
  %v247 = vpack.c.b16 %v213, %v211
  %v248 = vpack.c.b16 %v214, %v212
  %v249 = vpack.c.b16 %v217, %v215
  %v250 = vpack.c.b16 %v218, %v216
  %283 = vmatpush.bf16.msra.mxu0 %v233
  %284 = vmatpush.bf16.msra.mxu0 %v231
  %285 = vmatpush.bf16.msra.mxu0 %v229
  %286 = vmatpush.bf16.msra.mxu0 %v227
  %287 = vmatpush.bf16.msra.mxu0 %v225
  %288 = vmatpush.bf16.msra.mxu0 %v223
  %289 = vmatpush.bf16.msra.mxu0 %v221
  %290 = vmatpush.bf16.msra.mxu0 %v219
  %291 = vmatmul.bf16.gmra.mxu0 %v119
  %v292 = vpop.f32.mrf.mxu0
  %v293 = vadd.f32 %v100, %v292
  %v294 = vpop.f32.mrf.mxu0
  %295 = vdwg.mxu0
  %296 = vmatpush.bf16.msra.mxu0 %v249
  %297 = vmatpush.bf16.msra.mxu0 %v247
  %298 = vmatpush.bf16.msra.mxu0 %v245
  %299 = vmatpush.bf16.msra.mxu0 %v243
  %300 = vmatpush.bf16.msra.mxu0 %v241
  %301 = vmatpush.bf16.msra.mxu0 %v239
  %302 = vmatpush.bf16.msra.mxu0 %v237
  %303 = vmatpush.bf16.msra.mxu0 %v235
  %304 = vmatmul.bf16.gmra.mxu0 %v120
  %v305 = vpop.f32.mrf.mxu0
  %v306 = vadd.f32 %v293, %v305
  %v307 = vpop.f32.mrf.mxu0
  %308 = vdwg.mxu0
  %309 = vmatpush.bf16.msra.mxu0 %v234
  %310 = vmatpush.bf16.msra.mxu0 %v232
  %311 = vmatpush.bf16.msra.mxu0 %v230
  %312 = vmatpush.bf16.msra.mxu0 %v228
  %313 = vmatpush.bf16.msra.mxu0 %v226
  %314 = vmatpush.bf16.msra.mxu0 %v224
  %315 = vmatpush.bf16.msra.mxu0 %v222
  %316 = vmatpush.bf16.msra.mxu0 %v220
  %317 = vmatmul.bf16.gmra.mxu0 %v119
  %v318 = vpop.f32.mrf.mxu0
  %v319 = vadd.f32 %v113, %v318
  %v320 = vpop.f32.mrf.mxu0
  %321 = vdwg.mxu0
  %322 = vmatpush.bf16.msra.mxu0 %v250
  %323 = vmatpush.bf16.msra.mxu0 %v248
  %324 = vmatpush.bf16.msra.mxu0 %v246
  %325 = vmatpush.bf16.msra.mxu0 %v244
  %326 = vmatpush.bf16.msra.mxu0 %v242
  %327 = vmatpush.bf16.msra.mxu0 %v240
  %328 = vmatpush.bf16.msra.mxu0 %v238
  %329 = vmatpush.bf16.msra.mxu0 %v236
  %330 = vmatmul.bf16.gmra.mxu0 %v120
  %v331 = vpop.f32.mrf.mxu0
  %v332 = vadd.f32 %v319, %v331
  %v333 = vpop.f32.mrf.mxu0
  %334 = vdwg.mxu0
  %v335 = vld [vmem:[%s4] sm:$0x3]
  %v337 = vperm.slane %v335, 0
  %v338 = vperm.slane %v335, 1
  %v341 = vadd.f32 %v306, %v337
  %v342 = vadd.f32 %v332, %v338
  %v343 = vpack.c.bf16 %v342, %v341
  %v344 = vunpack.c.l.bf16 %v343
  %v345 = vunpack.c.h.bf16 %v343
  %v346 = vmax.f32 %v344, 0.0
  %v347 = vmax.f32 %v345, 0.0
  %v348 = vpack.c.bf16 %v346, %v346
  %v349 = vpack.c.bf16 %v347, %v347
  %v350 = vld [vmem:[%s5] sm:$0xff]
  %v351 = vld [vmem:[%s5 + $0x8] sm:$0xff]
  %v352 = vld [vmem:[%s5 + $0x10] sm:$0xff]
  %v353 = vld [vmem:[%s5 + $0x18] sm:$0xff]
  %v354 = vld [vmem:[%s5 + $0x20] sm:$0xff]
  %v355 = vld [vmem:[%s5 + $0x28] sm:$0xff]
  %v356 = vld [vmem:[%s5 + $0x30] sm:$0xff]
  %v357 = vld [vmem:[%s5 + $0x38] sm:$0xff]
  %v358 = vld [vmem:[%s5 + $0x40] sm:$0xff]
  %v359 = vld [vmem:[%s5 + $0x48] sm:$0xff]
  %v360 = vld [vmem:[%s5 + $0x50] sm:$0xff]
  %v361 = vld [vmem:[%s5 + $0x58] sm:$0xff]
  %v362 = vld [vmem:[%s5 + $0x60] sm:$0xff]
  %v363 = vld [vmem:[%s5 + $0x68] sm:$0xff]
  %v364 = vld [vmem:[%s5 + $0x70] sm:$0xff]
  %v365 = vld [vmem:[%s5 + $0x78] sm:$0xff]
  %v366 = vld [vmem:[%s5 + $0x80] sm:$0xff]
  %v367 = vld [vmem:[%s5 + $0x88] sm:$0xff]
  %v368 = vld [vmem:[%s5 + $0x90] sm:$0xff]
  %v369 = vld [vmem:[%s5 + $0x98] sm:$0xff]
  %v370 = vld [vmem:[%s5 + $0xa0] sm:$0xff]
  %v371 = vld [vmem:[%s5 + $0xa8] sm:$0xff]
  %v372 = vld [vmem:[%s5 + $0xb0] sm:$0xff]
  %v373 = vld [vmem:[%s5 + $0xb8] sm:$0xff]
  %v374 = vld [vmem:[%s5 + $0xc0] sm:$0xff]
  %v375 = vld [vmem:[%s5 + $0xc8] sm:$0xff]
  %v376 = vld [vmem:[%s5 + $0xd0] sm:$0xff]
  %v377 = vld [vmem:[%s5 + $0xd8] sm:$0xff]
  %v378 = vld [vmem:[%s5 + $0xe0] sm:$0xff]
  %v379 = vld [vmem:[%s5 + $0xe8] sm:$0xff]
  %v380 = vld [vmem:[%s5 + $0xf0] sm:$0xff]
  %v381 = vld [vmem:[%s5 + $0xf8] sm:$0xff]
  %v382 = vld [vmem:[%s5 + $0x100] sm:$0xff]
  %v383 = vld [vmem:[%s5 + $0x108] sm:$0xff]
  %v384 = vld [vmem:[%s5 + $0x110] sm:$0xff]
  %v385 = vld [vmem:[%s5 + $0x118] sm:$0xff]
  %v386 = vld [vmem:[%s5 + $0x120] sm:$0xff]
  %v387 = vld [vmem:[%s5 + $0x128] sm:$0xff]
  %v388 = vld [vmem:[%s5 + $0x130] sm:$0xff]
  %v389 = vld [vmem:[%s5 + $0x138] sm:$0xff]
  %v390 = vld [vmem:[%s5 + $0x140] sm:$0xff]
  %v391 = vld [vmem:[%s5 + $0x148] sm:$0xff]
  %v392 = vld [vmem:[%s5 + $0x150] sm:$0xff]
  %v393 = vld [vmem:[%s5 + $0x158] sm:$0xff]
  %v394 = vld [vmem:[%s5 + $0x160] sm:$0xff]
  %v395 = vld [vmem:[%s5 + $0x168] sm:$0xff]
  %v396 = vld [vmem:[%s5 + $0x170] sm:$0xff]
  %v397 = vld [vmem:[%s5 + $0x178] sm:$0xff]
  %v398 = vld [vmem:[%s5 + $0x180] sm:$0xff]
  %v399 = vld [vmem:[%s5 + $0x188] sm:$0xff]
  %v400 = vld [vmem:[%s5 + $0x190] sm:$0xff]
  %v401 = vld [vmem:[%s5 + $0x198] sm:$0xff]
  %v402 = vld [vmem:[%s5 + $0x1a0] sm:$0xff]
  %v403 = vld [vmem:[%s5 + $0x1a8] sm:$0xff]
  %v404 = vld [vmem:[%s5 + $0x1b0] sm:$0xff]
  %v405 = vld [vmem:[%s5 + $0x1b8] sm:$0xff]
  %v406 = vld [vmem:[%s5 + $0x1c0] sm:$0xff]
  %v407 = vld [vmem:[%s5 + $0x1c8] sm:$0xff]
  %v408 = vld [vmem:[%s5 + $0x1d0] sm:$0xff]
  %v409 = vld [vmem:[%s5 + $0x1d8] sm:$0xff]
  %v410 = vld [vmem:[%s5 + $0x1e0] sm:$0xff]
  %v411 = vld [vmem:[%s5 + $0x1e8] sm:$0xff]
  %v412 = vld [vmem:[%s5 + $0x1f0] sm:$0xff]
  %v413 = vld [vmem:[%s5 + $0x1f8] sm:$0xff]
  %v414 = vld [vmem:[%s6] sm:$0xf]
  %v416 = vperm.slane %v414, 0
  %v417 = vperm.slane %v414, 1
  %v418 = vperm.slane %v414, 2
  %v419 = vperm.slane %v414, 3
  %v488 = vunpack.c.l.b16 %v350
  %v489 = vunpack.c.h.b16 %v350
  %v490 = vunpack.c.l.b16 %v351
  %v491 = vunpack.c.h.b16 %v351
  %v492 = vunpack.c.l.b16 %v352
  %v493 = vunpack.c.h.b16 %v352
  %v494 = vunpack.c.l.b16 %v353
  %v495 = vunpack.c.h.b16 %v353
  %v496 = vunpack.c.l.b16 %v354
  %v497 = vunpack.c.h.b16 %v354
  %v498 = vunpack.c.l.b16 %v355
  %v499 = vunpack.c.h.b16 %v355
  %v500 = vunpack.c.l.b16 %v356
  %v501 = vunpack.c.h.b16 %v356
  %v502 = vunpack.c.l.b16 %v357
  %v503 = vunpack.c.h.b16 %v357
  %v504 = vunpack.c.l.b16 %v358
  %v505 = vunpack.c.h.b16 %v358
  %v506 = vunpack.c.l.b16 %v359
  %v507 = vunpack.c.h.b16 %v359
  %v508 = vunpack.c.l.b16 %v360
  %v509 = vunpack.c.h.b16 %v360
  %v510 = vunpack.c.l.b16 %v361
  %v511 = vunpack.c.h.b16 %v361
  %v512 = vunpack.c.l.b16 %v362
  %v513 = vunpack.c.h.b16 %v362
  %v514 = vunpack.c.l.b16 %v363
  %v515 = vunpack.c.h.b16 %v363
  %v516 = vunpack.c.l.b16 %v364
  %v517 = vunpack.c.h.b16 %v364
  %v518 = vunpack.c.l.b16 %v365
  %v519 = vunpack.c.h.b16 %v365
  %v520 = vunpack.c.l.b16 %v366
  %v521 = vunpack.c.h.b16 %v366
  %v522 = vunpack.c.l.b16 %v367
  %v523 = vunpack.c.h.b16 %v367
  %v524 = vunpack.c.l.b16 %v368
  %v525 = vunpack.c.h.b16 %v368
  %v526 = vunpack.c.l.b16 %v369
  %v527 = vunpack.c.h.b16 %v369
  %v528 = vunpack.c.l.b16 %v370
  %v529 = vunpack.c.h.b16 %v370
  %v530 = vunpack.c.l.b16 %v371
  %v531 = vunpack.c.h.b16 %v371
  %v532 = vunpack.c.l.b16 %v372
  %v533 = vunpack.c.h.b16 %v372
  %v534 = vunpack.c.l.b16 %v373
  %v535 = vunpack.c.h.b16 %v373
  %v536 = vunpack.c.l.b16 %v374
  %v537 = vunpack.c.h.b16 %v374
  %v538 = vunpack.c.l.b16 %v375
  %v539 = vunpack.c.h.b16 %v375
  %v540 = vunpack.c.l.b16 %v376
  %v541 = vunpack.c.h.b16 %v376
  %v542 = vunpack.c.l.b16 %v377
  %v543 = vunpack.c.h.b16 %v377
  %v544 = vunpack.c.l.b16 %v378
  %v545 = vunpack.c.h.b16 %v378
  %v546 = vunpack.c.l.b16 %v379
  %v547 = vunpack.c.h.b16 %v379
  %v548 = vunpack.c.l.b16 %v380
  %v549 = vunpack.c.h.b16 %v380
  %v550 = vunpack.c.l.b16 %v381
  %v551 = vunpack.c.h.b16 %v381
  %v552 = vunpack.c.l.b16 %v382
  %v553 = vunpack.c.h.b16 %v382
  %v554 = vunpack.c.l.b16 %v383
  %v555 = vunpack.c.h.b16 %v383
  %v556 = vunpack.c.l.b16 %v384
  %v557 = vunpack.c.h.b16 %v384
  %v558 = vunpack.c.l.b16 %v385
  %v559 = vunpack.c.h.b16 %v385
  %v560 = vunpack.c.l.b16 %v386
  %v561 = vunpack.c.h.b16 %v386
  %v562 = vunpack.c.l.b16 %v387
  %v563 = vunpack.c.h.b16 %v387
  %v564 = vunpack.c.l.b16 %v388
  %v565 = vunpack.c.h.b16 %v388
  %v566 = vunpack.c.l.b16 %v389
  %v567 = vunpack.c.h.b16 %v389
  %v568 = vunpack.c.l.b16 %v390
  %v569 = vunpack.c.h.b16 %v390
  %v570 = vunpack.c.l.b16 %v391
  %v571 = vunpack.c.h.b16 %v391
  %v572 = vunpack.c.l.b16 %v392
  %v573 = vunpack.c.h.b16 %v392
  %v574 = vunpack.c.l.b16 %v393
  %v575 = vunpack.c.h.b16 %v393
  %v576 = vunpack.c.l.b16 %v394
  %v577 = vunpack.c.h.b16 %v394
  %v578 = vunpack.c.l.b16 %v395
  %v579 = vunpack.c.h.b16 %v395
  %v580 = vunpack.c.l.b16 %v396
  %v581 = vunpack.c.h.b16 %v396
  %v582 = vunpack.c.l.b16 %v397
  %v583 = vunpack.c.h.b16 %v397
  %v584 = vunpack.c.l.b16 %v398
  %v585 = vunpack.c.h.b16 %v398
  %v586 = vunpack.c.l.b16 %v399
  %v587 = vunpack.c.h.b16 %v399
  %v588 = vunpack.c.l.b16 %v400
  %v589 = vunpack.c.h.b16 %v400
  %v590 = vunpack.c.l.b16 %v401
  %v591 = vunpack.c.h.b16 %v401
  %v592 = vunpack.c.l.b16 %v402
  %v593 = vunpack.c.h.b16 %v402
  %v594 = vunpack.c.l.b16 %v403
  %v595 = vunpack.c.h.b16 %v403
  %v596 = vunpack.c.l.b16 %v404
  %v597 = vunpack.c.h.b16 %v404
  %v598 = vunpack.c.l.b16 %v405
  %v599 = vunpack.c.h.b16 %v405
  %v600 = vunpack.c.l.b16 %v406
  %v601 = vunpack.c.h.b16 %v406
  %v602 = vunpack.c.l.b16 %v407
  %v603 = vunpack.c.h.b16 %v407
  %v604 = vunpack.c.l.b16 %v408
  %v605 = vunpack.c.h.b16 %v408
  %v606 = vunpack.c.l.b16 %v409
  %v607 = vunpack.c.h.b16 %v409
  %v608 = vunpack.c.l.b16 %v410
  %v609 = vunpack.c.h.b16 %v410
  %v610 = vunpack.c.l.b16 %v411
  %v611 = vunpack.c.h.b16 %v411
  %v612 = vunpack.c.l.b16 %v412
  %v613 = vunpack.c.h.b16 %v412
  %v614 = vunpack.c.l.b16 %v413
  %v615 = vunpack.c.h.b16 %v413
  %v616 = vpack.c.b16 %v492, %v488
  %v617 = vpack.c.b16 %v493, %v489
  %v618 = vpack.c.b16 %v494, %v490
  %v619 = vpack.c.b16 %v495, %v491
  %v620 = vpack.c.b16 %v500, %v496
  %v621 = vpack.c.b16 %v501, %v497
  %v622 = vpack.c.b16 %v502, %v498
  %v623 = vpack.c.b16 %v503, %v499
  %v624 = vpack.c.b16 %v508, %v504
  %v625 = vpack.c.b16 %v509, %v505
  %v626 = vpack.c.b16 %v510, %v506
  %v627 = vpack.c.b16 %v511, %v507
  %v628 = vpack.c.b16 %v516, %v512
  %v629 = vpack.c.b16 %v517, %v513
  %v630 = vpack.c.b16 %v518, %v514
  %v631 = vpack.c.b16 %v519, %v515
  %v632 = vpack.c.b16 %v524, %v520
  %v633 = vpack.c.b16 %v525, %v521
  %v634 = vpack.c.b16 %v526, %v522
  %v635 = vpack.c.b16 %v527, %v523
  %v636 = vpack.c.b16 %v532, %v528
  %v637 = vpack.c.b16 %v533, %v529
  %v638 = vpack.c.b16 %v534, %v530
  %v639 = vpack.c.b16 %v535, %v531
  %v640 = vpack.c.b16 %v540, %v536
  %v641 = vpack.c.b16 %v541, %v537
  %v642 = vpack.c.b16 %v542, %v538
  %v643 = vpack.c.b16 %v543, %v539
  %v644 = vpack.c.b16 %v548, %v544
  %v645 = vpack.c.b16 %v549, %v545
  %v646 = vpack.c.b16 %v550, %v546
  %v647 = vpack.c.b16 %v551, %v547
  %v648 = vpack.c.b16 %v556, %v552
  %v649 = vpack.c.b16 %v557, %v553
  %v650 = vpack.c.b16 %v558, %v554
  %v651 = vpack.c.b16 %v559, %v555
  %v652 = vpack.c.b16 %v564, %v560
  %v653 = vpack.c.b16 %v565, %v561
  %v654 = vpack.c.b16 %v566, %v562
  %v655 = vpack.c.b16 %v567, %v563
  %v656 = vpack.c.b16 %v572, %v568
  %v657 = vpack.c.b16 %v573, %v569
  %v658 = vpack.c.b16 %v574, %v570
  %v659 = vpack.c.b16 %v575, %v571
  %v660 = vpack.c.b16 %v580, %v576
  %v661 = vpack.c.b16 %v581, %v577
  %v662 = vpack.c.b16 %v582, %v578
  %v663 = vpack.c.b16 %v583, %v579
  %v664 = vpack.c.b16 %v588, %v584
  %v665 = vpack.c.b16 %v589, %v585
  %v666 = vpack.c.b16 %v590, %v586
  %v667 = vpack.c.b16 %v591, %v587
  %v668 = vpack.c.b16 %v596, %v592
  %v669 = vpack.c.b16 %v597, %v593
  %v670 = vpack.c.b16 %v598, %v594
  %v671 = vpack.c.b16 %v599, %v595
  %v672 = vpack.c.b16 %v604, %v600
  %v673 = vpack.c.b16 %v605, %v601
  %v674 = vpack.c.b16 %v606, %v602
  %v675 = vpack.c.b16 %v607, %v603
  %v676 = vpack.c.b16 %v612, %v608
  %v677 = vpack.c.b16 %v613, %v609
  %v678 = vpack.c.b16 %v614, %v610
  %v679 = vpack.c.b16 %v615, %v611
  %744 = vmatpush.bf16.msra.mxu0 %v644
  %745 = vmatpush.bf16.msra.mxu0 %v640
  %746 = vmatpush.bf16.msra.mxu0 %v636
  %747 = vmatpush.bf16.msra.mxu0 %v632
  %748 = vmatpush.bf16.msra.mxu0 %v628
  %749 = vmatpush.bf16.msra.mxu0 %v624
  %750 = vmatpush.bf16.msra.mxu0 %v620
  %751 = vmatpush.bf16.msra.mxu0 %v616
  %752 = vmatmul.bf16.gmra.mxu0 %v348
  %v753 = vpop.f32.mrf.mxu0
  %v754 = vadd.f32 %v416, %v753
  %v755 = vpop.f32.mrf.mxu0
  %756 = vdwg.mxu0
  %757 = vmatpush.bf16.msra.mxu0 %v676
  %758 = vmatpush.bf16.msra.mxu0 %v672
  %759 = vmatpush.bf16.msra.mxu0 %v668
  %760 = vmatpush.bf16.msra.mxu0 %v664
  %761 = vmatpush.bf16.msra.mxu0 %v660
  %762 = vmatpush.bf16.msra.mxu0 %v656
  %763 = vmatpush.bf16.msra.mxu0 %v652
  %764 = vmatpush.bf16.msra.mxu0 %v648
  %765 = vmatmul.bf16.gmra.mxu0 %v349
  %v766 = vpop.f32.mrf.mxu0
  %v767 = vadd.f32 %v754, %v766
  %v768 = vpop.f32.mrf.mxu0
  %769 = vdwg.mxu0
  %770 = vmatpush.bf16.msra.mxu0 %v645
  %771 = vmatpush.bf16.msra.mxu0 %v641
  %772 = vmatpush.bf16.msra.mxu0 %v637
  %773 = vmatpush.bf16.msra.mxu0 %v633
  %774 = vmatpush.bf16.msra.mxu0 %v629
  %775 = vmatpush.bf16.msra.mxu0 %v625
  %776 = vmatpush.bf16.msra.mxu0 %v621
  %777 = vmatpush.bf16.msra.mxu0 %v617
  %778 = vmatmul.bf16.gmra.mxu0 %v348
  %v779 = vpop.f32.mrf.mxu0
  %v780 = vadd.f32 %v417, %v779
  %v781 = vpop.f32.mrf.mxu0
  %782 = vdwg.mxu0
  %783 = vmatpush.bf16.msra.mxu0 %v677
  %784 = vmatpush.bf16.msra.mxu0 %v673
  %785 = vmatpush.bf16.msra.mxu0 %v669
  %786 = vmatpush.bf16.msra.mxu0 %v665
  %787 = vmatpush.bf16.msra.mxu0 %v661
  %788 = vmatpush.bf16.msra.mxu0 %v657
  %789 = vmatpush.bf16.msra.mxu0 %v653
  %790 = vmatpush.bf16.msra.mxu0 %v649
  %791 = vmatmul.bf16.gmra.mxu0 %v349
  %v792 = vpop.f32.mrf.mxu0
  %v793 = vadd.f32 %v780, %v792
  %v794 = vpop.f32.mrf.mxu0
  %795 = vdwg.mxu0
  %796 = vmatpush.bf16.msra.mxu0 %v646
  %797 = vmatpush.bf16.msra.mxu0 %v642
  %798 = vmatpush.bf16.msra.mxu0 %v638
  %799 = vmatpush.bf16.msra.mxu0 %v634
  %800 = vmatpush.bf16.msra.mxu0 %v630
  %801 = vmatpush.bf16.msra.mxu0 %v626
  %802 = vmatpush.bf16.msra.mxu0 %v622
  %803 = vmatpush.bf16.msra.mxu0 %v618
  %804 = vmatmul.bf16.gmra.mxu0 %v348
  %v805 = vpop.f32.mrf.mxu0
  %v806 = vadd.f32 %v418, %v805
  %v807 = vpop.f32.mrf.mxu0
  %808 = vdwg.mxu0
  %809 = vmatpush.bf16.msra.mxu0 %v678
  %810 = vmatpush.bf16.msra.mxu0 %v674
  %811 = vmatpush.bf16.msra.mxu0 %v670
  %812 = vmatpush.bf16.msra.mxu0 %v666
  %813 = vmatpush.bf16.msra.mxu0 %v662
  %814 = vmatpush.bf16.msra.mxu0 %v658
  %815 = vmatpush.bf16.msra.mxu0 %v654
  %816 = vmatpush.bf16.msra.mxu0 %v650
  %817 = vmatmul.bf16.gmra.mxu0 %v349
  %v818 = vpop.f32.mrf.mxu0
  %v819 = vadd.f32 %v806, %v818
  %v820 = vpop.f32.mrf.mxu0
  %821 = vdwg.mxu0
  %822 = vmatpush.bf16.msra.mxu0 %v647
  %823 = vmatpush.bf16.msra.mxu0 %v643
  %824 = vmatpush.bf16.msra.mxu0 %v639
  %825 = vmatpush.bf16.msra.mxu0 %v635
  %826 = vmatpush.bf16.msra.mxu0 %v631
  %827 = vmatpush.bf16.msra.mxu0 %v627
  %828 = vmatpush.bf16.msra.mxu0 %v623
  %829 = vmatpush.bf16.msra.mxu0 %v619
  %830 = vmatmul.bf16.gmra.mxu0 %v348
  %v831 = vpop.f32.mrf.mxu0
  %v832 = vadd.f32 %v419, %v831
  %v833 = vpop.f32.mrf.mxu0
  %834 = vdwg.mxu0
  %835 = vmatpush.bf16.msra.mxu0 %v679
  %836 = vmatpush.bf16.msra.mxu0 %v675
  %837 = vmatpush.bf16.msra.mxu0 %v671
  %838 = vmatpush.bf16.msra.mxu0 %v667
  %839 = vmatpush.bf16.msra.mxu0 %v663
  %840 = vmatpush.bf16.msra.mxu0 %v659
  %841 = vmatpush.bf16.msra.mxu0 %v655
  %842 = vmatpush.bf16.msra.mxu0 %v651
  %843 = vmatmul.bf16.gmra.mxu0 %v349
  %v844 = vpop.f32.mrf.mxu0
  %v845 = vadd.f32 %v832, %v844
  %v846 = vpop.f32.mrf.mxu0
  %847 = vdwg.mxu0
  %v848 = vpack.c.bf16 %v793, %v767
  %v849 = vpack.c.bf16 %v845, %v819
  %v850 = vunpack.c.l.bf16 %v848
  %v851 = vunpack.c.h.bf16 %v848
  %v852 = vunpack.c.l.bf16 %v849
  %v853 = vunpack.c.h.bf16 %v849
  %v854 = vmax.f32 %v850, 0.0
  %v855 = vmax.f32 %v851, 0.0
  %v856 = vmax.f32 %v852, 0.0
  %v857 = vmax.f32 %v853, 0.0
  %v858 = vpack.c.bf16 %v854, %v854
  %v859 = vpack.c.bf16 %v855, %v855
  %v860 = vpack.c.bf16 %v856, %v856
  %v861 = vpack.c.bf16 %v857, %v857
  %v862 = vld [vmem:[%s7] sm:$0xff]
  %v863 = vld [vmem:[%s7 + $0x8] sm:$0xff]
  %v864 = vld [vmem:[%s7 + $0x10] sm:$0xff]
  %v865 = vld [vmem:[%s7 + $0x18] sm:$0xff]
  %v866 = vld [vmem:[%s7 + $0x20] sm:$0xff]
  %v867 = vld [vmem:[%s7 + $0x28] sm:$0xff]
  %v868 = vld [vmem:[%s7 + $0x30] sm:$0xff]
  %v869 = vld [vmem:[%s7 + $0x38] sm:$0xff]
  %v870 = vld [vmem:[%s7 + $0x40] sm:$0xff]
  %v871 = vld [vmem:[%s7 + $0x48] sm:$0xff]
  %v872 = vld [vmem:[%s7 + $0x50] sm:$0xff]
  %v873 = vld [vmem:[%s7 + $0x58] sm:$0xff]
  %v874 = vld [vmem:[%s7 + $0x60] sm:$0xff]
  %v875 = vld [vmem:[%s7 + $0x68] sm:$0xff]
  %v876 = vld [vmem:[%s7 + $0x70] sm:$0xff]
  %v877 = vld [vmem:[%s7 + $0x78] sm:$0xff]
  %v878 = vld [vmem:[%s7 + $0x80] sm:$0xff]
  %v879 = vld [vmem:[%s7 + $0x88] sm:$0xff]
  %v880 = vld [vmem:[%s7 + $0x90] sm:$0xff]
  %v881 = vld [vmem:[%s7 + $0x98] sm:$0xff]
  %v882 = vld [vmem:[%s7 + $0xa0] sm:$0xff]
  %v883 = vld [vmem:[%s7 + $0xa8] sm:$0xff]
  %v884 = vld [vmem:[%s7 + $0xb0] sm:$0xff]
  %v885 = vld [vmem:[%s7 + $0xb8] sm:$0xff]
  %v886 = vld [vmem:[%s7 + $0xc0] sm:$0xff]
  %v887 = vld [vmem:[%s7 + $0xc8] sm:$0xff]
  %v888 = vld [vmem:[%s7 + $0xd0] sm:$0xff]
  %v889 = vld [vmem:[%s7 + $0xd8] sm:$0xff]
  %v890 = vld [vmem:[%s7 + $0xe0] sm:$0xff]
  %v891 = vld [vmem:[%s7 + $0xe8] sm:$0xff]
  %v892 = vld [vmem:[%s7 + $0xf0] sm:$0xff]
  %v893 = vld [vmem:[%s7 + $0xf8] sm:$0xff]
  %v894 = vld [vmem:[%s7 + $0x100] sm:$0xff]
  %v895 = vld [vmem:[%s7 + $0x108] sm:$0xff]
  %v896 = vld [vmem:[%s7 + $0x110] sm:$0xff]
  %v897 = vld [vmem:[%s7 + $0x118] sm:$0xff]
  %v898 = vld [vmem:[%s7 + $0x120] sm:$0xff]
  %v899 = vld [vmem:[%s7 + $0x128] sm:$0xff]
  %v900 = vld [vmem:[%s7 + $0x130] sm:$0xff]
  %v901 = vld [vmem:[%s7 + $0x138] sm:$0xff]
  %v902 = vld [vmem:[%s7 + $0x140] sm:$0xff]
  %v903 = vld [vmem:[%s7 + $0x148] sm:$0xff]
  %v904 = vld [vmem:[%s7 + $0x150] sm:$0xff]
  %v905 = vld [vmem:[%s7 + $0x158] sm:$0xff]
  %v906 = vld [vmem:[%s7 + $0x160] sm:$0xff]
  %v907 = vld [vmem:[%s7 + $0x168] sm:$0xff]
  %v908 = vld [vmem:[%s7 + $0x170] sm:$0xff]
  %v909 = vld [vmem:[%s7 + $0x178] sm:$0xff]
  %v910 = vld [vmem:[%s7 + $0x180] sm:$0xff]
  %v911 = vld [vmem:[%s7 + $0x188] sm:$0xff]
  %v912 = vld [vmem:[%s7 + $0x190] sm:$0xff]
  %v913 = vld [vmem:[%s7 + $0x198] sm:$0xff]
  %v914 = vld [vmem:[%s7 + $0x1a0] sm:$0xff]
  %v915 = vld [vmem:[%s7 + $0x1a8] sm:$0xff]
  %v916 = vld [vmem:[%s7 + $0x1b0] sm:$0xff]
  %v917 = vld [vmem:[%s7 + $0x1b8] sm:$0xff]
  %v918 = vld [vmem:[%s7 + $0x1c0] sm:$0xff]
  %v919 = vld [vmem:[%s7 + $0x1c8] sm:$0xff]
  %v920 = vld [vmem:[%s7 + $0x1d0] sm:$0xff]
  %v921 = vld [vmem:[%s7 + $0x1d8] sm:$0xff]
  %v922 = vld [vmem:[%s7 + $0x1e0] sm:$0xff]
  %v923 = vld [vmem:[%s7 + $0x1e8] sm:$0xff]
  %v924 = vld [vmem:[%s7 + $0x1f0] sm:$0xff]
  %v925 = vld [vmem:[%s7 + $0x1f8] sm:$0xff]
  %v926 = vld [vmem:[%s7 + $0x200] sm:$0xff]
  %v927 = vld [vmem:[%s7 + $0x208] sm:$0xff]
  %v928 = vld [vmem:[%s7 + $0x210] sm:$0xff]
  %v929 = vld [vmem:[%s7 + $0x218] sm:$0xff]
  %v930 = vld [vmem:[%s7 + $0x220] sm:$0xff]
  %v931 = vld [vmem:[%s7 + $0x228] sm:$0xff]
  %v932 = vld [vmem:[%s7 + $0x230] sm:$0xff]
  %v933 = vld [vmem:[%s7 + $0x238] sm:$0xff]
  %v934 = vld [vmem:[%s7 + $0x240] sm:$0xff]
  %v935 = vld [vmem:[%s7 + $0x248] sm:$0xff]
  %v936 = vld [vmem:[%s7 + $0x250] sm:$0xff]
  %v937 = vld [vmem:[%s7 + $0x258] sm:$0xff]
  %v938 = vld [vmem:[%s7 + $0x260] sm:$0xff]
  %v939 = vld [vmem:[%s7 + $0x268] sm:$0xff]
  %v940 = vld [vmem:[%s7 + $0x270] sm:$0xff]
  %v941 = vld [vmem:[%s7 + $0x278] sm:$0xff]
  %v942 = vld [vmem:[%s7 + $0x280] sm:$0xff]
  %v943 = vld [vmem:[%s7 + $0x288] sm:$0xff]
  %v944 = vld [vmem:[%s7 + $0x290] sm:$0xff]
  %v945 = vld [vmem:[%s7 + $0x298] sm:$0xff]
  %v946 = vld [vmem:[%s7 + $0x2a0] sm:$0xff]
  %v947 = vld [vmem:[%s7 + $0x2a8] sm:$0xff]
  %v948 = vld [vmem:[%s7 + $0x2b0] sm:$0xff]
  %v949 = vld [vmem:[%s7 + $0x2b8] sm:$0xff]
  %v950 = vld [vmem:[%s7 + $0x2c0] sm:$0xff]
  %v951 = vld [vmem:[%s7 + $0x2c8] sm:$0xff]
  %v952 = vld [vmem:[%s7 + $0x2d0] sm:$0xff]
  %v953 = vld [vmem:[%s7 + $0x2d8] sm:$0xff]
  %v954 = vld [vmem:[%s7 + $0x2e0] sm:$0xff]
  %v955 = vld [vmem:[%s7 + $0x2e8] sm:$0xff]
  %v956 = vld [vmem:[%s7 + $0x2f0] sm:$0xff]
  %v957 = vld [vmem:[%s7 + $0x2f8] sm:$0xff]
  %v958 = vld [vmem:[%s7 + $0x300] sm:$0xff]
  %v959 = vld [vmem:[%s7 + $0x308] sm:$0xff]
  %v960 = vld [vmem:[%s7 + $0x310] sm:$0xff]
  %v961 = vld [vmem:[%s7 + $0x318] sm:$0xff]
  %v962 = vld [vmem:[%s7 + $0x320] sm:$0xff]
  %v963 = vld [vmem:[%s7 + $0x328] sm:$0xff]
  %v964 = vld [vmem:[%s7 + $0x330] sm:$0xff]
  %v965 = vld [vmem:[%s7 + $0x338] sm:$0xff]
  %v966 = vld [vmem:[%s7 + $0x340] sm:$0xff]
  %v967 = vld [vmem:[%s7 + $0x348] sm:$0xff]
  %v968 = vld [vmem:[%s7 + $0x350] sm:$0xff]
  %v969 = vld [vmem:[%s7 + $0x358] sm:$0xff]
  %v970 = vld [vmem:[%s7 + $0x360] sm:$0xff]
  %v971 = vld [vmem:[%s7 + $0x368] sm:$0xff]
  %v972 = vld [vmem:[%s7 + $0x370] sm:$0xff]
  %v973 = vld [vmem:[%s7 + $0x378] sm:$0xff]
  %v974 = vld [vmem:[%s7 + $0x380] sm:$0xff]
  %v975 = vld [vmem:[%s7 + $0x388] sm:$0xff]
  %v976 = vld [vmem:[%s7 + $0x390] sm:$0xff]
  %v977 = vld [vmem:[%s7 + $0x398] sm:$0xff]
  %v978 = vld [vmem:[%s7 + $0x3a0] sm:$0xff]
  %v979 = vld [vmem:[%s7 + $0x3a8] sm:$0xff]
  %v980 = vld [vmem:[%s7 + $0x3b0] sm:$0xff]
  %v981 = vld [vmem:[%s7 + $0x3b8] sm:$0xff]
  %v982 = vld [vmem:[%s7 + $0x3c0] sm:$0xff]
  %v983 = vld [vmem:[%s7 + $0x3c8] sm:$0xff]
  %v984 = vld [vmem:[%s7 + $0x3d0] sm:$0xff]
  %v985 = vld [vmem:[%s7 + $0x3d8] sm:$0xff]
  %v986 = vld [vmem:[%s7 + $0x3e0] sm:$0xff]
  %v987 = vld [vmem:[%s7 + $0x3e8] sm:$0xff]
  %v988 = vld [vmem:[%s7 + $0x3f0] sm:$0xff]
  %v989 = vld [vmem:[%s7 + $0x3f8] sm:$0xff]
  %v990 = vld [vmem:[%s7 + $0x400] sm:$0xff]
  %v991 = vld [vmem:[%s7 + $0x408] sm:$0xff]
  %v992 = vld [vmem:[%s7 + $0x410] sm:$0xff]
  %v993 = vld [vmem:[%s7 + $0x418] sm:$0xff]
  %v994 = vld [vmem:[%s7 + $0x420] sm:$0xff]
  %v995 = vld [vmem:[%s7 + $0x428] sm:$0xff]
  %v996 = vld [vmem:[%s7 + $0x430] sm:$0xff]
  %v997 = vld [vmem:[%s7 + $0x438] sm:$0xff]
  %v998 = vld [vmem:[%s7 + $0x440] sm:$0xff]
  %v999 = vld [vmem:[%s7 + $0x448] sm:$0xff]
  %v1000 = vld [vmem:[%s7 + $0x450] sm:$0xff]
  %v1001 = vld [vmem:[%s7 + $0x458] sm:$0xff]
  %v1002 = vld [vmem:[%s7 + $0x460] sm:$0xff]
  %v1003 = vld [vmem:[%s7 + $0x468] sm:$0xff]
  %v1004 = vld [vmem:[%s7 + $0x470] sm:$0xff]
  %v1005 = vld [vmem:[%s7 + $0x478] sm:$0xff]
  %v1006 = vld [vmem:[%s7 + $0x480] sm:$0xff]
  %v1007 = vld [vmem:[%s7 + $0x488] sm:$0xff]
  %v1008 = vld [vmem:[%s7 + $0x490] sm:$0xff]
  %v1009 = vld [vmem:[%s7 + $0x498] sm:$0xff]
  %v1010 = vld [vmem:[%s7 + $0x4a0] sm:$0xff]
  %v1011 = vld [vmem:[%s7 + $0x4a8] sm:$0xff]
  %v1012 = vld [vmem:[%s7 + $0x4b0] sm:$0xff]
  %v1013 = vld [vmem:[%s7 + $0x4b8] sm:$0xff]
  %v1014 = vld [vmem:[%s7 + $0x4c0] sm:$0xff]
  %v1015 = vld [vmem:[%s7 + $0x4c8] sm:$0xff]
  %v1016 = vld [vmem:[%s7 + $0x4d0] sm:$0xff]
  %v1017 = vld [vmem:[%s7 + $0x4d8] sm:$0xff]
  %v1018 = vld [vmem:[%s7 + $0x4e0] sm:$0xff]
  %v1019 = vld [vmem:[%s7 + $0x4e8] sm:$0xff]
  %v1020 = vld [vmem:[%s7 + $0x4f0] sm:$0xff]
  %v1021 = vld [vmem:[%s7 + $0x4f8] sm:$0xff]
  %v1022 = vld [vmem:[%s7 + $0x500] sm:$0xff]
  %v1023 = vld [vmem:[%s7 + $0x508] sm:$0xff]
  %v1024 = vld [vmem:[%s7 + $0x510] sm:$0xff]
  %v1025 = vld [vmem:[%s7 + $0x518] sm:$0xff]
  %v1026 = vld [vmem:[%s7 + $0x520] sm:$0xff]
  %v1027 = vld [vmem:[%s7 + $0x528] sm:$0xff]
  %v1028 = vld [vmem:[%s7 + $0x530] sm:$0xff]
  %v1029 = vld [vmem:[%s7 + $0x538] sm:$0xff]
  %v1030 = vld [vmem:[%s7 + $0x540] sm:$0xff]
  %v1031 = vld [vmem:[%s7 + $0x548] sm:$0xff]
  %v1032 = vld [vmem:[%s7 + $0x550] sm:$0xff]
  %v1033 = vld [vmem:[%s7 + $0x558] sm:$0xff]
  %v1034 = vld [vmem:[%s7 + $0x560] sm:$0xff]
  %v1035 = vld [vmem:[%s7 + $0x568] sm:$0xff]
  %v1036 = vld [vmem:[%s7 + $0x570] sm:$0xff]
  %v1037 = vld [vmem:[%s7 + $0x578] sm:$0xff]
  %v1038 = vld [vmem:[%s7 + $0x580] sm:$0xff]
  %v1039 = vld [vmem:[%s7 + $0x588] sm:$0xff]
  %v1040 = vld [vmem:[%s7 + $0x590] sm:$0xff]
  %v1041 = vld [vmem:[%s7 + $0x598] sm:$0xff]
  %v1042 = vld [vmem:[%s7 + $0x5a0] sm:$0xff]
  %v1043 = vld [vmem:[%s7 + $0x5a8] sm:$0xff]
  %v1044 = vld [vmem:[%s7 + $0x5b0] sm:$0xff]
  %v1045 = vld [vmem:[%s7 + $0x5b8] sm:$0xff]
  %v1046 = vld [vmem:[%s7 + $0x5c0] sm:$0xff]
  %v1047 = vld [vmem:[%s7 + $0x5c8] sm:$0xff]
  %v1048 = vld [vmem:[%s7 + $0x5d0] sm:$0xff]
  %v1049 = vld [vmem:[%s7 + $0x5d8] sm:$0xff]
  %v1050 = vld [vmem:[%s7 + $0x5e0] sm:$0xff]
  %v1051 = vld [vmem:[%s7 + $0x5e8] sm:$0xff]
  %v1052 = vld [vmem:[%s7 + $0x5f0] sm:$0xff]
  %v1053 = vld [vmem:[%s7 + $0x5f8] sm:$0xff]
  %v1054 = vld [vmem:[%s7 + $0x600] sm:$0xff]
  %v1055 = vld [vmem:[%s7 + $0x608] sm:$0xff]
  %v1056 = vld [vmem:[%s7 + $0x610] sm:$0xff]
  %v1057 = vld [vmem:[%s7 + $0x618] sm:$0xff]
  %v1058 = vld [vmem:[%s7 + $0x620] sm:$0xff]
  %v1059 = vld [vmem:[%s7 + $0x628] sm:$0xff]
  %v1060 = vld [vmem:[%s7 + $0x630] sm:$0xff]
  %v1061 = vld [vmem:[%s7 + $0x638] sm:$0xff]
  %v1062 = vld [vmem:[%s7 + $0x640] sm:$0xff]
  %v1063 = vld [vmem:[%s7 + $0x648] sm:$0xff]
  %v1064 = vld [vmem:[%s7 + $0x650] sm:$0xff]
  %v1065 = vld [vmem:[%s7 + $0x658] sm:$0xff]
  %v1066 = vld [vmem:[%s7 + $0x660] sm:$0xff]
  %v1067 = vld [vmem:[%s7 + $0x668] sm:$0xff]
  %v1068 = vld [vmem:[%s7 + $0x670] sm:$0xff]
  %v1069 = vld [vmem:[%s7 + $0x678] sm:$0xff]
  %v1070 = vld [vmem:[%s7 + $0x680] sm:$0xff]
  %v1071 = vld [vmem:[%s7 + $0x688] sm:$0xff]
  %v1072 = vld [vmem:[%s7 + $0x690] sm:$0xff]
  %v1073 = vld [vmem:[%s7 + $0x698] sm:$0xff]
  %v1074 = vld [vmem:[%s7 + $0x6a0] sm:$0xff]
  %v1075 = vld [vmem:[%s7 + $0x6a8] sm:$0xff]
  %v1076 = vld [vmem:[%s7 + $0x6b0] sm:$0xff]
  %v1077 = vld [vmem:[%s7 + $0x6b8] sm:$0xff]
  %v1078 = vld [vmem:[%s7 + $0x6c0] sm:$0xff]
  %v1079 = vld [vmem:[%s7 + $0x6c8] sm:$0xff]
  %v1080 = vld [vmem:[%s7 + $0x6d0] sm:$0xff]
  %v1081 = vld [vmem:[%s7 + $0x6d8] sm:$0xff]
  %v1082 = vld [vmem:[%s7 + $0x6e0] sm:$0xff]
  %v1083 = vld [vmem:[%s7 + $0x6e8] sm:$0xff]
  %v1084 = vld [vmem:[%s7 + $0x6f0] sm:$0xff]
  %v1085 = vld [vmem:[%s7 + $0x6f8] sm:$0xff]
  %v1086 = vld [vmem:[%s7 + $0x700] sm:$0xff]
  %v1087 = vld [vmem:[%s7 + $0x708] sm:$0xff]
  %v1088 = vld [vmem:[%s7 + $0x710] sm:$0xff]
  %v1089 = vld [vmem:[%s7 + $0x718] sm:$0xff]
  %v1090 = vld [vmem:[%s7 + $0x720] sm:$0xff]
  %v1091 = vld [vmem:[%s7 + $0x728] sm:$0xff]
  %v1092 = vld [vmem:[%s7 + $0x730] sm:$0xff]
  %v1093 = vld [vmem:[%s7 + $0x738] sm:$0xff]
  %v1094 = vld [vmem:[%s7 + $0x740] sm:$0xff]
  %v1095 = vld [vmem:[%s7 + $0x748] sm:$0xff]
  %v1096 = vld [vmem:[%s7 + $0x750] sm:$0xff]
  %v1097 = vld [vmem:[%s7 + $0x758] sm:$0xff]
  %v1098 = vld [vmem:[%s7 + $0x760] sm:$0xff]
  %v1099 = vld [vmem:[%s7 + $0x768] sm:$0xff]
  %v1100 = vld [vmem:[%s7 + $0x770] sm:$0xff]
  %v1101 = vld [vmem:[%s7 + $0x778] sm:$0xff]
  %v1102 = vld [vmem:[%s7 + $0x780] sm:$0xff]
  %v1103 = vld [vmem:[%s7 + $0x788] sm:$0xff]
  %v1104 = vld [vmem:[%s7 + $0x790] sm:$0xff]
  %v1105 = vld [vmem:[%s7 + $0x798] sm:$0xff]
  %v1106 = vld [vmem:[%s7 + $0x7a0] sm:$0xff]
  %v1107 = vld [vmem:[%s7 + $0x7a8] sm:$0xff]
  %v1108 = vld [vmem:[%s7 + $0x7b0] sm:$0xff]
  %v1109 = vld [vmem:[%s7 + $0x7b8] sm:$0xff]
  %v1110 = vld [vmem:[%s7 + $0x7c0] sm:$0xff]
  %v1111 = vld [vmem:[%s7 + $0x7c8] sm:$0xff]
  %v1112 = vld [vmem:[%s7 + $0x7d0] sm:$0xff]
  %v1113 = vld [vmem:[%s7 + $0x7d8] sm:$0xff]
  %v1114 = vld [vmem:[%s7 + $0x7e0] sm:$0xff]
  %v1115 = vld [vmem:[%s7 + $0x7e8] sm:$0xff]
  %v1116 = vld [vmem:[%s7 + $0x7f0] sm:$0xff]
  %v1117 = vld [vmem:[%s7 + $0x7f8] sm:$0xff]
  %v1118 = vld [vmem:[%s8] sm:$0xff]
  %v1120 = vperm.slane %v1118, 0
  %v1121 = vperm.slane %v1118, 1
  %v1122 = vperm.slane %v1118, 2
  %v1123 = vperm.slane %v1118, 3
  %v1124 = vperm.slane %v1118, 4
  %v1125 = vperm.slane %v1118, 5
  %v1126 = vperm.slane %v1118, 6
  %v1127 = vperm.slane %v1118, 7
  %v1392 = vunpack.c.l.b16 %v862
  %v1393 = vunpack.c.h.b16 %v862
  %v1394 = vunpack.c.l.b16 %v863
  %v1395 = vunpack.c.h.b16 %v863
  %v1396 = vunpack.c.l.b16 %v864
  %v1397 = vunpack.c.h.b16 %v864
  %v1398 = vunpack.c.l.b16 %v865
  %v1399 = vunpack.c.h.b16 %v865
  %v1400 = vunpack.c.l.b16 %v866
  %v1401 = vunpack.c.h.b16 %v866
  %v1402 = vunpack.c.l.b16 %v867
  %v1403 = vunpack.c.h.b16 %v867
  %v1404 = vunpack.c.l.b16 %v868
  %v1405 = vunpack.c.h.b16 %v868
  %v1406 = vunpack.c.l.b16 %v869
  %v1407 = vunpack.c.h.b16 %v869
  %v1408 = vunpack.c.l.b16 %v870
  %v1409 = vunpack.c.h.b16 %v870
  %v1410 = vunpack.c.l.b16 %v871
  %v1411 = vunpack.c.h.b16 %v871
  %v1412 = vunpack.c.l.b16 %v872
  %v1413 = vunpack.c.h.b16 %v872
  %v1414 = vunpack.c.l.b16 %v873
  %v1415 = vunpack.c.h.b16 %v873
  %v1416 = vunpack.c.l.b16 %v874
  %v1417 = vunpack.c.h.b16 %v874
  %v1418 = vunpack.c.l.b16 %v875
  %v1419 = vunpack.c.h.b16 %v875
  %v1420 = vunpack.c.l.b16 %v876
  %v1421 = vunpack.c.h.b16 %v876
  %v1422 = vunpack.c.l.b16 %v877
  %v1423 = vunpack.c.h.b16 %v877
  %v1424 = vunpack.c.l.b16 %v878
  %v1425 = vunpack.c.h.b16 %v878
  %v1426 = vunpack.c.l.b16 %v879
  %v1427 = vunpack.c.h.b16 %v879
  %v1428 = vunpack.c.l.b16 %v880
  %v1429 = vunpack.c.h.b16 %v880
  %v1430 = vunpack.c.l.b16 %v881
  %v1431 = vunpack.c.h.b16 %v881
  %v1432 = vunpack.c.l.b16 %v882
  %v1433 = vunpack.c.h.b16 %v882
  %v1434 = vunpack.c.l.b16 %v883
  %v1435 = vunpack.c.h.b16 %v883
  %v1436 = vunpack.c.l.b16 %v884
  %v1437 = vunpack.c.h.b16 %v884
  %v1438 = vunpack.c.l.b16 %v885
  %v1439 = vunpack.c.h.b16 %v885
  %v1440 = vunpack.c.l.b16 %v886
  %v1441 = vunpack.c.h.b16 %v886
  %v1442 = vunpack.c.l.b16 %v887
  %v1443 = vunpack.c.h.b16 %v887
  %v1444 = vunpack.c.l.b16 %v888
  %v1445 = vunpack.c.h.b16 %v888
  %v1446 = vunpack.c.l.b16 %v889
  %v1447 = vunpack.c.h.b16 %v889
  %v1448 = vunpack.c.l.b16 %v890
  %v1449 = vunpack.c.h.b16 %v890
  %v1450 = vunpack.c.l.b16 %v891
  %v1451 = vunpack.c.h.b16 %v891
  %v1452 = vunpack.c.l.b16 %v892
  %v1453 = vunpack.c.h.b16 %v892
  %v1454 = vunpack.c.l.b16 %v893
  %v1455 = vunpack.c.h.b16 %v893
  %v1456 = vunpack.c.l.b16 %v894
  %v1457 = vunpack.c.h.b16 %v894
  %v1458 = vunpack.c.l.b16 %v895
  %v1459 = vunpack.c.h.b16 %v895
  %v1460 = vunpack.c.l.b16 %v896
  %v1461 = vunpack.c.h.b16 %v896
  %v1462 = vunpack.c.l.b16 %v897
  %v1463 = vunpack.c.h.b16 %v897
  %v1464 = vunpack.c.l.b16 %v898
  %v1465 = vunpack.c.h.b16 %v898
  %v1466 = vunpack.c.l.b16 %v899
  %v1467 = vunpack.c.h.b16 %v899
  %v1468 = vunpack.c.l.b16 %v900
  %v1469 = vunpack.c.h.b16 %v900
  %v1470 = vunpack.c.l.b16 %v901
  %v1471 = vunpack.c.h.b16 %v901
  %v1472 = vunpack.c.l.b16 %v902
  %v1473 = vunpack.c.h.b16 %v902
  %v1474 = vunpack.c.l.b16 %v903
  %v1475 = vunpack.c.h.b16 %v903
  %v1476 = vunpack.c.l.b16 %v904
  %v1477 = vunpack.c.h.b16 %v904
  %v1478 = vunpack.c.l.b16 %v905
  %v1479 = vunpack.c.h.b16 %v905
  %v1480 = vunpack.c.l.b16 %v906
  %v1481 = vunpack.c.h.b16 %v906
  %v1482 = vunpack.c.l.b16 %v907
  %v1483 = vunpack.c.h.b16 %v907
  %v1484 = vunpack.c.l.b16 %v908
  %v1485 = vunpack.c.h.b16 %v908
  %v1486 = vunpack.c.l.b16 %v909
  %v1487 = vunpack.c.h.b16 %v909
  %v1488 = vunpack.c.l.b16 %v910
  %v1489 = vunpack.c.h.b16 %v910
  %v1490 = vunpack.c.l.b16 %v911
  %v1491 = vunpack.c.h.b16 %v911
  %v1492 = vunpack.c.l.b16 %v912
  %v1493 = vunpack.c.h.b16 %v912
  %v1494 = vunpack.c.l.b16 %v913
  %v1495 = vunpack.c.h.b16 %v913
  %v1496 = vunpack.c.l.b16 %v914
  %v1497 = vunpack.c.h.b16 %v914
  %v1498 = vunpack.c.l.b16 %v915
  %v1499 = vunpack.c.h.b16 %v915
  %v1500 = vunpack.c.l.b16 %v916
  %v1501 = vunpack.c.h.b16 %v916
  %v1502 = vunpack.c.l.b16 %v917
  %v1503 = vunpack.c.h.b16 %v917
  %v1504 = vunpack.c.l.b16 %v918
  %v1505 = vunpack.c.h.b16 %v918
  %v1506 = vunpack.c.l.b16 %v919
  %v1507 = vunpack.c.h.b16 %v919
  %v1508 = vunpack.c.l.b16 %v920
  %v1509 = vunpack.c.h.b16 %v920
  %v1510 = vunpack.c.l.b16 %v921
  %v1511 = vunpack.c.h.b16 %v921
  %v1512 = vunpack.c.l.b16 %v922
  %v1513 = vunpack.c.h.b16 %v922
  %v1514 = vunpack.c.l.b16 %v923
  %v1515 = vunpack.c.h.b16 %v923
  %v1516 = vunpack.c.l.b16 %v924
  %v1517 = vunpack.c.h.b16 %v924
  %v1518 = vunpack.c.l.b16 %v925
  %v1519 = vunpack.c.h.b16 %v925
  %v1520 = vunpack.c.l.b16 %v926
  %v1521 = vunpack.c.h.b16 %v926
  %v1522 = vunpack.c.l.b16 %v927
  %v1523 = vunpack.c.h.b16 %v927
  %v1524 = vunpack.c.l.b16 %v928
  %v1525 = vunpack.c.h.b16 %v928
  %v1526 = vunpack.c.l.b16 %v929
  %v1527 = vunpack.c.h.b16 %v929
  %v1528 = vunpack.c.l.b16 %v930
  %v1529 = vunpack.c.h.b16 %v930
  %v1530 = vunpack.c.l.b16 %v931
  %v1531 = vunpack.c.h.b16 %v931
  %v1532 = vunpack.c.l.b16 %v932
  %v1533 = vunpack.c.h.b16 %v932
  %v1534 = vunpack.c.l.b16 %v933
  %v1535 = vunpack.c.h.b16 %v933
  %v1536 = vunpack.c.l.b16 %v934
  %v1537 = vunpack.c.h.b16 %v934
  %v1538 = vunpack.c.l.b16 %v935
  %v1539 = vunpack.c.h.b16 %v935
  %v1540 = vunpack.c.l.b16 %v936
  %v1541 = vunpack.c.h.b16 %v936
  %v1542 = vunpack.c.l.b16 %v937
  %v1543 = vunpack.c.h.b16 %v937
  %v1544 = vunpack.c.l.b16 %v938
  %v1545 = vunpack.c.h.b16 %v938
  %v1546 = vunpack.c.l.b16 %v939
  %v1547 = vunpack.c.h.b16 %v939
  %v1548 = vunpack.c.l.b16 %v940
  %v1549 = vunpack.c.h.b16 %v940
  %v1550 = vunpack.c.l.b16 %v941
  %v1551 = vunpack.c.h.b16 %v941
  %v1552 = vunpack.c.l.b16 %v942
  %v1553 = vunpack.c.h.b16 %v942
  %v1554 = vunpack.c.l.b16 %v943
  %v1555 = vunpack.c.h.b16 %v943
  %v1556 = vunpack.c.l.b16 %v944
  %v1557 = vunpack.c.h.b16 %v944
  %v1558 = vunpack.c.l.b16 %v945
  %v1559 = vunpack.c.h.b16 %v945
  %v1560 = vunpack.c.l.b16 %v946
  %v1561 = vunpack.c.h.b16 %v946
  %v1562 = vunpack.c.l.b16 %v947
  %v1563 = vunpack.c.h.b16 %v947
  %v1564 = vunpack.c.l.b16 %v948
  %v1565 = vunpack.c.h.b16 %v948
  %v1566 = vunpack.c.l.b16 %v949
  %v1567 = vunpack.c.h.b16 %v949
  %v1568 = vunpack.c.l.b16 %v950
  %v1569 = vunpack.c.h.b16 %v950
  %v1570 = vunpack.c.l.b16 %v951
  %v1571 = vunpack.c.h.b16 %v951
  %v1572 = vunpack.c.l.b16 %v952
  %v1573 = vunpack.c.h.b16 %v952
  %v1574 = vunpack.c.l.b16 %v953
  %v1575 = vunpack.c.h.b16 %v953
  %v1576 = vunpack.c.l.b16 %v954
  %v1577 = vunpack.c.h.b16 %v954
  %v1578 = vunpack.c.l.b16 %v955
  %v1579 = vunpack.c.h.b16 %v955
  %v1580 = vunpack.c.l.b16 %v956
  %v1581 = vunpack.c.h.b16 %v956
  %v1582 = vunpack.c.l.b16 %v957
  %v1583 = vunpack.c.h.b16 %v957
  %v1584 = vunpack.c.l.b16 %v958
  %v1585 = vunpack.c.h.b16 %v958
  %v1586 = vunpack.c.l.b16 %v959
  %v1587 = vunpack.c.h.b16 %v959
  %v1588 = vunpack.c.l.b16 %v960
  %v1589 = vunpack.c.h.b16 %v960
  %v1590 = vunpack.c.l.b16 %v961
  %v1591 = vunpack.c.h.b16 %v961
  %v1592 = vunpack.c.l.b16 %v962
  %v1593 = vunpack.c.h.b16 %v962
  %v1594 = vunpack.c.l.b16 %v963
  %v1595 = vunpack.c.h.b16 %v963
  %v1596 = vunpack.c.l.b16 %v964
  %v1597 = vunpack.c.h.b16 %v964
  %v1598 = vunpack.c.l.b16 %v965
  %v1599 = vunpack.c.h.b16 %v965
  %v1600 = vunpack.c.l.b16 %v966
  %v1601 = vunpack.c.h.b16 %v966
  %v1602 = vunpack.c.l.b16 %v967
  %v1603 = vunpack.c.h.b16 %v967
  %v1604 = vunpack.c.l.b16 %v968
  %v1605 = vunpack.c.h.b16 %v968
  %v1606 = vunpack.c.l.b16 %v969
  %v1607 = vunpack.c.h.b16 %v969
  %v1608 = vunpack.c.l.b16 %v970
  %v1609 = vunpack.c.h.b16 %v970
  %v1610 = vunpack.c.l.b16 %v971
  %v1611 = vunpack.c.h.b16 %v971
  %v1612 = vunpack.c.l.b16 %v972
  %v1613 = vunpack.c.h.b16 %v972
  %v1614 = vunpack.c.l.b16 %v973
  %v1615 = vunpack.c.h.b16 %v973
  %v1616 = vunpack.c.l.b16 %v974
  %v1617 = vunpack.c.h.b16 %v974
  %v1618 = vunpack.c.l.b16 %v975
  %v1619 = vunpack.c.h.b16 %v975
  %v1620 = vunpack.c.l.b16 %v976
  %v1621 = vunpack.c.h.b16 %v976
  %v1622 = vunpack.c.l.b16 %v977
  %v1623 = vunpack.c.h.b16 %v977
  %v1624 = vunpack.c.l.b16 %v978
  %v1625 = vunpack.c.h.b16 %v978
  %v1626 = vunpack.c.l.b16 %v979
  %v1627 = vunpack.c.h.b16 %v979
  %v1628 = vunpack.c.l.b16 %v980
  %v1629 = vunpack.c.h.b16 %v980
  %v1630 = vunpack.c.l.b16 %v981
  %v1631 = vunpack.c.h.b16 %v981
  %v1632 = vunpack.c.l.b16 %v982
  %v1633 = vunpack.c.h.b16 %v982
  %v1634 = vunpack.c.l.b16 %v983
  %v1635 = vunpack.c.h.b16 %v983
  %v1636 = vunpack.c.l.b16 %v984
  %v1637 = vunpack.c.h.b16 %v984
  %v1638 = vunpack.c.l.b16 %v985
  %v1639 = vunpack.c.h.b16 %v985
  %v1640 = vunpack.c.l.b16 %v986
  %v1641 = vunpack.c.h.b16 %v986
  %v1642 = vunpack.c.l.b16 %v987
  %v1643 = vunpack.c.h.b16 %v987
  %v1644 = vunpack.c.l.b16 %v988
  %v1645 = vunpack.c.h.b16 %v988
  %v1646 = vunpack.c.l.b16 %v989
  %v1647 = vunpack.c.h.b16 %v989
  %v1648 = vunpack.c.l.b16 %v990
  %v1649 = vunpack.c.h.b16 %v990
  %v1650 = vunpack.c.l.b16 %v991
  %v1651 = vunpack.c.h.b16 %v991
  %v1652 = vunpack.c.l.b16 %v992
  %v1653 = vunpack.c.h.b16 %v992
  %v1654 = vunpack.c.l.b16 %v993
  %v1655 = vunpack.c.h.b16 %v993
  %v1656 = vunpack.c.l.b16 %v994
  %v1657 = vunpack.c.h.b16 %v994
  %v1658 = vunpack.c.l.b16 %v995
  %v1659 = vunpack.c.h.b16 %v995
  %v1660 = vunpack.c.l.b16 %v996
  %v1661 = vunpack.c.h.b16 %v996
  %v1662 = vunpack.c.l.b16 %v997
  %v1663 = vunpack.c.h.b16 %v997
  %v1664 = vunpack.c.l.b16 %v998
  %v1665 = vunpack.c.h.b16 %v998
  %v1666 = vunpack.c.l.b16 %v999
  %v1667 = vunpack.c.h.b16 %v999
  %v1668 = vunpack.c.l.b16 %v1000
  %v1669 = vunpack.c.h.b16 %v1000
  %v1670 = vunpack.c.l.b16 %v1001
  %v1671 = vunpack.c.h.b16 %v1001
  %v1672 = vunpack.c.l.b16 %v1002
  %v1673 = vunpack.c.h.b16 %v1002
  %v1674 = vunpack.c.l.b16 %v1003
  %v1675 = vunpack.c.h.b16 %v1003
  %v1676 = vunpack.c.l.b16 %v1004
  %v1677 = vunpack.c.h.b16 %v1004
  %v1678 = vunpack.c.l.b16 %v1005
  %v1679 = vunpack.c.h.b16 %v1005
  %v1680 = vunpack.c.l.b16 %v1006
  %v1681 = vunpack.c.h.b16 %v1006
  %v1682 = vunpack.c.l.b16 %v1007
  %v1683 = vunpack.c.h.b16 %v1007
  %v1684 = vunpack.c.l.b16 %v1008
  %v1685 = vunpack.c.h.b16 %v1008
  %v1686 = vunpack.c.l.b16 %v1009
  %v1687 = vunpack.c.h.b16 %v1009
  %v1688 = vunpack.c.l.b16 %v1010
  %v1689 = vunpack.c.h.b16 %v1010
  %v1690 = vunpack.c.l.b16 %v1011
  %v1691 = vunpack.c.h.b16 %v1011
  %v1692 = vunpack.c.l.b16 %v1012
  %v1693 = vunpack.c.h.b16 %v1012
  %v1694 = vunpack.c.l.b16 %v1013
  %v1695 = vunpack.c.h.b16 %v1013
  %v1696 = vunpack.c.l.b16 %v1014
  %v1697 = vunpack.c.h.b16 %v1014
  %v1698 = vunpack.c.l.b16 %v1015
  %v1699 = vunpack.c.h.b16 %v1015
  %v1700 = vunpack.c.l.b16 %v1016
  %v1701 = vunpack.c.h.b16 %v1016
  %v1702 = vunpack.c.l.b16 %v1017
  %v1703 = vunpack.c.h.b16 %v1017
  %v1704 = vunpack.c.l.b16 %v1018
  %v1705 = vunpack.c.h.b16 %v1018
  %v1706 = vunpack.c.l.b16 %v1019
  %v1707 = vunpack.c.h.b16 %v1019
  %v1708 = vunpack.c.l.b16 %v1020
  %v1709 = vunpack.c.h.b16 %v1020
  %v1710 = vunpack.c.l.b16 %v1021
  %v1711 = vunpack.c.h.b16 %v1021
  %v1712 = vunpack.c.l.b16 %v1022
  %v1713 = vunpack.c.h.b16 %v1022
  %v1714 = vunpack.c.l.b16 %v1023
  %v1715 = vunpack.c.h.b16 %v1023
  %v1716 = vunpack.c.l.b16 %v1024
  %v1717 = vunpack.c.h.b16 %v1024
  %v1718 = vunpack.c.l.b16 %v1025
  %v1719 = vunpack.c.h.b16 %v1025
  %v1720 = vunpack.c.l.b16 %v1026
  %v1721 = vunpack.c.h.b16 %v1026
  %v1722 = vunpack.c.l.b16 %v1027
  %v1723 = vunpack.c.h.b16 %v1027
  %v1724 = vunpack.c.l.b16 %v1028
  %v1725 = vunpack.c.h.b16 %v1028
  %v1726 = vunpack.c.l.b16 %v1029
  %v1727 = vunpack.c.h.b16 %v1029
  %v1728 = vunpack.c.l.b16 %v1030
  %v1729 = vunpack.c.h.b16 %v1030
  %v1730 = vunpack.c.l.b16 %v1031
  %v1731 = vunpack.c.h.b16 %v1031
  %v1732 = vunpack.c.l.b16 %v1032
  %v1733 = vunpack.c.h.b16 %v1032
  %v1734 = vunpack.c.l.b16 %v1033
  %v1735 = vunpack.c.h.b16 %v1033
  %v1736 = vunpack.c.l.b16 %v1034
  %v1737 = vunpack.c.h.b16 %v1034
  %v1738 = vunpack.c.l.b16 %v1035
  %v1739 = vunpack.c.h.b16 %v1035
  %v1740 = vunpack.c.l.b16 %v1036
  %v1741 = vunpack.c.h.b16 %v1036
  %v1742 = vunpack.c.l.b16 %v1037
  %v1743 = vunpack.c.h.b16 %v1037
  %v1744 = vunpack.c.l.b16 %v1038
  %v1745 = vunpack.c.h.b16 %v1038
  %v1746 = vunpack.c.l.b16 %v1039
  %v1747 = vunpack.c.h.b16 %v1039
  %v1748 = vunpack.c.l.b16 %v1040
  %v1749 = vunpack.c.h.b16 %v1040
  %v1750 = vunpack.c.l.b16 %v1041
  %v1751 = vunpack.c.h.b16 %v1041
  %v1752 = vunpack.c.l.b16 %v1042
  %v1753 = vunpack.c.h.b16 %v1042
  %v1754 = vunpack.c.l.b16 %v1043
  %v1755 = vunpack.c.h.b16 %v1043
  %v1756 = vunpack.c.l.b16 %v1044
  %v1757 = vunpack.c.h.b16 %v1044
  %v1758 = vunpack.c.l.b16 %v1045
  %v1759 = vunpack.c.h.b16 %v1045
  %v1760 = vunpack.c.l.b16 %v1046
  %v1761 = vunpack.c.h.b16 %v1046
  %v1762 = vunpack.c.l.b16 %v1047
  %v1763 = vunpack.c.h.b16 %v1047
  %v1764 = vunpack.c.l.b16 %v1048
  %v1765 = vunpack.c.h.b16 %v1048
  %v1766 = vunpack.c.l.b16 %v1049
  %v1767 = vunpack.c.h.b16 %v1049
  %v1768 = vunpack.c.l.b16 %v1050
  %v1769 = vunpack.c.h.b16 %v1050
  %v1770 = vunpack.c.l.b16 %v1051
  %v1771 = vunpack.c.h.b16 %v1051
  %v1772 = vunpack.c.l.b16 %v1052
  %v1773 = vunpack.c.h.b16 %v1052
  %v1774 = vunpack.c.l.b16 %v1053
  %v1775 = vunpack.c.h.b16 %v1053
  %v1776 = vunpack.c.l.b16 %v1054
  %v1777 = vunpack.c.h.b16 %v1054
  %v1778 = vunpack.c.l.b16 %v1055
  %v1779 = vunpack.c.h.b16 %v1055
  %v1780 = vunpack.c.l.b16 %v1056
  %v1781 = vunpack.c.h.b16 %v1056
  %v1782 = vunpack.c.l.b16 %v1057
  %v1783 = vunpack.c.h.b16 %v1057
  %v1784 = vunpack.c.l.b16 %v1058
  %v1785 = vunpack.c.h.b16 %v1058
  %v1786 = vunpack.c.l.b16 %v1059
  %v1787 = vunpack.c.h.b16 %v1059
  %v1788 = vunpack.c.l.b16 %v1060
  %v1789 = vunpack.c.h.b16 %v1060
  %v1790 = vunpack.c.l.b16 %v1061
  %v1791 = vunpack.c.h.b16 %v1061
  %v1792 = vunpack.c.l.b16 %v1062
  %v1793 = vunpack.c.h.b16 %v1062
  %v1794 = vunpack.c.l.b16 %v1063
  %v1795 = vunpack.c.h.b16 %v1063
  %v1796 = vunpack.c.l.b16 %v1064
  %v1797 = vunpack.c.h.b16 %v1064
  %v1798 = vunpack.c.l.b16 %v1065
  %v1799 = vunpack.c.h.b16 %v1065
  %v1800 = vunpack.c.l.b16 %v1066
  %v1801 = vunpack.c.h.b16 %v1066
  %v1802 = vunpack.c.l.b16 %v1067
  %v1803 = vunpack.c.h.b16 %v1067
  %v1804 = vunpack.c.l.b16 %v1068
  %v1805 = vunpack.c.h.b16 %v1068
  %v1806 = vunpack.c.l.b16 %v1069
  %v1807 = vunpack.c.h.b16 %v1069
  %v1808 = vunpack.c.l.b16 %v1070
  %v1809 = vunpack.c.h.b16 %v1070
  %v1810 = vunpack.c.l.b16 %v1071
  %v1811 = vunpack.c.h.b16 %v1071
  %v1812 = vunpack.c.l.b16 %v1072
  %v1813 = vunpack.c.h.b16 %v1072
  %v1814 = vunpack.c.l.b16 %v1073
  %v1815 = vunpack.c.h.b16 %v1073
  %v1816 = vunpack.c.l.b16 %v1074
  %v1817 = vunpack.c.h.b16 %v1074
  %v1818 = vunpack.c.l.b16 %v1075
  %v1819 = vunpack.c.h.b16 %v1075
  %v1820 = vunpack.c.l.b16 %v1076
  %v1821 = vunpack.c.h.b16 %v1076
  %v1822 = vunpack.c.l.b16 %v1077
  %v1823 = vunpack.c.h.b16 %v1077
  %v1824 = vunpack.c.l.b16 %v1078
  %v1825 = vunpack.c.h.b16 %v1078
  %v1826 = vunpack.c.l.b16 %v1079
  %v1827 = vunpack.c.h.b16 %v1079
  %v1828 = vunpack.c.l.b16 %v1080
  %v1829 = vunpack.c.h.b16 %v1080
  %v1830 = vunpack.c.l.b16 %v1081
  %v1831 = vunpack.c.h.b16 %v1081
  %v1832 = vunpack.c.l.b16 %v1082
  %v1833 = vunpack.c.h.b16 %v1082
  %v1834 = vunpack.c.l.b16 %v1083
  %v1835 = vunpack.c.h.b16 %v1083
  %v1836 = vunpack.c.l.b16 %v1084
  %v1837 = vunpack.c.h.b16 %v1084
  %v1838 = vunpack.c.l.b16 %v1085
  %v1839 = vunpack.c.h.b16 %v1085
  %v1840 = vunpack.c.l.b16 %v1086
  %v1841 = vunpack.c.h.b16 %v1086
  %v1842 = vunpack.c.l.b16 %v1087
  %v1843 = vunpack.c.h.b16 %v1087
  %v1844 = vunpack.c.l.b16 %v1088
  %v1845 = vunpack.c.h.b16 %v1088
  %v1846 = vunpack.c.l.b16 %v1089
  %v1847 = vunpack.c.h.b16 %v1089
  %v1848 = vunpack.c.l.b16 %v1090
  %v1849 = vunpack.c.h.b16 %v1090
  %v1850 = vunpack.c.l.b16 %v1091
  %v1851 = vunpack.c.h.b16 %v1091
  %v1852 = vunpack.c.l.b16 %v1092
  %v1853 = vunpack.c.h.b16 %v1092
  %v1854 = vunpack.c.l.b16 %v1093
  %v1855 = vunpack.c.h.b16 %v1093
  %v1856 = vunpack.c.l.b16 %v1094
  %v1857 = vunpack.c.h.b16 %v1094
  %v1858 = vunpack.c.l.b16 %v1095
  %v1859 = vunpack.c.h.b16 %v1095
  %v1860 = vunpack.c.l.b16 %v1096
  %v1861 = vunpack.c.h.b16 %v1096
  %v1862 = vunpack.c.l.b16 %v1097
  %v1863 = vunpack.c.h.b16 %v1097
  %v1864 = vunpack.c.l.b16 %v1098
  %v1865 = vunpack.c.h.b16 %v1098
  %v1866 = vunpack.c.l.b16 %v1099
  %v1867 = vunpack.c.h.b16 %v1099
  %v1868 = vunpack.c.l.b16 %v1100
  %v1869 = vunpack.c.h.b16 %v1100
  %v1870 = vunpack.c.l.b16 %v1101
  %v1871 = vunpack.c.h.b16 %v1101
  %v1872 = vunpack.c.l.b16 %v1102
  %v1873 = vunpack.c.h.b16 %v1102
  %v1874 = vunpack.c.l.b16 %v1103
  %v1875 = vunpack.c.h.b16 %v1103
  %v1876 = vunpack.c.l.b16 %v1104
  %v1877 = vunpack.c.h.b16 %v1104
  %v1878 = vunpack.c.l.b16 %v1105
  %v1879 = vunpack.c.h.b16 %v1105
  %v1880 = vunpack.c.l.b16 %v1106
  %v1881 = vunpack.c.h.b16 %v1106
  %v1882 = vunpack.c.l.b16 %v1107
  %v1883 = vunpack.c.h.b16 %v1107
  %v1884 = vunpack.c.l.b16 %v1108
  %v1885 = vunpack.c.h.b16 %v1108
  %v1886 = vunpack.c.l.b16 %v1109
  %v1887 = vunpack.c.h.b16 %v1109
  %v1888 = vunpack.c.l.b16 %v1110
  %v1889 = vunpack.c.h.b16 %v1110
  %v1890 = vunpack.c.l.b16 %v1111
  %v1891 = vunpack.c.h.b16 %v1111
  %v1892 = vunpack.c.l.b16 %v1112
  %v1893 = vunpack.c.h.b16 %v1112
  %v1894 = vunpack.c.l.b16 %v1113
  %v1895 = vunpack.c.h.b16 %v1113
  %v1896 = vunpack.c.l.b16 %v1114
  %v1897 = vunpack.c.h.b16 %v1114
  %v1898 = vunpack.c.l.b16 %v1115
  %v1899 = vunpack.c.h.b16 %v1115
  %v1900 = vunpack.c.l.b16 %v1116
  %v1901 = vunpack.c.h.b16 %v1116
  %v1902 = vunpack.c.l.b16 %v1117
  %v1903 = vunpack.c.h.b16 %v1117
  %v1904 = vpack.c.b16 %v1400, %v1392
  %v1905 = vpack.c.b16 %v1401, %v1393
  %v1906 = vpack.c.b16 %v1402, %v1394
  %v1907 = vpack.c.b16 %v1403, %v1395
  %v1908 = vpack.c.b16 %v1404, %v1396
  %v1909 = vpack.c.b16 %v1405, %v1397
  %v1910 = vpack.c.b16 %v1406, %v1398
  %v1911 = vpack.c.b16 %v1407, %v1399
  %v1912 = vpack.c.b16 %v1416, %v1408
  %v1913 = vpack.c.b16 %v1417, %v1409
  %v1914 = vpack.c.b16 %v1418, %v1410
  %v1915 = vpack.c.b16 %v1419, %v1411
  %v1916 = vpack.c.b16 %v1420, %v1412
  %v1917 = vpack.c.b16 %v1421, %v1413
  %v1918 = vpack.c.b16 %v1422, %v1414
  %v1919 = vpack.c.b16 %v1423, %v1415
  %v1920 = vpack.c.b16 %v1432, %v1424
  %v1921 = vpack.c.b16 %v1433, %v1425
  %v1922 = vpack.c.b16 %v1434, %v1426
  %v1923 = vpack.c.b16 %v1435, %v1427
  %v1924 = vpack.c.b16 %v1436, %v1428
  %v1925 = vpack.c.b16 %v1437, %v1429
  %v1926 = vpack.c.b16 %v1438, %v1430
  %v1927 = vpack.c.b16 %v1439, %v1431
  %v1928 = vpack.c.b16 %v1448, %v1440
  %v1929 = vpack.c.b16 %v1449, %v1441
  %v1930 = vpack.c.b16 %v1450, %v1442
  %v1931 = vpack.c.b16 %v1451, %v1443
  %v1932 = vpack.c.b16 %v1452, %v1444
  %v1933 = vpack.c.b16 %v1453, %v1445
  %v1934 = vpack.c.b16 %v1454, %v1446
  %v1935 = vpack.c.b16 %v1455, %v1447
  %v1936 = vpack.c.b16 %v1464, %v1456
  %v1937 = vpack.c.b16 %v1465, %v1457
  %v1938 = vpack.c.b16 %v1466, %v1458
  %v1939 = vpack.c.b16 %v1467, %v1459
  %v1940 = vpack.c.b16 %v1468, %v1460
  %v1941 = vpack.c.b16 %v1469, %v1461
  %v1942 = vpack.c.b16 %v1470, %v1462
  %v1943 = vpack.c.b16 %v1471, %v1463
  %v1944 = vpack.c.b16 %v1480, %v1472
  %v1945 = vpack.c.b16 %v1481, %v1473
  %v1946 = vpack.c.b16 %v1482, %v1474
  %v1947 = vpack.c.b16 %v1483, %v1475
  %v1948 = vpack.c.b16 %v1484, %v1476
  %v1949 = vpack.c.b16 %v1485, %v1477
  %v1950 = vpack.c.b16 %v1486, %v1478
  %v1951 = vpack.c.b16 %v1487, %v1479
  %v1952 = vpack.c.b16 %v1496, %v1488
  %v1953 = vpack.c.b16 %v1497, %v1489
  %v1954 = vpack.c.b16 %v1498, %v1490
  %v1955 = vpack.c.b16 %v1499, %v1491
  %v1956 = vpack.c.b16 %v1500, %v1492
  %v1957 = vpack.c.b16 %v1501, %v1493
  %v1958 = vpack.c.b16 %v1502, %v1494
  %v1959 = vpack.c.b16 %v1503, %v1495
  %v1960 = vpack.c.b16 %v1512, %v1504
  %v1961 = vpack.c.b16 %v1513, %v1505
  %v1962 = vpack.c.b16 %v1514, %v1506
  %v1963 = vpack.c.b16 %v1515, %v1507
  %v1964 = vpack.c.b16 %v1516, %v1508
  %v1965 = vpack.c.b16 %v1517, %v1509
  %v1966 = vpack.c.b16 %v1518, %v1510
  %v1967 = vpack.c.b16 %v1519, %v1511
  %v1968 = vpack.c.b16 %v1528, %v1520
  %v1969 = vpack.c.b16 %v1529, %v1521
  %v1970 = vpack.c.b16 %v1530, %v1522
  %v1971 = vpack.c.b16 %v1531, %v1523
  %v1972 = vpack.c.b16 %v1532, %v1524
  %v1973 = vpack.c.b16 %v1533, %v1525
  %v1974 = vpack.c.b16 %v1534, %v1526
  %v1975 = vpack.c.b16 %v1535, %v1527
  %v1976 = vpack.c.b16 %v1544, %v1536
  %v1977 = vpack.c.b16 %v1545, %v1537
  %v1978 = vpack.c.b16 %v1546, %v1538
  %v1979 = vpack.c.b16 %v1547, %v1539
  %v1980 = vpack.c.b16 %v1548, %v1540
  %v1981 = vpack.c.b16 %v1549, %v1541
  %v1982 = vpack.c.b16 %v1550, %v1542
  %v1983 = vpack.c.b16 %v1551, %v1543
  %v1984 = vpack.c.b16 %v1560, %v1552
  %v1985 = vpack.c.b16 %v1561, %v1553
  %v1986 = vpack.c.b16 %v1562, %v1554
  %v1987 = vpack.c.b16 %v1563, %v1555
  %v1988 = vpack.c.b16 %v1564, %v1556
  %v1989 = vpack.c.b16 %v1565, %v1557
  %v1990 = vpack.c.b16 %v1566, %v1558
  %v1991 = vpack.c.b16 %v1567, %v1559
  %v1992 = vpack.c.b16 %v1576, %v1568
  %v1993 = vpack.c.b16 %v1577, %v1569
  %v1994 = vpack.c.b16 %v1578, %v1570
  %v1995 = vpack.c.b16 %v1579, %v1571
  %v1996 = vpack.c.b16 %v1580, %v1572
  %v1997 = vpack.c.b16 %v1581, %v1573
  %v1998 = vpack.c.b16 %v1582, %v1574
  %v1999 = vpack.c.b16 %v1583, %v1575
  %v2000 = vpack.c.b16 %v1592, %v1584
  %v2001 = vpack.c.b16 %v1593, %v1585
  %v2002 = vpack.c.b16 %v1594, %v1586
  %v2003 = vpack.c.b16 %v1595, %v1587
  %v2004 = vpack.c.b16 %v1596, %v1588
  %v2005 = vpack.c.b16 %v1597, %v1589
  %v2006 = vpack.c.b16 %v1598, %v1590
  %v2007 = vpack.c.b16 %v1599, %v1591
  %v2008 = vpack.c.b16 %v1608, %v1600
  %v2009 = vpack.c.b16 %v1609, %v1601
  %v2010 = vpack.c.b16 %v1610, %v1602
  %v2011 = vpack.c.b16 %v1611, %v1603
  %v2012 = vpack.c.b16 %v1612, %v1604
  %v2013 = vpack.c.b16 %v1613, %v1605
  %v2014 = vpack.c.b16 %v1614, %v1606
  %v2015 = vpack.c.b16 %v1615, %v1607
  %v2016 = vpack.c.b16 %v1624, %v1616
  %v2017 = vpack.c.b16 %v1625, %v1617
  %v2018 = vpack.c.b16 %v1626, %v1618
  %v2019 = vpack.c.b16 %v1627, %v1619
  %v2020 = vpack.c.b16 %v1628, %v1620
  %v2021 = vpack.c.b16 %v1629, %v1621
  %v2022 = vpack.c.b16 %v1630, %v1622
  %v2023 = vpack.c.b16 %v1631, %v1623
  %v2024 = vpack.c.b16 %v1640, %v1632
  %v2025 = vpack.c.b16 %v1641, %v1633
  %v2026 = vpack.c.b16 %v1642, %v1634
  %v2027 = vpack.c.b16 %v1643, %v1635
  %v2028 = vpack.c.b16 %v1644, %v1636
  %v2029 = vpack.c.b16 %v1645, %v1637
  %v2030 = vpack.c.b16 %v1646, %v1638
  %v2031 = vpack.c.b16 %v1647, %v1639
  %v2032 = vpack.c.b16 %v1656, %v1648
  %v2033 = vpack.c.b16 %v1657, %v1649
  %v2034 = vpack.c.b16 %v1658, %v1650
  %v2035 = vpack.c.b16 %v1659, %v1651
  %v2036 = vpack.c.b16 %v1660, %v1652
  %v2037 = vpack.c.b16 %v1661, %v1653
  %v2038 = vpack.c.b16 %v1662, %v1654
  %v2039 = vpack.c.b16 %v1663, %v1655
  %v2040 = vpack.c.b16 %v1672, %v1664
  %v2041 = vpack.c.b16 %v1673, %v1665
  %v2042 = vpack.c.b16 %v1674, %v1666
  %v2043 = vpack.c.b16 %v1675, %v1667
  %v2044 = vpack.c.b16 %v1676, %v1668
  %v2045 = vpack.c.b16 %v1677, %v1669
  %v2046 = vpack.c.b16 %v1678, %v1670
  %v2047 = vpack.c.b16 %v1679, %v1671
  %v2048 = vpack.c.b16 %v1688, %v1680
  %v2049 = vpack.c.b16 %v1689, %v1681
  %v2050 = vpack.c.b16 %v1690, %v1682
  %v2051 = vpack.c.b16 %v1691, %v1683
  %v2052 = vpack.c.b16 %v1692, %v1684
  %v2053 = vpack.c.b16 %v1693, %v1685
  %v2054 = vpack.c.b16 %v1694, %v1686
  %v2055 = vpack.c.b16 %v1695, %v1687
  %v2056 = vpack.c.b16 %v1704, %v1696
  %v2057 = vpack.c.b16 %v1705, %v1697
  %v2058 = vpack.c.b16 %v1706, %v1698
  %v2059 = vpack.c.b16 %v1707, %v1699
  %v2060 = vpack.c.b16 %v1708, %v1700
  %v2061 = vpack.c.b16 %v1709, %v1701
  %v2062 = vpack.c.b16 %v1710, %v1702
  %v2063 = vpack.c.b16 %v1711, %v1703
  %v2064 = vpack.c.b16 %v1720, %v1712
  %v2065 = vpack.c.b16 %v1721, %v1713
  %v2066 = vpack.c.b16 %v1722, %v1714
  %v2067 = vpack.c.b16 %v1723, %v1715
  %v2068 = vpack.c.b16 %v1724, %v1716
  %v2069 = vpack.c.b16 %v1725, %v1717
  %v2070 = vpack.c.b16 %v1726, %v1718
  %v2071 = vpack.c.b16 %v1727, %v1719
  %v2072 = vpack.c.b16 %v1736, %v1728
  %v2073 = vpack.c.b16 %v1737, %v1729
  %v2074 = vpack.c.b16 %v1738, %v1730
  %v2075 = vpack.c.b16 %v1739, %v1731
  %v2076 = vpack.c.b16 %v1740, %v1732
  %v2077 = vpack.c.b16 %v1741, %v1733
  %v2078 = vpack.c.b16 %v1742, %v1734
  %v2079 = vpack.c.b16 %v1743, %v1735
  %v2080 = vpack.c.b16 %v1752, %v1744
  %v2081 = vpack.c.b16 %v1753, %v1745
  %v2082 = vpack.c.b16 %v1754, %v1746
  %v2083 = vpack.c.b16 %v1755, %v1747
  %v2084 = vpack.c.b16 %v1756, %v1748
  %v2085 = vpack.c.b16 %v1757, %v1749
  %v2086 = vpack.c.b16 %v1758, %v1750
  %v2087 = vpack.c.b16 %v1759, %v1751
  %v2088 = vpack.c.b16 %v1768, %v1760
  %v2089 = vpack.c.b16 %v1769, %v1761
  %v2090 = vpack.c.b16 %v1770, %v1762
  %v2091 = vpack.c.b16 %v1771, %v1763
  %v2092 = vpack.c.b16 %v1772, %v1764
  %v2093 = vpack.c.b16 %v1773, %v1765
  %v2094 = vpack.c.b16 %v1774, %v1766
  %v2095 = vpack.c.b16 %v1775, %v1767
  %v2096 = vpack.c.b16 %v1784, %v1776
  %v2097 = vpack.c.b16 %v1785, %v1777
  %v2098 = vpack.c.b16 %v1786, %v1778
  %v2099 = vpack.c.b16 %v1787, %v1779
  %v2100 = vpack.c.b16 %v1788, %v1780
  %v2101 = vpack.c.b16 %v1789, %v1781
  %v2102 = vpack.c.b16 %v1790, %v1782
  %v2103 = vpack.c.b16 %v1791, %v1783
  %v2104 = vpack.c.b16 %v1800, %v1792
  %v2105 = vpack.c.b16 %v1801, %v1793
  %v2106 = vpack.c.b16 %v1802, %v1794
  %v2107 = vpack.c.b16 %v1803, %v1795
  %v2108 = vpack.c.b16 %v1804, %v1796
  %v2109 = vpack.c.b16 %v1805, %v1797
  %v2110 = vpack.c.b16 %v1806, %v1798
  %v2111 = vpack.c.b16 %v1807, %v1799
  %v2112 = vpack.c.b16 %v1816, %v1808
  %v2113 = vpack.c.b16 %v1817, %v1809
  %v2114 = vpack.c.b16 %v1818, %v1810
  %v2115 = vpack.c.b16 %v1819, %v1811
  %v2116 = vpack.c.b16 %v1820, %v1812
  %v2117 = vpack.c.b16 %v1821, %v1813
  %v2118 = vpack.c.b16 %v1822, %v1814
  %v2119 = vpack.c.b16 %v1823, %v1815
  %v2120 = vpack.c.b16 %v1832, %v1824
  %v2121 = vpack.c.b16 %v1833, %v1825
  %v2122 = vpack.c.b16 %v1834, %v1826
  %v2123 = vpack.c.b16 %v1835, %v1827
  %v2124 = vpack.c.b16 %v1836, %v1828
  %v2125 = vpack.c.b16 %v1837, %v1829
  %v2126 = vpack.c.b16 %v1838, %v1830
  %v2127 = vpack.c.b16 %v1839, %v1831
  %v2128 = vpack.c.b16 %v1848, %v1840
  %v2129 = vpack.c.b16 %v1849, %v1841
  %v2130 = vpack.c.b16 %v1850, %v1842
  %v2131 = vpack.c.b16 %v1851, %v1843
  %v2132 = vpack.c.b16 %v1852, %v1844
  %v2133 = vpack.c.b16 %v1853, %v1845
  %v2134 = vpack.c.b16 %v1854, %v1846
  %v2135 = vpack.c.b16 %v1855, %v1847
  %v2136 = vpack.c.b16 %v1864, %v1856
  %v2137 = vpack.c.b16 %v1865, %v1857
  %v2138 = vpack.c.b16 %v1866, %v1858
  %v2139 = vpack.c.b16 %v1867, %v1859
  %v2140 = vpack.c.b16 %v1868, %v1860
  %v2141 = vpack.c.b16 %v1869, %v1861
  %v2142 = vpack.c.b16 %v1870, %v1862
  %v2143 = vpack.c.b16 %v1871, %v1863
  %v2144 = vpack.c.b16 %v1880, %v1872
  %v2145 = vpack.c.b16 %v1881, %v1873
  %v2146 = vpack.c.b16 %v1882, %v1874
  %v2147 = vpack.c.b16 %v1883, %v1875
  %v2148 = vpack.c.b16 %v1884, %v1876
  %v2149 = vpack.c.b16 %v1885, %v1877
  %v2150 = vpack.c.b16 %v1886, %v1878
  %v2151 = vpack.c.b16 %v1887, %v1879
  %v2152 = vpack.c.b16 %v1896, %v1888
  %v2153 = vpack.c.b16 %v1897, %v1889
  %v2154 = vpack.c.b16 %v1898, %v1890
  %v2155 = vpack.c.b16 %v1899, %v1891
  %v2156 = vpack.c.b16 %v1900, %v1892
  %v2157 = vpack.c.b16 %v1901, %v1893
  %v2158 = vpack.c.b16 %v1902, %v1894
  %v2159 = vpack.c.b16 %v1903, %v1895
  %2416 = vmatpush.bf16.msra.mxu0 %v1960
  %2417 = vmatpush.bf16.msra.mxu0 %v1952
  %2418 = vmatpush.bf16.msra.mxu0 %v1944
  %2419 = vmatpush.bf16.msra.mxu0 %v1936
  %2420 = vmatpush.bf16.msra.mxu0 %v1928
  %2421 = vmatpush.bf16.msra.mxu0 %v1920
  %2422 = vmatpush.bf16.msra.mxu0 %v1912
  %2423 = vmatpush.bf16.msra.mxu0 %v1904
  %2424 = vmatmul.bf16.gmra.mxu0 %v858
  %v2425 = vpop.f32.mrf.mxu0
  %v2426 = vadd.f32 %v1120, %v2425
  %v2427 = vpop.f32.mrf.mxu0
  %2428 = vdwg.mxu0
  %2429 = vmatpush.bf16.msra.mxu0 %v2024
  %2430 = vmatpush.bf16.msra.mxu0 %v2016
  %2431 = vmatpush.bf16.msra.mxu0 %v2008
  %2432 = vmatpush.bf16.msra.mxu0 %v2000
  %2433 = vmatpush.bf16.msra.mxu0 %v1992
  %2434 = vmatpush.bf16.msra.mxu0 %v1984
  %2435 = vmatpush.bf16.msra.mxu0 %v1976
  %2436 = vmatpush.bf16.msra.mxu0 %v1968
  %2437 = vmatmul.bf16.gmra.mxu0 %v859
  %v2438 = vpop.f32.mrf.mxu0
  %v2439 = vadd.f32 %v2426, %v2438
  %v2440 = vpop.f32.mrf.mxu0
  %2441 = vdwg.mxu0
  %2442 = vmatpush.bf16.msra.mxu0 %v2088
  %2443 = vmatpush.bf16.msra.mxu0 %v2080
  %2444 = vmatpush.bf16.msra.mxu0 %v2072
  %2445 = vmatpush.bf16.msra.mxu0 %v2064
  %2446 = vmatpush.bf16.msra.mxu0 %v2056
  %2447 = vmatpush.bf16.msra.mxu0 %v2048
  %2448 = vmatpush.bf16.msra.mxu0 %v2040
  %2449 = vmatpush.bf16.msra.mxu0 %v2032
  %2450 = vmatmul.bf16.gmra.mxu0 %v860
  %v2451 = vpop.f32.mrf.mxu0
  %v2452 = vadd.f32 %v2439, %v2451
  %v2453 = vpop.f32.mrf.mxu0
  %2454 = vdwg.mxu0
  %2455 = vmatpush.bf16.msra.mxu0 %v2152
  %2456 = vmatpush.bf16.msra.mxu0 %v2144
  %2457 = vmatpush.bf16.msra.mxu0 %v2136
  %2458 = vmatpush.bf16.msra.mxu0 %v2128
  %2459 = vmatpush.bf16.msra.mxu0 %v2120
  %2460 = vmatpush.bf16.msra.mxu0 %v2112
  %2461 = vmatpush.bf16.msra.mxu0 %v2104
  %2462 = vmatpush.bf16.msra.mxu0 %v2096
  %2463 = vmatmul.bf16.gmra.mxu0 %v861
  %v2464 = vpop.f32.mrf.mxu0
  %v2465 = vadd.f32 %v2452, %v2464
  %v2466 = vpop.f32.mrf.mxu0
  %2467 = vdwg.mxu0
  %2468 = vmatpush.bf16.msra.mxu0 %v1961
  %2469 = vmatpush.bf16.msra.mxu0 %v1953
  %2470 = vmatpush.bf16.msra.mxu0 %v1945
  %2471 = vmatpush.bf16.msra.mxu0 %v1937
  %2472 = vmatpush.bf16.msra.mxu0 %v1929
  %2473 = vmatpush.bf16.msra.mxu0 %v1921
  %2474 = vmatpush.bf16.msra.mxu0 %v1913
  %2475 = vmatpush.bf16.msra.mxu0 %v1905
  %2476 = vmatmul.bf16.gmra.mxu0 %v858
  %v2477 = vpop.f32.mrf.mxu0
  %v2478 = vadd.f32 %v1121, %v2477
  %v2479 = vpop.f32.mrf.mxu0
  %2480 = vdwg.mxu0
  %2481 = vmatpush.bf16.msra.mxu0 %v2025
  %2482 = vmatpush.bf16.msra.mxu0 %v2017
  %2483 = vmatpush.bf16.msra.mxu0 %v2009
  %2484 = vmatpush.bf16.msra.mxu0 %v2001
  %2485 = vmatpush.bf16.msra.mxu0 %v1993
  %2486 = vmatpush.bf16.msra.mxu0 %v1985
  %2487 = vmatpush.bf16.msra.mxu0 %v1977
  %2488 = vmatpush.bf16.msra.mxu0 %v1969
  %2489 = vmatmul.bf16.gmra.mxu0 %v859
  %v2490 = vpop.f32.mrf.mxu0
  %v2491 = vadd.f32 %v2478, %v2490
  %v2492 = vpop.f32.mrf.mxu0
  %2493 = vdwg.mxu0
  %2494 = vmatpush.bf16.msra.mxu0 %v2089
  %2495 = vmatpush.bf16.msra.mxu0 %v2081
  %2496 = vmatpush.bf16.msra.mxu0 %v2073
  %2497 = vmatpush.bf16.msra.mxu0 %v2065
  %2498 = vmatpush.bf16.msra.mxu0 %v2057
  %2499 = vmatpush.bf16.msra.mxu0 %v2049
  %2500 = vmatpush.bf16.msra.mxu0 %v2041
  %2501 = vmatpush.bf16.msra.mxu0 %v2033
  %2502 = vmatmul.bf16.gmra.mxu0 %v860
  %v2503 = vpop.f32.mrf.mxu0
  %v2504 = vadd.f32 %v2491, %v2503
  %v2505 = vpop.f32.mrf.mxu0
  %2506 = vdwg.mxu0
  %2507 = vmatpush.bf16.msra.mxu0 %v2153
  %2508 = vmatpush.bf16.msra.mxu0 %v2145
  %2509 = vmatpush.bf16.msra.mxu0 %v2137
  %2510 = vmatpush.bf16.msra.mxu0 %v2129
  %2511 = vmatpush.bf16.msra.mxu0 %v2121
  %2512 = vmatpush.bf16.msra.mxu0 %v2113
  %2513 = vmatpush.bf16.msra.mxu0 %v2105
  %2514 = vmatpush.bf16.msra.mxu0 %v2097
  %2515 = vmatmul.bf16.gmra.mxu0 %v861
  %v2516 = vpop.f32.mrf.mxu0
  %v2517 = vadd.f32 %v2504, %v2516
  %v2518 = vpop.f32.mrf.mxu0
  %2519 = vdwg.mxu0
  %2520 = vmatpush.bf16.msra.mxu0 %v1962
  %2521 = vmatpush.bf16.msra.mxu0 %v1954
  %2522 = vmatpush.bf16.msra.mxu0 %v1946
  %2523 = vmatpush.bf16.msra.mxu0 %v1938
  %2524 = vmatpush.bf16.msra.mxu0 %v1930
  %2525 = vmatpush.bf16.msra.mxu0 %v1922
  %2526 = vmatpush.bf16.msra.mxu0 %v1914
  %2527 = vmatpush.bf16.msra.mxu0 %v1906
  %2528 = vmatmul.bf16.gmra.mxu0 %v858
  %v2529 = vpop.f32.mrf.mxu0
  %v2530 = vadd.f32 %v1122, %v2529
  %v2531 = vpop.f32.mrf.mxu0
  %2532 = vdwg.mxu0
  %2533 = vmatpush.bf16.msra.mxu0 %v2026
  %2534 = vmatpush.bf16.msra.mxu0 %v2018
  %2535 = vmatpush.bf16.msra.mxu0 %v2010
  %2536 = vmatpush.bf16.msra.mxu0 %v2002
  %2537 = vmatpush.bf16.msra.mxu0 %v1994
  %2538 = vmatpush.bf16.msra.mxu0 %v1986
  %2539 = vmatpush.bf16.msra.mxu0 %v1978
  %2540 = vmatpush.bf16.msra.mxu0 %v1970
  %2541 = vmatmul.bf16.gmra.mxu0 %v859
  %v2542 = vpop.f32.mrf.mxu0
  %v2543 = vadd.f32 %v2530, %v2542
  %v2544 = vpop.f32.mrf.mxu0
  %2545 = vdwg.mxu0
  %2546 = vmatpush.bf16.msra.mxu0 %v2090
  %2547 = vmatpush.bf16.msra.mxu0 %v2082
  %2548 = vmatpush.bf16.msra.mxu0 %v2074
  %2549 = vmatpush.bf16.msra.mxu0 %v2066
  %2550 = vmatpush.bf16.msra.mxu0 %v2058
  %2551 = vmatpush.bf16.msra.mxu0 %v2050
  %2552 = vmatpush.bf16.msra.mxu0 %v2042
  %2553 = vmatpush.bf16.msra.mxu0 %v2034
  %2554 = vmatmul.bf16.gmra.mxu0 %v860
  %v2555 = vpop.f32.mrf.mxu0
  %v2556 = vadd.f32 %v2543, %v2555
  %v2557 = vpop.f32.mrf.mxu0
  %2558 = vdwg.mxu0
  %2559 = vmatpush.bf16.msra.mxu0 %v2154
  %2560 = vmatpush.bf16.msra.mxu0 %v2146
  %2561 = vmatpush.bf16.msra.mxu0 %v2138
  %2562 = vmatpush.bf16.msra.mxu0 %v2130
  %2563 = vmatpush.bf16.msra.mxu0 %v2122
  %2564 = vmatpush.bf16.msra.mxu0 %v2114
  %2565 = vmatpush.bf16.msra.mxu0 %v2106
  %2566 = vmatpush.bf16.msra.mxu0 %v2098
  %2567 = vmatmul.bf16.gmra.mxu0 %v861
  %v2568 = vpop.f32.mrf.mxu0
  %v2569 = vadd.f32 %v2556, %v2568
  %v2570 = vpop.f32.mrf.mxu0
  %2571 = vdwg.mxu0
  %2572 = vmatpush.bf16.msra.mxu0 %v1963
  %2573 = vmatpush.bf16.msra.mxu0 %v1955
  %2574 = vmatpush.bf16.msra.mxu0 %v1947
  %2575 = vmatpush.bf16.msra.mxu0 %v1939
  %2576 = vmatpush.bf16.msra.mxu0 %v1931
  %2577 = vmatpush.bf16.msra.mxu0 %v1923
  %2578 = vmatpush.bf16.msra.mxu0 %v1915
  %2579 = vmatpush.bf16.msra.mxu0 %v1907
  %2580 = vmatmul.bf16.gmra.mxu0 %v858
  %v2581 = vpop.f32.mrf.mxu0
  %v2582 = vadd.f32 %v1123, %v2581
  %v2583 = vpop.f32.mrf.mxu0
  %2584 = vdwg.mxu0
  %2585 = vmatpush.bf16.msra.mxu0 %v2027
  %2586 = vmatpush.bf16.msra.mxu0 %v2019
  %2587 = vmatpush.bf16.msra.mxu0 %v2011
  %2588 = vmatpush.bf16.msra.mxu0 %v2003
  %2589 = vmatpush.bf16.msra.mxu0 %v1995
  %2590 = vmatpush.bf16.msra.mxu0 %v1987
  %2591 = vmatpush.bf16.msra.mxu0 %v1979
  %2592 = vmatpush.bf16.msra.mxu0 %v1971
  %2593 = vmatmul.bf16.gmra.mxu0 %v859
  %v2594 = vpop.f32.mrf.mxu0
  %v2595 = vadd.f32 %v2582, %v2594
  %v2596 = vpop.f32.mrf.mxu0
  %2597 = vdwg.mxu0
  %2598 = vmatpush.bf16.msra.mxu0 %v2091
  %2599 = vmatpush.bf16.msra.mxu0 %v2083
  %2600 = vmatpush.bf16.msra.mxu0 %v2075
  %2601 = vmatpush.bf16.msra.mxu0 %v2067
  %2602 = vmatpush.bf16.msra.mxu0 %v2059
  %2603 = vmatpush.bf16.msra.mxu0 %v2051
  %2604 = vmatpush.bf16.msra.mxu0 %v2043
  %2605 = vmatpush.bf16.msra.mxu0 %v2035
  %2606 = vmatmul.bf16.gmra.mxu0 %v860
  %v2607 = vpop.f32.mrf.mxu0
  %v2608 = vadd.f32 %v2595, %v2607
  %v2609 = vpop.f32.mrf.mxu0
  %2610 = vdwg.mxu0
  %2611 = vmatpush.bf16.msra.mxu0 %v2155
  %2612 = vmatpush.bf16.msra.mxu0 %v2147
  %2613 = vmatpush.bf16.msra.mxu0 %v2139
  %2614 = vmatpush.bf16.msra.mxu0 %v2131
  %2615 = vmatpush.bf16.msra.mxu0 %v2123
  %2616 = vmatpush.bf16.msra.mxu0 %v2115
  %2617 = vmatpush.bf16.msra.mxu0 %v2107
  %2618 = vmatpush.bf16.msra.mxu0 %v2099
  %2619 = vmatmul.bf16.gmra.mxu0 %v861
  %v2620 = vpop.f32.mrf.mxu0
  %v2621 = vadd.f32 %v2608, %v2620
  %v2622 = vpop.f32.mrf.mxu0
  %2623 = vdwg.mxu0
  %2624 = vmatpush.bf16.msra.mxu0 %v1964
  %2625 = vmatpush.bf16.msra.mxu0 %v1956
  %2626 = vmatpush.bf16.msra.mxu0 %v1948
  %2627 = vmatpush.bf16.msra.mxu0 %v1940
  %2628 = vmatpush.bf16.msra.mxu0 %v1932
  %2629 = vmatpush.bf16.msra.mxu0 %v1924
  %2630 = vmatpush.bf16.msra.mxu0 %v1916
  %2631 = vmatpush.bf16.msra.mxu0 %v1908
  %2632 = vmatmul.bf16.gmra.mxu0 %v858
  %v2633 = vpop.f32.mrf.mxu0
  %v2634 = vadd.f32 %v1124, %v2633
  %v2635 = vpop.f32.mrf.mxu0
  %2636 = vdwg.mxu0
  %2637 = vmatpush.bf16.msra.mxu0 %v2028
  %2638 = vmatpush.bf16.msra.mxu0 %v2020
  %2639 = vmatpush.bf16.msra.mxu0 %v2012
  %2640 = vmatpush.bf16.msra.mxu0 %v2004
  %2641 = vmatpush.bf16.msra.mxu0 %v1996
  %2642 = vmatpush.bf16.msra.mxu0 %v1988
  %2643 = vmatpush.bf16.msra.mxu0 %v1980
  %2644 = vmatpush.bf16.msra.mxu0 %v1972
  %2645 = vmatmul.bf16.gmra.mxu0 %v859
  %v2646 = vpop.f32.mrf.mxu0
  %v2647 = vadd.f32 %v2634, %v2646
  %v2648 = vpop.f32.mrf.mxu0
  %2649 = vdwg.mxu0
  %2650 = vmatpush.bf16.msra.mxu0 %v2092
  %2651 = vmatpush.bf16.msra.mxu0 %v2084
  %2652 = vmatpush.bf16.msra.mxu0 %v2076
  %2653 = vmatpush.bf16.msra.mxu0 %v2068
  %2654 = vmatpush.bf16.msra.mxu0 %v2060
  %2655 = vmatpush.bf16.msra.mxu0 %v2052
  %2656 = vmatpush.bf16.msra.mxu0 %v2044
  %2657 = vmatpush.bf16.msra.mxu0 %v2036
  %2658 = vmatmul.bf16.gmra.mxu0 %v860
  %v2659 = vpop.f32.mrf.mxu0
  %v2660 = vadd.f32 %v2647, %v2659
  %v2661 = vpop.f32.mrf.mxu0
  %2662 = vdwg.mxu0
  %2663 = vmatpush.bf16.msra.mxu0 %v2156
  %2664 = vmatpush.bf16.msra.mxu0 %v2148
  %2665 = vmatpush.bf16.msra.mxu0 %v2140
  %2666 = vmatpush.bf16.msra.mxu0 %v2132
  %2667 = vmatpush.bf16.msra.mxu0 %v2124
  %2668 = vmatpush.bf16.msra.mxu0 %v2116
  %2669 = vmatpush.bf16.msra.mxu0 %v2108
  %2670 = vmatpush.bf16.msra.mxu0 %v2100
  %2671 = vmatmul.bf16.gmra.mxu0 %v861
  %v2672 = vpop.f32.mrf.mxu0
  %v2673 = vadd.f32 %v2660, %v2672
  %v2674 = vpop.f32.mrf.mxu0
  %2675 = vdwg.mxu0
  %2676 = vmatpush.bf16.msra.mxu0 %v1965
  %2677 = vmatpush.bf16.msra.mxu0 %v1957
  %2678 = vmatpush.bf16.msra.mxu0 %v1949
  %2679 = vmatpush.bf16.msra.mxu0 %v1941
  %2680 = vmatpush.bf16.msra.mxu0 %v1933
  %2681 = vmatpush.bf16.msra.mxu0 %v1925
  %2682 = vmatpush.bf16.msra.mxu0 %v1917
  %2683 = vmatpush.bf16.msra.mxu0 %v1909
  %2684 = vmatmul.bf16.gmra.mxu0 %v858
  %v2685 = vpop.f32.mrf.mxu0
  %v2686 = vadd.f32 %v1125, %v2685
  %v2687 = vpop.f32.mrf.mxu0
  %2688 = vdwg.mxu0
  %2689 = vmatpush.bf16.msra.mxu0 %v2029
  %2690 = vmatpush.bf16.msra.mxu0 %v2021
  %2691 = vmatpush.bf16.msra.mxu0 %v2013
  %2692 = vmatpush.bf16.msra.mxu0 %v2005
  %2693 = vmatpush.bf16.msra.mxu0 %v1997
  %2694 = vmatpush.bf16.msra.mxu0 %v1989
  %2695 = vmatpush.bf16.msra.mxu0 %v1981
  %2696 = vmatpush.bf16.msra.mxu0 %v1973
  %2697 = vmatmul.bf16.gmra.mxu0 %v859
  %v2698 = vpop.f32.mrf.mxu0
  %v2699 = vadd.f32 %v2686, %v2698
  %v2700 = vpop.f32.mrf.mxu0
  %2701 = vdwg.mxu0
  %2702 = vmatpush.bf16.msra.mxu0 %v2093
  %2703 = vmatpush.bf16.msra.mxu0 %v2085
  %2704 = vmatpush.bf16.msra.mxu0 %v2077
  %2705 = vmatpush.bf16.msra.mxu0 %v2069
  %2706 = vmatpush.bf16.msra.mxu0 %v2061
  %2707 = vmatpush.bf16.msra.mxu0 %v2053
  %2708 = vmatpush.bf16.msra.mxu0 %v2045
  %2709 = vmatpush.bf16.msra.mxu0 %v2037
  %2710 = vmatmul.bf16.gmra.mxu0 %v860
  %v2711 = vpop.f32.mrf.mxu0
  %v2712 = vadd.f32 %v2699, %v2711
  %v2713 = vpop.f32.mrf.mxu0
  %2714 = vdwg.mxu0
  %2715 = vmatpush.bf16.msra.mxu0 %v2157
  %2716 = vmatpush.bf16.msra.mxu0 %v2149
  %2717 = vmatpush.bf16.msra.mxu0 %v2141
  %2718 = vmatpush.bf16.msra.mxu0 %v2133
  %2719 = vmatpush.bf16.msra.mxu0 %v2125
  %2720 = vmatpush.bf16.msra.mxu0 %v2117
  %2721 = vmatpush.bf16.msra.mxu0 %v2109
  %2722 = vmatpush.bf16.msra.mxu0 %v2101
  %2723 = vmatmul.bf16.gmra.mxu0 %v861
  %v2724 = vpop.f32.mrf.mxu0
  %v2725 = vadd.f32 %v2712, %v2724
  %v2726 = vpop.f32.mrf.mxu0
  %2727 = vdwg.mxu0
  %2728 = vmatpush.bf16.msra.mxu0 %v1966
  %2729 = vmatpush.bf16.msra.mxu0 %v1958
  %2730 = vmatpush.bf16.msra.mxu0 %v1950
  %2731 = vmatpush.bf16.msra.mxu0 %v1942
  %2732 = vmatpush.bf16.msra.mxu0 %v1934
  %2733 = vmatpush.bf16.msra.mxu0 %v1926
  %2734 = vmatpush.bf16.msra.mxu0 %v1918
  %2735 = vmatpush.bf16.msra.mxu0 %v1910
  %2736 = vmatmul.bf16.gmra.mxu0 %v858
  %v2737 = vpop.f32.mrf.mxu0
  %v2738 = vadd.f32 %v1126, %v2737
  %v2739 = vpop.f32.mrf.mxu0
  %2740 = vdwg.mxu0
  %2741 = vmatpush.bf16.msra.mxu0 %v2030
  %2742 = vmatpush.bf16.msra.mxu0 %v2022
  %2743 = vmatpush.bf16.msra.mxu0 %v2014
  %2744 = vmatpush.bf16.msra.mxu0 %v2006
  %2745 = vmatpush.bf16.msra.mxu0 %v1998
  %2746 = vmatpush.bf16.msra.mxu0 %v1990
  %2747 = vmatpush.bf16.msra.mxu0 %v1982
  %2748 = vmatpush.bf16.msra.mxu0 %v1974
  %2749 = vmatmul.bf16.gmra.mxu0 %v859
  %v2750 = vpop.f32.mrf.mxu0
  %v2751 = vadd.f32 %v2738, %v2750
  %v2752 = vpop.f32.mrf.mxu0
  %2753 = vdwg.mxu0
  %2754 = vmatpush.bf16.msra.mxu0 %v2094
  %2755 = vmatpush.bf16.msra.mxu0 %v2086
  %2756 = vmatpush.bf16.msra.mxu0 %v2078
  %2757 = vmatpush.bf16.msra.mxu0 %v2070
  %2758 = vmatpush.bf16.msra.mxu0 %v2062
  %2759 = vmatpush.bf16.msra.mxu0 %v2054
  %2760 = vmatpush.bf16.msra.mxu0 %v2046
  %2761 = vmatpush.bf16.msra.mxu0 %v2038
  %2762 = vmatmul.bf16.gmra.mxu0 %v860
  %v2763 = vpop.f32.mrf.mxu0
  %v2764 = vadd.f32 %v2751, %v2763
  %v2765 = vpop.f32.mrf.mxu0
  %2766 = vdwg.mxu0
  %2767 = vmatpush.bf16.msra.mxu0 %v2158
  %2768 = vmatpush.bf16.msra.mxu0 %v2150
  %2769 = vmatpush.bf16.msra.mxu0 %v2142
  %2770 = vmatpush.bf16.msra.mxu0 %v2134
  %2771 = vmatpush.bf16.msra.mxu0 %v2126
  %2772 = vmatpush.bf16.msra.mxu0 %v2118
  %2773 = vmatpush.bf16.msra.mxu0 %v2110
  %2774 = vmatpush.bf16.msra.mxu0 %v2102
  %2775 = vmatmul.bf16.gmra.mxu0 %v861
  %v2776 = vpop.f32.mrf.mxu0
  %v2777 = vadd.f32 %v2764, %v2776
  %v2778 = vpop.f32.mrf.mxu0
  %2779 = vdwg.mxu0
  %2780 = vmatpush.bf16.msra.mxu0 %v1967
  %2781 = vmatpush.bf16.msra.mxu0 %v1959
  %2782 = vmatpush.bf16.msra.mxu0 %v1951
  %2783 = vmatpush.bf16.msra.mxu0 %v1943
  %2784 = vmatpush.bf16.msra.mxu0 %v1935
  %2785 = vmatpush.bf16.msra.mxu0 %v1927
  %2786 = vmatpush.bf16.msra.mxu0 %v1919
  %2787 = vmatpush.bf16.msra.mxu0 %v1911
  %2788 = vmatmul.bf16.gmra.mxu0 %v858
  %v2789 = vpop.f32.mrf.mxu0
  %v2790 = vadd.f32 %v1127, %v2789
  %v2791 = vpop.f32.mrf.mxu0
  %2792 = vdwg.mxu0
  %2793 = vmatpush.bf16.msra.mxu0 %v2031
  %2794 = vmatpush.bf16.msra.mxu0 %v2023
  %2795 = vmatpush.bf16.msra.mxu0 %v2015
  %2796 = vmatpush.bf16.msra.mxu0 %v2007
  %2797 = vmatpush.bf16.msra.mxu0 %v1999
  %2798 = vmatpush.bf16.msra.mxu0 %v1991
  %2799 = vmatpush.bf16.msra.mxu0 %v1983
  %2800 = vmatpush.bf16.msra.mxu0 %v1975
  %2801 = vmatmul.bf16.gmra.mxu0 %v859
  %v2802 = vpop.f32.mrf.mxu0
  %v2803 = vadd.f32 %v2790, %v2802
  %v2804 = vpop.f32.mrf.mxu0
  %2805 = vdwg.mxu0
  %2806 = vmatpush.bf16.msra.mxu0 %v2095
  %2807 = vmatpush.bf16.msra.mxu0 %v2087
  %2808 = vmatpush.bf16.msra.mxu0 %v2079
  %2809 = vmatpush.bf16.msra.mxu0 %v2071
  %2810 = vmatpush.bf16.msra.mxu0 %v2063
  %2811 = vmatpush.bf16.msra.mxu0 %v2055
  %2812 = vmatpush.bf16.msra.mxu0 %v2047
  %2813 = vmatpush.bf16.msra.mxu0 %v2039
  %2814 = vmatmul.bf16.gmra.mxu0 %v860
  %v2815 = vpop.f32.mrf.mxu0
  %v2816 = vadd.f32 %v2803, %v2815
  %v2817 = vpop.f32.mrf.mxu0
  %2818 = vdwg.mxu0
  %2819 = vmatpush.bf16.msra.mxu0 %v2159
  %2820 = vmatpush.bf16.msra.mxu0 %v2151
  %2821 = vmatpush.bf16.msra.mxu0 %v2143
  %2822 = vmatpush.bf16.msra.mxu0 %v2135
  %2823 = vmatpush.bf16.msra.mxu0 %v2127
  %2824 = vmatpush.bf16.msra.mxu0 %v2119
  %2825 = vmatpush.bf16.msra.mxu0 %v2111
  %2826 = vmatpush.bf16.msra.mxu0 %v2103
  %2827 = vmatmul.bf16.gmra.mxu0 %v861
  %v2828 = vpop.f32.mrf.mxu0
  %v2829 = vadd.f32 %v2816, %v2828
  %v2830 = vpop.f32.mrf.mxu0
  %2831 = vdwg.mxu0
  %v2832 = vmax.f32 %v2465, 0.0
  %v2833 = vmax.f32 %v2517, 0.0
  %v2834 = vmax.f32 %v2569, 0.0
  %v2835 = vmax.f32 %v2621, 0.0
  %v2836 = vmax.f32 %v2673, 0.0
  %v2837 = vmax.f32 %v2725, 0.0
  %v2838 = vmax.f32 %v2777, 0.0
  %v2839 = vmax.f32 %v2829, 0.0
  %v2840 = vld [vmem:[%s9] sm:$0xff]
  %v2842 = vperm.slane %v2840, 0
  %v2843 = vperm.slane %v2840, 1
  %v2844 = vperm.slane %v2840, 2
  %v2845 = vperm.slane %v2840, 3
  %v2846 = vperm.slane %v2840, 4
  %v2847 = vperm.slane %v2840, 5
  %v2848 = vperm.slane %v2840, 6
  %v2849 = vperm.slane %v2840, 7
  %v2858 = vmul.f32 %v2832, %v2842
  %v2859 = vmul.f32 %v2833, %v2843
  %v2860 = vmul.f32 %v2834, %v2844
  %v2861 = vmul.f32 %v2835, %v2845
  %v2862 = vmul.f32 %v2836, %v2846
  %v2863 = vmul.f32 %v2837, %v2847
  %v2864 = vmul.f32 %v2838, %v2848
  %v2865 = vmul.f32 %v2839, %v2849
  %v2866 = vld [vmem:[%s10] sm:$0xff]
  %v2868 = vperm.slane %v2866, 0
  %v2869 = vperm.slane %v2866, 1
  %v2870 = vperm.slane %v2866, 2
  %v2871 = vperm.slane %v2866, 3
  %v2872 = vperm.slane %v2866, 4
  %v2873 = vperm.slane %v2866, 5
  %v2874 = vperm.slane %v2866, 6
  %v2875 = vperm.slane %v2866, 7
  %v2884 = vadd.f32 %v2858, %v2868
  %v2885 = vadd.f32 %v2859, %v2869
  %v2886 = vadd.f32 %v2860, %v2870
  %v2887 = vadd.f32 %v2861, %v2871
  %v2888 = vadd.f32 %v2862, %v2872
  %v2889 = vadd.f32 %v2863, %v2873
  %v2890 = vadd.f32 %v2864, %v2874
  %v2891 = vadd.f32 %v2865, %v2875
  %v2892 = vpack.c.bf16 %v2885, %v2884
  %v2893 = vpack.c.bf16 %v2887, %v2886
  %v2894 = vpack.c.bf16 %v2889, %v2888
  %v2895 = vpack.c.bf16 %v2891, %v2890
  %2896 = vst [vmem:[%s11] sm:$0xff] %v2892
  %2897 = vst [vmem:[%s11 + $0x8] sm:$0xff] %v2893
  %2898 = vst [vmem:[%s11 + $0x10] sm:$0xff] %v2894
  %2899 = vst [vmem:[%s11 + $0x18] sm:$0xff] %v2895
  // Predicated region
  $region46: #{_forward.9} parent=0 // pred_check
    _
  $region47: #{_forward.9} parent=0 // pred_check_branch
    %2901 = sbr.rel (0) target = $region49
  $region48: #{_forward.9} parent=0 // pred_region
    _
  $region49: #{_forward.9} parent=0 // pred_fallthru
    _
  // Predicated region
  $region50: #{_forward.9} parent=0 // pred_check
    _
  $region51: #{_forward.9} parent=0 // pred_check_branch
    %2903 = sbr.rel (0) target = $region53
  $region52: #{_forward.9} parent=0 // pred_region
    _
  $region53: #{_forward.9} parent=0 // pred_fallthru
    _

// kernel: neg.8
$region0: #{neg.8}
  #allocation0 [shape = 's32[1]{0}', space=sflag, size = 0x4, scoped, tag = 'scoped memory for neg.8']
  %s0 = inlined_call_operand.vmem [shape: f32[2,13,4], index: 0, kind: input, shape index: {}]
  %s1 = inlined_call_operand.vmem [shape: f32[2,13,4], index: 1, kind: output, shape index: {}]
  %v2 = vld [vmem:[%s0] sm:$0xf]
  %3 = xla_tuple %v2
  %4 = xla_tuple %3
  %v5 = vxor.u32 %v2, 2147483648
  %6 = xla_tuple %v5
  %7 = vst [vmem:[%s1] sm:$0xf] %v5
  %s8 = scalar_lea.vmem %s0, 4
  %v9 = vld [vmem:[%s8] sm:$0xf]
  %10 = xla_tuple %v9
  %11 = xla_tuple %10
  %v12 = vxor.u32 %v9, 2147483648
  %13 = xla_tuple %v12
  %s14 = scalar_lea.vmem %s1, 4
  %15 = vst [vmem:[%s14] sm:$0xf] %v12

// kernel: _forward.10
$region0: #{_forward.10}
  #allocation0 [shape = 'u32[]', space=smem, size = 0x4, offset = 0x4, fixed_abs, tag = 'smem constant byte address 0x4 - core index']
  #allocation1 [shape = 'u32[72,128]{1,0:T(1,128)}', space=vmem, size = 0x9000, scoped, tag = 'internal scratch']
  %s0 = inlined_call_operand.vmem [shape: bf16[8,1024], index: 0, kind: input, shape index: {}]
  %s1 = inlined_call_operand.vmem [shape: bf16[8,256], index: 1, kind: input, shape index: {}]
  %s2 = inlined_call_operand.vmem [shape: bf16[1024,256], index: 2, kind: input, shape index: {}]
  %s3 = inlined_call_operand.vmem [shape: bf16[256,256], index: 3, kind: input, shape index: {}]
  %s4 = inlined_call_operand.vmem [shape: f32[1,256], index: 4, kind: input, shape index: {}]
  %s5 = inlined_call_operand.vmem [shape: bf16[256,256], index: 5, kind: input, shape index: {}]
  %s6 = inlined_call_operand.vmem [shape: f32[1,256], index: 6, kind: input, shape index: {}]
  %s7 = inlined_call_operand.vmem [shape: f32[1,256], index: 7, kind: input, shape index: {}]
  %s8 = inlined_call_operand.vmem [shape: f32[1,256], index: 8, kind: input, shape index: {}]
  %s9 = inlined_call_operand.vmem [shape: bf16[8,256], index: 9, kind: output, shape index: {}]
  %s10 = sld [smem:[#allocation0]]
  $region46: #{_forward.10} parent=0
    _
  %s12 = ssub.s32 1, %s10
  %s13 = scalar_select 0, %s12, %s10
  // Predicated region
  $region2: #{_forward.10} parent=0 // pred_check
    _
  $region3: #{_forward.10} parent=0 // pred_check_branch
    %15 = sbr.rel (0) target = $region5
  $region4: #{_forward.10} parent=0 // pred_region
    _
  $region5: #{_forward.10} parent=0 // pred_fallthru
    _
  // Predicated region
  $region6: #{_forward.10} parent=0 // pred_check
    _
  $region7: #{_forward.10} parent=0 // pred_check_branch
    %17 = sbr.rel (0) target = $region9
  $region8: #{_forward.10} parent=0 // pred_region
    _
  $region9: #{_forward.10} parent=0 // pred_fallthru
    _
  // Predicated region
  $region10: #{_forward.10} parent=0 // pred_check
    _
  $region11: #{_forward.10} parent=0 // pred_check_branch
    %19 = sbr.rel (0) target = $region13
  $region12: #{_forward.10} parent=0 // pred_region
    _
  $region13: #{_forward.10} parent=0 // pred_fallthru
    _
  // Predicated region
  $region14: #{_forward.10} parent=0 // pred_check
    _
  $region15: #{_forward.10} parent=0 // pred_check_branch
    %21 = sbr.rel (0) target = $region17
  $region16: #{_forward.10} parent=0 // pred_region
    _
  $region17: #{_forward.10} parent=0 // pred_fallthru
    _
  // Predicated region
  $region18: #{_forward.10} parent=0 // pred_check
    _
  $region19: #{_forward.10} parent=0 // pred_check_branch
    %23 = sbr.rel (0) target = $region21
  $region20: #{_forward.10} parent=0 // pred_region
    _
  $region21: #{_forward.10} parent=0 // pred_fallthru
    _
  // Predicated region
  $region22: #{_forward.10} parent=0 // pred_check
    _
  $region23: #{_forward.10} parent=0 // pred_check_branch
    %25 = sbr.rel (0) target = $region25
  $region24: #{_forward.10} parent=0 // pred_region
    _
  $region25: #{_forward.10} parent=0 // pred_fallthru
    _
  // Predicated region
  $region26: #{_forward.10} parent=0 // pred_check
    _
  $region27: #{_forward.10} parent=0 // pred_check_branch
    %27 = sbr.rel (0) target = $region29
  $region28: #{_forward.10} parent=0 // pred_region
    _
  $region29: #{_forward.10} parent=0 // pred_fallthru
    _
  // Predicated region
  $region30: #{_forward.10} parent=0 // pred_check
    _
  $region31: #{_forward.10} parent=0 // pred_check_branch
    %29 = sbr.rel (0) target = $region33
  $region32: #{_forward.10} parent=0 // pred_region
    _
  $region33: #{_forward.10} parent=0 // pred_fallthru
    _
  // Predicated region
  $region34: #{_forward.10} parent=0 // pred_check
    _
  $region35: #{_forward.10} parent=0 // pred_check_branch
    %31 = sbr.rel (0) target = $region37
  $region36: #{_forward.10} parent=0 // pred_region
    _
  $region37: #{_forward.10} parent=0 // pred_fallthru
    _
  %v32 = vld [vmem:[%s0] sm:$0xff]
  %v33 = vld [vmem:[%s0 + $0x8] sm:$0xff]
  %v34 = vld [vmem:[%s0 + $0x10] sm:$0xff]
  %v35 = vld [vmem:[%s0 + $0x18] sm:$0xff]
  %v36 = vld [vmem:[%s2] sm:$0xff]
  %v37 = vld [vmem:[%s2 + $0x8] sm:$0xff]
  %v38 = vld [vmem:[%s2 + $0x10] sm:$0xff]
  %v39 = vld [vmem:[%s2 + $0x18] sm:$0xff]
  %v40 = vld [vmem:[%s2 + $0x20] sm:$0xff]
  %v41 = vld [vmem:[%s2 + $0x28] sm:$0xff]
  %v42 = vld [vmem:[%s2 + $0x30] sm:$0xff]
  %v43 = vld [vmem:[%s2 + $0x38] sm:$0xff]
  %v44 = vld [vmem:[%s2 + $0x40] sm:$0xff]
  %v45 = vld [vmem:[%s2 + $0x48] sm:$0xff]
  %v46 = vld [vmem:[%s2 + $0x50] sm:$0xff]
  %v47 = vld [vmem:[%s2 + $0x58] sm:$0xff]
  %v48 = vld [vmem:[%s2 + $0x60] sm:$0xff]
  %v49 = vld [vmem:[%s2 + $0x68] sm:$0xff]
  %v50 = vld [vmem:[%s2 + $0x70] sm:$0xff]
  %v51 = vld [vmem:[%s2 + $0x78] sm:$0xff]
  %v52 = vld [vmem:[%s2 + $0x80] sm:$0xff]
  %v53 = vld [vmem:[%s2 + $0x88] sm:$0xff]
  %v54 = vld [vmem:[%s2 + $0x90] sm:$0xff]
  %v55 = vld [vmem:[%s2 + $0x98] sm:$0xff]
  %v56 = vld [vmem:[%s2 + $0xa0] sm:$0xff]
  %v57 = vld [vmem:[%s2 + $0xa8] sm:$0xff]
  %v58 = vld [vmem:[%s2 + $0xb0] sm:$0xff]
  %v59 = vld [vmem:[%s2 + $0xb8] sm:$0xff]
  %v60 = vld [vmem:[%s2 + $0xc0] sm:$0xff]
  %v61 = vld [vmem:[%s2 + $0xc8] sm:$0xff]
  %v62 = vld [vmem:[%s2 + $0xd0] sm:$0xff]
  %v63 = vld [vmem:[%s2 + $0xd8] sm:$0xff]
  %v64 = vld [vmem:[%s2 + $0xe0] sm:$0xff]
  %v65 = vld [vmem:[%s2 + $0xe8] sm:$0xff]
  %v66 = vld [vmem:[%s2 + $0xf0] sm:$0xff]
  %v67 = vld [vmem:[%s2 + $0xf8] sm:$0xff]
  %v68 = vld [vmem:[%s2 + $0x100] sm:$0xff]
  %v69 = vld [vmem:[%s2 + $0x108] sm:$0xff]
  %v70 = vld [vmem:[%s2 + $0x110] sm:$0xff]
  %v71 = vld [vmem:[%s2 + $0x118] sm:$0xff]
  %v72 = vld [vmem:[%s2 + $0x120] sm:$0xff]
  %v73 = vld [vmem:[%s2 + $0x128] sm:$0xff]
  %v74 = vld [vmem:[%s2 + $0x130] sm:$0xff]
  %v75 = vld [vmem:[%s2 + $0x138] sm:$0xff]
  %v76 = vld [vmem:[%s2 + $0x140] sm:$0xff]
  %v77 = vld [vmem:[%s2 + $0x148] sm:$0xff]
  %v78 = vld [vmem:[%s2 + $0x150] sm:$0xff]
  %v79 = vld [vmem:[%s2 + $0x158] sm:$0xff]
  %v80 = vld [vmem:[%s2 + $0x160] sm:$0xff]
  %v81 = vld [vmem:[%s2 + $0x168] sm:$0xff]
  %v82 = vld [vmem:[%s2 + $0x170] sm:$0xff]
  %v83 = vld [vmem:[%s2 + $0x178] sm:$0xff]
  %v84 = vld [vmem:[%s2 + $0x180] sm:$0xff]
  %v85 = vld [vmem:[%s2 + $0x188] sm:$0xff]
  %v86 = vld [vmem:[%s2 + $0x190] sm:$0xff]
  %v87 = vld [vmem:[%s2 + $0x198] sm:$0xff]
  %v88 = vld [vmem:[%s2 + $0x1a0] sm:$0xff]
  %v89 = vld [vmem:[%s2 + $0x1a8] sm:$0xff]
  %v90 = vld [vmem:[%s2 + $0x1b0] sm:$0xff]
  %v91 = vld [vmem:[%s2 + $0x1b8] sm:$0xff]
  %v92 = vld [vmem:[%s2 + $0x1c0] sm:$0xff]
  %v93 = vld [vmem:[%s2 + $0x1c8] sm:$0xff]
  %v94 = vld [vmem:[%s2 + $0x1d0] sm:$0xff]
  %v95 = vld [vmem:[%s2 + $0x1d8] sm:$0xff]
  %v96 = vld [vmem:[%s2 + $0x1e0] sm:$0xff]
  %v97 = vld [vmem:[%s2 + $0x1e8] sm:$0xff]
  %v98 = vld [vmem:[%s2 + $0x1f0] sm:$0xff]
  %v99 = vld [vmem:[%s2 + $0x1f8] sm:$0xff]
  %v100 = vld [vmem:[%s2 + $0x200] sm:$0xff]
  %v101 = vld [vmem:[%s2 + $0x208] sm:$0xff]
  %v102 = vld [vmem:[%s2 + $0x210] sm:$0xff]
  %v103 = vld [vmem:[%s2 + $0x218] sm:$0xff]
  %v104 = vld [vmem:[%s2 + $0x220] sm:$0xff]
  %v105 = vld [vmem:[%s2 + $0x228] sm:$0xff]
  %v106 = vld [vmem:[%s2 + $0x230] sm:$0xff]
  %v107 = vld [vmem:[%s2 + $0x238] sm:$0xff]
  %v108 = vld [vmem:[%s2 + $0x240] sm:$0xff]
  %v109 = vld [vmem:[%s2 + $0x248] sm:$0xff]
  %v110 = vld [vmem:[%s2 + $0x250] sm:$0xff]
  %v111 = vld [vmem:[%s2 + $0x258] sm:$0xff]
  %v112 = vld [vmem:[%s2 + $0x260] sm:$0xff]
  %v113 = vld [vmem:[%s2 + $0x268] sm:$0xff]
  %v114 = vld [vmem:[%s2 + $0x270] sm:$0xff]
  %v115 = vld [vmem:[%s2 + $0x278] sm:$0xff]
  %v116 = vld [vmem:[%s2 + $0x280] sm:$0xff]
  %v117 = vld [vmem:[%s2 + $0x288] sm:$0xff]
  %v118 = vld [vmem:[%s2 + $0x290] sm:$0xff]
  %v119 = vld [vmem:[%s2 + $0x298] sm:$0xff]
  %v120 = vld [vmem:[%s2 + $0x2a0] sm:$0xff]
  %v121 = vld [vmem:[%s2 + $0x2a8] sm:$0xff]
  %v122 = vld [vmem:[%s2 + $0x2b0] sm:$0xff]
  %v123 = vld [vmem:[%s2 + $0x2b8] sm:$0xff]
  %v124 = vld [vmem:[%s2 + $0x2c0] sm:$0xff]
  %v125 = vld [vmem:[%s2 + $0x2c8] sm:$0xff]
  %v126 = vld [vmem:[%s2 + $0x2d0] sm:$0xff]
  %v127 = vld [vmem:[%s2 + $0x2d8] sm:$0xff]
  %v128 = vld [vmem:[%s2 + $0x2e0] sm:$0xff]
  %v129 = vld [vmem:[%s2 + $0x2e8] sm:$0xff]
  %v130 = vld [vmem:[%s2 + $0x2f0] sm:$0xff]
  %v131 = vld [vmem:[%s2 + $0x2f8] sm:$0xff]
  %v132 = vld [vmem:[%s2 + $0x300] sm:$0xff]
  %v133 = vld [vmem:[%s2 + $0x308] sm:$0xff]
  %v134 = vld [vmem:[%s2 + $0x310] sm:$0xff]
  %v135 = vld [vmem:[%s2 + $0x318] sm:$0xff]
  %v136 = vld [vmem:[%s2 + $0x320] sm:$0xff]
  %v137 = vld [vmem:[%s2 + $0x328] sm:$0xff]
  %v138 = vld [vmem:[%s2 + $0x330] sm:$0xff]
  %v139 = vld [vmem:[%s2 + $0x338] sm:$0xff]
  %v140 = vld [vmem:[%s2 + $0x340] sm:$0xff]
  %v141 = vld [vmem:[%s2 + $0x348] sm:$0xff]
  %v142 = vld [vmem:[%s2 + $0x350] sm:$0xff]
  %v143 = vld [vmem:[%s2 + $0x358] sm:$0xff]
  %v144 = vld [vmem:[%s2 + $0x360] sm:$0xff]
  %v145 = vld [vmem:[%s2 + $0x368] sm:$0xff]
  %v146 = vld [vmem:[%s2 + $0x370] sm:$0xff]
  %v147 = vld [vmem:[%s2 + $0x378] sm:$0xff]
  %v148 = vld [vmem:[%s2 + $0x380] sm:$0xff]
  %v149 = vld [vmem:[%s2 + $0x388] sm:$0xff]
  %v150 = vld [vmem:[%s2 + $0x390] sm:$0xff]
  %v151 = vld [vmem:[%s2 + $0x398] sm:$0xff]
  %v152 = vld [vmem:[%s2 + $0x3a0] sm:$0xff]
  %v153 = vld [vmem:[%s2 + $0x3a8] sm:$0xff]
  %v154 = vld [vmem:[%s2 + $0x3b0] sm:$0xff]
  %v155 = vld [vmem:[%s2 + $0x3b8] sm:$0xff]
  %v156 = vld [vmem:[%s2 + $0x3c0] sm:$0xff]
  %v157 = vld [vmem:[%s2 + $0x3c8] sm:$0xff]
  %v158 = vld [vmem:[%s2 + $0x3d0] sm:$0xff]
  %v159 = vld [vmem:[%s2 + $0x3d8] sm:$0xff]
  %v160 = vld [vmem:[%s2 + $0x3e0] sm:$0xff]
  %v161 = vld [vmem:[%s2 + $0x3e8] sm:$0xff]
  %v162 = vld [vmem:[%s2 + $0x3f0] sm:$0xff]
  %v163 = vld [vmem:[%s2 + $0x3f8] sm:$0xff]
  %v164 = vld [vmem:[%s1] sm:$0xff]
  %v165 = vld [vmem:[%s3] sm:$0xff]
  %v166 = vld [vmem:[%s3 + $0x8] sm:$0xff]
  %v167 = vld [vmem:[%s3 + $0x10] sm:$0xff]
  %v168 = vld [vmem:[%s3 + $0x18] sm:$0xff]
  %v169 = vld [vmem:[%s3 + $0x20] sm:$0xff]
  %v170 = vld [vmem:[%s3 + $0x28] sm:$0xff]
  %v171 = vld [vmem:[%s3 + $0x30] sm:$0xff]
  %v172 = vld [vmem:[%s3 + $0x38] sm:$0xff]
  %v173 = vld [vmem:[%s3 + $0x40] sm:$0xff]
  %v174 = vld [vmem:[%s3 + $0x48] sm:$0xff]
  %v175 = vld [vmem:[%s3 + $0x50] sm:$0xff]
  %v176 = vld [vmem:[%s3 + $0x58] sm:$0xff]
  %v177 = vld [vmem:[%s3 + $0x60] sm:$0xff]
  %v178 = vld [vmem:[%s3 + $0x68] sm:$0xff]
  %v179 = vld [vmem:[%s3 + $0x70] sm:$0xff]
  %v180 = vld [vmem:[%s3 + $0x78] sm:$0xff]
  %v181 = vld [vmem:[%s3 + $0x80] sm:$0xff]
  %v182 = vld [vmem:[%s3 + $0x88] sm:$0xff]
  %v183 = vld [vmem:[%s3 + $0x90] sm:$0xff]
  %v184 = vld [vmem:[%s3 + $0x98] sm:$0xff]
  %v185 = vld [vmem:[%s3 + $0xa0] sm:$0xff]
  %v186 = vld [vmem:[%s3 + $0xa8] sm:$0xff]
  %v187 = vld [vmem:[%s3 + $0xb0] sm:$0xff]
  %v188 = vld [vmem:[%s3 + $0xb8] sm:$0xff]
  %v189 = vld [vmem:[%s3 + $0xc0] sm:$0xff]
  %v190 = vld [vmem:[%s3 + $0xc8] sm:$0xff]
  %v191 = vld [vmem:[%s3 + $0xd0] sm:$0xff]
  %v192 = vld [vmem:[%s3 + $0xd8] sm:$0xff]
  %v193 = vld [vmem:[%s3 + $0xe0] sm:$0xff]
  %v194 = vld [vmem:[%s3 + $0xe8] sm:$0xff]
  %v195 = vld [vmem:[%s3 + $0xf0] sm:$0xff]
  %v196 = vld [vmem:[%s3 + $0xf8] sm:$0xff]
  %v198 = vunpack.c.l.b16 %v164
  %v199 = vunpack.c.h.b16 %v164
  %v200 = vpack.c.b16 %v198, %v198
  %v201 = vpack.c.b16 %v199, %v199
  %v236 = vunpack.c.l.b16 %v165
  %v237 = vunpack.c.h.b16 %v165
  %v238 = vunpack.c.l.b16 %v166
  %v239 = vunpack.c.h.b16 %v166
  %v240 = vunpack.c.l.b16 %v167
  %v241 = vunpack.c.h.b16 %v167
  %v242 = vunpack.c.l.b16 %v168
  %v243 = vunpack.c.h.b16 %v168
  %v244 = vunpack.c.l.b16 %v169
  %v245 = vunpack.c.h.b16 %v169
  %v246 = vunpack.c.l.b16 %v170
  %v247 = vunpack.c.h.b16 %v170
  %v248 = vunpack.c.l.b16 %v171
  %v249 = vunpack.c.h.b16 %v171
  %v250 = vunpack.c.l.b16 %v172
  %v251 = vunpack.c.h.b16 %v172
  %v252 = vunpack.c.l.b16 %v173
  %v253 = vunpack.c.h.b16 %v173
  %v254 = vunpack.c.l.b16 %v174
  %v255 = vunpack.c.h.b16 %v174
  %v256 = vunpack.c.l.b16 %v175
  %v257 = vunpack.c.h.b16 %v175
  %v258 = vunpack.c.l.b16 %v176
  %v259 = vunpack.c.h.b16 %v176
  %v260 = vunpack.c.l.b16 %v177
  %v261 = vunpack.c.h.b16 %v177
  %v262 = vunpack.c.l.b16 %v178
  %v263 = vunpack.c.h.b16 %v178
  %v264 = vunpack.c.l.b16 %v179
  %v265 = vunpack.c.h.b16 %v179
  %v266 = vunpack.c.l.b16 %v180
  %v267 = vunpack.c.h.b16 %v180
  %v268 = vunpack.c.l.b16 %v181
  %v269 = vunpack.c.h.b16 %v181
  %v270 = vunpack.c.l.b16 %v182
  %v271 = vunpack.c.h.b16 %v182
  %v272 = vunpack.c.l.b16 %v183
  %v273 = vunpack.c.h.b16 %v183
  %v274 = vunpack.c.l.b16 %v184
  %v275 = vunpack.c.h.b16 %v184
  %v276 = vunpack.c.l.b16 %v185
  %v277 = vunpack.c.h.b16 %v185
  %v278 = vunpack.c.l.b16 %v186
  %v279 = vunpack.c.h.b16 %v186
  %v280 = vunpack.c.l.b16 %v187
  %v281 = vunpack.c.h.b16 %v187
  %v282 = vunpack.c.l.b16 %v188
  %v283 = vunpack.c.h.b16 %v188
  %v284 = vunpack.c.l.b16 %v189
  %v285 = vunpack.c.h.b16 %v189
  %v286 = vunpack.c.l.b16 %v190
  %v287 = vunpack.c.h.b16 %v190
  %v288 = vunpack.c.l.b16 %v191
  %v289 = vunpack.c.h.b16 %v191
  %v290 = vunpack.c.l.b16 %v192
  %v291 = vunpack.c.h.b16 %v192
  %v292 = vunpack.c.l.b16 %v193
  %v293 = vunpack.c.h.b16 %v193
  %v294 = vunpack.c.l.b16 %v194
  %v295 = vunpack.c.h.b16 %v194
  %v296 = vunpack.c.l.b16 %v195
  %v297 = vunpack.c.h.b16 %v195
  %v298 = vunpack.c.l.b16 %v196
  %v299 = vunpack.c.h.b16 %v196
  %v300 = vpack.c.b16 %v238, %v236
  %v301 = vpack.c.b16 %v239, %v237
  %v302 = vpack.c.b16 %v242, %v240
  %v303 = vpack.c.b16 %v243, %v241
  %v304 = vpack.c.b16 %v246, %v244
  %v305 = vpack.c.b16 %v247, %v245
  %v306 = vpack.c.b16 %v250, %v248
  %v307 = vpack.c.b16 %v251, %v249
  %v308 = vpack.c.b16 %v254, %v252
  %v309 = vpack.c.b16 %v255, %v253
  %v310 = vpack.c.b16 %v258, %v256
  %v311 = vpack.c.b16 %v259, %v257
  %v312 = vpack.c.b16 %v262, %v260
  %v313 = vpack.c.b16 %v263, %v261
  %v314 = vpack.c.b16 %v266, %v264
  %v315 = vpack.c.b16 %v267, %v265
  %v316 = vpack.c.b16 %v270, %v268
  %v317 = vpack.c.b16 %v271, %v269
  %v318 = vpack.c.b16 %v274, %v272
  %v319 = vpack.c.b16 %v275, %v273
  %v320 = vpack.c.b16 %v278, %v276
  %v321 = vpack.c.b16 %v279, %v277
  %v322 = vpack.c.b16 %v282, %v280
  %v323 = vpack.c.b16 %v283, %v281
  %v324 = vpack.c.b16 %v286, %v284
  %v325 = vpack.c.b16 %v287, %v285
  %v326 = vpack.c.b16 %v290, %v288
  %v327 = vpack.c.b16 %v291, %v289
  %v328 = vpack.c.b16 %v294, %v292
  %v329 = vpack.c.b16 %v295, %v293
  %v330 = vpack.c.b16 %v298, %v296
  %v331 = vpack.c.b16 %v299, %v297
  %364 = vmatpush.bf16.msra.mxu0 %v314
  %365 = vmatpush.bf16.msra.mxu0 %v312
  %366 = vmatpush.bf16.msra.mxu0 %v310
  %367 = vmatpush.bf16.msra.mxu0 %v308
  %368 = vmatpush.bf16.msra.mxu0 %v306
  %369 = vmatpush.bf16.msra.mxu0 %v304
  %370 = vmatpush.bf16.msra.mxu0 %v302
  %371 = vmatpush.bf16.msra.mxu0 %v300
  %372 = vmatmul.bf16.gmra.mxu0 %v200
  %v373 = vpop.f32.mrf.mxu0
  %v374 = vadd.f32 0.0, %v373
  %v375 = vpop.f32.mrf.mxu0
  %376 = vdwg.mxu0
  %377 = vmatpush.bf16.msra.mxu0 %v330
  %378 = vmatpush.bf16.msra.mxu0 %v328
  %379 = vmatpush.bf16.msra.mxu0 %v326
  %380 = vmatpush.bf16.msra.mxu0 %v324
  %381 = vmatpush.bf16.msra.mxu0 %v322
  %382 = vmatpush.bf16.msra.mxu0 %v320
  %383 = vmatpush.bf16.msra.mxu0 %v318
  %384 = vmatpush.bf16.msra.mxu0 %v316
  %385 = vmatmul.bf16.gmra.mxu0 %v201
  %v386 = vpop.f32.mrf.mxu0
  %v387 = vadd.f32 %v374, %v386
  %v388 = vpop.f32.mrf.mxu0
  %389 = vdwg.mxu0
  %390 = vmatpush.bf16.msra.mxu0 %v315
  %391 = vmatpush.bf16.msra.mxu0 %v313
  %392 = vmatpush.bf16.msra.mxu0 %v311
  %393 = vmatpush.bf16.msra.mxu0 %v309
  %394 = vmatpush.bf16.msra.mxu0 %v307
  %395 = vmatpush.bf16.msra.mxu0 %v305
  %396 = vmatpush.bf16.msra.mxu0 %v303
  %397 = vmatpush.bf16.msra.mxu0 %v301
  %398 = vmatmul.bf16.gmra.mxu0 %v200
  %v399 = vpop.f32.mrf.mxu0
  %v400 = vadd.f32 0.0, %v399
  %v401 = vpop.f32.mrf.mxu0
  %402 = vdwg.mxu0
  %403 = vmatpush.bf16.msra.mxu0 %v331
  %404 = vmatpush.bf16.msra.mxu0 %v329
  %405 = vmatpush.bf16.msra.mxu0 %v327
  %406 = vmatpush.bf16.msra.mxu0 %v325
  %407 = vmatpush.bf16.msra.mxu0 %v323
  %408 = vmatpush.bf16.msra.mxu0 %v321
  %409 = vmatpush.bf16.msra.mxu0 %v319
  %410 = vmatpush.bf16.msra.mxu0 %v317
  %411 = vmatmul.bf16.gmra.mxu0 %v201
  %v412 = vpop.f32.mrf.mxu0
  %v413 = vadd.f32 %v400, %v412
  %v414 = vpop.f32.mrf.mxu0
  %415 = vdwg.mxu0
  %v420 = vunpack.c.l.b16 %v32
  %v421 = vunpack.c.h.b16 %v32
  %v422 = vunpack.c.l.b16 %v33
  %v423 = vunpack.c.h.b16 %v33
  %v424 = vunpack.c.l.b16 %v34
  %v425 = vunpack.c.h.b16 %v34
  %v426 = vunpack.c.l.b16 %v35
  %v427 = vunpack.c.h.b16 %v35
  %v428 = vpack.c.b16 %v420, %v420
  %v429 = vpack.c.b16 %v421, %v421
  %v430 = vpack.c.b16 %v422, %v422
  %v431 = vpack.c.b16 %v423, %v423
  %v432 = vpack.c.b16 %v424, %v424
  %v433 = vpack.c.b16 %v425, %v425
  %v434 = vpack.c.b16 %v426, %v426
  %v435 = vpack.c.b16 %v427, %v427
  %v572 = vunpack.c.l.b16 %v36
  %v573 = vunpack.c.h.b16 %v36
  %v574 = vunpack.c.l.b16 %v37
  %v575 = vunpack.c.h.b16 %v37
  %v576 = vunpack.c.l.b16 %v38
  %v577 = vunpack.c.h.b16 %v38
  %v578 = vunpack.c.l.b16 %v39
  %v579 = vunpack.c.h.b16 %v39
  %v580 = vunpack.c.l.b16 %v40
  %v581 = vunpack.c.h.b16 %v40
  %v582 = vunpack.c.l.b16 %v41
  %v583 = vunpack.c.h.b16 %v41
  %v584 = vunpack.c.l.b16 %v42
  %v585 = vunpack.c.h.b16 %v42
  %v586 = vunpack.c.l.b16 %v43
  %v587 = vunpack.c.h.b16 %v43
  %v588 = vunpack.c.l.b16 %v44
  %v589 = vunpack.c.h.b16 %v44
  %v590 = vunpack.c.l.b16 %v45
  %v591 = vunpack.c.h.b16 %v45
  %v592 = vunpack.c.l.b16 %v46
  %v593 = vunpack.c.h.b16 %v46
  %v594 = vunpack.c.l.b16 %v47
  %v595 = vunpack.c.h.b16 %v47
  %v596 = vunpack.c.l.b16 %v48
  %v597 = vunpack.c.h.b16 %v48
  %v598 = vunpack.c.l.b16 %v49
  %v599 = vunpack.c.h.b16 %v49
  %v600 = vunpack.c.l.b16 %v50
  %v601 = vunpack.c.h.b16 %v50
  %v602 = vunpack.c.l.b16 %v51
  %v603 = vunpack.c.h.b16 %v51
  %v604 = vunpack.c.l.b16 %v52
  %v605 = vunpack.c.h.b16 %v52
  %v606 = vunpack.c.l.b16 %v53
  %v607 = vunpack.c.h.b16 %v53
  %v608 = vunpack.c.l.b16 %v54
  %v609 = vunpack.c.h.b16 %v54
  %v610 = vunpack.c.l.b16 %v55
  %v611 = vunpack.c.h.b16 %v55
  %v612 = vunpack.c.l.b16 %v56
  %v613 = vunpack.c.h.b16 %v56
  %v614 = vunpack.c.l.b16 %v57
  %v615 = vunpack.c.h.b16 %v57
  %v616 = vunpack.c.l.b16 %v58
  %v617 = vunpack.c.h.b16 %v58
  %v618 = vunpack.c.l.b16 %v59
  %v619 = vunpack.c.h.b16 %v59
  %v620 = vunpack.c.l.b16 %v60
  %v621 = vunpack.c.h.b16 %v60
  %v622 = vunpack.c.l.b16 %v61
  %v623 = vunpack.c.h.b16 %v61
  %v624 = vunpack.c.l.b16 %v62
  %v625 = vunpack.c.h.b16 %v62
  %v626 = vunpack.c.l.b16 %v63
  %v627 = vunpack.c.h.b16 %v63
  %v628 = vunpack.c.l.b16 %v64
  %v629 = vunpack.c.h.b16 %v64
  %v630 = vunpack.c.l.b16 %v65
  %v631 = vunpack.c.h.b16 %v65
  %v632 = vunpack.c.l.b16 %v66
  %v633 = vunpack.c.h.b16 %v66
  %v634 = vunpack.c.l.b16 %v67
  %v635 = vunpack.c.h.b16 %v67
  %v636 = vunpack.c.l.b16 %v68
  %v637 = vunpack.c.h.b16 %v68
  %v638 = vunpack.c.l.b16 %v69
  %v639 = vunpack.c.h.b16 %v69
  %v640 = vunpack.c.l.b16 %v70
  %v641 = vunpack.c.h.b16 %v70
  %v642 = vunpack.c.l.b16 %v71
  %v643 = vunpack.c.h.b16 %v71
  %v644 = vunpack.c.l.b16 %v72
  %v645 = vunpack.c.h.b16 %v72
  %v646 = vunpack.c.l.b16 %v73
  %v647 = vunpack.c.h.b16 %v73
  %v648 = vunpack.c.l.b16 %v74
  %v649 = vunpack.c.h.b16 %v74
  %v650 = vunpack.c.l.b16 %v75
  %v651 = vunpack.c.h.b16 %v75
  %v652 = vunpack.c.l.b16 %v76
  %v653 = vunpack.c.h.b16 %v76
  %v654 = vunpack.c.l.b16 %v77
  %v655 = vunpack.c.h.b16 %v77
  %v656 = vunpack.c.l.b16 %v78
  %v657 = vunpack.c.h.b16 %v78
  %v658 = vunpack.c.l.b16 %v79
  %v659 = vunpack.c.h.b16 %v79
  %v660 = vunpack.c.l.b16 %v80
  %v661 = vunpack.c.h.b16 %v80
  %v662 = vunpack.c.l.b16 %v81
  %v663 = vunpack.c.h.b16 %v81
  %v664 = vunpack.c.l.b16 %v82
  %v665 = vunpack.c.h.b16 %v82
  %v666 = vunpack.c.l.b16 %v83
  %v667 = vunpack.c.h.b16 %v83
  %v668 = vunpack.c.l.b16 %v84
  %v669 = vunpack.c.h.b16 %v84
  %v670 = vunpack.c.l.b16 %v85
  %v671 = vunpack.c.h.b16 %v85
  %v672 = vunpack.c.l.b16 %v86
  %v673 = vunpack.c.h.b16 %v86
  %v674 = vunpack.c.l.b16 %v87
  %v675 = vunpack.c.h.b16 %v87
  %v676 = vunpack.c.l.b16 %v88
  %v677 = vunpack.c.h.b16 %v88
  %v678 = vunpack.c.l.b16 %v89
  %v679 = vunpack.c.h.b16 %v89
  %v680 = vunpack.c.l.b16 %v90
  %v681 = vunpack.c.h.b16 %v90
  %v682 = vunpack.c.l.b16 %v91
  %v683 = vunpack.c.h.b16 %v91
  %v684 = vunpack.c.l.b16 %v92
  %v685 = vunpack.c.h.b16 %v92
  %v686 = vunpack.c.l.b16 %v93
  %v687 = vunpack.c.h.b16 %v93
  %v688 = vunpack.c.l.b16 %v94
  %v689 = vunpack.c.h.b16 %v94
  %v690 = vunpack.c.l.b16 %v95
  %v691 = vunpack.c.h.b16 %v95
  %v692 = vunpack.c.l.b16 %v96
  %v693 = vunpack.c.h.b16 %v96
  %v694 = vunpack.c.l.b16 %v97
  %v695 = vunpack.c.h.b16 %v97
  %v696 = vunpack.c.l.b16 %v98
  %v697 = vunpack.c.h.b16 %v98
  %v698 = vunpack.c.l.b16 %v99
  %v699 = vunpack.c.h.b16 %v99
  %v700 = vunpack.c.l.b16 %v100
  %v701 = vunpack.c.h.b16 %v100
  %v702 = vunpack.c.l.b16 %v101
  %v703 = vunpack.c.h.b16 %v101
  %v704 = vunpack.c.l.b16 %v102
  %v705 = vunpack.c.h.b16 %v102
  %v706 = vunpack.c.l.b16 %v103
  %v707 = vunpack.c.h.b16 %v103
  %v708 = vunpack.c.l.b16 %v104
  %v709 = vunpack.c.h.b16 %v104
  %v710 = vunpack.c.l.b16 %v105
  %v711 = vunpack.c.h.b16 %v105
  %v712 = vunpack.c.l.b16 %v106
  %v713 = vunpack.c.h.b16 %v106
  %v714 = vunpack.c.l.b16 %v107
  %v715 = vunpack.c.h.b16 %v107
  %v716 = vunpack.c.l.b16 %v108
  %v717 = vunpack.c.h.b16 %v108
  %v718 = vunpack.c.l.b16 %v109
  %v719 = vunpack.c.h.b16 %v109
  %v720 = vunpack.c.l.b16 %v110
  %v721 = vunpack.c.h.b16 %v110
  %v722 = vunpack.c.l.b16 %v111
  %v723 = vunpack.c.h.b16 %v111
  %v724 = vunpack.c.l.b16 %v112
  %v725 = vunpack.c.h.b16 %v112
  %v726 = vunpack.c.l.b16 %v113
  %v727 = vunpack.c.h.b16 %v113
  %v728 = vunpack.c.l.b16 %v114
  %v729 = vunpack.c.h.b16 %v114
  %v730 = vunpack.c.l.b16 %v115
  %v731 = vunpack.c.h.b16 %v115
  %v732 = vunpack.c.l.b16 %v116
  %v733 = vunpack.c.h.b16 %v116
  %v734 = vunpack.c.l.b16 %v117
  %v735 = vunpack.c.h.b16 %v117
  %v736 = vunpack.c.l.b16 %v118
  %v737 = vunpack.c.h.b16 %v118
  %v738 = vunpack.c.l.b16 %v119
  %v739 = vunpack.c.h.b16 %v119
  %v740 = vunpack.c.l.b16 %v120
  %v741 = vunpack.c.h.b16 %v120
  %v742 = vunpack.c.l.b16 %v121
  %v743 = vunpack.c.h.b16 %v121
  %v744 = vunpack.c.l.b16 %v122
  %v745 = vunpack.c.h.b16 %v122
  %v746 = vunpack.c.l.b16 %v123
  %v747 = vunpack.c.h.b16 %v123
  %v748 = vunpack.c.l.b16 %v124
  %v749 = vunpack.c.h.b16 %v124
  %v750 = vunpack.c.l.b16 %v125
  %v751 = vunpack.c.h.b16 %v125
  %v752 = vunpack.c.l.b16 %v126
  %v753 = vunpack.c.h.b16 %v126
  %v754 = vunpack.c.l.b16 %v127
  %v755 = vunpack.c.h.b16 %v127
  %v756 = vunpack.c.l.b16 %v128
  %v757 = vunpack.c.h.b16 %v128
  %v758 = vunpack.c.l.b16 %v129
  %v759 = vunpack.c.h.b16 %v129
  %v760 = vunpack.c.l.b16 %v130
  %v761 = vunpack.c.h.b16 %v130
  %v762 = vunpack.c.l.b16 %v131
  %v763 = vunpack.c.h.b16 %v131
  %v764 = vunpack.c.l.b16 %v132
  %v765 = vunpack.c.h.b16 %v132
  %v766 = vunpack.c.l.b16 %v133
  %v767 = vunpack.c.h.b16 %v133
  %v768 = vunpack.c.l.b16 %v134
  %v769 = vunpack.c.h.b16 %v134
  %v770 = vunpack.c.l.b16 %v135
  %v771 = vunpack.c.h.b16 %v135
  %v772 = vunpack.c.l.b16 %v136
  %v773 = vunpack.c.h.b16 %v136
  %v774 = vunpack.c.l.b16 %v137
  %v775 = vunpack.c.h.b16 %v137
  %v776 = vunpack.c.l.b16 %v138
  %v777 = vunpack.c.h.b16 %v138
  %v778 = vunpack.c.l.b16 %v139
  %v779 = vunpack.c.h.b16 %v139
  %v780 = vunpack.c.l.b16 %v140
  %v781 = vunpack.c.h.b16 %v140
  %v782 = vunpack.c.l.b16 %v141
  %v783 = vunpack.c.h.b16 %v141
  %v784 = vunpack.c.l.b16 %v142
  %v785 = vunpack.c.h.b16 %v142
  %v786 = vunpack.c.l.b16 %v143
  %v787 = vunpack.c.h.b16 %v143
  %v788 = vunpack.c.l.b16 %v144
  %v789 = vunpack.c.h.b16 %v144
  %v790 = vunpack.c.l.b16 %v145
  %v791 = vunpack.c.h.b16 %v145
  %v792 = vunpack.c.l.b16 %v146
  %v793 = vunpack.c.h.b16 %v146
  %v794 = vunpack.c.l.b16 %v147
  %v795 = vunpack.c.h.b16 %v147
  %v796 = vunpack.c.l.b16 %v148
  %v797 = vunpack.c.h.b16 %v148
  %v798 = vunpack.c.l.b16 %v149
  %v799 = vunpack.c.h.b16 %v149
  %v800 = vunpack.c.l.b16 %v150
  %v801 = vunpack.c.h.b16 %v150
  %v802 = vunpack.c.l.b16 %v151
  %v803 = vunpack.c.h.b16 %v151
  %v804 = vunpack.c.l.b16 %v152
  %v805 = vunpack.c.h.b16 %v152
  %v806 = vunpack.c.l.b16 %v153
  %v807 = vunpack.c.h.b16 %v153
  %v808 = vunpack.c.l.b16 %v154
  %v809 = vunpack.c.h.b16 %v154
  %v810 = vunpack.c.l.b16 %v155
  %v811 = vunpack.c.h.b16 %v155
  %v812 = vunpack.c.l.b16 %v156
  %v813 = vunpack.c.h.b16 %v156
  %v814 = vunpack.c.l.b16 %v157
  %v815 = vunpack.c.h.b16 %v157
  %v816 = vunpack.c.l.b16 %v158
  %v817 = vunpack.c.h.b16 %v158
  %v818 = vunpack.c.l.b16 %v159
  %v819 = vunpack.c.h.b16 %v159
  %v820 = vunpack.c.l.b16 %v160
  %v821 = vunpack.c.h.b16 %v160
  %v822 = vunpack.c.l.b16 %v161
  %v823 = vunpack.c.h.b16 %v161
  %v824 = vunpack.c.l.b16 %v162
  %v825 = vunpack.c.h.b16 %v162
  %v826 = vunpack.c.l.b16 %v163
  %v827 = vunpack.c.h.b16 %v163
  %v828 = vpack.c.b16 %v574, %v572
  %v829 = vpack.c.b16 %v575, %v573
  %v830 = vpack.c.b16 %v578, %v576
  %v831 = vpack.c.b16 %v579, %v577
  %v832 = vpack.c.b16 %v582, %v580
  %v833 = vpack.c.b16 %v583, %v581
  %v834 = vpack.c.b16 %v586, %v584
  %v835 = vpack.c.b16 %v587, %v585
  %v836 = vpack.c.b16 %v590, %v588
  %v837 = vpack.c.b16 %v591, %v589
  %v838 = vpack.c.b16 %v594, %v592
  %v839 = vpack.c.b16 %v595, %v593
  %v840 = vpack.c.b16 %v598, %v596
  %v841 = vpack.c.b16 %v599, %v597
  %v842 = vpack.c.b16 %v602, %v600
  %v843 = vpack.c.b16 %v603, %v601
  %v844 = vpack.c.b16 %v606, %v604
  %v845 = vpack.c.b16 %v607, %v605
  %v846 = vpack.c.b16 %v610, %v608
  %v847 = vpack.c.b16 %v611, %v609
  %v848 = vpack.c.b16 %v614, %v612
  %v849 = vpack.c.b16 %v615, %v613
  %v850 = vpack.c.b16 %v618, %v616
  %v851 = vpack.c.b16 %v619, %v617
  %v852 = vpack.c.b16 %v622, %v620
  %v853 = vpack.c.b16 %v623, %v621
  %v854 = vpack.c.b16 %v626, %v624
  %v855 = vpack.c.b16 %v627, %v625
  %v856 = vpack.c.b16 %v630, %v628
  %v857 = vpack.c.b16 %v631, %v629
  %v858 = vpack.c.b16 %v634, %v632
  %v859 = vpack.c.b16 %v635, %v633
  %v860 = vpack.c.b16 %v638, %v636
  %v861 = vpack.c.b16 %v639, %v637
  %v862 = vpack.c.b16 %v642, %v640
  %v863 = vpack.c.b16 %v643, %v641
  %v864 = vpack.c.b16 %v646, %v644
  %v865 = vpack.c.b16 %v647, %v645
  %v866 = vpack.c.b16 %v650, %v648
  %v867 = vpack.c.b16 %v651, %v649
  %v868 = vpack.c.b16 %v654, %v652
  %v869 = vpack.c.b16 %v655, %v653
  %v870 = vpack.c.b16 %v658, %v656
  %v871 = vpack.c.b16 %v659, %v657
  %v872 = vpack.c.b16 %v662, %v660
  %v873 = vpack.c.b16 %v663, %v661
  %v874 = vpack.c.b16 %v666, %v664
  %v875 = vpack.c.b16 %v667, %v665
  %v876 = vpack.c.b16 %v670, %v668
  %v877 = vpack.c.b16 %v671, %v669
  %v878 = vpack.c.b16 %v674, %v672
  %v879 = vpack.c.b16 %v675, %v673
  %v880 = vpack.c.b16 %v678, %v676
  %v881 = vpack.c.b16 %v679, %v677
  %v882 = vpack.c.b16 %v682, %v680
  %v883 = vpack.c.b16 %v683, %v681
  %v884 = vpack.c.b16 %v686, %v684
  %v885 = vpack.c.b16 %v687, %v685
  %v886 = vpack.c.b16 %v690, %v688
  %v887 = vpack.c.b16 %v691, %v689
  %v888 = vpack.c.b16 %v694, %v692
  %v889 = vpack.c.b16 %v695, %v693
  %v890 = vpack.c.b16 %v698, %v696
  %v891 = vpack.c.b16 %v699, %v697
  %v892 = vpack.c.b16 %v702, %v700
  %v893 = vpack.c.b16 %v703, %v701
  %v894 = vpack.c.b16 %v706, %v704
  %v895 = vpack.c.b16 %v707, %v705
  %v896 = vpack.c.b16 %v710, %v708
  %v897 = vpack.c.b16 %v711, %v709
  %v898 = vpack.c.b16 %v714, %v712
  %v899 = vpack.c.b16 %v715, %v713
  %v900 = vpack.c.b16 %v718, %v716
  %v901 = vpack.c.b16 %v719, %v717
  %v902 = vpack.c.b16 %v722, %v720
  %v903 = vpack.c.b16 %v723, %v721
  %v904 = vpack.c.b16 %v726, %v724
  %v905 = vpack.c.b16 %v727, %v725
  %v906 = vpack.c.b16 %v730, %v728
  %v907 = vpack.c.b16 %v731, %v729
  %v908 = vpack.c.b16 %v734, %v732
  %v909 = vpack.c.b16 %v735, %v733
  %v910 = vpack.c.b16 %v738, %v736
  %v911 = vpack.c.b16 %v739, %v737
  %v912 = vpack.c.b16 %v742, %v740
  %v913 = vpack.c.b16 %v743, %v741
  %v914 = vpack.c.b16 %v746, %v744
  %v915 = vpack.c.b16 %v747, %v745
  %v916 = vpack.c.b16 %v750, %v748
  %v917 = vpack.c.b16 %v751, %v749
  %v918 = vpack.c.b16 %v754, %v752
  %v919 = vpack.c.b16 %v755, %v753
  %v920 = vpack.c.b16 %v758, %v756
  %v921 = vpack.c.b16 %v759, %v757
  %v922 = vpack.c.b16 %v762, %v760
  %v923 = vpack.c.b16 %v763, %v761
  %v924 = vpack.c.b16 %v766, %v764
  %v925 = vpack.c.b16 %v767, %v765
  %v926 = vpack.c.b16 %v770, %v768
  %v927 = vpack.c.b16 %v771, %v769
  %v928 = vpack.c.b16 %v774, %v772
  %v929 = vpack.c.b16 %v775, %v773
  %v930 = vpack.c.b16 %v778, %v776
  %v931 = vpack.c.b16 %v779, %v777
  %v932 = vpack.c.b16 %v782, %v780
  %v933 = vpack.c.b16 %v783, %v781
  %v934 = vpack.c.b16 %v786, %v784
  %v935 = vpack.c.b16 %v787, %v785
  %v936 = vpack.c.b16 %v790, %v788
  %v937 = vpack.c.b16 %v791, %v789
  %v938 = vpack.c.b16 %v794, %v792
  %v939 = vpack.c.b16 %v795, %v793
  %v940 = vpack.c.b16 %v798, %v796
  %v941 = vpack.c.b16 %v799, %v797
  %v942 = vpack.c.b16 %v802, %v800
  %v943 = vpack.c.b16 %v803, %v801
  %v944 = vpack.c.b16 %v806, %v804
  %v945 = vpack.c.b16 %v807, %v805
  %v946 = vpack.c.b16 %v810, %v808
  %v947 = vpack.c.b16 %v811, %v809
  %v948 = vpack.c.b16 %v814, %v812
  %v949 = vpack.c.b16 %v815, %v813
  %v950 = vpack.c.b16 %v818, %v816
  %v951 = vpack.c.b16 %v819, %v817
  %v952 = vpack.c.b16 %v822, %v820
  %v953 = vpack.c.b16 %v823, %v821
  %v954 = vpack.c.b16 %v826, %v824
  %v955 = vpack.c.b16 %v827, %v825
  %1084 = vmatpush.bf16.msra.mxu0 %v842
  %1085 = vmatpush.bf16.msra.mxu0 %v840
  %1086 = vmatpush.bf16.msra.mxu0 %v838
  %1087 = vmatpush.bf16.msra.mxu0 %v836
  %1088 = vmatpush.bf16.msra.mxu0 %v834
  %1089 = vmatpush.bf16.msra.mxu0 %v832
  %1090 = vmatpush.bf16.msra.mxu0 %v830
  %1091 = vmatpush.bf16.msra.mxu0 %v828
  %1092 = vmatmul.bf16.gmra.mxu0 %v428
  %v1093 = vpop.f32.mrf.mxu0
  %v1094 = vadd.f32 %v387, %v1093
  %v1095 = vpop.f32.mrf.mxu0
  %1096 = vdwg.mxu0
  %1097 = vmatpush.bf16.msra.mxu0 %v858
  %1098 = vmatpush.bf16.msra.mxu0 %v856
  %1099 = vmatpush.bf16.msra.mxu0 %v854
  %1100 = vmatpush.bf16.msra.mxu0 %v852
  %1101 = vmatpush.bf16.msra.mxu0 %v850
  %1102 = vmatpush.bf16.msra.mxu0 %v848
  %1103 = vmatpush.bf16.msra.mxu0 %v846
  %1104 = vmatpush.bf16.msra.mxu0 %v844
  %1105 = vmatmul.bf16.gmra.mxu0 %v429
  %v1106 = vpop.f32.mrf.mxu0
  %v1107 = vadd.f32 %v1094, %v1106
  %v1108 = vpop.f32.mrf.mxu0
  %1109 = vdwg.mxu0
  %1110 = vmatpush.bf16.msra.mxu0 %v874
  %1111 = vmatpush.bf16.msra.mxu0 %v872
  %1112 = vmatpush.bf16.msra.mxu0 %v870
  %1113 = vmatpush.bf16.msra.mxu0 %v868
  %1114 = vmatpush.bf16.msra.mxu0 %v866
  %1115 = vmatpush.bf16.msra.mxu0 %v864
  %1116 = vmatpush.bf16.msra.mxu0 %v862
  %1117 = vmatpush.bf16.msra.mxu0 %v860
  %1118 = vmatmul.bf16.gmra.mxu0 %v430
  %v1119 = vpop.f32.mrf.mxu0
  %v1120 = vadd.f32 %v1107, %v1119
  %v1121 = vpop.f32.mrf.mxu0
  %1122 = vdwg.mxu0
  %1123 = vmatpush.bf16.msra.mxu0 %v890
  %1124 = vmatpush.bf16.msra.mxu0 %v888
  %1125 = vmatpush.bf16.msra.mxu0 %v886
  %1126 = vmatpush.bf16.msra.mxu0 %v884
  %1127 = vmatpush.bf16.msra.mxu0 %v882
  %1128 = vmatpush.bf16.msra.mxu0 %v880
  %1129 = vmatpush.bf16.msra.mxu0 %v878
  %1130 = vmatpush.bf16.msra.mxu0 %v876
  %1131 = vmatmul.bf16.gmra.mxu0 %v431
  %v1132 = vpop.f32.mrf.mxu0
  %v1133 = vadd.f32 %v1120, %v1132
  %v1134 = vpop.f32.mrf.mxu0
  %1135 = vdwg.mxu0
  %1136 = vmatpush.bf16.msra.mxu0 %v906
  %1137 = vmatpush.bf16.msra.mxu0 %v904
  %1138 = vmatpush.bf16.msra.mxu0 %v902
  %1139 = vmatpush.bf16.msra.mxu0 %v900
  %1140 = vmatpush.bf16.msra.mxu0 %v898
  %1141 = vmatpush.bf16.msra.mxu0 %v896
  %1142 = vmatpush.bf16.msra.mxu0 %v894
  %1143 = vmatpush.bf16.msra.mxu0 %v892
  %1144 = vmatmul.bf16.gmra.mxu0 %v432
  %v1145 = vpop.f32.mrf.mxu0
  %v1146 = vadd.f32 %v1133, %v1145
  %v1147 = vpop.f32.mrf.mxu0
  %1148 = vdwg.mxu0
  %1149 = vmatpush.bf16.msra.mxu0 %v922
  %1150 = vmatpush.bf16.msra.mxu0 %v920
  %1151 = vmatpush.bf16.msra.mxu0 %v918
  %1152 = vmatpush.bf16.msra.mxu0 %v916
  %1153 = vmatpush.bf16.msra.mxu0 %v914
  %1154 = vmatpush.bf16.msra.mxu0 %v912
  %1155 = vmatpush.bf16.msra.mxu0 %v910
  %1156 = vmatpush.bf16.msra.mxu0 %v908
  %1157 = vmatmul.bf16.gmra.mxu0 %v433
  %v1158 = vpop.f32.mrf.mxu0
  %v1159 = vadd.f32 %v1146, %v1158
  %v1160 = vpop.f32.mrf.mxu0
  %1161 = vdwg.mxu0
  %1162 = vmatpush.bf16.msra.mxu0 %v938
  %1163 = vmatpush.bf16.msra.mxu0 %v936
  %1164 = vmatpush.bf16.msra.mxu0 %v934
  %1165 = vmatpush.bf16.msra.mxu0 %v932
  %1166 = vmatpush.bf16.msra.mxu0 %v930
  %1167 = vmatpush.bf16.msra.mxu0 %v928
  %1168 = vmatpush.bf16.msra.mxu0 %v926
  %1169 = vmatpush.bf16.msra.mxu0 %v924
  %1170 = vmatmul.bf16.gmra.mxu0 %v434
  %v1171 = vpop.f32.mrf.mxu0
  %v1172 = vadd.f32 %v1159, %v1171
  %v1173 = vpop.f32.mrf.mxu0
  %1174 = vdwg.mxu0
  %1175 = vmatpush.bf16.msra.mxu0 %v954
  %1176 = vmatpush.bf16.msra.mxu0 %v952
  %1177 = vmatpush.bf16.msra.mxu0 %v950
  %1178 = vmatpush.bf16.msra.mxu0 %v948
  %1179 = vmatpush.bf16.msra.mxu0 %v946
  %1180 = vmatpush.bf16.msra.mxu0 %v944
  %1181 = vmatpush.bf16.msra.mxu0 %v942
  %1182 = vmatpush.bf16.msra.mxu0 %v940
  %1183 = vmatmul.bf16.gmra.mxu0 %v435
  %v1184 = vpop.f32.mrf.mxu0
  %v1185 = vadd.f32 %v1172, %v1184
  %v1186 = vpop.f32.mrf.mxu0
  %1187 = vdwg.mxu0
  %1188 = vmatpush.bf16.msra.mxu0 %v843
  %1189 = vmatpush.bf16.msra.mxu0 %v841
  %1190 = vmatpush.bf16.msra.mxu0 %v839
  %1191 = vmatpush.bf16.msra.mxu0 %v837
  %1192 = vmatpush.bf16.msra.mxu0 %v835
  %1193 = vmatpush.bf16.msra.mxu0 %v833
  %1194 = vmatpush.bf16.msra.mxu0 %v831
  %1195 = vmatpush.bf16.msra.mxu0 %v829
  %1196 = vmatmul.bf16.gmra.mxu0 %v428
  %v1197 = vpop.f32.mrf.mxu0
  %v1198 = vadd.f32 %v413, %v1197
  %v1199 = vpop.f32.mrf.mxu0
  %1200 = vdwg.mxu0
  %1201 = vmatpush.bf16.msra.mxu0 %v859
  %1202 = vmatpush.bf16.msra.mxu0 %v857
  %1203 = vmatpush.bf16.msra.mxu0 %v855
  %1204 = vmatpush.bf16.msra.mxu0 %v853
  %1205 = vmatpush.bf16.msra.mxu0 %v851
  %1206 = vmatpush.bf16.msra.mxu0 %v849
  %1207 = vmatpush.bf16.msra.mxu0 %v847
  %1208 = vmatpush.bf16.msra.mxu0 %v845
  %1209 = vmatmul.bf16.gmra.mxu0 %v429
  %v1210 = vpop.f32.mrf.mxu0
  %v1211 = vadd.f32 %v1198, %v1210
  %v1212 = vpop.f32.mrf.mxu0
  %1213 = vdwg.mxu0
  %1214 = vmatpush.bf16.msra.mxu0 %v875
  %1215 = vmatpush.bf16.msra.mxu0 %v873
  %1216 = vmatpush.bf16.msra.mxu0 %v871
  %1217 = vmatpush.bf16.msra.mxu0 %v869
  %1218 = vmatpush.bf16.msra.mxu0 %v867
  %1219 = vmatpush.bf16.msra.mxu0 %v865
  %1220 = vmatpush.bf16.msra.mxu0 %v863
  %1221 = vmatpush.bf16.msra.mxu0 %v861
  %1222 = vmatmul.bf16.gmra.mxu0 %v430
  %v1223 = vpop.f32.mrf.mxu0
  %v1224 = vadd.f32 %v1211, %v1223
  %v1225 = vpop.f32.mrf.mxu0
  %1226 = vdwg.mxu0
  %1227 = vmatpush.bf16.msra.mxu0 %v891
  %1228 = vmatpush.bf16.msra.mxu0 %v889
  %1229 = vmatpush.bf16.msra.mxu0 %v887
  %1230 = vmatpush.bf16.msra.mxu0 %v885
  %1231 = vmatpush.bf16.msra.mxu0 %v883
  %1232 = vmatpush.bf16.msra.mxu0 %v881
  %1233 = vmatpush.bf16.msra.mxu0 %v879
  %1234 = vmatpush.bf16.msra.mxu0 %v877
  %1235 = vmatmul.bf16.gmra.mxu0 %v431
  %v1236 = vpop.f32.mrf.mxu0
  %v1237 = vadd.f32 %v1224, %v1236
  %v1238 = vpop.f32.mrf.mxu0
  %1239 = vdwg.mxu0
  %1240 = vmatpush.bf16.msra.mxu0 %v907
  %1241 = vmatpush.bf16.msra.mxu0 %v905
  %1242 = vmatpush.bf16.msra.mxu0 %v903
  %1243 = vmatpush.bf16.msra.mxu0 %v901
  %1244 = vmatpush.bf16.msra.mxu0 %v899
  %1245 = vmatpush.bf16.msra.mxu0 %v897
  %1246 = vmatpush.bf16.msra.mxu0 %v895
  %1247 = vmatpush.bf16.msra.mxu0 %v893
  %1248 = vmatmul.bf16.gmra.mxu0 %v432
  %v1249 = vpop.f32.mrf.mxu0
  %v1250 = vadd.f32 %v1237, %v1249
  %v1251 = vpop.f32.mrf.mxu0
  %1252 = vdwg.mxu0
  %1253 = vmatpush.bf16.msra.mxu0 %v923
  %1254 = vmatpush.bf16.msra.mxu0 %v921
  %1255 = vmatpush.bf16.msra.mxu0 %v919
  %1256 = vmatpush.bf16.msra.mxu0 %v917
  %1257 = vmatpush.bf16.msra.mxu0 %v915
  %1258 = vmatpush.bf16.msra.mxu0 %v913
  %1259 = vmatpush.bf16.msra.mxu0 %v911
  %1260 = vmatpush.bf16.msra.mxu0 %v909
  %1261 = vmatmul.bf16.gmra.mxu0 %v433
  %v1262 = vpop.f32.mrf.mxu0
  %v1263 = vadd.f32 %v1250, %v1262
  %v1264 = vpop.f32.mrf.mxu0
  %1265 = vdwg.mxu0
  %1266 = vmatpush.bf16.msra.mxu0 %v939
  %1267 = vmatpush.bf16.msra.mxu0 %v937
  %1268 = vmatpush.bf16.msra.mxu0 %v935
  %1269 = vmatpush.bf16.msra.mxu0 %v933
  %1270 = vmatpush.bf16.msra.mxu0 %v931
  %1271 = vmatpush.bf16.msra.mxu0 %v929
  %1272 = vmatpush.bf16.msra.mxu0 %v927
  %1273 = vmatpush.bf16.msra.mxu0 %v925
  %1274 = vmatmul.bf16.gmra.mxu0 %v434
  %v1275 = vpop.f32.mrf.mxu0
  %v1276 = vadd.f32 %v1263, %v1275
  %v1277 = vpop.f32.mrf.mxu0
  %1278 = vdwg.mxu0
  %1279 = vmatpush.bf16.msra.mxu0 %v955
  %1280 = vmatpush.bf16.msra.mxu0 %v953
  %1281 = vmatpush.bf16.msra.mxu0 %v951
  %1282 = vmatpush.bf16.msra.mxu0 %v949
  %1283 = vmatpush.bf16.msra.mxu0 %v947
  %1284 = vmatpush.bf16.msra.mxu0 %v945
  %1285 = vmatpush.bf16.msra.mxu0 %v943
  %1286 = vmatpush.bf16.msra.mxu0 %v941
  %1287 = vmatmul.bf16.gmra.mxu0 %v435
  %v1288 = vpop.f32.mrf.mxu0
  %v1289 = vadd.f32 %v1276, %v1288
  %v1290 = vpop.f32.mrf.mxu0
  %1291 = vdwg.mxu0
  %v1292 = vld [vmem:[%s4] sm:$0x3]
  %v1294 = vperm.slane %v1292, 0
  %v1295 = vperm.slane %v1292, 1
  %v1298 = vadd.f32 %v1185, %v1294
  %v1299 = vadd.f32 %v1289, %v1295
  %v1300 = vpack.c.bf16 %v1299, %v1298
  %v1301 = vunpack.c.l.bf16 %v1300
  %v1302 = vunpack.c.h.bf16 %v1300
  %v1303 = vmax.f32 %v1301, 0.0
  %v1304 = vmax.f32 %v1302, 0.0
  %v1305 = vpack.c.bf16 %v1303, %v1303
  %v1306 = vpack.c.bf16 %v1304, %v1304
  %v1307 = vld [vmem:[%s5] sm:$0xff]
  %v1308 = vld [vmem:[%s5 + $0x8] sm:$0xff]
  %v1309 = vld [vmem:[%s5 + $0x10] sm:$0xff]
  %v1310 = vld [vmem:[%s5 + $0x18] sm:$0xff]
  %v1311 = vld [vmem:[%s5 + $0x20] sm:$0xff]
  %v1312 = vld [vmem:[%s5 + $0x28] sm:$0xff]
  %v1313 = vld [vmem:[%s5 + $0x30] sm:$0xff]
  %v1314 = vld [vmem:[%s5 + $0x38] sm:$0xff]
  %v1315 = vld [vmem:[%s5 + $0x40] sm:$0xff]
  %v1316 = vld [vmem:[%s5 + $0x48] sm:$0xff]
  %v1317 = vld [vmem:[%s5 + $0x50] sm:$0xff]
  %v1318 = vld [vmem:[%s5 + $0x58] sm:$0xff]
  %v1319 = vld [vmem:[%s5 + $0x60] sm:$0xff]
  %v1320 = vld [vmem:[%s5 + $0x68] sm:$0xff]
  %v1321 = vld [vmem:[%s5 + $0x70] sm:$0xff]
  %v1322 = vld [vmem:[%s5 + $0x78] sm:$0xff]
  %v1323 = vld [vmem:[%s5 + $0x80] sm:$0xff]
  %v1324 = vld [vmem:[%s5 + $0x88] sm:$0xff]
  %v1325 = vld [vmem:[%s5 + $0x90] sm:$0xff]
  %v1326 = vld [vmem:[%s5 + $0x98] sm:$0xff]
  %v1327 = vld [vmem:[%s5 + $0xa0] sm:$0xff]
  %v1328 = vld [vmem:[%s5 + $0xa8] sm:$0xff]
  %v1329 = vld [vmem:[%s5 + $0xb0] sm:$0xff]
  %v1330 = vld [vmem:[%s5 + $0xb8] sm:$0xff]
  %v1331 = vld [vmem:[%s5 + $0xc0] sm:$0xff]
  %v1332 = vld [vmem:[%s5 + $0xc8] sm:$0xff]
  %v1333 = vld [vmem:[%s5 + $0xd0] sm:$0xff]
  %v1334 = vld [vmem:[%s5 + $0xd8] sm:$0xff]
  %v1335 = vld [vmem:[%s5 + $0xe0] sm:$0xff]
  %v1336 = vld [vmem:[%s5 + $0xe8] sm:$0xff]
  %v1337 = vld [vmem:[%s5 + $0xf0] sm:$0xff]
  %v1338 = vld [vmem:[%s5 + $0xf8] sm:$0xff]
  %v1339 = vld [vmem:[%s6] sm:$0x3]
  %v1341 = vperm.slane %v1339, 0
  %v1342 = vperm.slane %v1339, 1
  %v1377 = vunpack.c.l.b16 %v1307
  %v1378 = vunpack.c.h.b16 %v1307
  %v1379 = vunpack.c.l.b16 %v1308
  %v1380 = vunpack.c.h.b16 %v1308
  %v1381 = vunpack.c.l.b16 %v1309
  %v1382 = vunpack.c.h.b16 %v1309
  %v1383 = vunpack.c.l.b16 %v1310
  %v1384 = vunpack.c.h.b16 %v1310
  %v1385 = vunpack.c.l.b16 %v1311
  %v1386 = vunpack.c.h.b16 %v1311
  %v1387 = vunpack.c.l.b16 %v1312
  %v1388 = vunpack.c.h.b16 %v1312
  %v1389 = vunpack.c.l.b16 %v1313
  %v1390 = vunpack.c.h.b16 %v1313
  %v1391 = vunpack.c.l.b16 %v1314
  %v1392 = vunpack.c.h.b16 %v1314
  %v1393 = vunpack.c.l.b16 %v1315
  %v1394 = vunpack.c.h.b16 %v1315
  %v1395 = vunpack.c.l.b16 %v1316
  %v1396 = vunpack.c.h.b16 %v1316
  %v1397 = vunpack.c.l.b16 %v1317
  %v1398 = vunpack.c.h.b16 %v1317
  %v1399 = vunpack.c.l.b16 %v1318
  %v1400 = vunpack.c.h.b16 %v1318
  %v1401 = vunpack.c.l.b16 %v1319
  %v1402 = vunpack.c.h.b16 %v1319
  %v1403 = vunpack.c.l.b16 %v1320
  %v1404 = vunpack.c.h.b16 %v1320
  %v1405 = vunpack.c.l.b16 %v1321
  %v1406 = vunpack.c.h.b16 %v1321
  %v1407 = vunpack.c.l.b16 %v1322
  %v1408 = vunpack.c.h.b16 %v1322
  %v1409 = vunpack.c.l.b16 %v1323
  %v1410 = vunpack.c.h.b16 %v1323
  %v1411 = vunpack.c.l.b16 %v1324
  %v1412 = vunpack.c.h.b16 %v1324
  %v1413 = vunpack.c.l.b16 %v1325
  %v1414 = vunpack.c.h.b16 %v1325
  %v1415 = vunpack.c.l.b16 %v1326
  %v1416 = vunpack.c.h.b16 %v1326
  %v1417 = vunpack.c.l.b16 %v1327
  %v1418 = vunpack.c.h.b16 %v1327
  %v1419 = vunpack.c.l.b16 %v1328
  %v1420 = vunpack.c.h.b16 %v1328
  %v1421 = vunpack.c.l.b16 %v1329
  %v1422 = vunpack.c.h.b16 %v1329
  %v1423 = vunpack.c.l.b16 %v1330
  %v1424 = vunpack.c.h.b16 %v1330
  %v1425 = vunpack.c.l.b16 %v1331
  %v1426 = vunpack.c.h.b16 %v1331
  %v1427 = vunpack.c.l.b16 %v1332
  %v1428 = vunpack.c.h.b16 %v1332
  %v1429 = vunpack.c.l.b16 %v1333
  %v1430 = vunpack.c.h.b16 %v1333
  %v1431 = vunpack.c.l.b16 %v1334
  %v1432 = vunpack.c.h.b16 %v1334
  %v1433 = vunpack.c.l.b16 %v1335
  %v1434 = vunpack.c.h.b16 %v1335
  %v1435 = vunpack.c.l.b16 %v1336
  %v1436 = vunpack.c.h.b16 %v1336
  %v1437 = vunpack.c.l.b16 %v1337
  %v1438 = vunpack.c.h.b16 %v1337
  %v1439 = vunpack.c.l.b16 %v1338
  %v1440 = vunpack.c.h.b16 %v1338
  %v1441 = vpack.c.b16 %v1379, %v1377
  %v1442 = vpack.c.b16 %v1380, %v1378
  %v1443 = vpack.c.b16 %v1383, %v1381
  %v1444 = vpack.c.b16 %v1384, %v1382
  %v1445 = vpack.c.b16 %v1387, %v1385
  %v1446 = vpack.c.b16 %v1388, %v1386
  %v1447 = vpack.c.b16 %v1391, %v1389
  %v1448 = vpack.c.b16 %v1392, %v1390
  %v1449 = vpack.c.b16 %v1395, %v1393
  %v1450 = vpack.c.b16 %v1396, %v1394
  %v1451 = vpack.c.b16 %v1399, %v1397
  %v1452 = vpack.c.b16 %v1400, %v1398
  %v1453 = vpack.c.b16 %v1403, %v1401
  %v1454 = vpack.c.b16 %v1404, %v1402
  %v1455 = vpack.c.b16 %v1407, %v1405
  %v1456 = vpack.c.b16 %v1408, %v1406
  %v1457 = vpack.c.b16 %v1411, %v1409
  %v1458 = vpack.c.b16 %v1412, %v1410
  %v1459 = vpack.c.b16 %v1415, %v1413
  %v1460 = vpack.c.b16 %v1416, %v1414
  %v1461 = vpack.c.b16 %v1419, %v1417
  %v1462 = vpack.c.b16 %v1420, %v1418
  %v1463 = vpack.c.b16 %v1423, %v1421
  %v1464 = vpack.c.b16 %v1424, %v1422
  %v1465 = vpack.c.b16 %v1427, %v1425
  %v1466 = vpack.c.b16 %v1428, %v1426
  %v1467 = vpack.c.b16 %v1431, %v1429
  %v1468 = vpack.c.b16 %v1432, %v1430
  %v1469 = vpack.c.b16 %v1435, %v1433
  %v1470 = vpack.c.b16 %v1436, %v1434
  %v1471 = vpack.c.b16 %v1439, %v1437
  %v1472 = vpack.c.b16 %v1440, %v1438
  %1505 = vmatpush.bf16.msra.mxu0 %v1455
  %1506 = vmatpush.bf16.msra.mxu0 %v1453
  %1507 = vmatpush.bf16.msra.mxu0 %v1451
  %1508 = vmatpush.bf16.msra.mxu0 %v1449
  %1509 = vmatpush.bf16.msra.mxu0 %v1447
  %1510 = vmatpush.bf16.msra.mxu0 %v1445
  %1511 = vmatpush.bf16.msra.mxu0 %v1443
  %1512 = vmatpush.bf16.msra.mxu0 %v1441
  %1513 = vmatmul.bf16.gmra.mxu0 %v1305
  %v1514 = vpop.f32.mrf.mxu0
  %v1515 = vadd.f32 %v1341, %v1514
  %v1516 = vpop.f32.mrf.mxu0
  %1517 = vdwg.mxu0
  %1518 = vmatpush.bf16.msra.mxu0 %v1471
  %1519 = vmatpush.bf16.msra.mxu0 %v1469
  %1520 = vmatpush.bf16.msra.mxu0 %v1467
  %1521 = vmatpush.bf16.msra.mxu0 %v1465
  %1522 = vmatpush.bf16.msra.mxu0 %v1463
  %1523 = vmatpush.bf16.msra.mxu0 %v1461
  %1524 = vmatpush.bf16.msra.mxu0 %v1459
  %1525 = vmatpush.bf16.msra.mxu0 %v1457
  %1526 = vmatmul.bf16.gmra.mxu0 %v1306
  %v1527 = vpop.f32.mrf.mxu0
  %v1528 = vadd.f32 %v1515, %v1527
  %v1529 = vpop.f32.mrf.mxu0
  %1530 = vdwg.mxu0
  %1531 = vmatpush.bf16.msra.mxu0 %v1456
  %1532 = vmatpush.bf16.msra.mxu0 %v1454
  %1533 = vmatpush.bf16.msra.mxu0 %v1452
  %1534 = vmatpush.bf16.msra.mxu0 %v1450
  %1535 = vmatpush.bf16.msra.mxu0 %v1448
  %1536 = vmatpush.bf16.msra.mxu0 %v1446
  %1537 = vmatpush.bf16.msra.mxu0 %v1444
  %1538 = vmatpush.bf16.msra.mxu0 %v1442
  %1539 = vmatmul.bf16.gmra.mxu0 %v1305
  %v1540 = vpop.f32.mrf.mxu0
  %v1541 = vadd.f32 %v1342, %v1540
  %v1542 = vpop.f32.mrf.mxu0
  %1543 = vdwg.mxu0
  %1544 = vmatpush.bf16.msra.mxu0 %v1472
  %1545 = vmatpush.bf16.msra.mxu0 %v1470
  %1546 = vmatpush.bf16.msra.mxu0 %v1468
  %1547 = vmatpush.bf16.msra.mxu0 %v1466
  %1548 = vmatpush.bf16.msra.mxu0 %v1464
  %1549 = vmatpush.bf16.msra.mxu0 %v1462
  %1550 = vmatpush.bf16.msra.mxu0 %v1460
  %1551 = vmatpush.bf16.msra.mxu0 %v1458
  %1552 = vmatmul.bf16.gmra.mxu0 %v1306
  %v1553 = vpop.f32.mrf.mxu0
  %v1554 = vadd.f32 %v1541, %v1553
  %v1555 = vpop.f32.mrf.mxu0
  %1556 = vdwg.mxu0
  %v1557 = vmax.f32 %v1528, 0.0
  %v1558 = vmax.f32 %v1554, 0.0
  %v1559 = vld [vmem:[%s7] sm:$0x3]
  %v1561 = vperm.slane %v1559, 0
  %v1562 = vperm.slane %v1559, 1
  %v1565 = vmul.f32 %v1557, %v1561
  %v1566 = vmul.f32 %v1558, %v1562
  %v1567 = vld [vmem:[%s8] sm:$0x3]
  %v1569 = vperm.slane %v1567, 0
  %v1570 = vperm.slane %v1567, 1
  %v1573 = vadd.f32 %v1565, %v1569
  %v1574 = vadd.f32 %v1566, %v1570
  %v1575 = vpack.c.bf16 %v1574, %v1573
  %1576 = vst [vmem:[%s9] sm:$0xff] %v1575
  // Predicated region
  $region38: #{_forward.10} parent=0 // pred_check
    _
  $region39: #{_forward.10} parent=0 // pred_check_branch
    %1578 = sbr.rel (0) target = $region41
  $region40: #{_forward.10} parent=0 // pred_region
    _
  $region41: #{_forward.10} parent=0 // pred_fallthru
    _
  // Predicated region
  $region42: #{_forward.10} parent=0 // pred_check
    _
  $region43: #{_forward.10} parent=0 // pred_check_branch
    %1580 = sbr.rel (0) target = $region45
  $region44: #{_forward.10} parent=0 // pred_region
    _
  $region45: #{_forward.10} parent=0 // pred_fallthru
    _

// kernel: neg.10
$region0: #{neg.10}
  #allocation0 [shape = 's32[1]{0}', space=sflag, size = 0x4, scoped, tag = 'scoped memory for neg.10']
  %s0 = inlined_call_operand.vmem [shape: f32[2,64,13], index: 0, kind: input, shape index: {}]
  %s1 = inlined_call_operand.vmem [shape: f32[2,64,13], index: 1, kind: output, shape index: {}]
  %v2 = vld [vmem:[%s0] sm:$0x3]
  %3 = xla_tuple %v2
  %4 = xla_tuple %3
  %v5 = vxor.u32 %v2, 2147483648
  %6 = xla_tuple %v5
  %7 = vst [vmem:[%s1] sm:$0x3] %v5
  %s8 = scalar_lea.vmem %s0, 2
  %v9 = vld [vmem:[%s8] sm:$0x3]
  %10 = xla_tuple %v9
  %11 = xla_tuple %10
  %v12 = vxor.u32 %v9, 2147483648
  %13 = xla_tuple %v12
  %s14 = scalar_lea.vmem %s1, 2
  %15 = vst [vmem:[%s14] sm:$0x3] %v12
  %s16 = scalar_lea.vmem %s0, 4
  %v17 = vld [vmem:[%s16] sm:$0x3]
  %18 = xla_tuple %v17
  %19 = xla_tuple %18
  %v20 = vxor.u32 %v17, 2147483648
  %21 = xla_tuple %v20
  %s22 = scalar_lea.vmem %s1, 4
  %23 = vst [vmem:[%s22] sm:$0x3] %v20
  %s24 = scalar_lea.vmem %s0, 6
  %v25 = vld [vmem:[%s24] sm:$0x3]
  %26 = xla_tuple %v25
  %27 = xla_tuple %26
  %v28 = vxor.u32 %v25, 2147483648
  %29 = xla_tuple %v28
  %s30 = scalar_lea.vmem %s1, 6
  %31 = vst [vmem:[%s30] sm:$0x3] %v28
  %s32 = scalar_lea.vmem %s0, 8
  %v33 = vld [vmem:[%s32] sm:$0x3]
  %34 = xla_tuple %v33
  %35 = xla_tuple %34
  %v36 = vxor.u32 %v33, 2147483648
  %37 = xla_tuple %v36
  %s38 = scalar_lea.vmem %s1, 8
  %39 = vst [vmem:[%s38] sm:$0x3] %v36
  %s40 = scalar_lea.vmem %s0, 10
  %v41 = vld [vmem:[%s40] sm:$0x3]
  %42 = xla_tuple %v41
  %43 = xla_tuple %42
  %v44 = vxor.u32 %v41, 2147483648
  %45 = xla_tuple %v44
  %s46 = scalar_lea.vmem %s1, 10
  %47 = vst [vmem:[%s46] sm:$0x3] %v44
  %s48 = scalar_lea.vmem %s0, 12
  %v49 = vld [vmem:[%s48] sm:$0x3]
  %50 = xla_tuple %v49
  %51 = xla_tuple %50
  %v52 = vxor.u32 %v49, 2147483648
  %53 = xla_tuple %v52
  %s54 = scalar_lea.vmem %s1, 12
  %55 = vst [vmem:[%s54] sm:$0x3] %v52
  %s56 = scalar_lea.vmem %s0, 14
  %v57 = vld [vmem:[%s56] sm:$0x3]
  %58 = xla_tuple %v57
  %59 = xla_tuple %58
  %v60 = vxor.u32 %v57, 2147483648
  %61 = xla_tuple %v60
  %s62 = scalar_lea.vmem %s1, 14
  %63 = vst [vmem:[%s62] sm:$0x3] %v60
  %s64 = scalar_lea.vmem %s0, 16
  %v65 = vld [vmem:[%s64] sm:$0x3]
  %66 = xla_tuple %v65
  %67 = xla_tuple %66
  %v68 = vxor.u32 %v65, 2147483648
  %69 = xla_tuple %v68
  %s70 = scalar_lea.vmem %s1, 16
  %71 = vst [vmem:[%s70] sm:$0x3] %v68
  %s72 = scalar_lea.vmem %s0, 18
  %v73 = vld [vmem:[%s72] sm:$0x3]
  %74 = xla_tuple %v73
  %75 = xla_tuple %74
  %v76 = vxor.u32 %v73, 2147483648
  %77 = xla_tuple %v76
  %s78 = scalar_lea.vmem %s1, 18
  %79 = vst [vmem:[%s78] sm:$0x3] %v76
  %s80 = scalar_lea.vmem %s0, 20
  %v81 = vld [vmem:[%s80] sm:$0x3]
  %82 = xla_tuple %v81
  %83 = xla_tuple %82
  %v84 = vxor.u32 %v81, 2147483648
  %85 = xla_tuple %v84
  %s86 = scalar_lea.vmem %s1, 20
  %87 = vst [vmem:[%s86] sm:$0x3] %v84
  %s88 = scalar_lea.vmem %s0, 22
  %v89 = vld [vmem:[%s88] sm:$0x3]
  %90 = xla_tuple %v89
  %91 = xla_tuple %90
  %v92 = vxor.u32 %v89, 2147483648
  %93 = xla_tuple %v92
  %s94 = scalar_lea.vmem %s1, 22
  %95 = vst [vmem:[%s94] sm:$0x3] %v92
  %s96 = scalar_lea.vmem %s0, 24
  %v97 = vld [vmem:[%s96] sm:$0x3]
  %98 = xla_tuple %v97
  %99 = xla_tuple %98
  %v100 = vxor.u32 %v97, 2147483648
  %101 = xla_tuple %v100
  %s102 = scalar_lea.vmem %s1, 24
  %103 = vst [vmem:[%s102] sm:$0x3] %v100

// kernel: _forward.11
$region0: #{_forward.11}
  #allocation0 [shape = 'u32[]', space=smem, size = 0x4, offset = 0x4, fixed_abs, tag = 'smem constant byte address 0x4 - core index']
  #allocation1 [shape = 'u32[72,128]{1,0:T(1,128)}', space=vmem, size = 0x9000, scoped, tag = 'internal scratch']
  %s0 = inlined_call_operand.vmem [shape: bf16[32,256], index: 0, kind: input, shape index: {}]
  %s1 = inlined_call_operand.vmem [shape: bf16[32,128], index: 1, kind: input, shape index: {}]
  %s2 = inlined_call_operand.vmem [shape: bf16[256,256], index: 2, kind: input, shape index: {}]
  %s3 = inlined_call_operand.vmem [shape: bf16[128,256], index: 3, kind: input, shape index: {}]
  %s4 = inlined_call_operand.vmem [shape: f32[1,256], index: 4, kind: input, shape index: {}]
  %s5 = inlined_call_operand.vmem [shape: bf16[256,128], index: 5, kind: input, shape index: {}]
  %s6 = inlined_call_operand.vmem [shape: f32[1,128], index: 6, kind: input, shape index: {}]
  %s7 = inlined_call_operand.vmem [shape: f32[1,128], index: 7, kind: input, shape index: {}]
  %s8 = inlined_call_operand.vmem [shape: f32[1,128], index: 8, kind: input, shape index: {}]
  %s9 = inlined_call_operand.vmem [shape: bf16[32,128], index: 9, kind: output, shape index: {}]
  %s10 = sld [smem:[#allocation0]]
  $region46: #{_forward.11} parent=0
    _
  %s12 = ssub.s32 1, %s10
  %s13 = scalar_select 0, %s12, %s10
  // Predicated region
  $region2: #{_forward.11} parent=0 // pred_check
    _
  $region3: #{_forward.11} parent=0 // pred_check_branch
    %15 = sbr.rel (0) target = $region5
  $region4: #{_forward.11} parent=0 // pred_region
    _
  $region5: #{_forward.11} parent=0 // pred_fallthru
    _
  // Predicated region
  $region6: #{_forward.11} parent=0 // pred_check
    _
  $region7: #{_forward.11} parent=0 // pred_check_branch
    %17 = sbr.rel (0) target = $region9
  $region8: #{_forward.11} parent=0 // pred_region
    _
  $region9: #{_forward.11} parent=0 // pred_fallthru
    _
  // Predicated region
  $region10: #{_forward.11} parent=0 // pred_check
    _
  $region11: #{_forward.11} parent=0 // pred_check_branch
    %19 = sbr.rel (0) target = $region13
  $region12: #{_forward.11} parent=0 // pred_region
    _
  $region13: #{_forward.11} parent=0 // pred_fallthru
    _
  // Predicated region
  $region14: #{_forward.11} parent=0 // pred_check
    _
  $region15: #{_forward.11} parent=0 // pred_check_branch
    %21 = sbr.rel (0) target = $region17
  $region16: #{_forward.11} parent=0 // pred_region
    _
  $region17: #{_forward.11} parent=0 // pred_fallthru
    _
  // Predicated region
  $region18: #{_forward.11} parent=0 // pred_check
    _
  $region19: #{_forward.11} parent=0 // pred_check_branch
    %23 = sbr.rel (0) target = $region21
  $region20: #{_forward.11} parent=0 // pred_region
    _
  $region21: #{_forward.11} parent=0 // pred_fallthru
    _
  // Predicated region
  $region22: #{_forward.11} parent=0 // pred_check
    _
  $region23: #{_forward.11} parent=0 // pred_check_branch
    %25 = sbr.rel (0) target = $region25
  $region24: #{_forward.11} parent=0 // pred_region
    _
  $region25: #{_forward.11} parent=0 // pred_fallthru
    _
  // Predicated region
  $region26: #{_forward.11} parent=0 // pred_check
    _
  $region27: #{_forward.11} parent=0 // pred_check_branch
    %27 = sbr.rel (0) target = $region29
  $region28: #{_forward.11} parent=0 // pred_region
    _
  $region29: #{_forward.11} parent=0 // pred_fallthru
    _
  // Predicated region
  $region30: #{_forward.11} parent=0 // pred_check
    _
  $region31: #{_forward.11} parent=0 // pred_check_branch
    %29 = sbr.rel (0) target = $region33
  $region32: #{_forward.11} parent=0 // pred_region
    _
  $region33: #{_forward.11} parent=0 // pred_fallthru
    _
  // Predicated region
  $region34: #{_forward.11} parent=0 // pred_check
    _
  $region35: #{_forward.11} parent=0 // pred_check_branch
    %31 = sbr.rel (0) target = $region37
  $region36: #{_forward.11} parent=0 // pred_region
    _
  $region37: #{_forward.11} parent=0 // pred_fallthru
    _
  %v32 = vld [vmem:[%s0] sm:$0xff]
  %v33 = vld [vmem:[%s0 + $0x8] sm:$0xff]
  %v34 = vld [vmem:[%s0 + $0x10] sm:$0xff]
  %v35 = vld [vmem:[%s0 + $0x18] sm:$0xff]
  %v36 = vld [vmem:[%s2] sm:$0xff]
  %v37 = vld [vmem:[%s2 + $0x8] sm:$0xff]
  %v38 = vld [vmem:[%s2 + $0x10] sm:$0xff]
  %v39 = vld [vmem:[%s2 + $0x18] sm:$0xff]
  %v40 = vld [vmem:[%s2 + $0x20] sm:$0xff]
  %v41 = vld [vmem:[%s2 + $0x28] sm:$0xff]
  %v42 = vld [vmem:[%s2 + $0x30] sm:$0xff]
  %v43 = vld [vmem:[%s2 + $0x38] sm:$0xff]
  %v44 = vld [vmem:[%s2 + $0x40] sm:$0xff]
  %v45 = vld [vmem:[%s2 + $0x48] sm:$0xff]
  %v46 = vld [vmem:[%s2 + $0x50] sm:$0xff]
  %v47 = vld [vmem:[%s2 + $0x58] sm:$0xff]
  %v48 = vld [vmem:[%s2 + $0x60] sm:$0xff]
  %v49 = vld [vmem:[%s2 + $0x68] sm:$0xff]
  %v50 = vld [vmem:[%s2 + $0x70] sm:$0xff]
  %v51 = vld [vmem:[%s2 + $0x78] sm:$0xff]
  %v52 = vld [vmem:[%s2 + $0x80] sm:$0xff]
  %v53 = vld [vmem:[%s2 + $0x88] sm:$0xff]
  %v54 = vld [vmem:[%s2 + $0x90] sm:$0xff]
  %v55 = vld [vmem:[%s2 + $0x98] sm:$0xff]
  %v56 = vld [vmem:[%s2 + $0xa0] sm:$0xff]
  %v57 = vld [vmem:[%s2 + $0xa8] sm:$0xff]
  %v58 = vld [vmem:[%s2 + $0xb0] sm:$0xff]
  %v59 = vld [vmem:[%s2 + $0xb8] sm:$0xff]
  %v60 = vld [vmem:[%s2 + $0xc0] sm:$0xff]
  %v61 = vld [vmem:[%s2 + $0xc8] sm:$0xff]
  %v62 = vld [vmem:[%s2 + $0xd0] sm:$0xff]
  %v63 = vld [vmem:[%s2 + $0xd8] sm:$0xff]
  %v64 = vld [vmem:[%s2 + $0xe0] sm:$0xff]
  %v65 = vld [vmem:[%s2 + $0xe8] sm:$0xff]
  %v66 = vld [vmem:[%s2 + $0xf0] sm:$0xff]
  %v67 = vld [vmem:[%s2 + $0xf8] sm:$0xff]
  %v68 = vld [vmem:[%s1] sm:$0xf]
  %v69 = vld [vmem:[%s1 + $0x4] sm:$0xf]
  %v70 = vld [vmem:[%s1 + $0x8] sm:$0xf]
  %v71 = vld [vmem:[%s1 + $0xc] sm:$0xf]
  %v72 = vld [vmem:[%s3] sm:$0xff]
  %v73 = vld [vmem:[%s3 + $0x8] sm:$0xff]
  %v74 = vld [vmem:[%s3 + $0x10] sm:$0xff]
  %v75 = vld [vmem:[%s3 + $0x18] sm:$0xff]
  %v76 = vld [vmem:[%s3 + $0x20] sm:$0xff]
  %v77 = vld [vmem:[%s3 + $0x28] sm:$0xff]
  %v78 = vld [vmem:[%s3 + $0x30] sm:$0xff]
  %v79 = vld [vmem:[%s3 + $0x38] sm:$0xff]
  %v80 = vld [vmem:[%s3 + $0x40] sm:$0xff]
  %v81 = vld [vmem:[%s3 + $0x48] sm:$0xff]
  %v82 = vld [vmem:[%s3 + $0x50] sm:$0xff]
  %v83 = vld [vmem:[%s3 + $0x58] sm:$0xff]
  %v84 = vld [vmem:[%s3 + $0x60] sm:$0xff]
  %v85 = vld [vmem:[%s3 + $0x68] sm:$0xff]
  %v86 = vld [vmem:[%s3 + $0x70] sm:$0xff]
  %v87 = vld [vmem:[%s3 + $0x78] sm:$0xff]
  %v92 = vunpack.c.l.b16 %v68
  %v93 = vunpack.c.l.b16 %v69
  %v94 = vunpack.c.l.b16 %v70
  %v95 = vunpack.c.l.b16 %v71
  %v96 = vpack.c.b16 %v93, %v92
  %v97 = vpack.c.b16 %v95, %v94
  %v116 = vunpack.c.l.b16 %v72
  %v117 = vunpack.c.h.b16 %v72
  %v118 = vunpack.c.l.b16 %v73
  %v119 = vunpack.c.h.b16 %v73
  %v120 = vunpack.c.l.b16 %v74
  %v121 = vunpack.c.h.b16 %v74
  %v122 = vunpack.c.l.b16 %v75
  %v123 = vunpack.c.h.b16 %v75
  %v124 = vunpack.c.l.b16 %v76
  %v125 = vunpack.c.h.b16 %v76
  %v126 = vunpack.c.l.b16 %v77
  %v127 = vunpack.c.h.b16 %v77
  %v128 = vunpack.c.l.b16 %v78
  %v129 = vunpack.c.h.b16 %v78
  %v130 = vunpack.c.l.b16 %v79
  %v131 = vunpack.c.h.b16 %v79
  %v132 = vunpack.c.l.b16 %v80
  %v133 = vunpack.c.h.b16 %v80
  %v134 = vunpack.c.l.b16 %v81
  %v135 = vunpack.c.h.b16 %v81
  %v136 = vunpack.c.l.b16 %v82
  %v137 = vunpack.c.h.b16 %v82
  %v138 = vunpack.c.l.b16 %v83
  %v139 = vunpack.c.h.b16 %v83
  %v140 = vunpack.c.l.b16 %v84
  %v141 = vunpack.c.h.b16 %v84
  %v142 = vunpack.c.l.b16 %v85
  %v143 = vunpack.c.h.b16 %v85
  %v144 = vunpack.c.l.b16 %v86
  %v145 = vunpack.c.h.b16 %v86
  %v146 = vunpack.c.l.b16 %v87
  %v147 = vunpack.c.h.b16 %v87
  %v148 = vpack.c.b16 %v118, %v116
  %v149 = vpack.c.b16 %v119, %v117
  %v150 = vpack.c.b16 %v122, %v120
  %v151 = vpack.c.b16 %v123, %v121
  %v152 = vpack.c.b16 %v126, %v124
  %v153 = vpack.c.b16 %v127, %v125
  %v154 = vpack.c.b16 %v130, %v128
  %v155 = vpack.c.b16 %v131, %v129
  %v156 = vpack.c.b16 %v134, %v132
  %v157 = vpack.c.b16 %v135, %v133
  %v158 = vpack.c.b16 %v138, %v136
  %v159 = vpack.c.b16 %v139, %v137
  %v160 = vpack.c.b16 %v142, %v140
  %v161 = vpack.c.b16 %v143, %v141
  %v162 = vpack.c.b16 %v146, %v144
  %v163 = vpack.c.b16 %v147, %v145
  %180 = vmatpush.bf16.msra.mxu0 %v162
  %181 = vmatpush.bf16.msra.mxu0 %v160
  %182 = vmatpush.bf16.msra.mxu0 %v158
  %183 = vmatpush.bf16.msra.mxu0 %v156
  %184 = vmatpush.bf16.msra.mxu0 %v154
  %185 = vmatpush.bf16.msra.mxu0 %v152
  %186 = vmatpush.bf16.msra.mxu0 %v150
  %187 = vmatpush.bf16.msra.mxu0 %v148
  %188 = vmatmul.bf16.gmra.mxu0 %v96
  %v189 = vpop.f32.mrf.mxu0
  %v190 = vadd.f32 0.0, %v189
  %v191 = vpop.f32.mrf.mxu0
  %v192 = vadd.f32 0.0, %v191
  %193 = vmatmul.bf16.gmra.mxu0 %v97
  %v194 = vpop.f32.mrf.mxu0
  %v195 = vadd.f32 0.0, %v194
  %v196 = vpop.f32.mrf.mxu0
  %v197 = vadd.f32 0.0, %v196
  %198 = vdwg.mxu0
  %199 = vmatpush.bf16.msra.mxu0 %v163
  %200 = vmatpush.bf16.msra.mxu0 %v161
  %201 = vmatpush.bf16.msra.mxu0 %v159
  %202 = vmatpush.bf16.msra.mxu0 %v157
  %203 = vmatpush.bf16.msra.mxu0 %v155
  %204 = vmatpush.bf16.msra.mxu0 %v153
  %205 = vmatpush.bf16.msra.mxu0 %v151
  %206 = vmatpush.bf16.msra.mxu0 %v149
  %207 = vmatmul.bf16.gmra.mxu0 %v96
  %v208 = vpop.f32.mrf.mxu0
  %v209 = vadd.f32 0.0, %v208
  %v210 = vpop.f32.mrf.mxu0
  %v211 = vadd.f32 0.0, %v210
  %212 = vmatmul.bf16.gmra.mxu0 %v97
  %v213 = vpop.f32.mrf.mxu0
  %v214 = vadd.f32 0.0, %v213
  %v215 = vpop.f32.mrf.mxu0
  %v216 = vadd.f32 0.0, %v215
  %217 = vdwg.mxu0
  %v222 = vunpack.c.l.b16 %v32
  %v223 = vunpack.c.h.b16 %v32
  %v224 = vunpack.c.l.b16 %v33
  %v225 = vunpack.c.h.b16 %v33
  %v226 = vunpack.c.l.b16 %v34
  %v227 = vunpack.c.h.b16 %v34
  %v228 = vunpack.c.l.b16 %v35
  %v229 = vunpack.c.h.b16 %v35
  %v230 = vpack.c.b16 %v224, %v222
  %v231 = vpack.c.b16 %v225, %v223
  %v232 = vpack.c.b16 %v228, %v226
  %v233 = vpack.c.b16 %v229, %v227
  %v270 = vunpack.c.l.b16 %v36
  %v271 = vunpack.c.h.b16 %v36
  %v272 = vunpack.c.l.b16 %v37
  %v273 = vunpack.c.h.b16 %v37
  %v274 = vunpack.c.l.b16 %v38
  %v275 = vunpack.c.h.b16 %v38
  %v276 = vunpack.c.l.b16 %v39
  %v277 = vunpack.c.h.b16 %v39
  %v278 = vunpack.c.l.b16 %v40
  %v279 = vunpack.c.h.b16 %v40
  %v280 = vunpack.c.l.b16 %v41
  %v281 = vunpack.c.h.b16 %v41
  %v282 = vunpack.c.l.b16 %v42
  %v283 = vunpack.c.h.b16 %v42
  %v284 = vunpack.c.l.b16 %v43
  %v285 = vunpack.c.h.b16 %v43
  %v286 = vunpack.c.l.b16 %v44
  %v287 = vunpack.c.h.b16 %v44
  %v288 = vunpack.c.l.b16 %v45
  %v289 = vunpack.c.h.b16 %v45
  %v290 = vunpack.c.l.b16 %v46
  %v291 = vunpack.c.h.b16 %v46
  %v292 = vunpack.c.l.b16 %v47
  %v293 = vunpack.c.h.b16 %v47
  %v294 = vunpack.c.l.b16 %v48
  %v295 = vunpack.c.h.b16 %v48
  %v296 = vunpack.c.l.b16 %v49
  %v297 = vunpack.c.h.b16 %v49
  %v298 = vunpack.c.l.b16 %v50
  %v299 = vunpack.c.h.b16 %v50
  %v300 = vunpack.c.l.b16 %v51
  %v301 = vunpack.c.h.b16 %v51
  %v302 = vunpack.c.l.b16 %v52
  %v303 = vunpack.c.h.b16 %v52
  %v304 = vunpack.c.l.b16 %v53
  %v305 = vunpack.c.h.b16 %v53
  %v306 = vunpack.c.l.b16 %v54
  %v307 = vunpack.c.h.b16 %v54
  %v308 = vunpack.c.l.b16 %v55
  %v309 = vunpack.c.h.b16 %v55
  %v310 = vunpack.c.l.b16 %v56
  %v311 = vunpack.c.h.b16 %v56
  %v312 = vunpack.c.l.b16 %v57
  %v313 = vunpack.c.h.b16 %v57
  %v314 = vunpack.c.l.b16 %v58
  %v315 = vunpack.c.h.b16 %v58
  %v316 = vunpack.c.l.b16 %v59
  %v317 = vunpack.c.h.b16 %v59
  %v318 = vunpack.c.l.b16 %v60
  %v319 = vunpack.c.h.b16 %v60
  %v320 = vunpack.c.l.b16 %v61
  %v321 = vunpack.c.h.b16 %v61
  %v322 = vunpack.c.l.b16 %v62
  %v323 = vunpack.c.h.b16 %v62
  %v324 = vunpack.c.l.b16 %v63
  %v325 = vunpack.c.h.b16 %v63
  %v326 = vunpack.c.l.b16 %v64
  %v327 = vunpack.c.h.b16 %v64
  %v328 = vunpack.c.l.b16 %v65
  %v329 = vunpack.c.h.b16 %v65
  %v330 = vunpack.c.l.b16 %v66
  %v331 = vunpack.c.h.b16 %v66
  %v332 = vunpack.c.l.b16 %v67
  %v333 = vunpack.c.h.b16 %v67
  %v334 = vpack.c.b16 %v272, %v270
  %v335 = vpack.c.b16 %v273, %v271
  %v336 = vpack.c.b16 %v276, %v274
  %v337 = vpack.c.b16 %v277, %v275
  %v338 = vpack.c.b16 %v280, %v278
  %v339 = vpack.c.b16 %v281, %v279
  %v340 = vpack.c.b16 %v284, %v282
  %v341 = vpack.c.b16 %v285, %v283
  %v342 = vpack.c.b16 %v288, %v286
  %v343 = vpack.c.b16 %v289, %v287
  %v344 = vpack.c.b16 %v292, %v290
  %v345 = vpack.c.b16 %v293, %v291
  %v346 = vpack.c.b16 %v296, %v294
  %v347 = vpack.c.b16 %v297, %v295
  %v348 = vpack.c.b16 %v300, %v298
  %v349 = vpack.c.b16 %v301, %v299
  %v350 = vpack.c.b16 %v304, %v302
  %v351 = vpack.c.b16 %v305, %v303
  %v352 = vpack.c.b16 %v308, %v306
  %v353 = vpack.c.b16 %v309, %v307
  %v354 = vpack.c.b16 %v312, %v310
  %v355 = vpack.c.b16 %v313, %v311
  %v356 = vpack.c.b16 %v316, %v314
  %v357 = vpack.c.b16 %v317, %v315
  %v358 = vpack.c.b16 %v320, %v318
  %v359 = vpack.c.b16 %v321, %v319
  %v360 = vpack.c.b16 %v324, %v322
  %v361 = vpack.c.b16 %v325, %v323
  %v362 = vpack.c.b16 %v328, %v326
  %v363 = vpack.c.b16 %v329, %v327
  %v364 = vpack.c.b16 %v332, %v330
  %v365 = vpack.c.b16 %v333, %v331
  %398 = vmatpush.bf16.msra.mxu0 %v348
  %399 = vmatpush.bf16.msra.mxu0 %v346
  %400 = vmatpush.bf16.msra.mxu0 %v344
  %401 = vmatpush.bf16.msra.mxu0 %v342
  %402 = vmatpush.bf16.msra.mxu0 %v340
  %403 = vmatpush.bf16.msra.mxu0 %v338
  %404 = vmatpush.bf16.msra.mxu0 %v336
  %405 = vmatpush.bf16.msra.mxu0 %v334
  %406 = vmatmul.bf16.gmra.mxu0 %v230
  %v407 = vpop.f32.mrf.mxu0
  %v408 = vadd.f32 %v190, %v407
  %v409 = vpop.f32.mrf.mxu0
  %v410 = vadd.f32 %v192, %v409
  %411 = vmatmul.bf16.gmra.mxu0 %v232
  %v412 = vpop.f32.mrf.mxu0
  %v413 = vadd.f32 %v195, %v412
  %v414 = vpop.f32.mrf.mxu0
  %v415 = vadd.f32 %v197, %v414
  %416 = vdwg.mxu0
  %417 = vmatpush.bf16.msra.mxu0 %v364
  %418 = vmatpush.bf16.msra.mxu0 %v362
  %419 = vmatpush.bf16.msra.mxu0 %v360
  %420 = vmatpush.bf16.msra.mxu0 %v358
  %421 = vmatpush.bf16.msra.mxu0 %v356
  %422 = vmatpush.bf16.msra.mxu0 %v354
  %423 = vmatpush.bf16.msra.mxu0 %v352
  %424 = vmatpush.bf16.msra.mxu0 %v350
  %425 = vmatmul.bf16.gmra.mxu0 %v231
  %v426 = vpop.f32.mrf.mxu0
  %v427 = vadd.f32 %v408, %v426
  %v428 = vpop.f32.mrf.mxu0
  %v429 = vadd.f32 %v410, %v428
  %430 = vmatmul.bf16.gmra.mxu0 %v233
  %v431 = vpop.f32.mrf.mxu0
  %v432 = vadd.f32 %v413, %v431
  %v433 = vpop.f32.mrf.mxu0
  %v434 = vadd.f32 %v415, %v433
  %435 = vdwg.mxu0
  %436 = vmatpush.bf16.msra.mxu0 %v349
  %437 = vmatpush.bf16.msra.mxu0 %v347
  %438 = vmatpush.bf16.msra.mxu0 %v345
  %439 = vmatpush.bf16.msra.mxu0 %v343
  %440 = vmatpush.bf16.msra.mxu0 %v341
  %441 = vmatpush.bf16.msra.mxu0 %v339
  %442 = vmatpush.bf16.msra.mxu0 %v337
  %443 = vmatpush.bf16.msra.mxu0 %v335
  %444 = vmatmul.bf16.gmra.mxu0 %v230
  %v445 = vpop.f32.mrf.mxu0
  %v446 = vadd.f32 %v209, %v445
  %v447 = vpop.f32.mrf.mxu0
  %v448 = vadd.f32 %v211, %v447
  %449 = vmatmul.bf16.gmra.mxu0 %v232
  %v450 = vpop.f32.mrf.mxu0
  %v451 = vadd.f32 %v214, %v450
  %v452 = vpop.f32.mrf.mxu0
  %v453 = vadd.f32 %v216, %v452
  %454 = vdwg.mxu0
  %455 = vmatpush.bf16.msra.mxu0 %v365
  %456 = vmatpush.bf16.msra.mxu0 %v363
  %457 = vmatpush.bf16.msra.mxu0 %v361
  %458 = vmatpush.bf16.msra.mxu0 %v359
  %459 = vmatpush.bf16.msra.mxu0 %v357
  %460 = vmatpush.bf16.msra.mxu0 %v355
  %461 = vmatpush.bf16.msra.mxu0 %v353
  %462 = vmatpush.bf16.msra.mxu0 %v351
  %463 = vmatmul.bf16.gmra.mxu0 %v231
  %v464 = vpop.f32.mrf.mxu0
  %v465 = vadd.f32 %v446, %v464
  %v466 = vpop.f32.mrf.mxu0
  %v467 = vadd.f32 %v448, %v466
  %468 = vmatmul.bf16.gmra.mxu0 %v233
  %v469 = vpop.f32.mrf.mxu0
  %v470 = vadd.f32 %v451, %v469
  %v471 = vpop.f32.mrf.mxu0
  %v472 = vadd.f32 %v453, %v471
  %473 = vdwg.mxu0
  %v474 = vld [vmem:[%s4] sm:$0x3]
  %v476 = vperm.slane %v474, 0
  %v477 = vperm.slane %v474, 1
  %v480 = vadd.f32 %v427, %v476
  %v481 = vadd.f32 %v465, %v477
  %v482 = vadd.f32 %v429, %v476
  %v483 = vadd.f32 %v467, %v477
  %v484 = vadd.f32 %v432, %v476
  %v485 = vadd.f32 %v470, %v477
  %v486 = vadd.f32 %v434, %v476
  %v487 = vadd.f32 %v472, %v477
  %v488 = vpack.c.bf16 %v481, %v480
  %v489 = vpack.c.bf16 %v483, %v482
  %v490 = vpack.c.bf16 %v485, %v484
  %v491 = vpack.c.bf16 %v487, %v486
  %v492 = vunpack.c.l.bf16 %v488
  %v493 = vunpack.c.h.bf16 %v488
  %v494 = vunpack.c.l.bf16 %v489
  %v495 = vunpack.c.h.bf16 %v489
  %v496 = vunpack.c.l.bf16 %v490
  %v497 = vunpack.c.h.bf16 %v490
  %v498 = vunpack.c.l.bf16 %v491
  %v499 = vunpack.c.h.bf16 %v491
  %v500 = vmax.f32 %v492, 0.0
  %v501 = vmax.f32 %v493, 0.0
  %v502 = vmax.f32 %v494, 0.0
  %v503 = vmax.f32 %v495, 0.0
  %v504 = vmax.f32 %v496, 0.0
  %v505 = vmax.f32 %v497, 0.0
  %v506 = vmax.f32 %v498, 0.0
  %v507 = vmax.f32 %v499, 0.0
  %v508 = vpack.c.bf16 %v502, %v500
  %v509 = vpack.c.bf16 %v503, %v501
  %v510 = vpack.c.bf16 %v506, %v504
  %v511 = vpack.c.bf16 %v507, %v505
  %v512 = vld [vmem:[%s5] sm:$0xf]
  %v513 = vld [vmem:[%s5 + $0x4] sm:$0xf]
  %v514 = vld [vmem:[%s5 + $0x8] sm:$0xf]
  %v515 = vld [vmem:[%s5 + $0xc] sm:$0xf]
  %v516 = vld [vmem:[%s5 + $0x10] sm:$0xf]
  %v517 = vld [vmem:[%s5 + $0x14] sm:$0xf]
  %v518 = vld [vmem:[%s5 + $0x18] sm:$0xf]
  %v519 = vld [vmem:[%s5 + $0x1c] sm:$0xf]
  %v520 = vld [vmem:[%s5 + $0x20] sm:$0xf]
  %v521 = vld [vmem:[%s5 + $0x24] sm:$0xf]
  %v522 = vld [vmem:[%s5 + $0x28] sm:$0xf]
  %v523 = vld [vmem:[%s5 + $0x2c] sm:$0xf]
  %v524 = vld [vmem:[%s5 + $0x30] sm:$0xf]
  %v525 = vld [vmem:[%s5 + $0x34] sm:$0xf]
  %v526 = vld [vmem:[%s5 + $0x38] sm:$0xf]
  %v527 = vld [vmem:[%s5 + $0x3c] sm:$0xf]
  %v528 = vld [vmem:[%s5 + $0x40] sm:$0xf]
  %v529 = vld [vmem:[%s5 + $0x44] sm:$0xf]
  %v530 = vld [vmem:[%s5 + $0x48] sm:$0xf]
  %v531 = vld [vmem:[%s5 + $0x4c] sm:$0xf]
  %v532 = vld [vmem:[%s5 + $0x50] sm:$0xf]
  %v533 = vld [vmem:[%s5 + $0x54] sm:$0xf]
  %v534 = vld [vmem:[%s5 + $0x58] sm:$0xf]
  %v535 = vld [vmem:[%s5 + $0x5c] sm:$0xf]
  %v536 = vld [vmem:[%s5 + $0x60] sm:$0xf]
  %v537 = vld [vmem:[%s5 + $0x64] sm:$0xf]
  %v538 = vld [vmem:[%s5 + $0x68] sm:$0xf]
  %v539 = vld [vmem:[%s5 + $0x6c] sm:$0xf]
  %v540 = vld [vmem:[%s5 + $0x70] sm:$0xf]
  %v541 = vld [vmem:[%s5 + $0x74] sm:$0xf]
  %v542 = vld [vmem:[%s5 + $0x78] sm:$0xf]
  %v543 = vld [vmem:[%s5 + $0x7c] sm:$0xf]
  %v544 = vld [vmem:[%s6] sm:$0x1]
  %v546 = vperm.slane %v544, 0
  %v580 = vunpack.c.l.b16 %v512
  %v581 = vunpack.c.l.b16 %v513
  %v582 = vunpack.c.l.b16 %v514
  %v583 = vunpack.c.l.b16 %v515
  %v584 = vunpack.c.l.b16 %v516
  %v585 = vunpack.c.l.b16 %v517
  %v586 = vunpack.c.l.b16 %v518
  %v587 = vunpack.c.l.b16 %v519
  %v588 = vunpack.c.l.b16 %v520
  %v589 = vunpack.c.l.b16 %v521
  %v590 = vunpack.c.l.b16 %v522
  %v591 = vunpack.c.l.b16 %v523
  %v592 = vunpack.c.l.b16 %v524
  %v593 = vunpack.c.l.b16 %v525
  %v594 = vunpack.c.l.b16 %v526
  %v595 = vunpack.c.l.b16 %v527
  %v596 = vunpack.c.l.b16 %v528
  %v597 = vunpack.c.l.b16 %v529
  %v598 = vunpack.c.l.b16 %v530
  %v599 = vunpack.c.l.b16 %v531
  %v600 = vunpack.c.l.b16 %v532
  %v601 = vunpack.c.l.b16 %v533
  %v602 = vunpack.c.l.b16 %v534
  %v603 = vunpack.c.l.b16 %v535
  %v604 = vunpack.c.l.b16 %v536
  %v605 = vunpack.c.l.b16 %v537
  %v606 = vunpack.c.l.b16 %v538
  %v607 = vunpack.c.l.b16 %v539
  %v608 = vunpack.c.l.b16 %v540
  %v609 = vunpack.c.l.b16 %v541
  %v610 = vunpack.c.l.b16 %v542
  %v611 = vunpack.c.l.b16 %v543
  %v612 = vpack.c.b16 %v581, %v580
  %v613 = vpack.c.b16 %v583, %v582
  %v614 = vpack.c.b16 %v585, %v584
  %v615 = vpack.c.b16 %v587, %v586
  %v616 = vpack.c.b16 %v589, %v588
  %v617 = vpack.c.b16 %v591, %v590
  %v618 = vpack.c.b16 %v593, %v592
  %v619 = vpack.c.b16 %v595, %v594
  %v620 = vpack.c.b16 %v597, %v596
  %v621 = vpack.c.b16 %v599, %v598
  %v622 = vpack.c.b16 %v601, %v600
  %v623 = vpack.c.b16 %v603, %v602
  %v624 = vpack.c.b16 %v605, %v604
  %v625 = vpack.c.b16 %v607, %v606
  %v626 = vpack.c.b16 %v609, %v608
  %v627 = vpack.c.b16 %v611, %v610
  %644 = vmatpush.bf16.msra.mxu0 %v619
  %645 = vmatpush.bf16.msra.mxu0 %v618
  %646 = vmatpush.bf16.msra.mxu0 %v617
  %647 = vmatpush.bf16.msra.mxu0 %v616
  %648 = vmatpush.bf16.msra.mxu0 %v615
  %649 = vmatpush.bf16.msra.mxu0 %v614
  %650 = vmatpush.bf16.msra.mxu0 %v613
  %651 = vmatpush.bf16.msra.mxu0 %v612
  %652 = vmatmul.bf16.gmra.mxu0 %v508
  %v653 = vpop.f32.mrf.mxu0
  %v654 = vadd.f32 %v546, %v653
  %v655 = vpop.f32.mrf.mxu0
  %v656 = vadd.f32 %v546, %v655
  %657 = vmatmul.bf16.gmra.mxu0 %v510
  %v658 = vpop.f32.mrf.mxu0
  %v659 = vadd.f32 %v546, %v658
  %v660 = vpop.f32.mrf.mxu0
  %v661 = vadd.f32 %v546, %v660
  %662 = vdwg.mxu0
  %663 = vmatpush.bf16.msra.mxu0 %v627
  %664 = vmatpush.bf16.msra.mxu0 %v626
  %665 = vmatpush.bf16.msra.mxu0 %v625
  %666 = vmatpush.bf16.msra.mxu0 %v624
  %667 = vmatpush.bf16.msra.mxu0 %v623
  %668 = vmatpush.bf16.msra.mxu0 %v622
  %669 = vmatpush.bf16.msra.mxu0 %v621
  %670 = vmatpush.bf16.msra.mxu0 %v620
  %671 = vmatmul.bf16.gmra.mxu0 %v509
  %v672 = vpop.f32.mrf.mxu0
  %v673 = vadd.f32 %v654, %v672
  %v674 = vpop.f32.mrf.mxu0
  %v675 = vadd.f32 %v656, %v674
  %676 = vmatmul.bf16.gmra.mxu0 %v511
  %v677 = vpop.f32.mrf.mxu0
  %v678 = vadd.f32 %v659, %v677
  %v679 = vpop.f32.mrf.mxu0
  %v680 = vadd.f32 %v661, %v679
  %681 = vdwg.mxu0
  %v682 = vmax.f32 %v673, 0.0
  %v683 = vmax.f32 %v675, 0.0
  %v684 = vmax.f32 %v678, 0.0
  %v685 = vmax.f32 %v680, 0.0
  %v686 = vld [vmem:[%s7] sm:$0x1]
  %v688 = vperm.slane %v686, 0
  %v690 = vmul.f32 %v682, %v688
  %v691 = vmul.f32 %v683, %v688
  %v692 = vmul.f32 %v684, %v688
  %v693 = vmul.f32 %v685, %v688
  %v694 = vld [vmem:[%s8] sm:$0x1]
  %v696 = vperm.slane %v694, 0
  %v698 = vadd.f32 %v690, %v696
  %v699 = vadd.f32 %v691, %v696
  %v700 = vadd.f32 %v692, %v696
  %v701 = vadd.f32 %v693, %v696
  %v702 = vpack.c.bf16 %v698, %v698
  %v703 = vpack.c.bf16 %v699, %v699
  %v704 = vpack.c.bf16 %v700, %v700
  %v705 = vpack.c.bf16 %v701, %v701
  %706 = vst [vmem:[%s9] sm:$0xf] %v702
  %707 = vst [vmem:[%s9 + $0x4] sm:$0xf] %v703
  %708 = vst [vmem:[%s9 + $0x8] sm:$0xf] %v704
  %709 = vst [vmem:[%s9 + $0xc] sm:$0xf] %v705
  // Predicated region
  $region38: #{_forward.11} parent=0 // pred_check
    _
  $region39: #{_forward.11} parent=0 // pred_check_branch
    %711 = sbr.rel (0) target = $region41
  $region40: #{_forward.11} parent=0 // pred_region
    _
  $region41: #{_forward.11} parent=0 // pred_fallthru
    _
  // Predicated region
  $region42: #{_forward.11} parent=0 // pred_check
    _
  $region43: #{_forward.11} parent=0 // pred_check_branch
    %713 = sbr.rel (0) target = $region45
  $region44: #{_forward.11} parent=0 // pred_region
    _
  $region45: #{_forward.11} parent=0 // pred_fallthru
    _

// kernel: _forward.13
$region0: #{_forward.13}
  #allocation0 [shape = 'u32[]', space=smem, size = 0x4, offset = 0x4, fixed_abs, tag = 'smem constant byte address 0x4 - core index']
  #allocation1 [shape = 'u32[72,128]{1,0:T(1,128)}', space=vmem, size = 0x9000, scoped, tag = 'internal scratch']
  %s0 = inlined_call_operand.vmem [shape: bf16[128,128], index: 0, kind: input, shape index: {}]
  %s1 = inlined_call_operand.vmem [shape: bf16[128,128], index: 1, kind: input, shape index: {}]
  %s2 = inlined_call_operand.vmem [shape: f32[1,128], index: 2, kind: input, shape index: {}]
  %s3 = inlined_call_operand.vmem [shape: bf16[128,128], index: 3, kind: input, shape index: {}]
  %s4 = inlined_call_operand.vmem [shape: f32[1,128], index: 4, kind: input, shape index: {}]
  %s5 = inlined_call_operand.vmem [shape: bf16[128,128], index: 5, kind: input, shape index: {}]
  %s6 = inlined_call_operand.vmem [shape: f32[1,128], index: 6, kind: input, shape index: {}]
  %s7 = inlined_call_operand.vmem [shape: f32[128,128], index: 7, kind: output, shape index: {}]
  %s8 = sld [smem:[#allocation0]]
  $region38: #{_forward.13} parent=0
    _
  %s10 = ssub.s32 1, %s8
  %s11 = scalar_select 0, %s10, %s8
  // Predicated region
  $region2: #{_forward.13} parent=0 // pred_check
    _
  $region3: #{_forward.13} parent=0 // pred_check_branch
    %13 = sbr.rel (0) target = $region5
  $region4: #{_forward.13} parent=0 // pred_region
    _
  $region5: #{_forward.13} parent=0 // pred_fallthru
    _
  // Predicated region
  $region6: #{_forward.13} parent=0 // pred_check
    _
  $region7: #{_forward.13} parent=0 // pred_check_branch
    %15 = sbr.rel (0) target = $region9
  $region8: #{_forward.13} parent=0 // pred_region
    _
  $region9: #{_forward.13} parent=0 // pred_fallthru
    _
  // Predicated region
  $region10: #{_forward.13} parent=0 // pred_check
    _
  $region11: #{_forward.13} parent=0 // pred_check_branch
    %17 = sbr.rel (0) target = $region13
  $region12: #{_forward.13} parent=0 // pred_region
    _
  $region13: #{_forward.13} parent=0 // pred_fallthru
    _
  // Predicated region
  $region14: #{_forward.13} parent=0 // pred_check
    _
  $region15: #{_forward.13} parent=0 // pred_check_branch
    %19 = sbr.rel (0) target = $region17
  $region16: #{_forward.13} parent=0 // pred_region
    _
  $region17: #{_forward.13} parent=0 // pred_fallthru
    _
  // Predicated region
  $region18: #{_forward.13} parent=0 // pred_check
    _
  $region19: #{_forward.13} parent=0 // pred_check_branch
    %21 = sbr.rel (0) target = $region21
  $region20: #{_forward.13} parent=0 // pred_region
    _
  $region21: #{_forward.13} parent=0 // pred_fallthru
    _
  // Predicated region
  $region22: #{_forward.13} parent=0 // pred_check
    _
  $region23: #{_forward.13} parent=0 // pred_check_branch
    %23 = sbr.rel (0) target = $region25
  $region24: #{_forward.13} parent=0 // pred_region
    _
  $region25: #{_forward.13} parent=0 // pred_fallthru
    _
  // Predicated region
  $region26: #{_forward.13} parent=0 // pred_check
    _
  $region27: #{_forward.13} parent=0 // pred_check_branch
    %25 = sbr.rel (0) target = $region29
  $region28: #{_forward.13} parent=0 // pred_region
    _
  $region29: #{_forward.13} parent=0 // pred_fallthru
    _
  %v26 = vld [vmem:[%s0] sm:$0xf]
  %v27 = vld [vmem:[%s0 + $0x4] sm:$0xf]
  %v28 = vld [vmem:[%s0 + $0x8] sm:$0xf]
  %v29 = vld [vmem:[%s0 + $0xc] sm:$0xf]
  %v30 = vld [vmem:[%s0 + $0x10] sm:$0xf]
  %v31 = vld [vmem:[%s0 + $0x14] sm:$0xf]
  %v32 = vld [vmem:[%s0 + $0x18] sm:$0xf]
  %v33 = vld [vmem:[%s0 + $0x1c] sm:$0xf]
  %v34 = vld [vmem:[%s0 + $0x20] sm:$0xf]
  %v35 = vld [vmem:[%s0 + $0x24] sm:$0xf]
  %v36 = vld [vmem:[%s0 + $0x28] sm:$0xf]
  %v37 = vld [vmem:[%s0 + $0x2c] sm:$0xf]
  %v38 = vld [vmem:[%s0 + $0x30] sm:$0xf]
  %v39 = vld [vmem:[%s0 + $0x34] sm:$0xf]
  %v40 = vld [vmem:[%s0 + $0x38] sm:$0xf]
  %v41 = vld [vmem:[%s0 + $0x3c] sm:$0xf]
  %v42 = vld [vmem:[%s1] sm:$0xf]
  %v43 = vld [vmem:[%s1 + $0x4] sm:$0xf]
  %v44 = vld [vmem:[%s1 + $0x8] sm:$0xf]
  %v45 = vld [vmem:[%s1 + $0xc] sm:$0xf]
  %v46 = vld [vmem:[%s1 + $0x10] sm:$0xf]
  %v47 = vld [vmem:[%s1 + $0x14] sm:$0xf]
  %v48 = vld [vmem:[%s1 + $0x18] sm:$0xf]
  %v49 = vld [vmem:[%s1 + $0x1c] sm:$0xf]
  %v50 = vld [vmem:[%s1 + $0x20] sm:$0xf]
  %v51 = vld [vmem:[%s1 + $0x24] sm:$0xf]
  %v52 = vld [vmem:[%s1 + $0x28] sm:$0xf]
  %v53 = vld [vmem:[%s1 + $0x2c] sm:$0xf]
  %v54 = vld [vmem:[%s1 + $0x30] sm:$0xf]
  %v55 = vld [vmem:[%s1 + $0x34] sm:$0xf]
  %v56 = vld [vmem:[%s1 + $0x38] sm:$0xf]
  %v57 = vld [vmem:[%s1 + $0x3c] sm:$0xf]
  %v58 = vld [vmem:[%s2] sm:$0x1]
  %v60 = vperm.slane %v58, 0
  %v78 = vunpack.c.l.b16 %v26
  %v79 = vunpack.c.l.b16 %v27
  %v80 = vunpack.c.l.b16 %v28
  %v81 = vunpack.c.l.b16 %v29
  %v82 = vunpack.c.l.b16 %v30
  %v83 = vunpack.c.l.b16 %v31
  %v84 = vunpack.c.l.b16 %v32
  %v85 = vunpack.c.l.b16 %v33
  %v86 = vunpack.c.l.b16 %v34
  %v87 = vunpack.c.l.b16 %v35
  %v88 = vunpack.c.l.b16 %v36
  %v89 = vunpack.c.l.b16 %v37
  %v90 = vunpack.c.l.b16 %v38
  %v91 = vunpack.c.l.b16 %v39
  %v92 = vunpack.c.l.b16 %v40
  %v93 = vunpack.c.l.b16 %v41
  %v94 = vpack.c.b16 %v79, %v78
  %v95 = vpack.c.b16 %v81, %v80
  %v96 = vpack.c.b16 %v83, %v82
  %v97 = vpack.c.b16 %v85, %v84
  %v98 = vpack.c.b16 %v87, %v86
  %v99 = vpack.c.b16 %v89, %v88
  %v100 = vpack.c.b16 %v91, %v90
  %v101 = vpack.c.b16 %v93, %v92
  %v126 = vunpack.c.l.b16 %v42
  %v127 = vunpack.c.l.b16 %v43
  %v128 = vunpack.c.l.b16 %v44
  %v129 = vunpack.c.l.b16 %v45
  %v130 = vunpack.c.l.b16 %v46
  %v131 = vunpack.c.l.b16 %v47
  %v132 = vunpack.c.l.b16 %v48
  %v133 = vunpack.c.l.b16 %v49
  %v134 = vunpack.c.l.b16 %v50
  %v135 = vunpack.c.l.b16 %v51
  %v136 = vunpack.c.l.b16 %v52
  %v137 = vunpack.c.l.b16 %v53
  %v138 = vunpack.c.l.b16 %v54
  %v139 = vunpack.c.l.b16 %v55
  %v140 = vunpack.c.l.b16 %v56
  %v141 = vunpack.c.l.b16 %v57
  %v142 = vpack.c.b16 %v127, %v126
  %v143 = vpack.c.b16 %v129, %v128
  %v144 = vpack.c.b16 %v131, %v130
  %v145 = vpack.c.b16 %v133, %v132
  %v146 = vpack.c.b16 %v135, %v134
  %v147 = vpack.c.b16 %v137, %v136
  %v148 = vpack.c.b16 %v139, %v138
  %v149 = vpack.c.b16 %v141, %v140
  %158 = vmatpush.bf16.msra.mxu0 %v149
  %159 = vmatpush.bf16.msra.mxu0 %v148
  %160 = vmatpush.bf16.msra.mxu0 %v147
  %161 = vmatpush.bf16.msra.mxu0 %v146
  %162 = vmatpush.bf16.msra.mxu0 %v145
  %163 = vmatpush.bf16.msra.mxu0 %v144
  %164 = vmatpush.bf16.msra.mxu0 %v143
  %165 = vmatpush.bf16.msra.mxu0 %v142
  %166 = vmatmul.bf16.gmra.mxu0 %v94
  %v167 = vpop.f32.mrf.mxu0
  %v168 = vadd.f32 %v60, %v167
  %v169 = vpop.f32.mrf.mxu0
  %v170 = vadd.f32 %v60, %v169
  %171 = vmatmul.bf16.gmra.mxu0 %v95
  %v172 = vpop.f32.mrf.mxu0
  %v173 = vadd.f32 %v60, %v172
  %v174 = vpop.f32.mrf.mxu0
  %v175 = vadd.f32 %v60, %v174
  %176 = vmatmul.bf16.gmra.mxu0 %v96
  %v177 = vpop.f32.mrf.mxu0
  %v178 = vadd.f32 %v60, %v177
  %v179 = vpop.f32.mrf.mxu0
  %v180 = vadd.f32 %v60, %v179
  %181 = vmatmul.bf16.gmra.mxu0 %v97
  %v182 = vpop.f32.mrf.mxu0
  %v183 = vadd.f32 %v60, %v182
  %v184 = vpop.f32.mrf.mxu0
  %v185 = vadd.f32 %v60, %v184
  %186 = vmatmul.bf16.gmra.mxu0 %v98
  %v187 = vpop.f32.mrf.mxu0
  %v188 = vadd.f32 %v60, %v187
  %v189 = vpop.f32.mrf.mxu0
  %v190 = vadd.f32 %v60, %v189
  %191 = vmatmul.bf16.gmra.mxu0 %v99
  %v192 = vpop.f32.mrf.mxu0
  %v193 = vadd.f32 %v60, %v192
  %v194 = vpop.f32.mrf.mxu0
  %v195 = vadd.f32 %v60, %v194
  %196 = vmatmul.bf16.gmra.mxu0 %v100
  %v197 = vpop.f32.mrf.mxu0
  %v198 = vadd.f32 %v60, %v197
  %v199 = vpop.f32.mrf.mxu0
  %v200 = vadd.f32 %v60, %v199
  %201 = vmatmul.bf16.gmra.mxu0 %v101
  %v202 = vpop.f32.mrf.mxu0
  %v203 = vadd.f32 %v60, %v202
  %v204 = vpop.f32.mrf.mxu0
  %v205 = vadd.f32 %v60, %v204
  %206 = vdwg.mxu0
  %v207 = vpack.c.bf16 %v168, %v168
  %v208 = vpack.c.bf16 %v170, %v170
  %v209 = vpack.c.bf16 %v173, %v173
  %v210 = vpack.c.bf16 %v175, %v175
  %v211 = vpack.c.bf16 %v178, %v178
  %v212 = vpack.c.bf16 %v180, %v180
  %v213 = vpack.c.bf16 %v183, %v183
  %v214 = vpack.c.bf16 %v185, %v185
  %v215 = vpack.c.bf16 %v188, %v188
  %v216 = vpack.c.bf16 %v190, %v190
  %v217 = vpack.c.bf16 %v193, %v193
  %v218 = vpack.c.bf16 %v195, %v195
  %v219 = vpack.c.bf16 %v198, %v198
  %v220 = vpack.c.bf16 %v200, %v200
  %v221 = vpack.c.bf16 %v203, %v203
  %v222 = vpack.c.bf16 %v205, %v205
  %v223 = vunpack.c.l.bf16 %v207
  %v224 = vunpack.c.l.bf16 %v208
  %v225 = vunpack.c.l.bf16 %v209
  %v226 = vunpack.c.l.bf16 %v210
  %v227 = vunpack.c.l.bf16 %v211
  %v228 = vunpack.c.l.bf16 %v212
  %v229 = vunpack.c.l.bf16 %v213
  %v230 = vunpack.c.l.bf16 %v214
  %v231 = vunpack.c.l.bf16 %v215
  %v232 = vunpack.c.l.bf16 %v216
  %v233 = vunpack.c.l.bf16 %v217
  %v234 = vunpack.c.l.bf16 %v218
  %v235 = vunpack.c.l.bf16 %v219
  %v236 = vunpack.c.l.bf16 %v220
  %v237 = vunpack.c.l.bf16 %v221
  %v238 = vunpack.c.l.bf16 %v222
  %v239 = vmax.f32 %v223, 0.0
  %v240 = vmax.f32 %v224, 0.0
  %v241 = vmax.f32 %v225, 0.0
  %v242 = vmax.f32 %v226, 0.0
  %v243 = vmax.f32 %v227, 0.0
  %v244 = vmax.f32 %v228, 0.0
  %v245 = vmax.f32 %v229, 0.0
  %v246 = vmax.f32 %v230, 0.0
  %v247 = vmax.f32 %v231, 0.0
  %v248 = vmax.f32 %v232, 0.0
  %v249 = vmax.f32 %v233, 0.0
  %v250 = vmax.f32 %v234, 0.0
  %v251 = vmax.f32 %v235, 0.0
  %v252 = vmax.f32 %v236, 0.0
  %v253 = vmax.f32 %v237, 0.0
  %v254 = vmax.f32 %v238, 0.0
  %v255 = vpack.c.bf16 %v240, %v239
  %v256 = vpack.c.bf16 %v242, %v241
  %v257 = vpack.c.bf16 %v244, %v243
  %v258 = vpack.c.bf16 %v246, %v245
  %v259 = vpack.c.bf16 %v248, %v247
  %v260 = vpack.c.bf16 %v250, %v249
  %v261 = vpack.c.bf16 %v252, %v251
  %v262 = vpack.c.bf16 %v254, %v253
  %v263 = vld [vmem:[%s3] sm:$0xf]
  %v264 = vld [vmem:[%s3 + $0x4] sm:$0xf]
  %v265 = vld [vmem:[%s3 + $0x8] sm:$0xf]
  %v266 = vld [vmem:[%s3 + $0xc] sm:$0xf]
  %v267 = vld [vmem:[%s3 + $0x10] sm:$0xf]
  %v268 = vld [vmem:[%s3 + $0x14] sm:$0xf]
  %v269 = vld [vmem:[%s3 + $0x18] sm:$0xf]
  %v270 = vld [vmem:[%s3 + $0x1c] sm:$0xf]
  %v271 = vld [vmem:[%s3 + $0x20] sm:$0xf]
  %v272 = vld [vmem:[%s3 + $0x24] sm:$0xf]
  %v273 = vld [vmem:[%s3 + $0x28] sm:$0xf]
  %v274 = vld [vmem:[%s3 + $0x2c] sm:$0xf]
  %v275 = vld [vmem:[%s3 + $0x30] sm:$0xf]
  %v276 = vld [vmem:[%s3 + $0x34] sm:$0xf]
  %v277 = vld [vmem:[%s3 + $0x38] sm:$0xf]
  %v278 = vld [vmem:[%s3 + $0x3c] sm:$0xf]
  %v279 = vld [vmem:[%s4] sm:$0x1]
  %v281 = vperm.slane %v279, 0
  %v299 = vunpack.c.l.b16 %v263
  %v300 = vunpack.c.l.b16 %v264
  %v301 = vunpack.c.l.b16 %v265
  %v302 = vunpack.c.l.b16 %v266
  %v303 = vunpack.c.l.b16 %v267
  %v304 = vunpack.c.l.b16 %v268
  %v305 = vunpack.c.l.b16 %v269
  %v306 = vunpack.c.l.b16 %v270
  %v307 = vunpack.c.l.b16 %v271
  %v308 = vunpack.c.l.b16 %v272
  %v309 = vunpack.c.l.b16 %v273
  %v310 = vunpack.c.l.b16 %v274
  %v311 = vunpack.c.l.b16 %v275
  %v312 = vunpack.c.l.b16 %v276
  %v313 = vunpack.c.l.b16 %v277
  %v314 = vunpack.c.l.b16 %v278
  %v315 = vpack.c.b16 %v300, %v299
  %v316 = vpack.c.b16 %v302, %v301
  %v317 = vpack.c.b16 %v304, %v303
  %v318 = vpack.c.b16 %v306, %v305
  %v319 = vpack.c.b16 %v308, %v307
  %v320 = vpack.c.b16 %v310, %v309
  %v321 = vpack.c.b16 %v312, %v311
  %v322 = vpack.c.b16 %v314, %v313
  %331 = vmatpush.bf16.msra.mxu0 %v322
  %332 = vmatpush.bf16.msra.mxu0 %v321
  %333 = vmatpush.bf16.msra.mxu0 %v320
  %334 = vmatpush.bf16.msra.mxu0 %v319
  %335 = vmatpush.bf16.msra.mxu0 %v318
  %336 = vmatpush.bf16.msra.mxu0 %v317
  %337 = vmatpush.bf16.msra.mxu0 %v316
  %338 = vmatpush.bf16.msra.mxu0 %v315
  %339 = vmatmul.bf16.gmra.mxu0 %v255
  %v340 = vpop.f32.mrf.mxu0
  %v341 = vadd.f32 %v281, %v340
  %v342 = vpop.f32.mrf.mxu0
  %v343 = vadd.f32 %v281, %v342
  %344 = vmatmul.bf16.gmra.mxu0 %v256
  %v345 = vpop.f32.mrf.mxu0
  %v346 = vadd.f32 %v281, %v345
  %v347 = vpop.f32.mrf.mxu0
  %v348 = vadd.f32 %v281, %v347
  %349 = vmatmul.bf16.gmra.mxu0 %v257
  %v350 = vpop.f32.mrf.mxu0
  %v351 = vadd.f32 %v281, %v350
  %v352 = vpop.f32.mrf.mxu0
  %v353 = vadd.f32 %v281, %v352
  %354 = vmatmul.bf16.gmra.mxu0 %v258
  %v355 = vpop.f32.mrf.mxu0
  %v356 = vadd.f32 %v281, %v355
  %v357 = vpop.f32.mrf.mxu0
  %v358 = vadd.f32 %v281, %v357
  %359 = vmatmul.bf16.gmra.mxu0 %v259
  %v360 = vpop.f32.mrf.mxu0
  %v361 = vadd.f32 %v281, %v360
  %v362 = vpop.f32.mrf.mxu0
  %v363 = vadd.f32 %v281, %v362
  %364 = vmatmul.bf16.gmra.mxu0 %v260
  %v365 = vpop.f32.mrf.mxu0
  %v366 = vadd.f32 %v281, %v365
  %v367 = vpop.f32.mrf.mxu0
  %v368 = vadd.f32 %v281, %v367
  %369 = vmatmul.bf16.gmra.mxu0 %v261
  %v370 = vpop.f32.mrf.mxu0
  %v371 = vadd.f32 %v281, %v370
  %v372 = vpop.f32.mrf.mxu0
  %v373 = vadd.f32 %v281, %v372
  %374 = vmatmul.bf16.gmra.mxu0 %v262
  %v375 = vpop.f32.mrf.mxu0
  %v376 = vadd.f32 %v281, %v375
  %v377 = vpop.f32.mrf.mxu0
  %v378 = vadd.f32 %v281, %v377
  %379 = vdwg.mxu0
  %v380 = vpack.c.bf16 %v343, %v341
  %v381 = vpack.c.bf16 %v348, %v346
  %v382 = vpack.c.bf16 %v353, %v351
  %v383 = vpack.c.bf16 %v358, %v356
  %v384 = vpack.c.bf16 %v363, %v361
  %v385 = vpack.c.bf16 %v368, %v366
  %v386 = vpack.c.bf16 %v373, %v371
  %v387 = vpack.c.bf16 %v378, %v376
  %v388 = vld [vmem:[%s5] sm:$0xf]
  %v389 = vld [vmem:[%s5 + $0x4] sm:$0xf]
  %v390 = vld [vmem:[%s5 + $0x8] sm:$0xf]
  %v391 = vld [vmem:[%s5 + $0xc] sm:$0xf]
  %v392 = vld [vmem:[%s5 + $0x10] sm:$0xf]
  %v393 = vld [vmem:[%s5 + $0x14] sm:$0xf]
  %v394 = vld [vmem:[%s5 + $0x18] sm:$0xf]
  %v395 = vld [vmem:[%s5 + $0x1c] sm:$0xf]
  %v396 = vld [vmem:[%s5 + $0x20] sm:$0xf]
  %v397 = vld [vmem:[%s5 + $0x24] sm:$0xf]
  %v398 = vld [vmem:[%s5 + $0x28] sm:$0xf]
  %v399 = vld [vmem:[%s5 + $0x2c] sm:$0xf]
  %v400 = vld [vmem:[%s5 + $0x30] sm:$0xf]
  %v401 = vld [vmem:[%s5 + $0x34] sm:$0xf]
  %v402 = vld [vmem:[%s5 + $0x38] sm:$0xf]
  %v403 = vld [vmem:[%s5 + $0x3c] sm:$0xf]
  %v404 = vld [vmem:[%s6] sm:$0x1]
  %v406 = vperm.slane %v404, 0
  %v424 = vunpack.c.l.b16 %v388
  %v425 = vunpack.c.l.b16 %v389
  %v426 = vunpack.c.l.b16 %v390
  %v427 = vunpack.c.l.b16 %v391
  %v428 = vunpack.c.l.b16 %v392
  %v429 = vunpack.c.l.b16 %v393
  %v430 = vunpack.c.l.b16 %v394
  %v431 = vunpack.c.l.b16 %v395
  %v432 = vunpack.c.l.b16 %v396
  %v433 = vunpack.c.l.b16 %v397
  %v434 = vunpack.c.l.b16 %v398
  %v435 = vunpack.c.l.b16 %v399
  %v436 = vunpack.c.l.b16 %v400
  %v437 = vunpack.c.l.b16 %v401
  %v438 = vunpack.c.l.b16 %v402
  %v439 = vunpack.c.l.b16 %v403
  %v440 = vpack.c.b16 %v425, %v424
  %v441 = vpack.c.b16 %v427, %v426
  %v442 = vpack.c.b16 %v429, %v428
  %v443 = vpack.c.b16 %v431, %v430
  %v444 = vpack.c.b16 %v433, %v432
  %v445 = vpack.c.b16 %v435, %v434
  %v446 = vpack.c.b16 %v437, %v436
  %v447 = vpack.c.b16 %v439, %v438
  %456 = vmatpush.bf16.msra.mxu0 %v447
  %457 = vmatpush.bf16.msra.mxu0 %v446
  %458 = vmatpush.bf16.msra.mxu0 %v445
  %459 = vmatpush.bf16.msra.mxu0 %v444
  %460 = vmatpush.bf16.msra.mxu0 %v443
  %461 = vmatpush.bf16.msra.mxu0 %v442
  %462 = vmatpush.bf16.msra.mxu0 %v441
  %463 = vmatpush.bf16.msra.mxu0 %v440
  %464 = vmatmul.bf16.gmra.mxu0 %v380
  %v465 = vpop.f32.mrf.mxu0
  %v466 = vadd.f32 %v406, %v465
  %v467 = vpop.f32.mrf.mxu0
  %v468 = vadd.f32 %v406, %v467
  %469 = vmatmul.bf16.gmra.mxu0 %v381
  %v470 = vpop.f32.mrf.mxu0
  %v471 = vadd.f32 %v406, %v470
  %v472 = vpop.f32.mrf.mxu0
  %v473 = vadd.f32 %v406, %v472
  %474 = vmatmul.bf16.gmra.mxu0 %v382
  %v475 = vpop.f32.mrf.mxu0
  %v476 = vadd.f32 %v406, %v475
  %v477 = vpop.f32.mrf.mxu0
  %v478 = vadd.f32 %v406, %v477
  %479 = vmatmul.bf16.gmra.mxu0 %v383
  %v480 = vpop.f32.mrf.mxu0
  %v481 = vadd.f32 %v406, %v480
  %v482 = vpop.f32.mrf.mxu0
  %v483 = vadd.f32 %v406, %v482
  %484 = vmatmul.bf16.gmra.mxu0 %v384
  %v485 = vpop.f32.mrf.mxu0
  %v486 = vadd.f32 %v406, %v485
  %v487 = vpop.f32.mrf.mxu0
  %v488 = vadd.f32 %v406, %v487
  %489 = vmatmul.bf16.gmra.mxu0 %v385
  %v490 = vpop.f32.mrf.mxu0
  %v491 = vadd.f32 %v406, %v490
  %v492 = vpop.f32.mrf.mxu0
  %v493 = vadd.f32 %v406, %v492
  %494 = vmatmul.bf16.gmra.mxu0 %v386
  %v495 = vpop.f32.mrf.mxu0
  %v496 = vadd.f32 %v406, %v495
  %v497 = vpop.f32.mrf.mxu0
  %v498 = vadd.f32 %v406, %v497
  %499 = vmatmul.bf16.gmra.mxu0 %v387
  %v500 = vpop.f32.mrf.mxu0
  %v501 = vadd.f32 %v406, %v500
  %v502 = vpop.f32.mrf.mxu0
  %v503 = vadd.f32 %v406, %v502
  %504 = vdwg.mxu0
  %v505 = vlaneseq
  %v506 = vand.u32 %v505, 127
  %vm507 = vcmp.lt.s32.totalorder %v506, 10
  %v508 = vsel %vm507, %v466, -1e+30
  %v509 = vsel %vm507, %v468, -1e+30
  %v510 = vsel %vm507, %v471, -1e+30
  %v511 = vsel %vm507, %v473, -1e+30
  %v512 = vsel %vm507, %v476, -1e+30
  %v513 = vsel %vm507, %v478, -1e+30
  %v514 = vsel %vm507, %v481, -1e+30
  %v515 = vsel %vm507, %v483, -1e+30
  %v516 = vsel %vm507, %v486, -1e+30
  %v517 = vsel %vm507, %v488, -1e+30
  %v518 = vsel %vm507, %v491, -1e+30
  %v519 = vsel %vm507, %v493, -1e+30
  %v520 = vsel %vm507, %v496, -1e+30
  %v521 = vsel %vm507, %v498, -1e+30
  %v522 = vsel %vm507, %v501, -1e+30
  %v523 = vsel %vm507, %v503, -1e+30
  %524 = vmax.xlane.f32.xlu0 %v508
  %v525 = vpop.xlane.xlu0 %524
  %526 = vmax.xlane.f32.xlu0 %v509
  %v527 = vpop.xlane.xlu0 %526
  %528 = vmax.xlane.f32.xlu0 %v510
  %v529 = vpop.xlane.xlu0 %528
  %530 = vmax.xlane.f32.xlu0 %v511
  %v531 = vpop.xlane.xlu0 %530
  %532 = vmax.xlane.f32.xlu0 %v512
  %v533 = vpop.xlane.xlu0 %532
  %534 = vmax.xlane.f32.xlu0 %v513
  %v535 = vpop.xlane.xlu0 %534
  %536 = vmax.xlane.f32.xlu0 %v514
  %v537 = vpop.xlane.xlu0 %536
  %538 = vmax.xlane.f32.xlu0 %v515
  %v539 = vpop.xlane.xlu0 %538
  %540 = vmax.xlane.f32.xlu0 %v516
  %v541 = vpop.xlane.xlu0 %540
  %542 = vmax.xlane.f32.xlu0 %v517
  %v543 = vpop.xlane.xlu0 %542
  %544 = vmax.xlane.f32.xlu0 %v518
  %v545 = vpop.xlane.xlu0 %544
  %546 = vmax.xlane.f32.xlu0 %v519
  %v547 = vpop.xlane.xlu0 %546
  %548 = vmax.xlane.f32.xlu0 %v520
  %v549 = vpop.xlane.xlu0 %548
  %550 = vmax.xlane.f32.xlu0 %v521
  %v551 = vpop.xlane.xlu0 %550
  %552 = vmax.xlane.f32.xlu0 %v522
  %v553 = vpop.xlane.xlu0 %552
  %554 = vmax.xlane.f32.xlu0 %v523
  %v555 = vpop.xlane.xlu0 %554
  %v556 = vsub.f32 %v466, %v525
  %v557 = vsub.f32 %v468, %v527
  %v558 = vsub.f32 %v471, %v529
  %v559 = vsub.f32 %v473, %v531
  %v560 = vsub.f32 %v476, %v533
  %v561 = vsub.f32 %v478, %v535
  %v562 = vsub.f32 %v481, %v537
  %v563 = vsub.f32 %v483, %v539
  %v564 = vsub.f32 %v486, %v541
  %v565 = vsub.f32 %v488, %v543
  %v566 = vsub.f32 %v491, %v545
  %v567 = vsub.f32 %v493, %v547
  %v568 = vsub.f32 %v496, %v549
  %v569 = vsub.f32 %v498, %v551
  %v570 = vsub.f32 %v501, %v553
  %v571 = vsub.f32 %v503, %v555
  %v572 = vmul.f32 %v556, 1.442695
  %v573 = vpow.pop %v572
  %v574 = vmul.f32 %v557, 1.442695
  %v575 = vpow.pop %v574
  %v576 = vmul.f32 %v558, 1.442695
  %v577 = vpow.pop %v576
  %v578 = vmul.f32 %v559, 1.442695
  %v579 = vpow.pop %v578
  %v580 = vmul.f32 %v560, 1.442695
  %v581 = vpow.pop %v580
  %v582 = vmul.f32 %v561, 1.442695
  %v583 = vpow.pop %v582
  %v584 = vmul.f32 %v562, 1.442695
  %v585 = vpow.pop %v584
  %v586 = vmul.f32 %v563, 1.442695
  %v587 = vpow.pop %v586
  %v588 = vmul.f32 %v564, 1.442695
  %v589 = vpow.pop %v588
  %v590 = vmul.f32 %v565, 1.442695
  %v591 = vpow.pop %v590
  %v592 = vmul.f32 %v566, 1.442695
  %v593 = vpow.pop %v592
  %v594 = vmul.f32 %v567, 1.442695
  %v595 = vpow.pop %v594
  %v596 = vmul.f32 %v568, 1.442695
  %v597 = vpow.pop %v596
  %v598 = vmul.f32 %v569, 1.442695
  %v599 = vpow.pop %v598
  %v600 = vmul.f32 %v570, 1.442695
  %v601 = vpow.pop %v600
  %v602 = vmul.f32 %v571, 1.442695
  %v603 = vpow.pop %v602
  %v604 = vsel %vm507, %v573, 0.0
  %v605 = vsel %vm507, %v575, 0.0
  %v606 = vsel %vm507, %v577, 0.0
  %v607 = vsel %vm507, %v579, 0.0
  %v608 = vsel %vm507, %v581, 0.0
  %v609 = vsel %vm507, %v583, 0.0
  %v610 = vsel %vm507, %v585, 0.0
  %v611 = vsel %vm507, %v587, 0.0
  %v612 = vsel %vm507, %v589, 0.0
  %v613 = vsel %vm507, %v591, 0.0
  %v614 = vsel %vm507, %v593, 0.0
  %v615 = vsel %vm507, %v595, 0.0
  %v616 = vsel %vm507, %v597, 0.0
  %v617 = vsel %vm507, %v599, 0.0
  %v618 = vsel %vm507, %v601, 0.0
  %v619 = vsel %vm507, %v603, 0.0
  %620 = vadd.xlane.f32.xlu0 %v604
  %v621 = vpop.xlane.xlu0 %620
  %622 = vadd.xlane.f32.xlu0 %v605
  %v623 = vpop.xlane.xlu0 %622
  %624 = vadd.xlane.f32.xlu0 %v606
  %v625 = vpop.xlane.xlu0 %624
  %626 = vadd.xlane.f32.xlu0 %v607
  %v627 = vpop.xlane.xlu0 %626
  %628 = vadd.xlane.f32.xlu0 %v608
  %v629 = vpop.xlane.xlu0 %628
  %630 = vadd.xlane.f32.xlu0 %v609
  %v631 = vpop.xlane.xlu0 %630
  %632 = vadd.xlane.f32.xlu0 %v610
  %v633 = vpop.xlane.xlu0 %632
  %634 = vadd.xlane.f32.xlu0 %v611
  %v635 = vpop.xlane.xlu0 %634
  %636 = vadd.xlane.f32.xlu0 %v612
  %v637 = vpop.xlane.xlu0 %636
  %638 = vadd.xlane.f32.xlu0 %v613
  %v639 = vpop.xlane.xlu0 %638
  %640 = vadd.xlane.f32.xlu0 %v614
  %v641 = vpop.xlane.xlu0 %640
  %642 = vadd.xlane.f32.xlu0 %v615
  %v643 = vpop.xlane.xlu0 %642
  %644 = vadd.xlane.f32.xlu0 %v616
  %v645 = vpop.xlane.xlu0 %644
  %646 = vadd.xlane.f32.xlu0 %v617
  %v647 = vpop.xlane.xlu0 %646
  %648 = vadd.xlane.f32.xlu0 %v618
  %v649 = vpop.xlane.xlu0 %648
  %650 = vadd.xlane.f32.xlu0 %v619
  %v651 = vpop.xlane.xlu0 %650
  %v652 = vlog2.pop %v621
  %v653 = vmul.f32 %v652, 0.6931472
  %v654 = vlog2.pop %v623
  %v655 = vmul.f32 %v654, 0.6931472
  %v656 = vlog2.pop %v625
  %v657 = vmul.f32 %v656, 0.6931472
  %v658 = vlog2.pop %v627
  %v659 = vmul.f32 %v658, 0.6931472
  %v660 = vlog2.pop %v629
  %v661 = vmul.f32 %v660, 0.6931472
  %v662 = vlog2.pop %v631
  %v663 = vmul.f32 %v662, 0.6931472
  %v664 = vlog2.pop %v633
  %v665 = vmul.f32 %v664, 0.6931472
  %v666 = vlog2.pop %v635
  %v667 = vmul.f32 %v666, 0.6931472
  %v668 = vlog2.pop %v637
  %v669 = vmul.f32 %v668, 0.6931472
  %v670 = vlog2.pop %v639
  %v671 = vmul.f32 %v670, 0.6931472
  %v672 = vlog2.pop %v641
  %v673 = vmul.f32 %v672, 0.6931472
  %v674 = vlog2.pop %v643
  %v675 = vmul.f32 %v674, 0.6931472
  %v676 = vlog2.pop %v645
  %v677 = vmul.f32 %v676, 0.6931472
  %v678 = vlog2.pop %v647
  %v679 = vmul.f32 %v678, 0.6931472
  %v680 = vlog2.pop %v649
  %v681 = vmul.f32 %v680, 0.6931472
  %v682 = vlog2.pop %v651
  %v683 = vmul.f32 %v682, 0.6931472
  %v684 = vsub.f32 %v556, %v653
  %v685 = vsub.f32 %v557, %v655
  %v686 = vsub.f32 %v558, %v657
  %v687 = vsub.f32 %v559, %v659
  %v688 = vsub.f32 %v560, %v661
  %v689 = vsub.f32 %v561, %v663
  %v690 = vsub.f32 %v562, %v665
  %v691 = vsub.f32 %v563, %v667
  %v692 = vsub.f32 %v564, %v669
  %v693 = vsub.f32 %v565, %v671
  %v694 = vsub.f32 %v566, %v673
  %v695 = vsub.f32 %v567, %v675
  %v696 = vsub.f32 %v568, %v677
  %v697 = vsub.f32 %v569, %v679
  %v698 = vsub.f32 %v570, %v681
  %v699 = vsub.f32 %v571, %v683
  %700 = vst [vmem:[%s7] sm:$0xff] %v684
  %701 = vst [vmem:[%s7 + $0x8] sm:$0xff] %v685
  %702 = vst [vmem:[%s7 + $0x10] sm:$0xff] %v686
  %703 = vst [vmem:[%s7 + $0x18] sm:$0xff] %v687
  %704 = vst [vmem:[%s7 + $0x20] sm:$0xff] %v688
  %705 = vst [vmem:[%s7 + $0x28] sm:$0xff] %v689
  %706 = vst [vmem:[%s7 + $0x30] sm:$0xff] %v690
  %707 = vst [vmem:[%s7 + $0x38] sm:$0xff] %v691
  %708 = vst [vmem:[%s7 + $0x40] sm:$0xff] %v692
  %709 = vst [vmem:[%s7 + $0x48] sm:$0xff] %v693
  %710 = vst [vmem:[%s7 + $0x50] sm:$0xff] %v694
  %711 = vst [vmem:[%s7 + $0x58] sm:$0xff] %v695
  %712 = vst [vmem:[%s7 + $0x60] sm:$0xff] %v696
  %713 = vst [vmem:[%s7 + $0x68] sm:$0xff] %v697
  %714 = vst [vmem:[%s7 + $0x70] sm:$0xff] %v698
  %715 = vst [vmem:[%s7 + $0x78] sm:$0xff] %v699
  // Predicated region
  $region30: #{_forward.13} parent=0 // pred_check
    _
  $region31: #{_forward.13} parent=0 // pred_check_branch
    %717 = sbr.rel (0) target = $region33
  $region32: #{_forward.13} parent=0 // pred_region
    _
  $region33: #{_forward.13} parent=0 // pred_fallthru
    _
  // Predicated region
  $region34: #{_forward.13} parent=0 // pred_check
    _
  $region35: #{_forward.13} parent=0 // pred_check_branch
    %719 = sbr.rel (0) target = $region37
  $region36: #{_forward.13} parent=0 // pred_region
    _
  $region37: #{_forward.13} parent=0 // pred_fallthru
    _

// kernel: _forward.12
$region0: #{_forward.12}
  #allocation0 [shape = 'u32[]', space=smem, size = 0x4, offset = 0x4, fixed_abs, tag = 'smem constant byte address 0x4 - core index']
  #allocation1 [shape = 'u32[72,128]{1,0:T(1,128)}', space=vmem, size = 0x9000, scoped, tag = 'internal scratch']
  %s0 = inlined_call_operand.vmem [shape: bf16[128,128], index: 0, kind: input, shape index: {}]
  %s1 = inlined_call_operand.vmem [shape: bf16[128,25], index: 1, kind: input, shape index: {}]
  %s2 = inlined_call_operand.vmem [shape: bf16[128,128], index: 2, kind: input, shape index: {}]
  %s3 = inlined_call_operand.vmem [shape: bf16[25,128], index: 3, kind: input, shape index: {}]
  %s4 = inlined_call_operand.vmem [shape: f32[1,128], index: 4, kind: input, shape index: {}]
  %s5 = inlined_call_operand.vmem [shape: bf16[128,128], index: 5, kind: input, shape index: {}]
  %s6 = inlined_call_operand.vmem [shape: f32[1,128], index: 6, kind: input, shape index: {}]
  %s7 = inlined_call_operand.vmem [shape: bf16[128,128], index: 7, kind: input, shape index: {}]
  %s8 = inlined_call_operand.vmem [shape: f32[1,128], index: 8, kind: input, shape index: {}]
  %s9 = inlined_call_operand.vmem [shape: f32[1,128], index: 9, kind: input, shape index: {}]
  %s10 = inlined_call_operand.vmem [shape: f32[1,128], index: 10, kind: input, shape index: {}]
  %s11 = inlined_call_operand.vmem [shape: bf16[128,128], index: 11, kind: output, shape index: {}]
  %s12 = sld [smem:[#allocation0]]
  $region54: #{_forward.12} parent=0
    _
  %s14 = ssub.s32 1, %s12
  %s15 = scalar_select 0, %s14, %s12
  // Predicated region
  $region2: #{_forward.12} parent=0 // pred_check
    _
  $region3: #{_forward.12} parent=0 // pred_check_branch
    %17 = sbr.rel (0) target = $region5
  $region4: #{_forward.12} parent=0 // pred_region
    _
  $region5: #{_forward.12} parent=0 // pred_fallthru
    _
  // Predicated region
  $region6: #{_forward.12} parent=0 // pred_check
    _
  $region7: #{_forward.12} parent=0 // pred_check_branch
    %19 = sbr.rel (0) target = $region9
  $region8: #{_forward.12} parent=0 // pred_region
    _
  $region9: #{_forward.12} parent=0 // pred_fallthru
    _
  // Predicated region
  $region10: #{_forward.12} parent=0 // pred_check
    _
  $region11: #{_forward.12} parent=0 // pred_check_branch
    %21 = sbr.rel (0) target = $region13
  $region12: #{_forward.12} parent=0 // pred_region
    _
  $region13: #{_forward.12} parent=0 // pred_fallthru
    _
  // Predicated region
  $region14: #{_forward.12} parent=0 // pred_check
    _
  $region15: #{_forward.12} parent=0 // pred_check_branch
    %23 = sbr.rel (0) target = $region17
  $region16: #{_forward.12} parent=0 // pred_region
    _
  $region17: #{_forward.12} parent=0 // pred_fallthru
    _
  // Predicated region
  $region18: #{_forward.12} parent=0 // pred_check
    _
  $region19: #{_forward.12} parent=0 // pred_check_branch
    %25 = sbr.rel (0) target = $region21
  $region20: #{_forward.12} parent=0 // pred_region
    _
  $region21: #{_forward.12} parent=0 // pred_fallthru
    _
  // Predicated region
  $region22: #{_forward.12} parent=0 // pred_check
    _
  $region23: #{_forward.12} parent=0 // pred_check_branch
    %27 = sbr.rel (0) target = $region25
  $region24: #{_forward.12} parent=0 // pred_region
    _
  $region25: #{_forward.12} parent=0 // pred_fallthru
    _
  // Predicated region
  $region26: #{_forward.12} parent=0 // pred_check
    _
  $region27: #{_forward.12} parent=0 // pred_check_branch
    %29 = sbr.rel (0) target = $region29
  $region28: #{_forward.12} parent=0 // pred_region
    _
  $region29: #{_forward.12} parent=0 // pred_fallthru
    _
  // Predicated region
  $region30: #{_forward.12} parent=0 // pred_check
    _
  $region31: #{_forward.12} parent=0 // pred_check_branch
    %31 = sbr.rel (0) target = $region33
  $region32: #{_forward.12} parent=0 // pred_region
    _
  $region33: #{_forward.12} parent=0 // pred_fallthru
    _
  // Predicated region
  $region34: #{_forward.12} parent=0 // pred_check
    _
  $region35: #{_forward.12} parent=0 // pred_check_branch
    %33 = sbr.rel (0) target = $region37
  $region36: #{_forward.12} parent=0 // pred_region
    _
  $region37: #{_forward.12} parent=0 // pred_fallthru
    _
  // Predicated region
  $region38: #{_forward.12} parent=0 // pred_check
    _
  $region39: #{_forward.12} parent=0 // pred_check_branch
    %35 = sbr.rel (0) target = $region41
  $region40: #{_forward.12} parent=0 // pred_region
    _
  $region41: #{_forward.12} parent=0 // pred_fallthru
    _
  // Predicated region
  $region42: #{_forward.12} parent=0 // pred_check
    _
  $region43: #{_forward.12} parent=0 // pred_check_branch
    %37 = sbr.rel (0) target = $region45
  $region44: #{_forward.12} parent=0 // pred_region
    _
  $region45: #{_forward.12} parent=0 // pred_fallthru
    _
  %v39 = vld [vmem:[%s0] sm:$0xf]
  %v40 = vld [vmem:[%s0 + $0x4] sm:$0xf]
  %v41 = vld [vmem:[%s0 + $0x8] sm:$0xf]
  %v42 = vld [vmem:[%s0 + $0xc] sm:$0xf]
  %v43 = vld [vmem:[%s0 + $0x10] sm:$0xf]
  %v44 = vld [vmem:[%s0 + $0x14] sm:$0xf]
  %v45 = vld [vmem:[%s0 + $0x18] sm:$0xf]
  %v46 = vld [vmem:[%s0 + $0x1c] sm:$0xf]
  %v47 = vld [vmem:[%s0 + $0x20] sm:$0xf]
  %v48 = vld [vmem:[%s0 + $0x24] sm:$0xf]
  %v49 = vld [vmem:[%s0 + $0x28] sm:$0xf]
  %v50 = vld [vmem:[%s0 + $0x2c] sm:$0xf]
  %v51 = vld [vmem:[%s0 + $0x30] sm:$0xf]
  %v52 = vld [vmem:[%s0 + $0x34] sm:$0xf]
  %v53 = vld [vmem:[%s0 + $0x38] sm:$0xf]
  %v54 = vld [vmem:[%s0 + $0x3c] sm:$0xf]
  %v55 = vld [vmem:[%s2] sm:$0xf]
  %v56 = vld [vmem:[%s2 + $0x4] sm:$0xf]
  %v57 = vld [vmem:[%s2 + $0x8] sm:$0xf]
  %v58 = vld [vmem:[%s2 + $0xc] sm:$0xf]
  %v59 = vld [vmem:[%s2 + $0x10] sm:$0xf]
  %v60 = vld [vmem:[%s2 + $0x14] sm:$0xf]
  %v61 = vld [vmem:[%s2 + $0x18] sm:$0xf]
  %v62 = vld [vmem:[%s2 + $0x1c] sm:$0xf]
  %v63 = vld [vmem:[%s2 + $0x20] sm:$0xf]
  %v64 = vld [vmem:[%s2 + $0x24] sm:$0xf]
  %v65 = vld [vmem:[%s2 + $0x28] sm:$0xf]
  %v66 = vld [vmem:[%s2 + $0x2c] sm:$0xf]
  %v67 = vld [vmem:[%s2 + $0x30] sm:$0xf]
  %v68 = vld [vmem:[%s2 + $0x34] sm:$0xf]
  %v69 = vld [vmem:[%s2 + $0x38] sm:$0xf]
  %v70 = vld [vmem:[%s2 + $0x3c] sm:$0xf]
  %v71 = vld [vmem:[%s1] sm:$0xf]
  %v72 = vld [vmem:[%s1 + $0x4] sm:$0xf]
  %v73 = vld [vmem:[%s1 + $0x8] sm:$0xf]
  %v74 = vld [vmem:[%s1 + $0xc] sm:$0xf]
  %v75 = vld [vmem:[%s1 + $0x10] sm:$0xf]
  %v76 = vld [vmem:[%s1 + $0x14] sm:$0xf]
  %v77 = vld [vmem:[%s1 + $0x18] sm:$0xf]
  %v78 = vld [vmem:[%s1 + $0x1c] sm:$0xf]
  %v79 = vld [vmem:[%s1 + $0x20] sm:$0xf]
  %v80 = vld [vmem:[%s1 + $0x24] sm:$0xf]
  %v81 = vld [vmem:[%s1 + $0x28] sm:$0xf]
  %v82 = vld [vmem:[%s1 + $0x2c] sm:$0xf]
  %v83 = vld [vmem:[%s1 + $0x30] sm:$0xf]
  %v84 = vld [vmem:[%s1 + $0x34] sm:$0xf]
  %v85 = vld [vmem:[%s1 + $0x38] sm:$0xf]
  %v86 = vld [vmem:[%s1 + $0x3c] sm:$0xf]
  %v87 = vld [vmem:[%s3] sm:$0xf]
  %v88 = vld [vmem:[%s3 + $0x4] sm:$0xf]
  %v89 = vld [vmem:[%s3 + $0x8] sm:$0xf]
  %v90 = vld [vmem:[%s3 + $0xc] sm:$0x1]
  %v107 = vunpack.c.l.b16 %v71
  %v108 = vunpack.c.l.b16 %v72
  %v109 = vunpack.c.l.b16 %v73
  %v110 = vunpack.c.l.b16 %v74
  %v111 = vunpack.c.l.b16 %v75
  %v112 = vunpack.c.l.b16 %v76
  %v113 = vunpack.c.l.b16 %v77
  %v114 = vunpack.c.l.b16 %v78
  %v115 = vunpack.c.l.b16 %v79
  %v116 = vunpack.c.l.b16 %v80
  %v117 = vunpack.c.l.b16 %v81
  %v118 = vunpack.c.l.b16 %v82
  %v119 = vunpack.c.l.b16 %v83
  %v120 = vunpack.c.l.b16 %v84
  %v121 = vunpack.c.l.b16 %v85
  %v122 = vunpack.c.l.b16 %v86
  %v123 = vpack.c.b16 %v108, %v107
  %v124 = vpack.c.b16 %v110, %v109
  %v125 = vpack.c.b16 %v112, %v111
  %v126 = vpack.c.b16 %v114, %v113
  %v127 = vpack.c.b16 %v116, %v115
  %v128 = vpack.c.b16 %v118, %v117
  %v129 = vpack.c.b16 %v120, %v119
  %v130 = vpack.c.b16 %v122, %v121
  %v135 = vunpack.c.l.b16 %v87
  %v136 = vunpack.c.l.b16 %v88
  %v137 = vunpack.c.l.b16 %v89
  %v138 = vunpack.c.l.b16 %v90
  %v139 = vpack.c.b16 %v136, %v135
  %v140 = vpack.c.b16 %v138, %v137
  %vm142 = vcmask 203776
  %v144 = vsel %vm142, %v123, 0
  %v147 = vsel %vm142, %v124, 0
  %v150 = vsel %vm142, %v125, 0
  %v153 = vsel %vm142, %v126, 0
  %v156 = vsel %vm142, %v127, 0
  %v159 = vsel %vm142, %v128, 0
  %v162 = vsel %vm142, %v129, 0
  %v165 = vsel %vm142, %v130, 0
  %vm167 = vcmask 1043456
  %vm168 = vcmask 1044480
  %v169 = vsel %vm167, 4294967295, 65535
  %v170 = vsel %vm168, %v169, 0
  %v172 = vand.u32 %v140, %v170
  %174 = vmatpush.bf16.msra.mxu0 0
  %175 = vmatpush.bf16.msra.mxu0 0
  %176 = vmatpush.bf16.msra.mxu0 0
  %177 = vmatpush.bf16.msra.mxu0 0
  %178 = vmatpush.bf16.msra.mxu0 0
  %179 = vmatpush.bf16.msra.mxu0 0
  %180 = vmatpush.bf16.msra.mxu0 %v172
  %181 = vmatpush.bf16.msra.mxu0 %v139
  %182 = vmatmul.bf16.gmra.mxu0 %v144
  %v183 = vpop.f32.mrf.mxu0
  %v184 = vadd.f32 0.0, %v183
  %v185 = vpop.f32.mrf.mxu0
  %v186 = vadd.f32 0.0, %v185
  %187 = vmatmul.bf16.gmra.mxu0 %v147
  %v188 = vpop.f32.mrf.mxu0
  %v189 = vadd.f32 0.0, %v188
  %v190 = vpop.f32.mrf.mxu0
  %v191 = vadd.f32 0.0, %v190
  %192 = vmatmul.bf16.gmra.mxu0 %v150
  %v193 = vpop.f32.mrf.mxu0
  %v194 = vadd.f32 0.0, %v193
  %v195 = vpop.f32.mrf.mxu0
  %v196 = vadd.f32 0.0, %v195
  %197 = vmatmul.bf16.gmra.mxu0 %v153
  %v198 = vpop.f32.mrf.mxu0
  %v199 = vadd.f32 0.0, %v198
  %v200 = vpop.f32.mrf.mxu0
  %v201 = vadd.f32 0.0, %v200
  %202 = vmatmul.bf16.gmra.mxu0 %v156
  %v203 = vpop.f32.mrf.mxu0
  %v204 = vadd.f32 0.0, %v203
  %v205 = vpop.f32.mrf.mxu0
  %v206 = vadd.f32 0.0, %v205
  %207 = vmatmul.bf16.gmra.mxu0 %v159
  %v208 = vpop.f32.mrf.mxu0
  %v209 = vadd.f32 0.0, %v208
  %v210 = vpop.f32.mrf.mxu0
  %v211 = vadd.f32 0.0, %v210
  %212 = vmatmul.bf16.gmra.mxu0 %v162
  %v213 = vpop.f32.mrf.mxu0
  %v214 = vadd.f32 0.0, %v213
  %v215 = vpop.f32.mrf.mxu0
  %v216 = vadd.f32 0.0, %v215
  %217 = vmatmul.bf16.gmra.mxu0 %v165
  %v218 = vpop.f32.mrf.mxu0
  %v219 = vadd.f32 0.0, %v218
  %v220 = vpop.f32.mrf.mxu0
  %v221 = vadd.f32 0.0, %v220
  %222 = vdwg.mxu0
  %v239 = vunpack.c.l.b16 %v39
  %v240 = vunpack.c.l.b16 %v40
  %v241 = vunpack.c.l.b16 %v41
  %v242 = vunpack.c.l.b16 %v42
  %v243 = vunpack.c.l.b16 %v43
  %v244 = vunpack.c.l.b16 %v44
  %v245 = vunpack.c.l.b16 %v45
  %v246 = vunpack.c.l.b16 %v46
  %v247 = vunpack.c.l.b16 %v47
  %v248 = vunpack.c.l.b16 %v48
  %v249 = vunpack.c.l.b16 %v49
  %v250 = vunpack.c.l.b16 %v50
  %v251 = vunpack.c.l.b16 %v51
  %v252 = vunpack.c.l.b16 %v52
  %v253 = vunpack.c.l.b16 %v53
  %v254 = vunpack.c.l.b16 %v54
  %v255 = vpack.c.b16 %v240, %v239
  %v256 = vpack.c.b16 %v242, %v241
  %v257 = vpack.c.b16 %v244, %v243
  %v258 = vpack.c.b16 %v246, %v245
  %v259 = vpack.c.b16 %v248, %v247
  %v260 = vpack.c.b16 %v250, %v249
  %v261 = vpack.c.b16 %v252, %v251
  %v262 = vpack.c.b16 %v254, %v253
  %v287 = vunpack.c.l.b16 %v55
  %v288 = vunpack.c.l.b16 %v56
  %v289 = vunpack.c.l.b16 %v57
  %v290 = vunpack.c.l.b16 %v58
  %v291 = vunpack.c.l.b16 %v59
  %v292 = vunpack.c.l.b16 %v60
  %v293 = vunpack.c.l.b16 %v61
  %v294 = vunpack.c.l.b16 %v62
  %v295 = vunpack.c.l.b16 %v63
  %v296 = vunpack.c.l.b16 %v64
  %v297 = vunpack.c.l.b16 %v65
  %v298 = vunpack.c.l.b16 %v66
  %v299 = vunpack.c.l.b16 %v67
  %v300 = vunpack.c.l.b16 %v68
  %v301 = vunpack.c.l.b16 %v69
  %v302 = vunpack.c.l.b16 %v70
  %v303 = vpack.c.b16 %v288, %v287
  %v304 = vpack.c.b16 %v290, %v289
  %v305 = vpack.c.b16 %v292, %v291
  %v306 = vpack.c.b16 %v294, %v293
  %v307 = vpack.c.b16 %v296, %v295
  %v308 = vpack.c.b16 %v298, %v297
  %v309 = vpack.c.b16 %v300, %v299
  %v310 = vpack.c.b16 %v302, %v301
  %319 = vmatpush.bf16.msra.mxu0 %v310
  %320 = vmatpush.bf16.msra.mxu0 %v309
  %321 = vmatpush.bf16.msra.mxu0 %v308
  %322 = vmatpush.bf16.msra.mxu0 %v307
  %323 = vmatpush.bf16.msra.mxu0 %v306
  %324 = vmatpush.bf16.msra.mxu0 %v305
  %325 = vmatpush.bf16.msra.mxu0 %v304
  %326 = vmatpush.bf16.msra.mxu0 %v303
  %327 = vmatmul.bf16.gmra.mxu0 %v255
  %v328 = vpop.f32.mrf.mxu0
  %v329 = vadd.f32 %v184, %v328
  %v330 = vpop.f32.mrf.mxu0
  %v331 = vadd.f32 %v186, %v330
  %332 = vmatmul.bf16.gmra.mxu0 %v256
  %v333 = vpop.f32.mrf.mxu0
  %v334 = vadd.f32 %v189, %v333
  %v335 = vpop.f32.mrf.mxu0
  %v336 = vadd.f32 %v191, %v335
  %337 = vmatmul.bf16.gmra.mxu0 %v257
  %v338 = vpop.f32.mrf.mxu0
  %v339 = vadd.f32 %v194, %v338
  %v340 = vpop.f32.mrf.mxu0
  %v341 = vadd.f32 %v196, %v340
  %342 = vmatmul.bf16.gmra.mxu0 %v258
  %v343 = vpop.f32.mrf.mxu0
  %v344 = vadd.f32 %v199, %v343
  %v345 = vpop.f32.mrf.mxu0
  %v346 = vadd.f32 %v201, %v345
  %347 = vmatmul.bf16.gmra.mxu0 %v259
  %v348 = vpop.f32.mrf.mxu0
  %v349 = vadd.f32 %v204, %v348
  %v350 = vpop.f32.mrf.mxu0
  %v351 = vadd.f32 %v206, %v350
  %352 = vmatmul.bf16.gmra.mxu0 %v260
  %v353 = vpop.f32.mrf.mxu0
  %v354 = vadd.f32 %v209, %v353
  %v355 = vpop.f32.mrf.mxu0
  %v356 = vadd.f32 %v211, %v355
  %357 = vmatmul.bf16.gmra.mxu0 %v261
  %v358 = vpop.f32.mrf.mxu0
  %v359 = vadd.f32 %v214, %v358
  %v360 = vpop.f32.mrf.mxu0
  %v361 = vadd.f32 %v216, %v360
  %362 = vmatmul.bf16.gmra.mxu0 %v262
  %v363 = vpop.f32.mrf.mxu0
  %v364 = vadd.f32 %v219, %v363
  %v365 = vpop.f32.mrf.mxu0
  %v366 = vadd.f32 %v221, %v365
  %367 = vdwg.mxu0
  %v368 = vld [vmem:[%s4] sm:$0x1]
  %v370 = vperm.slane %v368, 0
  %v372 = vadd.f32 %v329, %v370
  %v373 = vadd.f32 %v331, %v370
  %v374 = vadd.f32 %v334, %v370
  %v375 = vadd.f32 %v336, %v370
  %v376 = vadd.f32 %v339, %v370
  %v377 = vadd.f32 %v341, %v370
  %v378 = vadd.f32 %v344, %v370
  %v379 = vadd.f32 %v346, %v370
  %v380 = vadd.f32 %v349, %v370
  %v381 = vadd.f32 %v351, %v370
  %v382 = vadd.f32 %v354, %v370
  %v383 = vadd.f32 %v356, %v370
  %v384 = vadd.f32 %v359, %v370
  %v385 = vadd.f32 %v361, %v370
  %v386 = vadd.f32 %v364, %v370
  %v387 = vadd.f32 %v366, %v370
  %v388 = vpack.c.bf16 %v372, %v372
  %v389 = vpack.c.bf16 %v373, %v373
  %v390 = vpack.c.bf16 %v374, %v374
  %v391 = vpack.c.bf16 %v375, %v375
  %v392 = vpack.c.bf16 %v376, %v376
  %v393 = vpack.c.bf16 %v377, %v377
  %v394 = vpack.c.bf16 %v378, %v378
  %v395 = vpack.c.bf16 %v379, %v379
  %v396 = vpack.c.bf16 %v380, %v380
  %v397 = vpack.c.bf16 %v381, %v381
  %v398 = vpack.c.bf16 %v382, %v382
  %v399 = vpack.c.bf16 %v383, %v383
  %v400 = vpack.c.bf16 %v384, %v384
  %v401 = vpack.c.bf16 %v385, %v385
  %v402 = vpack.c.bf16 %v386, %v386
  %v403 = vpack.c.bf16 %v387, %v387
  %v404 = vunpack.c.l.bf16 %v388
  %v405 = vunpack.c.l.bf16 %v389
  %v406 = vunpack.c.l.bf16 %v390
  %v407 = vunpack.c.l.bf16 %v391
  %v408 = vunpack.c.l.bf16 %v392
  %v409 = vunpack.c.l.bf16 %v393
  %v410 = vunpack.c.l.bf16 %v394
  %v411 = vunpack.c.l.bf16 %v395
  %v412 = vunpack.c.l.bf16 %v396
  %v413 = vunpack.c.l.bf16 %v397
  %v414 = vunpack.c.l.bf16 %v398
  %v415 = vunpack.c.l.bf16 %v399
  %v416 = vunpack.c.l.bf16 %v400
  %v417 = vunpack.c.l.bf16 %v401
  %v418 = vunpack.c.l.bf16 %v402
  %v419 = vunpack.c.l.bf16 %v403
  %v420 = vmax.f32 %v404, 0.0
  %v421 = vmax.f32 %v405, 0.0
  %v422 = vmax.f32 %v406, 0.0
  %v423 = vmax.f32 %v407, 0.0
  %v424 = vmax.f32 %v408, 0.0
  %v425 = vmax.f32 %v409, 0.0
  %v426 = vmax.f32 %v410, 0.0
  %v427 = vmax.f32 %v411, 0.0
  %v428 = vmax.f32 %v412, 0.0
  %v429 = vmax.f32 %v413, 0.0
  %v430 = vmax.f32 %v414, 0.0
  %v431 = vmax.f32 %v415, 0.0
  %v432 = vmax.f32 %v416, 0.0
  %v433 = vmax.f32 %v417, 0.0
  %v434 = vmax.f32 %v418, 0.0
  %v435 = vmax.f32 %v419, 0.0
  %v436 = vpack.c.bf16 %v421, %v420
  %v437 = vpack.c.bf16 %v423, %v422
  %v438 = vpack.c.bf16 %v425, %v424
  %v439 = vpack.c.bf16 %v427, %v426
  %v440 = vpack.c.bf16 %v429, %v428
  %v441 = vpack.c.bf16 %v431, %v430
  %v442 = vpack.c.bf16 %v433, %v432
  %v443 = vpack.c.bf16 %v435, %v434
  %v444 = vld [vmem:[%s5] sm:$0xf]
  %v445 = vld [vmem:[%s5 + $0x4] sm:$0xf]
  %v446 = vld [vmem:[%s5 + $0x8] sm:$0xf]
  %v447 = vld [vmem:[%s5 + $0xc] sm:$0xf]
  %v448 = vld [vmem:[%s5 + $0x10] sm:$0xf]
  %v449 = vld [vmem:[%s5 + $0x14] sm:$0xf]
  %v450 = vld [vmem:[%s5 + $0x18] sm:$0xf]
  %v451 = vld [vmem:[%s5 + $0x1c] sm:$0xf]
  %v452 = vld [vmem:[%s5 + $0x20] sm:$0xf]
  %v453 = vld [vmem:[%s5 + $0x24] sm:$0xf]
  %v454 = vld [vmem:[%s5 + $0x28] sm:$0xf]
  %v455 = vld [vmem:[%s5 + $0x2c] sm:$0xf]
  %v456 = vld [vmem:[%s5 + $0x30] sm:$0xf]
  %v457 = vld [vmem:[%s5 + $0x34] sm:$0xf]
  %v458 = vld [vmem:[%s5 + $0x38] sm:$0xf]
  %v459 = vld [vmem:[%s5 + $0x3c] sm:$0xf]
  %v460 = vld [vmem:[%s6] sm:$0x1]
  %v462 = vperm.slane %v460, 0
  %v480 = vunpack.c.l.b16 %v444
  %v481 = vunpack.c.l.b16 %v445
  %v482 = vunpack.c.l.b16 %v446
  %v483 = vunpack.c.l.b16 %v447
  %v484 = vunpack.c.l.b16 %v448
  %v485 = vunpack.c.l.b16 %v449
  %v486 = vunpack.c.l.b16 %v450
  %v487 = vunpack.c.l.b16 %v451
  %v488 = vunpack.c.l.b16 %v452
  %v489 = vunpack.c.l.b16 %v453
  %v490 = vunpack.c.l.b16 %v454
  %v491 = vunpack.c.l.b16 %v455
  %v492 = vunpack.c.l.b16 %v456
  %v493 = vunpack.c.l.b16 %v457
  %v494 = vunpack.c.l.b16 %v458
  %v495 = vunpack.c.l.b16 %v459
  %v496 = vpack.c.b16 %v481, %v480
  %v497 = vpack.c.b16 %v483, %v482
  %v498 = vpack.c.b16 %v485, %v484
  %v499 = vpack.c.b16 %v487, %v486
  %v500 = vpack.c.b16 %v489, %v488
  %v501 = vpack.c.b16 %v491, %v490
  %v502 = vpack.c.b16 %v493, %v492
  %v503 = vpack.c.b16 %v495, %v494
  %512 = vmatpush.bf16.msra.mxu0 %v503
  %513 = vmatpush.bf16.msra.mxu0 %v502
  %514 = vmatpush.bf16.msra.mxu0 %v501
  %515 = vmatpush.bf16.msra.mxu0 %v500
  %516 = vmatpush.bf16.msra.mxu0 %v499
  %517 = vmatpush.bf16.msra.mxu0 %v498
  %518 = vmatpush.bf16.msra.mxu0 %v497
  %519 = vmatpush.bf16.msra.mxu0 %v496
  %520 = vmatmul.bf16.gmra.mxu0 %v436
  %v521 = vpop.f32.mrf.mxu0
  %v522 = vadd.f32 %v462, %v521
  %v523 = vpop.f32.mrf.mxu0
  %v524 = vadd.f32 %v462, %v523
  %525 = vmatmul.bf16.gmra.mxu0 %v437
  %v526 = vpop.f32.mrf.mxu0
  %v527 = vadd.f32 %v462, %v526
  %v528 = vpop.f32.mrf.mxu0
  %v529 = vadd.f32 %v462, %v528
  %530 = vmatmul.bf16.gmra.mxu0 %v438
  %v531 = vpop.f32.mrf.mxu0
  %v532 = vadd.f32 %v462, %v531
  %v533 = vpop.f32.mrf.mxu0
  %v534 = vadd.f32 %v462, %v533
  %535 = vmatmul.bf16.gmra.mxu0 %v439
  %v536 = vpop.f32.mrf.mxu0
  %v537 = vadd.f32 %v462, %v536
  %v538 = vpop.f32.mrf.mxu0
  %v539 = vadd.f32 %v462, %v538
  %540 = vmatmul.bf16.gmra.mxu0 %v440
  %v541 = vpop.f32.mrf.mxu0
  %v542 = vadd.f32 %v462, %v541
  %v543 = vpop.f32.mrf.mxu0
  %v544 = vadd.f32 %v462, %v543
  %545 = vmatmul.bf16.gmra.mxu0 %v441
  %v546 = vpop.f32.mrf.mxu0
  %v547 = vadd.f32 %v462, %v546
  %v548 = vpop.f32.mrf.mxu0
  %v549 = vadd.f32 %v462, %v548
  %550 = vmatmul.bf16.gmra.mxu0 %v442
  %v551 = vpop.f32.mrf.mxu0
  %v552 = vadd.f32 %v462, %v551
  %v553 = vpop.f32.mrf.mxu0
  %v554 = vadd.f32 %v462, %v553
  %555 = vmatmul.bf16.gmra.mxu0 %v443
  %v556 = vpop.f32.mrf.mxu0
  %v557 = vadd.f32 %v462, %v556
  %v558 = vpop.f32.mrf.mxu0
  %v559 = vadd.f32 %v462, %v558
  %560 = vdwg.mxu0
  %v561 = vpack.c.bf16 %v522, %v522
  %v562 = vpack.c.bf16 %v524, %v524
  %v563 = vpack.c.bf16 %v527, %v527
  %v564 = vpack.c.bf16 %v529, %v529
  %v565 = vpack.c.bf16 %v532, %v532
  %v566 = vpack.c.bf16 %v534, %v534
  %v567 = vpack.c.bf16 %v537, %v537
  %v568 = vpack.c.bf16 %v539, %v539
  %v569 = vpack.c.bf16 %v542, %v542
  %v570 = vpack.c.bf16 %v544, %v544
  %v571 = vpack.c.bf16 %v547, %v547
  %v572 = vpack.c.bf16 %v549, %v549
  %v573 = vpack.c.bf16 %v552, %v552
  %v574 = vpack.c.bf16 %v554, %v554
  %v575 = vpack.c.bf16 %v557, %v557
  %v576 = vpack.c.bf16 %v559, %v559
  %v577 = vunpack.c.l.bf16 %v561
  %v578 = vunpack.c.l.bf16 %v562
  %v579 = vunpack.c.l.bf16 %v563
  %v580 = vunpack.c.l.bf16 %v564
  %v581 = vunpack.c.l.bf16 %v565
  %v582 = vunpack.c.l.bf16 %v566
  %v583 = vunpack.c.l.bf16 %v567
  %v584 = vunpack.c.l.bf16 %v568
  %v585 = vunpack.c.l.bf16 %v569
  %v586 = vunpack.c.l.bf16 %v570
  %v587 = vunpack.c.l.bf16 %v571
  %v588 = vunpack.c.l.bf16 %v572
  %v589 = vunpack.c.l.bf16 %v573
  %v590 = vunpack.c.l.bf16 %v574
  %v591 = vunpack.c.l.bf16 %v575
  %v592 = vunpack.c.l.bf16 %v576
  %v593 = vmax.f32 %v577, 0.0
  %v594 = vmax.f32 %v578, 0.0
  %v595 = vmax.f32 %v579, 0.0
  %v596 = vmax.f32 %v580, 0.0
  %v597 = vmax.f32 %v581, 0.0
  %v598 = vmax.f32 %v582, 0.0
  %v599 = vmax.f32 %v583, 0.0
  %v600 = vmax.f32 %v584, 0.0
  %v601 = vmax.f32 %v585, 0.0
  %v602 = vmax.f32 %v586, 0.0
  %v603 = vmax.f32 %v587, 0.0
  %v604 = vmax.f32 %v588, 0.0
  %v605 = vmax.f32 %v589, 0.0
  %v606 = vmax.f32 %v590, 0.0
  %v607 = vmax.f32 %v591, 0.0
  %v608 = vmax.f32 %v592, 0.0
  %v609 = vpack.c.bf16 %v594, %v593
  %v610 = vpack.c.bf16 %v596, %v595
  %v611 = vpack.c.bf16 %v598, %v597
  %v612 = vpack.c.bf16 %v600, %v599
  %v613 = vpack.c.bf16 %v602, %v601
  %v614 = vpack.c.bf16 %v604, %v603
  %v615 = vpack.c.bf16 %v606, %v605
  %v616 = vpack.c.bf16 %v608, %v607
  %v617 = vld [vmem:[%s7] sm:$0xf]
  %v618 = vld [vmem:[%s7 + $0x4] sm:$0xf]
  %v619 = vld [vmem:[%s7 + $0x8] sm:$0xf]
  %v620 = vld [vmem:[%s7 + $0xc] sm:$0xf]
  %v621 = vld [vmem:[%s7 + $0x10] sm:$0xf]
  %v622 = vld [vmem:[%s7 + $0x14] sm:$0xf]
  %v623 = vld [vmem:[%s7 + $0x18] sm:$0xf]
  %v624 = vld [vmem:[%s7 + $0x1c] sm:$0xf]
  %v625 = vld [vmem:[%s7 + $0x20] sm:$0xf]
  %v626 = vld [vmem:[%s7 + $0x24] sm:$0xf]
  %v627 = vld [vmem:[%s7 + $0x28] sm:$0xf]
  %v628 = vld [vmem:[%s7 + $0x2c] sm:$0xf]
  %v629 = vld [vmem:[%s7 + $0x30] sm:$0xf]
  %v630 = vld [vmem:[%s7 + $0x34] sm:$0xf]
  %v631 = vld [vmem:[%s7 + $0x38] sm:$0xf]
  %v632 = vld [vmem:[%s7 + $0x3c] sm:$0xf]
  %v633 = vld [vmem:[%s8] sm:$0x1]
  %v635 = vperm.slane %v633, 0
  %v653 = vunpack.c.l.b16 %v617
  %v654 = vunpack.c.l.b16 %v618
  %v655 = vunpack.c.l.b16 %v619
  %v656 = vunpack.c.l.b16 %v620
  %v657 = vunpack.c.l.b16 %v621
  %v658 = vunpack.c.l.b16 %v622
  %v659 = vunpack.c.l.b16 %v623
  %v660 = vunpack.c.l.b16 %v624
  %v661 = vunpack.c.l.b16 %v625
  %v662 = vunpack.c.l.b16 %v626
  %v663 = vunpack.c.l.b16 %v627
  %v664 = vunpack.c.l.b16 %v628
  %v665 = vunpack.c.l.b16 %v629
  %v666 = vunpack.c.l.b16 %v630
  %v667 = vunpack.c.l.b16 %v631
  %v668 = vunpack.c.l.b16 %v632
  %v669 = vpack.c.b16 %v654, %v653
  %v670 = vpack.c.b16 %v656, %v655
  %v671 = vpack.c.b16 %v658, %v657
  %v672 = vpack.c.b16 %v660, %v659
  %v673 = vpack.c.b16 %v662, %v661
  %v674 = vpack.c.b16 %v664, %v663
  %v675 = vpack.c.b16 %v666, %v665
  %v676 = vpack.c.b16 %v668, %v667
  %685 = vmatpush.bf16.msra.mxu0 %v676
  %686 = vmatpush.bf16.msra.mxu0 %v675
  %687 = vmatpush.bf16.msra.mxu0 %v674
  %688 = vmatpush.bf16.msra.mxu0 %v673
  %689 = vmatpush.bf16.msra.mxu0 %v672
  %690 = vmatpush.bf16.msra.mxu0 %v671
  %691 = vmatpush.bf16.msra.mxu0 %v670
  %692 = vmatpush.bf16.msra.mxu0 %v669
  %693 = vmatmul.bf16.gmra.mxu0 %v609
  %v694 = vpop.f32.mrf.mxu0
  %v695 = vadd.f32 %v635, %v694
  %v696 = vpop.f32.mrf.mxu0
  %v697 = vadd.f32 %v635, %v696
  %698 = vmatmul.bf16.gmra.mxu0 %v610
  %v699 = vpop.f32.mrf.mxu0
  %v700 = vadd.f32 %v635, %v699
  %v701 = vpop.f32.mrf.mxu0
  %v702 = vadd.f32 %v635, %v701
  %703 = vmatmul.bf16.gmra.mxu0 %v611
  %v704 = vpop.f32.mrf.mxu0
  %v705 = vadd.f32 %v635, %v704
  %v706 = vpop.f32.mrf.mxu0
  %v707 = vadd.f32 %v635, %v706
  %708 = vmatmul.bf16.gmra.mxu0 %v612
  %v709 = vpop.f32.mrf.mxu0
  %v710 = vadd.f32 %v635, %v709
  %v711 = vpop.f32.mrf.mxu0
  %v712 = vadd.f32 %v635, %v711
  %713 = vmatmul.bf16.gmra.mxu0 %v613
  %v714 = vpop.f32.mrf.mxu0
  %v715 = vadd.f32 %v635, %v714
  %v716 = vpop.f32.mrf.mxu0
  %v717 = vadd.f32 %v635, %v716
  %718 = vmatmul.bf16.gmra.mxu0 %v614
  %v719 = vpop.f32.mrf.mxu0
  %v720 = vadd.f32 %v635, %v719
  %v721 = vpop.f32.mrf.mxu0
  %v722 = vadd.f32 %v635, %v721
  %723 = vmatmul.bf16.gmra.mxu0 %v615
  %v724 = vpop.f32.mrf.mxu0
  %v725 = vadd.f32 %v635, %v724
  %v726 = vpop.f32.mrf.mxu0
  %v727 = vadd.f32 %v635, %v726
  %728 = vmatmul.bf16.gmra.mxu0 %v616
  %v729 = vpop.f32.mrf.mxu0
  %v730 = vadd.f32 %v635, %v729
  %v731 = vpop.f32.mrf.mxu0
  %v732 = vadd.f32 %v635, %v731
  %733 = vdwg.mxu0
  %v734 = vmax.f32 %v695, 0.0
  %v735 = vmax.f32 %v697, 0.0
  %v736 = vmax.f32 %v700, 0.0
  %v737 = vmax.f32 %v702, 0.0
  %v738 = vmax.f32 %v705, 0.0
  %v739 = vmax.f32 %v707, 0.0
  %v740 = vmax.f32 %v710, 0.0
  %v741 = vmax.f32 %v712, 0.0
  %v742 = vmax.f32 %v715, 0.0
  %v743 = vmax.f32 %v717, 0.0
  %v744 = vmax.f32 %v720, 0.0
  %v745 = vmax.f32 %v722, 0.0
  %v746 = vmax.f32 %v725, 0.0
  %v747 = vmax.f32 %v727, 0.0
  %v748 = vmax.f32 %v730, 0.0
  %v749 = vmax.f32 %v732, 0.0
  %v750 = vld [vmem:[%s9] sm:$0x1]
  %v752 = vperm.slane %v750, 0
  %v754 = vmul.f32 %v734, %v752
  %v755 = vmul.f32 %v735, %v752
  %v756 = vmul.f32 %v736, %v752
  %v757 = vmul.f32 %v737, %v752
  %v758 = vmul.f32 %v738, %v752
  %v759 = vmul.f32 %v739, %v752
  %v760 = vmul.f32 %v740, %v752
  %v761 = vmul.f32 %v741, %v752
  %v762 = vmul.f32 %v742, %v752
  %v763 = vmul.f32 %v743, %v752
  %v764 = vmul.f32 %v744, %v752
  %v765 = vmul.f32 %v745, %v752
  %v766 = vmul.f32 %v746, %v752
  %v767 = vmul.f32 %v747, %v752
  %v768 = vmul.f32 %v748, %v752
  %v769 = vmul.f32 %v749, %v752
  %v770 = vld [vmem:[%s10] sm:$0x1]
  %v772 = vperm.slane %v770, 0
  %v774 = vadd.f32 %v754, %v772
  %v775 = vadd.f32 %v755, %v772
  %v776 = vadd.f32 %v756, %v772
  %v777 = vadd.f32 %v757, %v772
  %v778 = vadd.f32 %v758, %v772
  %v779 = vadd.f32 %v759, %v772
  %v780 = vadd.f32 %v760, %v772
  %v781 = vadd.f32 %v761, %v772
  %v782 = vadd.f32 %v762, %v772
  %v783 = vadd.f32 %v763, %v772
  %v784 = vadd.f32 %v764, %v772
  %v785 = vadd.f32 %v765, %v772
  %v786 = vadd.f32 %v766, %v772
  %v787 = vadd.f32 %v767, %v772
  %v788 = vadd.f32 %v768, %v772
  %v789 = vadd.f32 %v769, %v772
  %v790 = vpack.c.bf16 %v774, %v774
  %v791 = vpack.c.bf16 %v775, %v775
  %v792 = vpack.c.bf16 %v776, %v776
  %v793 = vpack.c.bf16 %v777, %v777
  %v794 = vpack.c.bf16 %v778, %v778
  %v795 = vpack.c.bf16 %v779, %v779
  %v796 = vpack.c.bf16 %v780, %v780
  %v797 = vpack.c.bf16 %v781, %v781
  %v798 = vpack.c.bf16 %v782, %v782
  %v799 = vpack.c.bf16 %v783, %v783
  %v800 = vpack.c.bf16 %v784, %v784
  %v801 = vpack.c.bf16 %v785, %v785
  %v802 = vpack.c.bf16 %v786, %v786
  %v803 = vpack.c.bf16 %v787, %v787
  %v804 = vpack.c.bf16 %v788, %v788
  %v805 = vpack.c.bf16 %v789, %v789
  %806 = vst [vmem:[%s11] sm:$0xf] %v790
  %807 = vst [vmem:[%s11 + $0x4] sm:$0xf] %v791
  %808 = vst [vmem:[%s11 + $0x8] sm:$0xf] %v792
  %809 = vst [vmem:[%s11 + $0xc] sm:$0xf] %v793
  %810 = vst [vmem:[%s11 + $0x10] sm:$0xf] %v794
  %811 = vst [vmem:[%s11 + $0x14] sm:$0xf] %v795
  %812 = vst [vmem:[%s11 + $0x18] sm:$0xf] %v796
  %813 = vst [vmem:[%s11 + $0x1c] sm:$0xf] %v797
  %814 = vst [vmem:[%s11 + $0x20] sm:$0xf] %v798
  %815 = vst [vmem:[%s11 + $0x24] sm:$0xf] %v799
  %816 = vst [vmem:[%s11 + $0x28] sm:$0xf] %v800
  %817 = vst [vmem:[%s11 + $0x2c] sm:$0xf] %v801
  %818 = vst [vmem:[%s11 + $0x30] sm:$0xf] %v802
  %819 = vst [vmem:[%s11 + $0x34] sm:$0xf] %v803
  %820 = vst [vmem:[%s11 + $0x38] sm:$0xf] %v804
  %821 = vst [vmem:[%s11 + $0x3c] sm:$0xf] %v805
  // Predicated region
  $region46: #{_forward.12} parent=0 // pred_check
    _
  $region47: #{_forward.12} parent=0 // pred_check_branch
    %823 = sbr.rel (0) target = $region49
  $region48: #{_forward.12} parent=0 // pred_region
    _
  $region49: #{_forward.12} parent=0 // pred_fallthru
    _
  // Predicated region
  $region50: #{_forward.12} parent=0 // pred_check
    _
  $region51: #{_forward.12} parent=0 // pred_check_branch
    %825 = sbr.rel (0) target = $region53
  $region52: #{_forward.12} parent=0 // pred_region
    _
  $region53: #{_forward.12} parent=0 // pred_fallthru
    _

</llo_original>
